<compile_context>
chip_gen: v7x
topology: tpu7x:2x2x1
jax: 0.10.0
libtpu: 0.0.40
codegen_flags: <defaults>
</compile_context>

<pallas_src>
import jax
import jax.numpy as jnp
from jax import lax
from jax.experimental import pallas as pl
from jax.experimental.pallas import tpu as pltpu


# ----------------------------- Pallas kernel -----------------------------
def lstm_attn_kernel(x_ref, wih0_ref, whh0_ref, b0_ref, w1_ref, b1_ref,
                     wa_ref, ba_ref, ws_ref, wfc_ref, bfc_ref,
                     out_ref, xw_ref, seq_ref):
    SB = x_ref.shape[0]
    Hp = whh0_ref.shape[0]          # padded hidden size (multiple of 128)
    Bp = out_ref.shape[0]           # padded batch (multiple of 8)
    S = SB // Bp
    bf16 = jnp.bfloat16

    # ---- hoisted layer-0 input projection: one big MXU GEMM (bias folded) ----
    xw_ref[...] = (jnp.dot(x_ref[...], wih0_ref[...],
                           preferred_element_type=jnp.float32) + b0_ref[...])

    # ---- hoisted bias broadcast for layer 1 (done once, not per step) ----
    b1b = jnp.broadcast_to(b1_ref[...], (Bp, 4 * Hp))

    def gates(g, c):
        # lane-aligned 128-wide gate slices (H padded to a multiple of 128)
        i = jax.nn.sigmoid(g[:, 0 * Hp:1 * Hp])
        f = jax.nn.sigmoid(g[:, 1 * Hp:2 * Hp])
        gg = jnp.tanh(g[:, 2 * Hp:3 * Hp])
        o = jax.nn.sigmoid(g[:, 3 * Hp:4 * Hp])
        c_new = f * c + i * gg
        return o * jnp.tanh(c_new), c_new

    def step(t, carry):
        h0, c0, h1, c1 = carry                       # f32 carries
        r = pl.multiple_of(t * Bp, Bp)
        # layer 0: only the recurrent matmul is on the serial path
        g0 = xw_ref[pl.ds(r, Bp), :] + jnp.dot(
            h0.astype(bf16), whh0_ref[...], preferred_element_type=jnp.float32)
        h0, c0 = gates(g0, c0)
        # layer 1: single fused matmul  [h0, h1] @ [[Wih1],[Whh1]]
        hcat = jnp.concatenate([h0, h1], axis=1).astype(bf16)   # (Bp, 2*Hp)
        g1 = jnp.dot(hcat, w1_ref[...], preferred_element_type=jnp.float32) + b1b
        h1, c1 = gates(g1, c1)
        seq_ref[pl.ds(r, Bp), :] = h1                # sublane-aligned row store
        return (h0, c0, h1, c1)

    zeros = jnp.zeros((Bp, Hp), jnp.float32)
    _, _, h1, _ = lax.fori_loop(0, S, step, (zeros, zeros, zeros, zeros),
                                unroll=True)

    # --------------------------- attention ---------------------------
    out_flat = seq_ref[...]                                     # (S*Bp, Hp) f32
    # energy = tanh(out @ Wa^T + ba + hidden_last): one big MXU GEMM
    ew = jnp.dot(out_flat.astype(bf16), wa_ref[...],
                 preferred_element_type=jnp.float32) + ba_ref[...]
    e3 = jnp.tanh(ew.reshape(S, Bp, Hp) + h1[None, :, :])       # (S, Bp, Hp)

    # scores: VPU multiply + lane reduction (instead of an N=1 MXU matmul)
    s3 = jnp.sum(e3 * ws_ref[...][None, :, :], axis=-1, keepdims=True)  # (S,Bp,1)

    # softmax over the sequence axis (axis 0), per batch element
    m = jnp.max(s3, axis=0, keepdims=True)
    p = jnp.exp(s3 - m)
    attn = p * pl.reciprocal(jnp.sum(p, axis=0, keepdims=True), approx=True)

    # context = sum_t attn[t, b] * out[t, b, :]
    out3 = out_flat.reshape(S, Bp, Hp)
    context = jnp.sum(attn * out3, axis=0)                      # (Bp, Hp)

    # final fc -> lane-dense (Bp, Op) store
    out_ref[...] = (jnp.dot(context.astype(bf16), wfc_ref[...],
                            preferred_element_type=jnp.float32) + bfc_ref[...])


# ------------------------------ wrapper ------------------------------
def _round_up(v, m):
    return ((v + m - 1) // m) * m


def _pad2(w, shape):
    out = jnp.zeros(shape, jnp.float32)
    return out.at[:w.shape[0], :w.shape[1]].set(w.astype(jnp.float32))


def _pack_gate_weight(w_t, in_pad, H, H_pad):
    """w_t: (in_dim, 4H) -> (in_pad, 4*H_pad), padded PER gate block."""
    in_dim = w_t.shape[0]
    blk = w_t.reshape(in_dim, 4, H)
    out = jnp.zeros((in_pad, 4, H_pad), jnp.float32)
    out = out.at[:in_dim, :, :H].set(blk.astype(jnp.float32))
    return out.reshape(in_pad, 4 * H_pad)


def _pack_gate_bias(b, H, H_pad):
    out = jnp.zeros((4, H_pad), jnp.float32)
    out = out.at[:, :H].set(b.reshape(4, H).astype(jnp.float32))
    return out.reshape(1, 4 * H_pad)


def lstm_with_attention(x, params):
    """x: (batch, seq, input) -> (batch, output_size)."""
    B, S, I = x.shape
    H = params["whh0"].shape[1]
    O = params["wfc"].shape[0]
    bf16 = jnp.bfloat16

    Bp = _round_up(max(B, 8), 8)
    Ip = _round_up(I, 128)
    Hp = _round_up(H, 128)
    Op = _round_up(O, 128)

    # x: (B,S,I) -> seq-major, flat (S*Bp, Ip), zero-padded, bf16 MXU operand
    x_sbi = jnp.transpose(x, (1, 0, 2)).astype(jnp.float32)
    x_pad = jnp.zeros((S, Bp, Ip), jnp.float32).at[:, :B, :I].set(x_sbi)
    x_flat = x_pad.reshape(S * Bp, Ip).astype(bf16)

    wih0 = _pack_gate_weight(params["wih0"].T, Ip, H, Hp).astype(bf16)
    whh0 = _pack_gate_weight(params["whh0"].T, Hp, H, Hp).astype(bf16)
    b0 = _pack_gate_bias(params["bih0"] + params["bhh0"], H, Hp)
    w1 = jnp.concatenate(
        [_pack_gate_weight(params["wih1"].T, Hp, H, Hp),
         _pack_gate_weight(params["whh1"].T, Hp, H, Hp)], axis=0).astype(bf16)
    b1 = _pack_gate_bias(params["bih1"] + params["bhh1"], H, Hp)
    wa = _pad2(params["wa"].T, (Hp, Hp)).astype(bf16)
    ba = _pad2(params["ba"].reshape(1, H), (1, Hp))
    ws = _pad2(params["ws"], (1, Hp))                     # f32 (VPU score)
    wfc = _pad2(params["wfc"].T, (Hp, Op)).astype(bf16)
    bfc = _pad2(params["bfc"].reshape(1, O), (1, Op))

    args = (x_flat, wih0, whh0, b0, w1, b1, wa, ba, ws, wfc, bfc)
    vmem = pl.BlockSpec(memory_space=pltpu.MemorySpace.VMEM)
    out = pl.pallas_call(
        lstm_attn_kernel,
        out_shape=jax.ShapeDtypeStruct((Bp, Op), jnp.float32),
        in_specs=[vmem] * len(args),
        out_specs=vmem,
        scratch_shapes=[
            pltpu.VMEM((S * Bp, 4 * Hp), jnp.float32),   # precomputed x @ Wih0
            pltpu.VMEM((S * Bp, Hp), jnp.float32),       # top-layer outputs
        ],
    )(*args)
    return out[:B, :O]


# --------------- plain-JAX reference (PyTorch semantics) ---------------
# `matmul_dtype=bf16` mirrors the kernel's bf16 MXU-operand rounding so the
# comparison is tight; with f32 it is the exact PyTorch eval-mode forward.
def reference(x, p, matmul_dtype=jnp.float32):
    B, S, _ = x.shape
    H = p["whh0"].shape[1]
    md = matmul_dtype

    def mm(a, b):
        return jnp.dot(a.astype(md), b.astype(md),
                       preferred_element_type=jnp.float32)

    def cell(x_t, h, c, wih, whh, bih, bhh):
        g = mm(x_t, wih.T) + bih + mm(h, whh.T) + bhh
        i = jax.nn.sigmoid(g[:, 0 * H:1 * H])
        f = jax.nn.sigmoid(g[:, 1 * H:2 * H])
        gg = jnp.tanh(g[:, 2 * H:3 * H])
        o = jax.nn.sigmoid(g[:, 3 * H:4 * H])
        c = f * c + i * gg
        return o * jnp.tanh(c), c

    h0 = c0 = h1 = c1 = jnp.zeros((B, H), jnp.float32)
    outs = []
    for t in range(S):
        h0, c0 = cell(x[:, t, :], h0, c0, p["wih0"], p["whh0"], p["bih0"], p["bhh0"])
        h1, c1 = cell(h0, h1, c1, p["wih1"], p["whh1"], p["bih1"], p["bhh1"])
        outs.append(h1)
    out = jnp.stack(outs, axis=1)                          # (B, S, H)

    energy = jnp.tanh(mm(out, p["wa"].T) + p["ba"] + h1[:, None, :])
    scores = jnp.sum(energy * p["ws"][0], axis=-1)         # (B, S)
    attn = jax.nn.softmax(scores, axis=-1)
    context = jnp.einsum("bs,bsh->bh", attn, out)
    return mm(context, p["wfc"].T) + p["bfc"]


def init_params(key, input_size, hidden_size, output_size):
    H, I, O = hidden_size, input_size, output_size
    k = 1.0 / jnp.sqrt(H)
    keys = jax.random.split(key, 14)
    u = lambda kk, shape: jax.random.uniform(kk, shape, jnp.float32, -k, k)
    return {
        "wih0": u(keys[0], (4 * H, I)), "whh0": u(keys[1], (4 * H, H)),
        "bih0": u(keys[2], (4 * H,)),   "bhh0": u(keys[3], (4 * H,)),
        "wih1": u(keys[4], (4 * H, H)), "whh1": u(keys[5], (4 * H, H)),
        "bih1": u(keys[6], (4 * H,)),   "bhh1": u(keys[7], (4 * H,)),
        "wa":   u(keys[8], (H, H)),     "ba":   u(keys[9], (H,)),
        "ws":   u(keys[10], (1, H)),
        "wfc":  u(keys[11], (O, H)),    "bfc":  u(keys[12], (O,)),
    }


if __name__ == "__main__":
    B, S, I, H, O = 2, 8, 4, 32, 4
    key = jax.random.PRNGKey(0)
    kx, kp = jax.random.split(key)
    x = jax.random.normal(kx, (B, S, I), jnp.float32)
    params = init_params(kp, I, H, O)

    y = jax.block_until_ready(lstm_with_attention(x, params))
    y_ref = reference(x, params, matmul_dtype=jnp.bfloat16)

    assert y.shape == (B, O), (y.shape, (B, O))
    assert jnp.allclose(y, y_ref, rtol=1e-2, atol=1e-3), (y, y_ref)
    print("KERNEL_OK")
</pallas_src>

<mosaic_0001>
module attributes {stable_mosaic.version = 11 : i64} {
  func.func @lstm_attn_kernel(%arg0: memref<64x128xbf16, #tpu.memory_space<vmem>>, %arg1: memref<128x512xbf16, #tpu.memory_space<vmem>>, %arg2: memref<128x512xbf16, #tpu.memory_space<vmem>>, %arg3: memref<1x512xf32, #tpu.memory_space<vmem>>, %arg4: memref<256x512xbf16, #tpu.memory_space<vmem>>, %arg5: memref<1x512xf32, #tpu.memory_space<vmem>>, %arg6: memref<128x128xbf16, #tpu.memory_space<vmem>>, %arg7: memref<1x128xf32, #tpu.memory_space<vmem>>, %arg8: memref<1x128xf32, #tpu.memory_space<vmem>>, %arg9: memref<128x128xbf16, #tpu.memory_space<vmem>>, %arg10: memref<1x128xf32, #tpu.memory_space<vmem>>, %arg11: memref<8x128xf32, #tpu.memory_space<vmem>>, %arg12: memref<64x512xf32, #tpu.memory_space<vmem>>, %arg13: memref<64x128xf32, #tpu.memory_space<vmem>>) attributes {dimension_semantics = [], scalar_prefetch = 0 : i64, scratch_operands = 2 : i64, tpu.core_type = #tpu.core_type<tc>} {
    %c0 = arith.constant 0 : index
    %c0_0 = arith.constant 0 : index
    %0 = vector.load %arg0[%c0, %c0_0] : memref<64x128xbf16, #tpu.memory_space<vmem>>, vector<64x128xbf16>
    %c0_1 = arith.constant 0 : index
    %c0_2 = arith.constant 0 : index
    %1 = vector.load %arg1[%c0_1, %c0_2] : memref<128x512xbf16, #tpu.memory_space<vmem>>, vector<128x512xbf16>
    %cst = arith.constant dense<0.000000e+00> : vector<64x512xf32>
    %2 = tpu.matmul %0, %1, %cst {dimension_numbers = #tpu.dot_dimension_numbers<[1], [0], [0], [1], [0, 0, 1, 1], [], []>} : vector<64x128xbf16>, vector<128x512xbf16>, vector<64x512xf32> -> vector<64x512xf32>
    %c0_3 = arith.constant 0 : index
    %c0_4 = arith.constant 0 : index
    %3 = vector.load %arg3[%c0_3, %c0_4] : memref<1x512xf32, #tpu.memory_space<vmem>>, vector<1x512xf32>
    %4 = vector.broadcast %3 : vector<1x512xf32> to vector<64x512xf32>
    %5 = arith.addf %2, %4 : vector<64x512xf32>
    %c0_5 = arith.constant 0 : index
    %c0_6 = arith.constant 0 : index
    %6 = vector.load %arg12[%c0_5, %c0_6] : memref<64x512xf32, #tpu.memory_space<vmem>>, vector<64x512xf32>
    tpu.vector_store %arg12[%c0_5, %c0_6], %5 {strides = array<i32>} : memref<64x512xf32, #tpu.memory_space<vmem>>, vector<64x512xf32>,
    %c0_7 = arith.constant 0 : index
    %c0_8 = arith.constant 0 : index
    %7 = vector.load %arg5[%c0_7, %c0_8] : memref<1x512xf32, #tpu.memory_space<vmem>>, vector<1x512xf32>
    %8 = vector.shape_cast %7 : vector<1x512xf32> to vector<1x512xf32>
    %9 = vector.broadcast %8 : vector<1x512xf32> to vector<8x512xf32>
    %cst_9 = arith.constant 0.000000e+00 : f32
    %10 = vector.broadcast %cst_9 : f32 to vector<8x128xf32>
    %c0_i32 = arith.constant 0 : i32
    %c8_i32 = arith.constant 8 : i32
    %11 = arith.muli %c0_i32, %c8_i32 : i32
    %12 = tpu.assume_multiple %11, 8 : i32
    %13 = arith.index_cast %12 : i32 to index
    %c0_10 = arith.constant 0 : index
    %14 = vector.load %arg12[%13, %c0_10] : memref<64x512xf32, #tpu.memory_space<vmem>>, vector<8x512xf32>
    %15 = arith.truncf %10 : vector<8x128xf32> to vector<8x128xbf16>
    %c0_11 = arith.constant 0 : index
    %c0_12 = arith.constant 0 : index
    %16 = vector.load %arg2[%c0_11, %c0_12] : memref<128x512xbf16, #tpu.memory_space<vmem>>, vector<128x512xbf16>
    %cst_13 = arith.constant dense<0.000000e+00> : vector<8x512xf32>
    %17 = tpu.matmul %15, %16, %cst_13 {dimension_numbers = #tpu.dot_dimension_numbers<[1], [0], [0], [1], [0, 0, 1, 1], [], []>} : vector<8x128xbf16>, vector<128x512xbf16>, vector<8x512xf32> -> vector<8x512xf32>
    %18 = arith.addf %14, %17 : vector<8x512xf32>
    %19 = vector.extract_strided_slice %18 {offsets = [0, 0], sizes = [8, 128], strides = [1, 1]} : vector<8x512xf32> to vector<8x128xf32>
    %20 = arith.negf %19 : vector<8x128xf32>
    %21 = math.exp %20 : vector<8x128xf32>
    %cst_14 = arith.constant 1.000000e+00 : f32
    %22 = vector.broadcast %cst_14 : f32 to vector<8x128xf32>
    %23 = arith.addf %22, %21 : vector<8x128xf32>
    %24 = arith.divf %22, %23 : vector<8x128xf32>
    %25 = vector.extract_strided_slice %18 {offsets = [0, 128], sizes = [8, 128], strides = [1, 1]} : vector<8x512xf32> to vector<8x128xf32>
    %26 = arith.negf %25 : vector<8x128xf32>
    %27 = math.exp %26 : vector<8x128xf32>
    %cst_15 = arith.constant 1.000000e+00 : f32
    %28 = vector.broadcast %cst_15 : f32 to vector<8x128xf32>
    %29 = arith.addf %28, %27 : vector<8x128xf32>
    %30 = arith.divf %28, %29 : vector<8x128xf32>
    %31 = vector.extract_strided_slice %18 {offsets = [0, 256], sizes = [8, 128], strides = [1, 1]} : vector<8x512xf32> to vector<8x128xf32>
    %32 = math.tanh %31 : vector<8x128xf32>
    %33 = vector.extract_strided_slice %18 {offsets = [0, 384], sizes = [8, 128], strides = [1, 1]} : vector<8x512xf32> to vector<8x128xf32>
    %34 = arith.negf %33 : vector<8x128xf32>
    %35 = math.exp %34 : vector<8x128xf32>
    %cst_16 = arith.constant 1.000000e+00 : f32
    %36 = vector.broadcast %cst_16 : f32 to vector<8x128xf32>
    %37 = arith.addf %36, %35 : vector<8x128xf32>
    %38 = arith.divf %36, %37 : vector<8x128xf32>
    %39 = arith.mulf %30, %10 : vector<8x128xf32>
    %40 = arith.mulf %24, %32 : vector<8x128xf32>
    %41 = arith.addf %39, %40 : vector<8x128xf32>
    %42 = math.tanh %41 : vector<8x128xf32>
    %43 = arith.mulf %38, %42 : vector<8x128xf32>
    %44 = tpu.concatenate %43, %10 in 1 : vector<8x128xf32>, vector<8x128xf32> -> vector<8x256xf32>
    %45 = arith.truncf %44 : vector<8x256xf32> to vector<8x256xbf16>
    %c0_17 = arith.constant 0 : index
    %c0_18 = arith.constant 0 : index
    %46 = vector.load %arg4[%c0_17, %c0_18] : memref<256x512xbf16, #tpu.memory_space<vmem>>, vector<256x512xbf16>
    %cst_19 = arith.constant dense<0.000000e+00> : vector<8x512xf32>
    %47 = tpu.matmul %45, %46, %cst_19 {dimension_numbers = #tpu.dot_dimension_numbers<[1], [0], [0], [1], [0, 0, 1, 1], [], []>} : vector<8x256xbf16>, vector<256x512xbf16>, vector<8x512xf32> -> vector<8x512xf32>
    %48 = arith.addf %47, %9 : vector<8x512xf32>
    %49 = vector.extract_strided_slice %48 {offsets = [0, 0], sizes = [8, 128], strides = [1, 1]} : vector<8x512xf32> to vector<8x128xf32>
    %50 = arith.negf %49 : vector<8x128xf32>
    %51 = math.exp %50 : vector<8x128xf32>
    %cst_20 = arith.constant 1.000000e+00 : f32
    %52 = vector.broadcast %cst_20 : f32 to vector<8x128xf32>
    %53 = arith.addf %52, %51 : vector<8x128xf32>
    %54 = arith.divf %52, %53 : vector<8x128xf32>
    %55 = vector.extract_strided_slice %48 {offsets = [0, 128], sizes = [8, 128], strides = [1, 1]} : vector<8x512xf32> to vector<8x128xf32>
    %56 = arith.negf %55 : vector<8x128xf32>
    %57 = math.exp %56 : vector<8x128xf32>
    %cst_21 = arith.constant 1.000000e+00 : f32
    %58 = vector.broadcast %cst_21 : f32 to vector<8x128xf32>
    %59 = arith.addf %58, %57 : vector<8x128xf32>
    %60 = arith.divf %58, %59 : vector<8x128xf32>
    %61 = vector.extract_strided_slice %48 {offsets = [0, 256], sizes = [8, 128], strides = [1, 1]} : vector<8x512xf32> to vector<8x128xf32>
    %62 = math.tanh %61 : vector<8x128xf32>
    %63 = vector.extract_strided_slice %48 {offsets = [0, 384], sizes = [8, 128], strides = [1, 1]} : vector<8x512xf32> to vector<8x128xf32>
    %64 = arith.negf %63 : vector<8x128xf32>
    %65 = math.exp %64 : vector<8x128xf32>
    %cst_22 = arith.constant 1.000000e+00 : f32
    %66 = vector.broadcast %cst_22 : f32 to vector<8x128xf32>
    %67 = arith.addf %66, %65 : vector<8x128xf32>
    %68 = arith.divf %66, %67 : vector<8x128xf32>
    %69 = arith.mulf %60, %10 : vector<8x128xf32>
    %70 = arith.mulf %54, %62 : vector<8x128xf32>
    %71 = arith.addf %69, %70 : vector<8x128xf32>
    %72 = math.tanh %71 : vector<8x128xf32>
    %73 = arith.mulf %68, %72 : vector<8x128xf32>
    %74 = arith.index_cast %12 : i32 to index
    %c0_23 = arith.constant 0 : index
    %75 = vector.load %arg13[%74, %c0_23] : memref<64x128xf32, #tpu.memory_space<vmem>>, vector<8x128xf32>
    tpu.vector_store %arg13[%74, %c0_23], %73 {strides = array<i32>} : memref<64x128xf32, #tpu.memory_space<vmem>>, vector<8x128xf32>,
    %c1_i32 = arith.constant 1 : i32
    %c8_i32_24 = arith.constant 8 : i32
    %76 = arith.muli %c1_i32, %c8_i32_24 : i32
    %77 = tpu.assume_multiple %76, 8 : i32
    %78 = arith.index_cast %77 : i32 to index
    %c0_25 = arith.constant 0 : index
    %79 = vector.load %arg12[%78, %c0_25] : memref<64x512xf32, #tpu.memory_space<vmem>>, vector<8x512xf32>
    %80 = arith.truncf %43 : vector<8x128xf32> to vector<8x128xbf16>
    %c0_26 = arith.constant 0 : index
    %c0_27 = arith.constant 0 : index
    %81 = vector.load %arg2[%c0_26, %c0_27] : memref<128x512xbf16, #tpu.memory_space<vmem>>, vector<128x512xbf16>
    %cst_28 = arith.constant dense<0.000000e+00> : vector<8x512xf32>
    %82 = tpu.matmul %80, %81, %cst_28 {dimension_numbers = #tpu.dot_dimension_numbers<[1], [0], [0], [1], [0, 0, 1, 1], [], []>} : vector<8x128xbf16>, vector<128x512xbf16>, vector<8x512xf32> -> vector<8x512xf32>
    %83 = arith.addf %79, %82 : vector<8x512xf32>
    %84 = vector.extract_strided_slice %83 {offsets = [0, 0], sizes = [8, 128], strides = [1, 1]} : vector<8x512xf32> to vector<8x128xf32>
    %85 = arith.negf %84 : vector<8x128xf32>
    %86 = math.exp %85 : vector<8x128xf32>
    %cst_29 = arith.constant 1.000000e+00 : f32
    %87 = vector.broadcast %cst_29 : f32 to vector<8x128xf32>
    %88 = arith.addf %87, %86 : vector<8x128xf32>
    %89 = arith.divf %87, %88 : vector<8x128xf32>
    %90 = vector.extract_strided_slice %83 {offsets = [0, 128], sizes = [8, 128], strides = [1, 1]} : vector<8x512xf32> to vector<8x128xf32>
    %91 = arith.negf %90 : vector<8x128xf32>
    %92 = math.exp %91 : vector<8x128xf32>
    %cst_30 = arith.constant 1.000000e+00 : f32
    %93 = vector.broadcast %cst_30 : f32 to vector<8x128xf32>
    %94 = arith.addf %93, %92 : vector<8x128xf32>
    %95 = arith.divf %93, %94 : vector<8x128xf32>
    %96 = vector.extract_strided_slice %83 {offsets = [0, 256], sizes = [8, 128], strides = [1, 1]} : vector<8x512xf32> to vector<8x128xf32>
    %97 = math.tanh %96 : vector<8x128xf32>
    %98 = vector.extract_strided_slice %83 {offsets = [0, 384], sizes = [8, 128], strides = [1, 1]} : vector<8x512xf32> to vector<8x128xf32>
    %99 = arith.negf %98 : vector<8x128xf32>
    %100 = math.exp %99 : vector<8x128xf32>
    %cst_31 = arith.constant 1.000000e+00 : f32
    %101 = vector.broadcast %cst_31 : f32 to vector<8x128xf32>
    %102 = arith.addf %101, %100 : vector<8x128xf32>
    %103 = arith.divf %101, %102 : vector<8x128xf32>
    %104 = arith.mulf %95, %41 : vector<8x128xf32>
    %105 = arith.mulf %89, %97 : vector<8x128xf32>
    %106 = arith.addf %104, %105 : vector<8x128xf32>
    %107 = math.tanh %106 : vector<8x128xf32>
    %108 = arith.mulf %103, %107 : vector<8x128xf32>
    %109 = tpu.concatenate %108, %73 in 1 : vector<8x128xf32>, vector<8x128xf32> -> vector<8x256xf32>
    %110 = arith.truncf %109 : vector<8x256xf32> to vector<8x256xbf16>
    %c0_32 = arith.constant 0 : index
    %c0_33 = arith.constant 0 : index
    %111 = vector.load %arg4[%c0_32, %c0_33] : memref<256x512xbf16, #tpu.memory_space<vmem>>, vector<256x512xbf16>
    %cst_34 = arith.constant dense<0.000000e+00> : vector<8x512xf32>
    %112 = tpu.matmul %110, %111, %cst_34 {dimension_numbers = #tpu.dot_dimension_numbers<[1], [0], [0], [1], [0, 0, 1, 1], [], []>} : vector<8x256xbf16>, vector<256x512xbf16>, vector<8x512xf32> -> vector<8x512xf32>
    %113 = arith.addf %112, %9 : vector<8x512xf32>
    %114 = vector.extract_strided_slice %113 {offsets = [0, 0], sizes = [8, 128], strides = [1, 1]} : vector<8x512xf32> to vector<8x128xf32>
    %115 = arith.negf %114 : vector<8x128xf32>
    %116 = math.exp %115 : vector<8x128xf32>
    %cst_35 = arith.constant 1.000000e+00 : f32
    %117 = vector.broadcast %cst_35 : f32 to vector<8x128xf32>
    %118 = arith.addf %117, %116 : vector<8x128xf32>
    %119 = arith.divf %117, %118 : vector<8x128xf32>
    %120 = vector.extract_strided_slice %113 {offsets = [0, 128], sizes = [8, 128], strides = [1, 1]} : vector<8x512xf32> to vector<8x128xf32>
    %121 = arith.negf %120 : vector<8x128xf32>
    %122 = math.exp %121 : vector<8x128xf32>
    %cst_36 = arith.constant 1.000000e+00 : f32
    %123 = vector.broadcast %cst_36 : f32 to vector<8x128xf32>
    %124 = arith.addf %123, %122 : vector<8x128xf32>
    %125 = arith.divf %123, %124 : vector<8x128xf32>
    %126 = vector.extract_strided_slice %113 {offsets = [0, 256], sizes = [8, 128], strides = [1, 1]} : vector<8x512xf32> to vector<8x128xf32>
    %127 = math.tanh %126 : vector<8x128xf32>
    %128 = vector.extract_strided_slice %113 {offsets = [0, 384], sizes = [8, 128], strides = [1, 1]} : vector<8x512xf32> to vector<8x128xf32>
    %129 = arith.negf %128 : vector<8x128xf32>
    %130 = math.exp %129 : vector<8x128xf32>
    %cst_37 = arith.constant 1.000000e+00 : f32
    %131 = vector.broadcast %cst_37 : f32 to vector<8x128xf32>
    %132 = arith.addf %131, %130 : vector<8x128xf32>
    %133 = arith.divf %131, %132 : vector<8x128xf32>
    %134 = arith.mulf %125, %71 : vector<8x128xf32>
    %135 = arith.mulf %119, %127 : vector<8x128xf32>
    %136 = arith.addf %134, %135 : vector<8x128xf32>
    %137 = math.tanh %136 : vector<8x128xf32>
    %138 = arith.mulf %133, %137 : vector<8x128xf32>
    %139 = arith.index_cast %77 : i32 to index
    %c0_38 = arith.constant 0 : index
    %140 = vector.load %arg13[%139, %c0_38] : memref<64x128xf32, #tpu.memory_space<vmem>>, vector<8x128xf32>
    tpu.vector_store %arg13[%139, %c0_38], %138 {strides = array<i32>} : memref<64x128xf32, #tpu.memory_space<vmem>>, vector<8x128xf32>,
    %c2_i32 = arith.constant 2 : i32
    %c8_i32_39 = arith.constant 8 : i32
    %141 = arith.muli %c2_i32, %c8_i32_39 : i32
    %142 = tpu.assume_multiple %141, 8 : i32
    %143 = arith.index_cast %142 : i32 to index
    %c0_40 = arith.constant 0 : index
    %144 = vector.load %arg12[%143, %c0_40] : memref<64x512xf32, #tpu.memory_space<vmem>>, vector<8x512xf32>
    %145 = arith.truncf %108 : vector<8x128xf32> to vector<8x128xbf16>
    %c0_41 = arith.constant 0 : index
    %c0_42 = arith.constant 0 : index
    %146 = vector.load %arg2[%c0_41, %c0_42] : memref<128x512xbf16, #tpu.memory_space<vmem>>, vector<128x512xbf16>
    %cst_43 = arith.constant dense<0.000000e+00> : vector<8x512xf32>
    %147 = tpu.matmul %145, %146, %cst_43 {dimension_numbers = #tpu.dot_dimension_numbers<[1], [0], [0], [1], [0, 0, 1, 1], [], []>} : vector<8x128xbf16>, vector<128x512xbf16>, vector<8x512xf32> -> vector<8x512xf32>
    %148 = arith.addf %144, %147 : vector<8x512xf32>
    %149 = vector.extract_strided_slice %148 {offsets = [0, 0], sizes = [8, 128], strides = [1, 1]} : vector<8x512xf32> to vector<8x128xf32>
    %150 = arith.negf %149 : vector<8x128xf32>
    %151 = math.exp %150 : vector<8x128xf32>
    %cst_44 = arith.constant 1.000000e+00 : f32
    %152 = vector.broadcast %cst_44 : f32 to vector<8x128xf32>
    %153 = arith.addf %152, %151 : vector<8x128xf32>
    %154 = arith.divf %152, %153 : vector<8x128xf32>
    %155 = vector.extract_strided_slice %148 {offsets = [0, 128], sizes = [8, 128], strides = [1, 1]} : vector<8x512xf32> to vector<8x128xf32>
    %156 = arith.negf %155 : vector<8x128xf32>
    %157 = math.exp %156 : vector<8x128xf32>
    %cst_45 = arith.constant 1.000000e+00 : f32
    %158 = vector.broadcast %cst_45 : f32 to vector<8x128xf32>
    %159 = arith.addf %158, %157 : vector<8x128xf32>
    %160 = arith.divf %158, %159 : vector<8x128xf32>
    %161 = vector.extract_strided_slice %148 {offsets = [0, 256], sizes = [8, 128], strides = [1, 1]} : vector<8x512xf32> to vector<8x128xf32>
    %162 = math.tanh %161 : vector<8x128xf32>
    %163 = vector.extract_strided_slice %148 {offsets = [0, 384], sizes = [8, 128], strides = [1, 1]} : vector<8x512xf32> to vector<8x128xf32>
    %164 = arith.negf %163 : vector<8x128xf32>
    %165 = math.exp %164 : vector<8x128xf32>
    %cst_46 = arith.constant 1.000000e+00 : f32
    %166 = vector.broadcast %cst_46 : f32 to vector<8x128xf32>
    %167 = arith.addf %166, %165 : vector<8x128xf32>
    %168 = arith.divf %166, %167 : vector<8x128xf32>
    %169 = arith.mulf %160, %106 : vector<8x128xf32>
    %170 = arith.mulf %154, %162 : vector<8x128xf32>
    %171 = arith.addf %169, %170 : vector<8x128xf32>
    %172 = math.tanh %171 : vector<8x128xf32>
    %173 = arith.mulf %168, %172 : vector<8x128xf32>
    %174 = tpu.concatenate %173, %138 in 1 : vector<8x128xf32>, vector<8x128xf32> -> vector<8x256xf32>
    %175 = arith.truncf %174 : vector<8x256xf32> to vector<8x256xbf16>
    %c0_47 = arith.constant 0 : index
    %c0_48 = arith.constant 0 : index
    %176 = vector.load %arg4[%c0_47, %c0_48] : memref<256x512xbf16, #tpu.memory_space<vmem>>, vector<256x512xbf16>
    %cst_49 = arith.constant dense<0.000000e+00> : vector<8x512xf32>
    %177 = tpu.matmul %175, %176, %cst_49 {dimension_numbers = #tpu.dot_dimension_numbers<[1], [0], [0], [1], [0, 0, 1, 1], [], []>} : vector<8x256xbf16>, vector<256x512xbf16>, vector<8x512xf32> -> vector<8x512xf32>
    %178 = arith.addf %177, %9 : vector<8x512xf32>
    %179 = vector.extract_strided_slice %178 {offsets = [0, 0], sizes = [8, 128], strides = [1, 1]} : vector<8x512xf32> to vector<8x128xf32>
    %180 = arith.negf %179 : vector<8x128xf32>
    %181 = math.exp %180 : vector<8x128xf32>
    %cst_50 = arith.constant 1.000000e+00 : f32
    %182 = vector.broadcast %cst_50 : f32 to vector<8x128xf32>
    %183 = arith.addf %182, %181 : vector<8x128xf32>
    %184 = arith.divf %182, %183 : vector<8x128xf32>
    %185 = vector.extract_strided_slice %178 {offsets = [0, 128], sizes = [8, 128], strides = [1, 1]} : vector<8x512xf32> to vector<8x128xf32>
    %186 = arith.negf %185 : vector<8x128xf32>
    %187 = math.exp %186 : vector<8x128xf32>
    %cst_51 = arith.constant 1.000000e+00 : f32
    %188 = vector.broadcast %cst_51 : f32 to vector<8x128xf32>
    %189 = arith.addf %188, %187 : vector<8x128xf32>
    %190 = arith.divf %188, %189 : vector<8x128xf32>
    %191 = vector.extract_strided_slice %178 {offsets = [0, 256], sizes = [8, 128], strides = [1, 1]} : vector<8x512xf32> to vector<8x128xf32>
    %192 = math.tanh %191 : vector<8x128xf32>
    %193 = vector.extract_strided_slice %178 {offsets = [0, 384], sizes = [8, 128], strides = [1, 1]} : vector<8x512xf32> to vector<8x128xf32>
    %194 = arith.negf %193 : vector<8x128xf32>
    %195 = math.exp %194 : vector<8x128xf32>
    %cst_52 = arith.constant 1.000000e+00 : f32
    %196 = vector.broadcast %cst_52 : f32 to vector<8x128xf32>
    %197 = arith.addf %196, %195 : vector<8x128xf32>
    %198 = arith.divf %196, %197 : vector<8x128xf32>
    %199 = arith.mulf %190, %136 : vector<8x128xf32>
    %200 = arith.mulf %184, %192 : vector<8x128xf32>
    %201 = arith.addf %199, %200 : vector<8x128xf32>
    %202 = math.tanh %201 : vector<8x128xf32>
    %203 = arith.mulf %198, %202 : vector<8x128xf32>
    %204 = arith.index_cast %142 : i32 to index
    %c0_53 = arith.constant 0 : index
    %205 = vector.load %arg13[%204, %c0_53] : memref<64x128xf32, #tpu.memory_space<vmem>>, vector<8x128xf32>
    tpu.vector_store %arg13[%204, %c0_53], %203 {strides = array<i32>} : memref<64x128xf32, #tpu.memory_space<vmem>>, vector<8x128xf32>,
    %c3_i32 = arith.constant 3 : i32
    %c8_i32_54 = arith.constant 8 : i32
    %206 = arith.muli %c3_i32, %c8_i32_54 : i32
    %207 = tpu.assume_multiple %206, 8 : i32
    %208 = arith.index_cast %207 : i32 to index
    %c0_55 = arith.constant 0 : index
    %209 = vector.load %arg12[%208, %c0_55] : memref<64x512xf32, #tpu.memory_space<vmem>>, vector<8x512xf32>
    %210 = arith.truncf %173 : vector<8x128xf32> to vector<8x128xbf16>
    %c0_56 = arith.constant 0 : index
    %c0_57 = arith.constant 0 : index
    %211 = vector.load %arg2[%c0_56, %c0_57] : memref<128x512xbf16, #tpu.memory_space<vmem>>, vector<128x512xbf16>
    %cst_58 = arith.constant dense<0.000000e+00> : vector<8x512xf32>
    %212 = tpu.matmul %210, %211, %cst_58 {dimension_numbers = #tpu.dot_dimension_numbers<[1], [0], [0], [1], [0, 0, 1, 1], [], []>} : vector<8x128xbf16>, vector<128x512xbf16>, vector<8x512xf32> -> vector<8x512xf32>
    %213 = arith.addf %209, %212 : vector<8x512xf32>
    %214 = vector.extract_strided_slice %213 {offsets = [0, 0], sizes = [8, 128], strides = [1, 1]} : vector<8x512xf32> to vector<8x128xf32>
    %215 = arith.negf %214 : vector<8x128xf32>
    %216 = math.exp %215 : vector<8x128xf32>
    %cst_59 = arith.constant 1.000000e+00 : f32
    %217 = vector.broadcast %cst_59 : f32 to vector<8x128xf32>
    %218 = arith.addf %217, %216 : vector<8x128xf32>
    %219 = arith.divf %217, %218 : vector<8x128xf32>
    %220 = vector.extract_strided_slice %213 {offsets = [0, 128], sizes = [8, 128], strides = [1, 1]} : vector<8x512xf32> to vector<8x128xf32>
    %221 = arith.negf %220 : vector<8x128xf32>
    %222 = math.exp %221 : vector<8x128xf32>
    %cst_60 = arith.constant 1.000000e+00 : f32
    %223 = vector.broadcast %cst_60 : f32 to vector<8x128xf32>
    %224 = arith.addf %223, %222 : vector<8x128xf32>
    %225 = arith.divf %223, %224 : vector<8x128xf32>
    %226 = vector.extract_strided_slice %213 {offsets = [0, 256], sizes = [8, 128], strides = [1, 1]} : vector<8x512xf32> to vector<8x128xf32>
    %227 = math.tanh %226 : vector<8x128xf32>
    %228 = vector.extract_strided_slice %213 {offsets = [0, 384], sizes = [8, 128], strides = [1, 1]} : vector<8x512xf32> to vector<8x128xf32>
    %229 = arith.negf %228 : vector<8x128xf32>
    %230 = math.exp %229 : vector<8x128xf32>
    %cst_61 = arith.constant 1.000000e+00 : f32
    %231 = vector.broadcast %cst_61 : f32 to vector<8x128xf32>
    %232 = arith.addf %231, %230 : vector<8x128xf32>
    %233 = arith.divf %231, %232 : vector<8x128xf32>
    %234 = arith.mulf %225, %171 : vector<8x128xf32>
    %235 = arith.mulf %219, %227 : vector<8x128xf32>
    %236 = arith.addf %234, %235 : vector<8x128xf32>
    %237 = math.tanh %236 : vector<8x128xf32>
    %238 = arith.mulf %233, %237 : vector<8x128xf32>
    %239 = tpu.concatenate %238, %203 in 1 : vector<8x128xf32>, vector<8x128xf32> -> vector<8x256xf32>
    %240 = arith.truncf %239 : vector<8x256xf32> to vector<8x256xbf16>
    %c0_62 = arith.constant 0 : index
    %c0_63 = arith.constant 0 : index
    %241 = vector.load %arg4[%c0_62, %c0_63] : memref<256x512xbf16, #tpu.memory_space<vmem>>, vector<256x512xbf16>
    %cst_64 = arith.constant dense<0.000000e+00> : vector<8x512xf32>
    %242 = tpu.matmul %240, %241, %cst_64 {dimension_numbers = #tpu.dot_dimension_numbers<[1], [0], [0], [1], [0, 0, 1, 1], [], []>} : vector<8x256xbf16>, vector<256x512xbf16>, vector<8x512xf32> -> vector<8x512xf32>
    %243 = arith.addf %242, %9 : vector<8x512xf32>
    %244 = vector.extract_strided_slice %243 {offsets = [0, 0], sizes = [8, 128], strides = [1, 1]} : vector<8x512xf32> to vector<8x128xf32>
    %245 = arith.negf %244 : vector<8x128xf32>
    %246 = math.exp %245 : vector<8x128xf32>
    %cst_65 = arith.constant 1.000000e+00 : f32
    %247 = vector.broadcast %cst_65 : f32 to vector<8x128xf32>
    %248 = arith.addf %247, %246 : vector<8x128xf32>
    %249 = arith.divf %247, %248 : vector<8x128xf32>
    %250 = vector.extract_strided_slice %243 {offsets = [0, 128], sizes = [8, 128], strides = [1, 1]} : vector<8x512xf32> to vector<8x128xf32>
    %251 = arith.negf %250 : vector<8x128xf32>
    %252 = math.exp %251 : vector<8x128xf32>
    %cst_66 = arith.constant 1.000000e+00 : f32
    %253 = vector.broadcast %cst_66 : f32 to vector<8x128xf32>
    %254 = arith.addf %253, %252 : vector<8x128xf32>
    %255 = arith.divf %253, %254 : vector<8x128xf32>
    %256 = vector.extract_strided_slice %243 {offsets = [0, 256], sizes = [8, 128], strides = [1, 1]} : vector<8x512xf32> to vector<8x128xf32>
    %257 = math.tanh %256 : vector<8x128xf32>
    %258 = vector.extract_strided_slice %243 {offsets = [0, 384], sizes = [8, 128], strides = [1, 1]} : vector<8x512xf32> to vector<8x128xf32>
    %259 = arith.negf %258 : vector<8x128xf32>
    %260 = math.exp %259 : vector<8x128xf32>
    %cst_67 = arith.constant 1.000000e+00 : f32
    %261 = vector.broadcast %cst_67 : f32 to vector<8x128xf32>
    %262 = arith.addf %261, %260 : vector<8x128xf32>
    %263 = arith.divf %261, %262 : vector<8x128xf32>
    %264 = arith.mulf %255, %201 : vector<8x128xf32>
    %265 = arith.mulf %249, %257 : vector<8x128xf32>
    %266 = arith.addf %264, %265 : vector<8x128xf32>
    %267 = math.tanh %266 : vector<8x128xf32>
    %268 = arith.mulf %263, %267 : vector<8x128xf32>
    %269 = arith.index_cast %207 : i32 to index
    %c0_68 = arith.constant 0 : index
    %270 = vector.load %arg13[%269, %c0_68] : memref<64x128xf32, #tpu.memory_space<vmem>>, vector<8x128xf32>
    tpu.vector_store %arg13[%269, %c0_68], %268 {strides = array<i32>} : memref<64x128xf32, #tpu.memory_space<vmem>>, vector<8x128xf32>,
    %c4_i32 = arith.constant 4 : i32
    %c8_i32_69 = arith.constant 8 : i32
    %271 = arith.muli %c4_i32, %c8_i32_69 : i32
    %272 = tpu.assume_multiple %271, 8 : i32
    %273 = arith.index_cast %272 : i32 to index
    %c0_70 = arith.constant 0 : index
    %274 = vector.load %arg12[%273, %c0_70] : memref<64x512xf32, #tpu.memory_space<vmem>>, vector<8x512xf32>
    %275 = arith.truncf %238 : vector<8x128xf32> to vector<8x128xbf16>
    %c0_71 = arith.constant 0 : index
    %c0_72 = arith.constant 0 : index
    %276 = vector.load %arg2[%c0_71, %c0_72] : memref<128x512xbf16, #tpu.memory_space<vmem>>, vector<128x512xbf16>
    %cst_73 = arith.constant dense<0.000000e+00> : vector<8x512xf32>
    %277 = tpu.matmul %275, %276, %cst_73 {dimension_numbers = #tpu.dot_dimension_numbers<[1], [0], [0], [1], [0, 0, 1, 1], [], []>} : vector<8x128xbf16>, vector<128x512xbf16>, vector<8x512xf32> -> vector<8x512xf32>
    %278 = arith.addf %274, %277 : vector<8x512xf32>
    %279 = vector.extract_strided_slice %278 {offsets = [0, 0], sizes = [8, 128], strides = [1, 1]} : vector<8x512xf32> to vector<8x128xf32>
    %280 = arith.negf %279 : vector<8x128xf32>
    %281 = math.exp %280 : vector<8x128xf32>
    %cst_74 = arith.constant 1.000000e+00 : f32
    %282 = vector.broadcast %cst_74 : f32 to vector<8x128xf32>
    %283 = arith.addf %282, %281 : vector<8x128xf32>
    %284 = arith.divf %282, %283 : vector<8x128xf32>
    %285 = vector.extract_strided_slice %278 {offsets = [0, 128], sizes = [8, 128], strides = [1, 1]} : vector<8x512xf32> to vector<8x128xf32>
    %286 = arith.negf %285 : vector<8x128xf32>
    %287 = math.exp %286 : vector<8x128xf32>
    %cst_75 = arith.constant 1.000000e+00 : f32
    %288 = vector.broadcast %cst_75 : f32 to vector<8x128xf32>
    %289 = arith.addf %288, %287 : vector<8x128xf32>
    %290 = arith.divf %288, %289 : vector<8x128xf32>
    %291 = vector.extract_strided_slice %278 {offsets = [0, 256], sizes = [8, 128], strides = [1, 1]} : vector<8x512xf32> to vector<8x128xf32>
    %292 = math.tanh %291 : vector<8x128xf32>
    %293 = vector.extract_strided_slice %278 {offsets = [0, 384], sizes = [8, 128], strides = [1, 1]} : vector<8x512xf32> to vector<8x128xf32>
    %294 = arith.negf %293 : vector<8x128xf32>
    %295 = math.exp %294 : vector<8x128xf32>
    %cst_76 = arith.constant 1.000000e+00 : f32
    %296 = vector.broadcast %cst_76 : f32 to vector<8x128xf32>
    %297 = arith.addf %296, %295 : vector<8x128xf32>
    %298 = arith.divf %296, %297 : vector<8x128xf32>
    %299 = arith.mulf %290, %236 : vector<8x128xf32>
    %300 = arith.mulf %284, %292 : vector<8x128xf32>
    %301 = arith.addf %299, %300 : vector<8x128xf32>
    %302 = math.tanh %301 : vector<8x128xf32>
    %303 = arith.mulf %298, %302 : vector<8x128xf32>
    %304 = tpu.concatenate %303, %268 in 1 : vector<8x128xf32>, vector<8x128xf32> -> vector<8x256xf32>
    %305 = arith.truncf %304 : vector<8x256xf32> to vector<8x256xbf16>
    %c0_77 = arith.constant 0 : index
    %c0_78 = arith.constant 0 : index
    %306 = vector.load %arg4[%c0_77, %c0_78] : memref<256x512xbf16, #tpu.memory_space<vmem>>, vector<256x512xbf16>
    %cst_79 = arith.constant dense<0.000000e+00> : vector<8x512xf32>
    %307 = tpu.matmul %305, %306, %cst_79 {dimension_numbers = #tpu.dot_dimension_numbers<[1], [0], [0], [1], [0, 0, 1, 1], [], []>} : vector<8x256xbf16>, vector<256x512xbf16>, vector<8x512xf32> -> vector<8x512xf32>
    %308 = arith.addf %307, %9 : vector<8x512xf32>
    %309 = vector.extract_strided_slice %308 {offsets = [0, 0], sizes = [8, 128], strides = [1, 1]} : vector<8x512xf32> to vector<8x128xf32>
    %310 = arith.negf %309 : vector<8x128xf32>
    %311 = math.exp %310 : vector<8x128xf32>
    %cst_80 = arith.constant 1.000000e+00 : f32
    %312 = vector.broadcast %cst_80 : f32 to vector<8x128xf32>
    %313 = arith.addf %312, %311 : vector<8x128xf32>
    %314 = arith.divf %312, %313 : vector<8x128xf32>
    %315 = vector.extract_strided_slice %308 {offsets = [0, 128], sizes = [8, 128], strides = [1, 1]} : vector<8x512xf32> to vector<8x128xf32>
    %316 = arith.negf %315 : vector<8x128xf32>
    %317 = math.exp %316 : vector<8x128xf32>
    %cst_81 = arith.constant 1.000000e+00 : f32
    %318 = vector.broadcast %cst_81 : f32 to vector<8x128xf32>
    %319 = arith.addf %318, %317 : vector<8x128xf32>
    %320 = arith.divf %318, %319 : vector<8x128xf32>
    %321 = vector.extract_strided_slice %308 {offsets = [0, 256], sizes = [8, 128], strides = [1, 1]} : vector<8x512xf32> to vector<8x128xf32>
    %322 = math.tanh %321 : vector<8x128xf32>
    %323 = vector.extract_strided_slice %308 {offsets = [0, 384], sizes = [8, 128], strides = [1, 1]} : vector<8x512xf32> to vector<8x128xf32>
    %324 = arith.negf %323 : vector<8x128xf32>
    %325 = math.exp %324 : vector<8x128xf32>
    %cst_82 = arith.constant 1.000000e+00 : f32
    %326 = vector.broadcast %cst_82 : f32 to vector<8x128xf32>
    %327 = arith.addf %326, %325 : vector<8x128xf32>
    %328 = arith.divf %326, %327 : vector<8x128xf32>
    %329 = arith.mulf %320, %266 : vector<8x128xf32>
    %330 = arith.mulf %314, %322 : vector<8x128xf32>
    %331 = arith.addf %329, %330 : vector<8x128xf32>
    %332 = math.tanh %331 : vector<8x128xf32>
    %333 = arith.mulf %328, %332 : vector<8x128xf32>
    %334 = arith.index_cast %272 : i32 to index
    %c0_83 = arith.constant 0 : index
    %335 = vector.load %arg13[%334, %c0_83] : memref<64x128xf32, #tpu.memory_space<vmem>>, vector<8x128xf32>
    tpu.vector_store %arg13[%334, %c0_83], %333 {strides = array<i32>} : memref<64x128xf32, #tpu.memory_space<vmem>>, vector<8x128xf32>,
    %c5_i32 = arith.constant 5 : i32
    %c8_i32_84 = arith.constant 8 : i32
    %336 = arith.muli %c5_i32, %c8_i32_84 : i32
    %337 = tpu.assume_multiple %336, 8 : i32
    %338 = arith.index_cast %337 : i32 to index
    %c0_85 = arith.constant 0 : index
    %339 = vector.load %arg12[%338, %c0_85] : memref<64x512xf32, #tpu.memory_space<vmem>>, vector<8x512xf32>
    %340 = arith.truncf %303 : vector<8x128xf32> to vector<8x128xbf16>
    %c0_86 = arith.constant 0 : index
    %c0_87 = arith.constant 0 : index
    %341 = vector.load %arg2[%c0_86, %c0_87] : memref<128x512xbf16, #tpu.memory_space<vmem>>, vector<128x512xbf16>
    %cst_88 = arith.constant dense<0.000000e+00> : vector<8x512xf32>
    %342 = tpu.matmul %340, %341, %cst_88 {dimension_numbers = #tpu.dot_dimension_numbers<[1], [0], [0], [1], [0, 0, 1, 1], [], []>} : vector<8x128xbf16>, vector<128x512xbf16>, vector<8x512xf32> -> vector<8x512xf32>
    %343 = arith.addf %339, %342 : vector<8x512xf32>
    %344 = vector.extract_strided_slice %343 {offsets = [0, 0], sizes = [8, 128], strides = [1, 1]} : vector<8x512xf32> to vector<8x128xf32>
    %345 = arith.negf %344 : vector<8x128xf32>
    %346 = math.exp %345 : vector<8x128xf32>
    %cst_89 = arith.constant 1.000000e+00 : f32
    %347 = vector.broadcast %cst_89 : f32 to vector<8x128xf32>
    %348 = arith.addf %347, %346 : vector<8x128xf32>
    %349 = arith.divf %347, %348 : vector<8x128xf32>
    %350 = vector.extract_strided_slice %343 {offsets = [0, 128], sizes = [8, 128], strides = [1, 1]} : vector<8x512xf32> to vector<8x128xf32>
    %351 = arith.negf %350 : vector<8x128xf32>
    %352 = math.exp %351 : vector<8x128xf32>
    %cst_90 = arith.constant 1.000000e+00 : f32
    %353 = vector.broadcast %cst_90 : f32 to vector<8x128xf32>
    %354 = arith.addf %353, %352 : vector<8x128xf32>
    %355 = arith.divf %353, %354 : vector<8x128xf32>
    %356 = vector.extract_strided_slice %343 {offsets = [0, 256], sizes = [8, 128], strides = [1, 1]} : vector<8x512xf32> to vector<8x128xf32>
    %357 = math.tanh %356 : vector<8x128xf32>
    %358 = vector.extract_strided_slice %343 {offsets = [0, 384], sizes = [8, 128], strides = [1, 1]} : vector<8x512xf32> to vector<8x128xf32>
    %359 = arith.negf %358 : vector<8x128xf32>
    %360 = math.exp %359 : vector<8x128xf32>
    %cst_91 = arith.constant 1.000000e+00 : f32
    %361 = vector.broadcast %cst_91 : f32 to vector<8x128xf32>
    %362 = arith.addf %361, %360 : vector<8x128xf32>
    %363 = arith.divf %361, %362 : vector<8x128xf32>
    %364 = arith.mulf %355, %301 : vector<8x128xf32>
    %365 = arith.mulf %349, %357 : vector<8x128xf32>
    %366 = arith.addf %364, %365 : vector<8x128xf32>
    %367 = math.tanh %366 : vector<8x128xf32>
    %368 = arith.mulf %363, %367 : vector<8x128xf32>
    %369 = tpu.concatenate %368, %333 in 1 : vector<8x128xf32>, vector<8x128xf32> -> vector<8x256xf32>
    %370 = arith.truncf %369 : vector<8x256xf32> to vector<8x256xbf16>
    %c0_92 = arith.constant 0 : index
    %c0_93 = arith.constant 0 : index
    %371 = vector.load %arg4[%c0_92, %c0_93] : memref<256x512xbf16, #tpu.memory_space<vmem>>, vector<256x512xbf16>
    %cst_94 = arith.constant dense<0.000000e+00> : vector<8x512xf32>
    %372 = tpu.matmul %370, %371, %cst_94 {dimension_numbers = #tpu.dot_dimension_numbers<[1], [0], [0], [1], [0, 0, 1, 1], [], []>} : vector<8x256xbf16>, vector<256x512xbf16>, vector<8x512xf32> -> vector<8x512xf32>
    %373 = arith.addf %372, %9 : vector<8x512xf32>
    %374 = vector.extract_strided_slice %373 {offsets = [0, 0], sizes = [8, 128], strides = [1, 1]} : vector<8x512xf32> to vector<8x128xf32>
    %375 = arith.negf %374 : vector<8x128xf32>
    %376 = math.exp %375 : vector<8x128xf32>
    %cst_95 = arith.constant 1.000000e+00 : f32
    %377 = vector.broadcast %cst_95 : f32 to vector<8x128xf32>
    %378 = arith.addf %377, %376 : vector<8x128xf32>
    %379 = arith.divf %377, %378 : vector<8x128xf32>
    %380 = vector.extract_strided_slice %373 {offsets = [0, 128], sizes = [8, 128], strides = [1, 1]} : vector<8x512xf32> to vector<8x128xf32>
    %381 = arith.negf %380 : vector<8x128xf32>
    %382 = math.exp %381 : vector<8x128xf32>
    %cst_96 = arith.constant 1.000000e+00 : f32
    %383 = vector.broadcast %cst_96 : f32 to vector<8x128xf32>
    %384 = arith.addf %383, %382 : vector<8x128xf32>
    %385 = arith.divf %383, %384 : vector<8x128xf32>
    %386 = vector.extract_strided_slice %373 {offsets = [0, 256], sizes = [8, 128], strides = [1, 1]} : vector<8x512xf32> to vector<8x128xf32>
    %387 = math.tanh %386 : vector<8x128xf32>
    %388 = vector.extract_strided_slice %373 {offsets = [0, 384], sizes = [8, 128], strides = [1, 1]} : vector<8x512xf32> to vector<8x128xf32>
    %389 = arith.negf %388 : vector<8x128xf32>
    %390 = math.exp %389 : vector<8x128xf32>
    %cst_97 = arith.constant 1.000000e+00 : f32
    %391 = vector.broadcast %cst_97 : f32 to vector<8x128xf32>
    %392 = arith.addf %391, %390 : vector<8x128xf32>
    %393 = arith.divf %391, %392 : vector<8x128xf32>
    %394 = arith.mulf %385, %331 : vector<8x128xf32>
    %395 = arith.mulf %379, %387 : vector<8x128xf32>
    %396 = arith.addf %394, %395 : vector<8x128xf32>
    %397 = math.tanh %396 : vector<8x128xf32>
    %398 = arith.mulf %393, %397 : vector<8x128xf32>
    %399 = arith.index_cast %337 : i32 to index
    %c0_98 = arith.constant 0 : index
    %400 = vector.load %arg13[%399, %c0_98] : memref<64x128xf32, #tpu.memory_space<vmem>>, vector<8x128xf32>
    tpu.vector_store %arg13[%399, %c0_98], %398 {strides = array<i32>} : memref<64x128xf32, #tpu.memory_space<vmem>>, vector<8x128xf32>,
    %c6_i32 = arith.constant 6 : i32
    %c8_i32_99 = arith.constant 8 : i32
    %401 = arith.muli %c6_i32, %c8_i32_99 : i32
    %402 = tpu.assume_multiple %401, 8 : i32
    %403 = arith.index_cast %402 : i32 to index
    %c0_100 = arith.constant 0 : index
    %404 = vector.load %arg12[%403, %c0_100] : memref<64x512xf32, #tpu.memory_space<vmem>>, vector<8x512xf32>
    %405 = arith.truncf %368 : vector<8x128xf32> to vector<8x128xbf16>
    %c0_101 = arith.constant 0 : index
    %c0_102 = arith.constant 0 : index
    %406 = vector.load %arg2[%c0_101, %c0_102] : memref<128x512xbf16, #tpu.memory_space<vmem>>, vector<128x512xbf16>
    %cst_103 = arith.constant dense<0.000000e+00> : vector<8x512xf32>
    %407 = tpu.matmul %405, %406, %cst_103 {dimension_numbers = #tpu.dot_dimension_numbers<[1], [0], [0], [1], [0, 0, 1, 1], [], []>} : vector<8x128xbf16>, vector<128x512xbf16>, vector<8x512xf32> -> vector<8x512xf32>
    %408 = arith.addf %404, %407 : vector<8x512xf32>
    %409 = vector.extract_strided_slice %408 {offsets = [0, 0], sizes = [8, 128], strides = [1, 1]} : vector<8x512xf32> to vector<8x128xf32>
    %410 = arith.negf %409 : vector<8x128xf32>
    %411 = math.exp %410 : vector<8x128xf32>
    %cst_104 = arith.constant 1.000000e+00 : f32
    %412 = vector.broadcast %cst_104 : f32 to vector<8x128xf32>
    %413 = arith.addf %412, %411 : vector<8x128xf32>
    %414 = arith.divf %412, %413 : vector<8x128xf32>
    %415 = vector.extract_strided_slice %408 {offsets = [0, 128], sizes = [8, 128], strides = [1, 1]} : vector<8x512xf32> to vector<8x128xf32>
    %416 = arith.negf %415 : vector<8x128xf32>
    %417 = math.exp %416 : vector<8x128xf32>
    %cst_105 = arith.constant 1.000000e+00 : f32
    %418 = vector.broadcast %cst_105 : f32 to vector<8x128xf32>
    %419 = arith.addf %418, %417 : vector<8x128xf32>
    %420 = arith.divf %418, %419 : vector<8x128xf32>
    %421 = vector.extract_strided_slice %408 {offsets = [0, 256], sizes = [8, 128], strides = [1, 1]} : vector<8x512xf32> to vector<8x128xf32>
    %422 = math.tanh %421 : vector<8x128xf32>
    %423 = vector.extract_strided_slice %408 {offsets = [0, 384], sizes = [8, 128], strides = [1, 1]} : vector<8x512xf32> to vector<8x128xf32>
    %424 = arith.negf %423 : vector<8x128xf32>
    %425 = math.exp %424 : vector<8x128xf32>
    %cst_106 = arith.constant 1.000000e+00 : f32
    %426 = vector.broadcast %cst_106 : f32 to vector<8x128xf32>
    %427 = arith.addf %426, %425 : vector<8x128xf32>
    %428 = arith.divf %426, %427 : vector<8x128xf32>
    %429 = arith.mulf %420, %366 : vector<8x128xf32>
    %430 = arith.mulf %414, %422 : vector<8x128xf32>
    %431 = arith.addf %429, %430 : vector<8x128xf32>
    %432 = math.tanh %431 : vector<8x128xf32>
    %433 = arith.mulf %428, %432 : vector<8x128xf32>
    %434 = tpu.concatenate %433, %398 in 1 : vector<8x128xf32>, vector<8x128xf32> -> vector<8x256xf32>
    %435 = arith.truncf %434 : vector<8x256xf32> to vector<8x256xbf16>
    %c0_107 = arith.constant 0 : index
    %c0_108 = arith.constant 0 : index
    %436 = vector.load %arg4[%c0_107, %c0_108] : memref<256x512xbf16, #tpu.memory_space<vmem>>, vector<256x512xbf16>
    %cst_109 = arith.constant dense<0.000000e+00> : vector<8x512xf32>
    %437 = tpu.matmul %435, %436, %cst_109 {dimension_numbers = #tpu.dot_dimension_numbers<[1], [0], [0], [1], [0, 0, 1, 1], [], []>} : vector<8x256xbf16>, vector<256x512xbf16>, vector<8x512xf32> -> vector<8x512xf32>
    %438 = arith.addf %437, %9 : vector<8x512xf32>
    %439 = vector.extract_strided_slice %438 {offsets = [0, 0], sizes = [8, 128], strides = [1, 1]} : vector<8x512xf32> to vector<8x128xf32>
    %440 = arith.negf %439 : vector<8x128xf32>
    %441 = math.exp %440 : vector<8x128xf32>
    %cst_110 = arith.constant 1.000000e+00 : f32
    %442 = vector.broadcast %cst_110 : f32 to vector<8x128xf32>
    %443 = arith.addf %442, %441 : vector<8x128xf32>
    %444 = arith.divf %442, %443 : vector<8x128xf32>
    %445 = vector.extract_strided_slice %438 {offsets = [0, 128], sizes = [8, 128], strides = [1, 1]} : vector<8x512xf32> to vector<8x128xf32>
    %446 = arith.negf %445 : vector<8x128xf32>
    %447 = math.exp %446 : vector<8x128xf32>
    %cst_111 = arith.constant 1.000000e+00 : f32
    %448 = vector.broadcast %cst_111 : f32 to vector<8x128xf32>
    %449 = arith.addf %448, %447 : vector<8x128xf32>
    %450 = arith.divf %448, %449 : vector<8x128xf32>
    %451 = vector.extract_strided_slice %438 {offsets = [0, 256], sizes = [8, 128], strides = [1, 1]} : vector<8x512xf32> to vector<8x128xf32>
    %452 = math.tanh %451 : vector<8x128xf32>
    %453 = vector.extract_strided_slice %438 {offsets = [0, 384], sizes = [8, 128], strides = [1, 1]} : vector<8x512xf32> to vector<8x128xf32>
    %454 = arith.negf %453 : vector<8x128xf32>
    %455 = math.exp %454 : vector<8x128xf32>
    %cst_112 = arith.constant 1.000000e+00 : f32
    %456 = vector.broadcast %cst_112 : f32 to vector<8x128xf32>
    %457 = arith.addf %456, %455 : vector<8x128xf32>
    %458 = arith.divf %456, %457 : vector<8x128xf32>
    %459 = arith.mulf %450, %396 : vector<8x128xf32>
    %460 = arith.mulf %444, %452 : vector<8x128xf32>
    %461 = arith.addf %459, %460 : vector<8x128xf32>
    %462 = math.tanh %461 : vector<8x128xf32>
    %463 = arith.mulf %458, %462 : vector<8x128xf32>
    %464 = arith.index_cast %402 : i32 to index
    %c0_113 = arith.constant 0 : index
    %465 = vector.load %arg13[%464, %c0_113] : memref<64x128xf32, #tpu.memory_space<vmem>>, vector<8x128xf32>
    tpu.vector_store %arg13[%464, %c0_113], %463 {strides = array<i32>} : memref<64x128xf32, #tpu.memory_space<vmem>>, vector<8x128xf32>,
    %c7_i32 = arith.constant 7 : i32
    %c8_i32_114 = arith.constant 8 : i32
    %466 = arith.muli %c7_i32, %c8_i32_114 : i32
    %467 = tpu.assume_multiple %466, 8 : i32
    %468 = arith.index_cast %467 : i32 to index
    %c0_115 = arith.constant 0 : index
    %469 = vector.load %arg12[%468, %c0_115] : memref<64x512xf32, #tpu.memory_space<vmem>>, vector<8x512xf32>
    %470 = arith.truncf %433 : vector<8x128xf32> to vector<8x128xbf16>
    %c0_116 = arith.constant 0 : index
    %c0_117 = arith.constant 0 : index
    %471 = vector.load %arg2[%c0_116, %c0_117] : memref<128x512xbf16, #tpu.memory_space<vmem>>, vector<128x512xbf16>
    %cst_118 = arith.constant dense<0.000000e+00> : vector<8x512xf32>
    %472 = tpu.matmul %470, %471, %cst_118 {dimension_numbers = #tpu.dot_dimension_numbers<[1], [0], [0], [1], [0, 0, 1, 1], [], []>} : vector<8x128xbf16>, vector<128x512xbf16>, vector<8x512xf32> -> vector<8x512xf32>
    %473 = arith.addf %469, %472 : vector<8x512xf32>
    %474 = vector.extract_strided_slice %473 {offsets = [0, 0], sizes = [8, 128], strides = [1, 1]} : vector<8x512xf32> to vector<8x128xf32>
    %475 = arith.negf %474 : vector<8x128xf32>
    %476 = math.exp %475 : vector<8x128xf32>
    %cst_119 = arith.constant 1.000000e+00 : f32
    %477 = vector.broadcast %cst_119 : f32 to vector<8x128xf32>
    %478 = arith.addf %477, %476 : vector<8x128xf32>
    %479 = arith.divf %477, %478 : vector<8x128xf32>
    %480 = vector.extract_strided_slice %473 {offsets = [0, 128], sizes = [8, 128], strides = [1, 1]} : vector<8x512xf32> to vector<8x128xf32>
    %481 = arith.negf %480 : vector<8x128xf32>
    %482 = math.exp %481 : vector<8x128xf32>
    %cst_120 = arith.constant 1.000000e+00 : f32
    %483 = vector.broadcast %cst_120 : f32 to vector<8x128xf32>
    %484 = arith.addf %483, %482 : vector<8x128xf32>
    %485 = arith.divf %483, %484 : vector<8x128xf32>
    %486 = vector.extract_strided_slice %473 {offsets = [0, 256], sizes = [8, 128], strides = [1, 1]} : vector<8x512xf32> to vector<8x128xf32>
    %487 = math.tanh %486 : vector<8x128xf32>
    %488 = vector.extract_strided_slice %473 {offsets = [0, 384], sizes = [8, 128], strides = [1, 1]} : vector<8x512xf32> to vector<8x128xf32>
    %489 = arith.negf %488 : vector<8x128xf32>
    %490 = math.exp %489 : vector<8x128xf32>
    %cst_121 = arith.constant 1.000000e+00 : f32
    %491 = vector.broadcast %cst_121 : f32 to vector<8x128xf32>
    %492 = arith.addf %491, %490 : vector<8x128xf32>
    %493 = arith.divf %491, %492 : vector<8x128xf32>
    %494 = arith.mulf %485, %431 : vector<8x128xf32>
    %495 = arith.mulf %479, %487 : vector<8x128xf32>
    %496 = arith.addf %494, %495 : vector<8x128xf32>
    %497 = math.tanh %496 : vector<8x128xf32>
    %498 = arith.mulf %493, %497 : vector<8x128xf32>
    %499 = tpu.concatenate %498, %463 in 1 : vector<8x128xf32>, vector<8x128xf32> -> vector<8x256xf32>
    %500 = arith.truncf %499 : vector<8x256xf32> to vector<8x256xbf16>
    %c0_122 = arith.constant 0 : index
    %c0_123 = arith.constant 0 : index
    %501 = vector.load %arg4[%c0_122, %c0_123] : memref<256x512xbf16, #tpu.memory_space<vmem>>, vector<256x512xbf16>
    %cst_124 = arith.constant dense<0.000000e+00> : vector<8x512xf32>
    %502 = tpu.matmul %500, %501, %cst_124 {dimension_numbers = #tpu.dot_dimension_numbers<[1], [0], [0], [1], [0, 0, 1, 1], [], []>} : vector<8x256xbf16>, vector<256x512xbf16>, vector<8x512xf32> -> vector<8x512xf32>
    %503 = arith.addf %502, %9 : vector<8x512xf32>
    %504 = vector.extract_strided_slice %503 {offsets = [0, 0], sizes = [8, 128], strides = [1, 1]} : vector<8x512xf32> to vector<8x128xf32>
    %505 = arith.negf %504 : vector<8x128xf32>
    %506 = math.exp %505 : vector<8x128xf32>
    %cst_125 = arith.constant 1.000000e+00 : f32
    %507 = vector.broadcast %cst_125 : f32 to vector<8x128xf32>
    %508 = arith.addf %507, %506 : vector<8x128xf32>
    %509 = arith.divf %507, %508 : vector<8x128xf32>
    %510 = vector.extract_strided_slice %503 {offsets = [0, 128], sizes = [8, 128], strides = [1, 1]} : vector<8x512xf32> to vector<8x128xf32>
    %511 = arith.negf %510 : vector<8x128xf32>
    %512 = math.exp %511 : vector<8x128xf32>
    %cst_126 = arith.constant 1.000000e+00 : f32
    %513 = vector.broadcast %cst_126 : f32 to vector<8x128xf32>
    %514 = arith.addf %513, %512 : vector<8x128xf32>
    %515 = arith.divf %513, %514 : vector<8x128xf32>
    %516 = vector.extract_strided_slice %503 {offsets = [0, 256], sizes = [8, 128], strides = [1, 1]} : vector<8x512xf32> to vector<8x128xf32>
    %517 = math.tanh %516 : vector<8x128xf32>
    %518 = vector.extract_strided_slice %503 {offsets = [0, 384], sizes = [8, 128], strides = [1, 1]} : vector<8x512xf32> to vector<8x128xf32>
    %519 = arith.negf %518 : vector<8x128xf32>
    %520 = math.exp %519 : vector<8x128xf32>
    %cst_127 = arith.constant 1.000000e+00 : f32
    %521 = vector.broadcast %cst_127 : f32 to vector<8x128xf32>
    %522 = arith.addf %521, %520 : vector<8x128xf32>
    %523 = arith.divf %521, %522 : vector<8x128xf32>
    %524 = arith.mulf %515, %461 : vector<8x128xf32>
    %525 = arith.mulf %509, %517 : vector<8x128xf32>
    %526 = arith.addf %524, %525 : vector<8x128xf32>
    %527 = math.tanh %526 : vector<8x128xf32>
    %528 = arith.mulf %523, %527 : vector<8x128xf32>
    %529 = arith.index_cast %467 : i32 to index
    %c0_128 = arith.constant 0 : index
    %530 = vector.load %arg13[%529, %c0_128] : memref<64x128xf32, #tpu.memory_space<vmem>>, vector<8x128xf32>
    tpu.vector_store %arg13[%529, %c0_128], %528 {strides = array<i32>} : memref<64x128xf32, #tpu.memory_space<vmem>>, vector<8x128xf32>,
    %c8_i32_129 = arith.constant 8 : i32
    %c0_130 = arith.constant 0 : index
    %c0_131 = arith.constant 0 : index
    %531 = vector.load %arg13[%c0_130, %c0_131] : memref<64x128xf32, #tpu.memory_space<vmem>>, vector<64x128xf32>
    %532 = arith.truncf %531 : vector<64x128xf32> to vector<64x128xbf16>
    %c0_132 = arith.constant 0 : index
    %c0_133 = arith.constant 0 : index
    %533 = vector.load %arg6[%c0_132, %c0_133] : memref<128x128xbf16, #tpu.memory_space<vmem>>, vector<128x128xbf16>
    %cst_134 = arith.constant dense<0.000000e+00> : vector<64x128xf32>
    %534 = tpu.matmul %532, %533, %cst_134 {dimension_numbers = #tpu.dot_dimension_numbers<[1], [0], [0], [1], [0, 0, 1, 1], [], []>} : vector<64x128xbf16>, vector<128x128xbf16>, vector<64x128xf32> -> vector<64x128xf32>
    %c0_135 = arith.constant 0 : index
    %c0_136 = arith.constant 0 : index
    %535 = vector.load %arg7[%c0_135, %c0_136] : memref<1x128xf32, #tpu.memory_space<vmem>>, vector<1x128xf32>
    %536 = vector.broadcast %535 : vector<1x128xf32> to vector<64x128xf32>
    %537 = arith.addf %534, %536 : vector<64x128xf32>
    %538 = vector.shape_cast %537 : vector<64x128xf32> to vector<8x8x128xf32>
    %539 = vector.shape_cast %528 : vector<8x128xf32> to vector<1x8x128xf32>
    %540 = vector.broadcast %539 : vector<1x8x128xf32> to vector<8x8x128xf32>
    %541 = arith.addf %538, %540 : vector<8x8x128xf32>
    %542 = math.tanh %541 : vector<8x8x128xf32>
    %c0_137 = arith.constant 0 : index
    %c0_138 = arith.constant 0 : index
    %543 = vector.load %arg8[%c0_137, %c0_138] : memref<1x128xf32, #tpu.memory_space<vmem>>, vector<1x128xf32>
    %544 = vector.shape_cast %543 : vector<1x128xf32> to vector<1x1x128xf32>
    %545 = vector.broadcast %544 : vector<1x1x128xf32> to vector<8x8x128xf32>
    %546 = arith.mulf %542, %545 : vector<8x8x128xf32>
    %cst_139 = arith.constant dense<0.000000e+00> : vector<8x8xf32>
    %547 = vector.multi_reduction <add>, %546, %cst_139 [2] : vector<8x8x128xf32> to vector<8x8xf32>
    %548 = vector.shape_cast %547 : vector<8x8xf32> to vector<8x8x1xf32>
    %cst_140 = arith.constant dense<0xFF800000> : vector<8x1xf32>
    %549 = vector.multi_reduction <maximumf>, %548, %cst_140 [0] : vector<8x8x1xf32> to vector<8x1xf32>
    %550 = vector.shape_cast %549 : vector<8x1xf32> to vector<1x8x1xf32>
    %551 = vector.broadcast %550 : vector<1x8x1xf32> to vector<8x8x1xf32>
    %552 = arith.subf %548, %551 : vector<8x8x1xf32>
    %553 = math.exp %552 : vector<8x8x1xf32>
    %cst_141 = arith.constant dense<0.000000e+00> : vector<8x1xf32>
    %554 = vector.multi_reduction <add>, %553, %cst_141 [0] : vector<8x8x1xf32> to vector<8x1xf32>
    %555 = vector.shape_cast %554 : vector<8x1xf32> to vector<1x8x1xf32>
    %556 = tpu.reciprocal %555 {approx = true} : vector<1x8x1xf32> -> vector<1x8x1xf32>
    %557 = vector.broadcast %556 : vector<1x8x1xf32> to vector<8x8x1xf32>
    %558 = arith.mulf %553, %557 : vector<8x8x1xf32>
    %559 = vector.shape_cast %531 : vector<64x128xf32> to vector<8x8x128xf32>
    %560 = vector.broadcast %558 : vector<8x8x1xf32> to vector<8x8x128xf32>
    %561 = arith.mulf %560, %559 : vector<8x8x128xf32>
    %cst_142 = arith.constant dense<0.000000e+00> : vector<8x128xf32>
    %562 = vector.multi_reduction <add>, %561, %cst_142 [0] : vector<8x8x128xf32> to vector<8x128xf32>
    %563 = arith.truncf %562 : vector<8x128xf32> to vector<8x128xbf16>
    %c0_143 = arith.constant 0 : index
    %c0_144 = arith.constant 0 : index
    %564 = vector.load %arg9[%c0_143, %c0_144] : memref<128x128xbf16, #tpu.memory_space<vmem>>, vector<128x128xbf16>
    %cst_145 = arith.constant dense<0.000000e+00> : vector<8x128xf32>
    %565 = tpu.matmul %563, %564, %cst_145 {dimension_numbers = #tpu.dot_dimension_numbers<[1], [0], [0], [1], [0, 0, 1, 1], [], []>} : vector<8x128xbf16>, vector<128x128xbf16>, vector<8x128xf32> -> vector<8x128xf32>
    %c0_146 = arith.constant 0 : index
    %c0_147 = arith.constant 0 : index
    %566 = vector.load %arg10[%c0_146, %c0_147] : memref<1x128xf32, #tpu.memory_space<vmem>>, vector<1x128xf32>
    %567 = vector.broadcast %566 : vector<1x128xf32> to vector<8x128xf32>
    %568 = arith.addf %565, %567 : vector<8x128xf32>
    %c0_148 = arith.constant 0 : index
    %c0_149 = arith.constant 0 : index
    %569 = vector.load %arg11[%c0_148, %c0_149] : memref<8x128xf32, #tpu.memory_space<vmem>>, vector<8x128xf32>
    tpu.vector_store %arg11[%c0_148, %c0_149], %568 {strides = array<i32>} : memref<8x128xf32, #tpu.memory_space<vmem>>, vector<8x128xf32>,
    return
  }
}

</mosaic_0001>

<llo_original>
// kernel: tpu_custom_call.1
$region0: #{tpu_custom_call.1}
  #allocation0 [shape = 'u32[]', space=smem, size = 0x4, offset = 0x4, fixed_abs, tag = 'smem constant byte address 0x4 - core index']
  #allocation1 [shape = 'u32[144,128]{1,0:T(1,128)}', space=vmem, size = 0x12000, scoped, tag = 'internal scratch']
  #allocation2 [shape = 'f32[64,512]{1,0:T(8,128)}', space=vmem, size = 0x20000, scoped, tag = 'scratch operand']
  #allocation3 [shape = 'f32[64,128]{1,0:T(8,128)}', space=vmem, size = 0x8000, scoped, tag = 'scratch operand']
  %s0 = inlined_call_operand.hbm [shape: bf16[64,128], index: 0, kind: input, shape index: {}]
  %s1 = inlined_call_operand.hbm [shape: bf16[128,512], index: 1, kind: input, shape index: {}]
  %s2 = inlined_call_operand.hbm [shape: bf16[128,512], index: 2, kind: input, shape index: {}]
  %s3 = inlined_call_operand.vmem [shape: f32[1,512], index: 3, kind: input, shape index: {}]
  %s4 = inlined_call_operand.hbm [shape: bf16[256,512], index: 4, kind: input, shape index: {}]
  %s5 = inlined_call_operand.vmem [shape: f32[1,512], index: 5, kind: input, shape index: {}]
  %s6 = inlined_call_operand.hbm [shape: bf16[128,128], index: 6, kind: input, shape index: {}]
  %s7 = inlined_call_operand.vmem [shape: f32[1,128], index: 7, kind: input, shape index: {}]
  %s8 = inlined_call_operand.vmem [shape: f32[1,128], index: 8, kind: input, shape index: {}]
  %s9 = inlined_call_operand.hbm [shape: bf16[128,128], index: 9, kind: input, shape index: {}]
  %s10 = inlined_call_operand.vmem [shape: f32[1,128], index: 10, kind: input, shape index: {}]
  %s11 = inlined_call_operand.hbm [shape: f32[8,128], index: 11, kind: output, shape index: {}]
  %s12 = sld [smem:[#allocation0]]
  $region78: #{tpu_custom_call.1} parent=0
    _
  %s14 = ssub.s32 1, %s12
  %s15 = scalar_select 0, %s14, %s12
  $region1: #{tpu_custom_call.1} parent=0
    #allocation4 [shape = 'u8[16384]{0}', space=vmem, size = 0x4000, scoped, tag = 'input window, operand 0, single buffered']
    #allocation5 [shape = 's32[1]{0}', space=sflag, size = 0x4, scoped, tag = 'scoped memory for tpu_custom_call.1']
    #allocation6 [shape = 's32[1]{0}', space=sflag, size = 0x4, scoped, tag = 'scoped memory for tpu_custom_call.1']
    #allocation7 [shape = 'u8[131072]{0}', space=vmem, size = 0x20000, scoped, tag = 'input window, operand 1, single buffered']
    #allocation8 [shape = 's32[1]{0}', space=sflag, size = 0x4, scoped, tag = 'scoped memory for tpu_custom_call.1']
    #allocation9 [shape = 'u8[131072]{0}', space=vmem, size = 0x20000, scoped, tag = 'input window, operand 2, single buffered']
    #allocation10 [shape = 'u8[262144]{0}', space=vmem, size = 0x40000, scoped, tag = 'input window, operand 4, single buffered']
    #allocation11 [shape = 's32[1]{0}', space=sflag, size = 0x4, scoped, tag = 'scoped memory for tpu_custom_call.1']
    #allocation12 [shape = 'u8[32768]{0}', space=vmem, size = 0x8000, scoped, tag = 'input window, operand 6, single buffered']
    #allocation13 [shape = 'u8[32768]{0}', space=vmem, size = 0x8000, scoped, tag = 'input window, operand 9, single buffered']
    #allocation14 [shape = 's32[1]{0}', space=sflag, size = 0x4, scoped, tag = 'scoped memory for tpu_custom_call.1']
    #allocation15 [shape = 'u8[4096]{0}', space=vmem, size = 0x1000, scoped, tag = 'output window, operand 0, single buffered']
    %16 = vsyncpa [#allocation5], 0
    %17 = vsyncpa [#allocation8], 0
    %18 = vsyncpa [#allocation11], 0
    %19 = vsyncpa [#allocation14], 0
    %20 = vsyncpa [#allocation6], 0
    // Predicated region
    $region2: #{tpu_custom_call.1} parent=1 // pred_check
      _
    $region3: #{tpu_custom_call.1} parent=1 // pred_check_branch
      %22 = sbr.rel (0) target = $region5
    $region4: #{tpu_custom_call.1} parent=1 // pred_region
      %s24 = ssub.s32 512, 512
      %25 = vsyncadd [#allocation5], %s24
      %s26 = sshll.u32 [#allocation4], 4
      %s27 = int_to_ptr.vmem [resolvable:$true] %s26
      %32 = dma.hbm_to_vmem [thread:$0]  %s0, 512, %s27, [#allocation5], 64, 64, 4
    $region5: #{tpu_custom_call.1} parent=1 // pred_fallthru
      _
    // Predicated region
    $region6: #{tpu_custom_call.1} parent=1 // pred_check
      _
    $region7: #{tpu_custom_call.1} parent=1 // pred_check_branch
      %34 = sbr.rel (0) target = $region9
    $region8: #{tpu_custom_call.1} parent=1 // pred_region
      %s36 = ssub.s32 4096, 4096
      %37 = vsyncadd [#allocation8], %s36
      %s38 = sshll.u32 [#allocation7], 4
      %s39 = int_to_ptr.vmem [resolvable:$true] %s38
      %44 = dma.hbm_to_vmem [thread:$0]  %s1, 4096, %s39, [#allocation8], 256, 256, 16
    $region9: #{tpu_custom_call.1} parent=1 // pred_fallthru
      _
    // Predicated region
    $region10: #{tpu_custom_call.1} parent=1 // pred_check
      _
    $region11: #{tpu_custom_call.1} parent=1 // pred_check_branch
      %46 = sbr.rel (0) target = $region13
    $region12: #{tpu_custom_call.1} parent=1 // pred_region
      %s48 = ssub.s32 4096, 4096
      %49 = vsyncadd [#allocation8], %s48
      %s50 = sshll.u32 [#allocation9], 4
      %s51 = int_to_ptr.vmem [resolvable:$true] %s50
      %56 = dma.hbm_to_vmem [thread:$0]  %s2, 4096, %s51, [#allocation8], 256, 256, 16
    $region13: #{tpu_custom_call.1} parent=1 // pred_fallthru
      _
    // Predicated region
    $region14: #{tpu_custom_call.1} parent=1 // pred_check
      _
    $region15: #{tpu_custom_call.1} parent=1 // pred_check_branch
      %58 = sbr.rel (0) target = $region17
    $region16: #{tpu_custom_call.1} parent=1 // pred_region
      _
    $region17: #{tpu_custom_call.1} parent=1 // pred_fallthru
      _
    // Predicated region
    $region18: #{tpu_custom_call.1} parent=1 // pred_check
      _
    $region19: #{tpu_custom_call.1} parent=1 // pred_check_branch
      %60 = sbr.rel (0) target = $region21
    $region20: #{tpu_custom_call.1} parent=1 // pred_region
      %s62 = ssub.s32 8192, 8192
      %63 = vsyncadd [#allocation11], %s62
      %s64 = sshll.u32 [#allocation10], 4
      %s65 = int_to_ptr.vmem [resolvable:$true] %s64
      %70 = dma.hbm_to_vmem [thread:$0]  %s4, 8192, %s65, [#allocation11], 256, 256, 16
    $region21: #{tpu_custom_call.1} parent=1 // pred_fallthru
      _
    // Predicated region
    $region22: #{tpu_custom_call.1} parent=1 // pred_check
      _
    $region23: #{tpu_custom_call.1} parent=1 // pred_check_branch
      %72 = sbr.rel (0) target = $region25
    $region24: #{tpu_custom_call.1} parent=1 // pred_region
      _
    $region25: #{tpu_custom_call.1} parent=1 // pred_fallthru
      _
    // Predicated region
    $region26: #{tpu_custom_call.1} parent=1 // pred_check
      _
    $region27: #{tpu_custom_call.1} parent=1 // pred_check_branch
      %74 = sbr.rel (0) target = $region29
    $region28: #{tpu_custom_call.1} parent=1 // pred_region
      %s76 = ssub.s32 1024, 1024
      %77 = vsyncadd [#allocation11], %s76
      %s78 = sshll.u32 [#allocation12], 4
      %s79 = int_to_ptr.vmem [resolvable:$true] %s78
      %84 = dma.hbm_to_vmem [thread:$0]  %s6, 1024, %s79, [#allocation11], 64, 64, 4
    $region29: #{tpu_custom_call.1} parent=1 // pred_fallthru
      _
    // Predicated region
    $region30: #{tpu_custom_call.1} parent=1 // pred_check
      _
    $region31: #{tpu_custom_call.1} parent=1 // pred_check_branch
      %86 = sbr.rel (0) target = $region33
    $region32: #{tpu_custom_call.1} parent=1 // pred_region
      _
    $region33: #{tpu_custom_call.1} parent=1 // pred_fallthru
      _
    // Predicated region
    $region34: #{tpu_custom_call.1} parent=1 // pred_check
      _
    $region35: #{tpu_custom_call.1} parent=1 // pred_check_branch
      %88 = sbr.rel (0) target = $region37
    $region36: #{tpu_custom_call.1} parent=1 // pred_region
      _
    $region37: #{tpu_custom_call.1} parent=1 // pred_fallthru
      _
    // Predicated region
    $region38: #{tpu_custom_call.1} parent=1 // pred_check
      _
    $region39: #{tpu_custom_call.1} parent=1 // pred_check_branch
      %90 = sbr.rel (0) target = $region41
    $region40: #{tpu_custom_call.1} parent=1 // pred_region
      %s92 = ssub.s32 1024, 1024
      %93 = vsyncadd [#allocation14], %s92
      %s94 = sshll.u32 [#allocation13], 4
      %s95 = int_to_ptr.vmem [resolvable:$true] %s94
      %100 = dma.hbm_to_vmem [thread:$0]  %s9, 1024, %s95, [#allocation14], 64, 64, 4
    $region41: #{tpu_custom_call.1} parent=1 // pred_fallthru
      _
    // Predicated region
    $region42: #{tpu_custom_call.1} parent=1 // pred_check
      _
    $region43: #{tpu_custom_call.1} parent=1 // pred_check_branch
      %102 = sbr.rel (0) target = $region45
    $region44: #{tpu_custom_call.1} parent=1 // pred_region
      _
    $region45: #{tpu_custom_call.1} parent=1 // pred_fallthru
      _
    // Predicated region
    $region46: #{tpu_custom_call.1} parent=1 // pred_check
      _
    $region47: #{tpu_custom_call.1} parent=1 // pred_check_branch
      %104 = sbr.rel (0) target = $region49
    $region48: #{tpu_custom_call.1} parent=1 // pred_region
      %105 = dma.done [#allocation5], 512
    $region49: #{tpu_custom_call.1} parent=1 // pred_fallthru
      _
    // Predicated region
    $region50: #{tpu_custom_call.1} parent=1 // pred_check
      _
    $region51: #{tpu_custom_call.1} parent=1 // pred_check_branch
      %107 = sbr.rel (0) target = $region53
    $region52: #{tpu_custom_call.1} parent=1 // pred_region
      %108 = dma.done [#allocation8], 4096
    $region53: #{tpu_custom_call.1} parent=1 // pred_fallthru
      _
    // Predicated region
    $region54: #{tpu_custom_call.1} parent=1 // pred_check
      _
    $region55: #{tpu_custom_call.1} parent=1 // pred_check_branch
      %110 = sbr.rel (0) target = $region57
    $region56: #{tpu_custom_call.1} parent=1 // pred_region
      %111 = dma.done [#allocation8], 4096
    $region57: #{tpu_custom_call.1} parent=1 // pred_fallthru
      _
    // Predicated region
    $region58: #{tpu_custom_call.1} parent=1 // pred_check
      _
    $region59: #{tpu_custom_call.1} parent=1 // pred_check_branch
      %113 = sbr.rel (0) target = $region61
    $region60: #{tpu_custom_call.1} parent=1 // pred_region
      %114 = dma.done [#allocation11], 8192
    $region61: #{tpu_custom_call.1} parent=1 // pred_fallthru
      _
    // Predicated region
    $region62: #{tpu_custom_call.1} parent=1 // pred_check
      _
    $region63: #{tpu_custom_call.1} parent=1 // pred_check_branch
      %116 = sbr.rel (0) target = $region65
    $region64: #{tpu_custom_call.1} parent=1 // pred_region
      %117 = dma.done [#allocation11], 1024
    $region65: #{tpu_custom_call.1} parent=1 // pred_fallthru
      _
    // Predicated region
    $region66: #{tpu_custom_call.1} parent=1 // pred_check
      _
    $region67: #{tpu_custom_call.1} parent=1 // pred_check_branch
      %119 = sbr.rel (0) target = $region69
    $region68: #{tpu_custom_call.1} parent=1 // pred_region
      %120 = dma.done [#allocation14], 1024
    $region69: #{tpu_custom_call.1} parent=1 // pred_fallthru
      _
    %v122 = vld [vmem:[#allocation4] sm:$0xf]
    %v123 = vld [vmem:[#allocation4 + $0x4] sm:$0xf]
    %v124 = vld [vmem:[#allocation4 + $0x8] sm:$0xf]
    %v125 = vld [vmem:[#allocation4 + $0xc] sm:$0xf]
    %v126 = vld [vmem:[#allocation4 + $0x10] sm:$0xf]
    %v127 = vld [vmem:[#allocation4 + $0x14] sm:$0xf]
    %v128 = vld [vmem:[#allocation4 + $0x18] sm:$0xf]
    %v129 = vld [vmem:[#allocation4 + $0x1c] sm:$0xf]
    %v130 = vld [vmem:[#allocation7] sm:$0xff]
    %v131 = vld [vmem:[#allocation7 + $0x8] sm:$0xff]
    %v132 = vld [vmem:[#allocation7 + $0x10] sm:$0xff]
    %v133 = vld [vmem:[#allocation7 + $0x18] sm:$0xff]
    %v134 = vld [vmem:[#allocation7 + $0x20] sm:$0xff]
    %v135 = vld [vmem:[#allocation7 + $0x28] sm:$0xff]
    %v136 = vld [vmem:[#allocation7 + $0x30] sm:$0xff]
    %v137 = vld [vmem:[#allocation7 + $0x38] sm:$0xff]
    %v138 = vld [vmem:[#allocation7 + $0x40] sm:$0xff]
    %v139 = vld [vmem:[#allocation7 + $0x48] sm:$0xff]
    %v140 = vld [vmem:[#allocation7 + $0x50] sm:$0xff]
    %v141 = vld [vmem:[#allocation7 + $0x58] sm:$0xff]
    %v142 = vld [vmem:[#allocation7 + $0x60] sm:$0xff]
    %v143 = vld [vmem:[#allocation7 + $0x68] sm:$0xff]
    %v144 = vld [vmem:[#allocation7 + $0x70] sm:$0xff]
    %v145 = vld [vmem:[#allocation7 + $0x78] sm:$0xff]
    %v146 = vld [vmem:[#allocation7 + $0x80] sm:$0xff]
    %v147 = vld [vmem:[#allocation7 + $0x88] sm:$0xff]
    %v148 = vld [vmem:[#allocation7 + $0x90] sm:$0xff]
    %v149 = vld [vmem:[#allocation7 + $0x98] sm:$0xff]
    %v150 = vld [vmem:[#allocation7 + $0xa0] sm:$0xff]
    %v151 = vld [vmem:[#allocation7 + $0xa8] sm:$0xff]
    %v152 = vld [vmem:[#allocation7 + $0xb0] sm:$0xff]
    %v153 = vld [vmem:[#allocation7 + $0xb8] sm:$0xff]
    %v154 = vld [vmem:[#allocation7 + $0xc0] sm:$0xff]
    %v155 = vld [vmem:[#allocation7 + $0xc8] sm:$0xff]
    %v156 = vld [vmem:[#allocation7 + $0xd0] sm:$0xff]
    %v157 = vld [vmem:[#allocation7 + $0xd8] sm:$0xff]
    %v158 = vld [vmem:[#allocation7 + $0xe0] sm:$0xff]
    %v159 = vld [vmem:[#allocation7 + $0xe8] sm:$0xff]
    %v160 = vld [vmem:[#allocation7 + $0xf0] sm:$0xff]
    %v161 = vld [vmem:[#allocation7 + $0xf8] sm:$0xff]
    %v162 = vld [vmem:[%s3] sm:$0xf]
    %v164 = vlaneseq
    %v165 = vshrl.u32 %v164, 7
    %v166 = vsub.s32 0, %v165
    %v167 = vrot.slane %v162, %v166
    %v168 = vlaneseq
    %v169 = vshrl.u32 %v168, 7
    %v170 = vsub.s32 1, %v169
    %v171 = vrot.slane %v162, %v170
    %v172 = vlaneseq
    %v173 = vshrl.u32 %v172, 7
    %v174 = vsub.s32 2, %v173
    %v175 = vrot.slane %v162, %v174
    %v176 = vlaneseq
    %v177 = vshrl.u32 %v176, 7
    %v178 = vsub.s32 3, %v177
    %v179 = vrot.slane %v162, %v178
    %v192 = vunpack.c.l.b16 %v122
    %v193 = vunpack.c.l.b16 %v123
    %v194 = vunpack.c.l.b16 %v124
    %v195 = vunpack.c.l.b16 %v125
    %v196 = vunpack.c.l.b16 %v126
    %v197 = vunpack.c.l.b16 %v127
    %v198 = vunpack.c.l.b16 %v128
    %v199 = vunpack.c.l.b16 %v129
    %v200 = vpack.c.b16 %v193, %v192
    %v201 = vpack.c.b16 %v195, %v194
    %v202 = vpack.c.b16 %v197, %v196
    %v203 = vpack.c.b16 %v199, %v198
    %v240 = vunpack.c.l.b16 %v130
    %v241 = vunpack.c.h.b16 %v130
    %v242 = vunpack.c.l.b16 %v131
    %v243 = vunpack.c.h.b16 %v131
    %v244 = vunpack.c.l.b16 %v132
    %v245 = vunpack.c.h.b16 %v132
    %v246 = vunpack.c.l.b16 %v133
    %v247 = vunpack.c.h.b16 %v133
    %v248 = vunpack.c.l.b16 %v134
    %v249 = vunpack.c.h.b16 %v134
    %v250 = vunpack.c.l.b16 %v135
    %v251 = vunpack.c.h.b16 %v135
    %v252 = vunpack.c.l.b16 %v136
    %v253 = vunpack.c.h.b16 %v136
    %v254 = vunpack.c.l.b16 %v137
    %v255 = vunpack.c.h.b16 %v137
    %v256 = vunpack.c.l.b16 %v138
    %v257 = vunpack.c.h.b16 %v138
    %v258 = vunpack.c.l.b16 %v139
    %v259 = vunpack.c.h.b16 %v139
    %v260 = vunpack.c.l.b16 %v140
    %v261 = vunpack.c.h.b16 %v140
    %v262 = vunpack.c.l.b16 %v141
    %v263 = vunpack.c.h.b16 %v141
    %v264 = vunpack.c.l.b16 %v142
    %v265 = vunpack.c.h.b16 %v142
    %v266 = vunpack.c.l.b16 %v143
    %v267 = vunpack.c.h.b16 %v143
    %v268 = vunpack.c.l.b16 %v144
    %v269 = vunpack.c.h.b16 %v144
    %v270 = vunpack.c.l.b16 %v145
    %v271 = vunpack.c.h.b16 %v145
    %v272 = vunpack.c.l.b16 %v146
    %v273 = vunpack.c.h.b16 %v146
    %v274 = vunpack.c.l.b16 %v147
    %v275 = vunpack.c.h.b16 %v147
    %v276 = vunpack.c.l.b16 %v148
    %v277 = vunpack.c.h.b16 %v148
    %v278 = vunpack.c.l.b16 %v149
    %v279 = vunpack.c.h.b16 %v149
    %v280 = vunpack.c.l.b16 %v150
    %v281 = vunpack.c.h.b16 %v150
    %v282 = vunpack.c.l.b16 %v151
    %v283 = vunpack.c.h.b16 %v151
    %v284 = vunpack.c.l.b16 %v152
    %v285 = vunpack.c.h.b16 %v152
    %v286 = vunpack.c.l.b16 %v153
    %v287 = vunpack.c.h.b16 %v153
    %v288 = vunpack.c.l.b16 %v154
    %v289 = vunpack.c.h.b16 %v154
    %v290 = vunpack.c.l.b16 %v155
    %v291 = vunpack.c.h.b16 %v155
    %v292 = vunpack.c.l.b16 %v156
    %v293 = vunpack.c.h.b16 %v156
    %v294 = vunpack.c.l.b16 %v157
    %v295 = vunpack.c.h.b16 %v157
    %v296 = vunpack.c.l.b16 %v158
    %v297 = vunpack.c.h.b16 %v158
    %v298 = vunpack.c.l.b16 %v159
    %v299 = vunpack.c.h.b16 %v159
    %v300 = vunpack.c.l.b16 %v160
    %v301 = vunpack.c.h.b16 %v160
    %v302 = vunpack.c.l.b16 %v161
    %v303 = vunpack.c.h.b16 %v161
    %v304 = vpack.c.b16 %v244, %v240
    %v305 = vpack.c.b16 %v245, %v241
    %v306 = vpack.c.b16 %v246, %v242
    %v307 = vpack.c.b16 %v247, %v243
    %v308 = vpack.c.b16 %v252, %v248
    %v309 = vpack.c.b16 %v253, %v249
    %v310 = vpack.c.b16 %v254, %v250
    %v311 = vpack.c.b16 %v255, %v251
    %v312 = vpack.c.b16 %v260, %v256
    %v313 = vpack.c.b16 %v261, %v257
    %v314 = vpack.c.b16 %v262, %v258
    %v315 = vpack.c.b16 %v263, %v259
    %v316 = vpack.c.b16 %v268, %v264
    %v317 = vpack.c.b16 %v269, %v265
    %v318 = vpack.c.b16 %v270, %v266
    %v319 = vpack.c.b16 %v271, %v267
    %v320 = vpack.c.b16 %v276, %v272
    %v321 = vpack.c.b16 %v277, %v273
    %v322 = vpack.c.b16 %v278, %v274
    %v323 = vpack.c.b16 %v279, %v275
    %v324 = vpack.c.b16 %v284, %v280
    %v325 = vpack.c.b16 %v285, %v281
    %v326 = vpack.c.b16 %v286, %v282
    %v327 = vpack.c.b16 %v287, %v283
    %v328 = vpack.c.b16 %v292, %v288
    %v329 = vpack.c.b16 %v293, %v289
    %v330 = vpack.c.b16 %v294, %v290
    %v331 = vpack.c.b16 %v295, %v291
    %v332 = vpack.c.b16 %v300, %v296
    %v333 = vpack.c.b16 %v301, %v297
    %v334 = vpack.c.b16 %v302, %v298
    %v335 = vpack.c.b16 %v303, %v299
    %368 = vmatprep.subr.bf16.mxu0 %v305
    %369 = vmatpush1.bf16.msra.mxu0 %v304
    %370 = vmatprep.subr.bf16.mxu0 %v309
    %371 = vmatpush1.bf16.msra.mxu0 %v308
    %372 = vmatprep.subr.bf16.mxu0 %v313
    %373 = vmatpush1.bf16.msra.mxu0 %v312
    %374 = vmatprep.subr.bf16.mxu0 %v317
    %375 = vmatpush1.bf16.msra.mxu0 %v316
    %376 = vmatprep.subr.bf16.mxu0 %v321
    %377 = vmatpush1.bf16.msra.mxu0 %v320
    %378 = vmatprep.subr.bf16.mxu0 %v325
    %379 = vmatpush1.bf16.msra.mxu0 %v324
    %380 = vmatprep.subr.bf16.mxu0 %v329
    %381 = vmatpush1.bf16.msra.mxu0 %v328
    %382 = vmatprep.subr.bf16.mxu0 %v333
    %383 = vmatpush1.bf16.msra.mxu0 %v332
    %384 = vmatprep.subr.bf16.mxu0 0
    %385 = vmatpush1.bf16.msra.mxu0 0
    %386 = vmatprep.subr.bf16.mxu0 0
    %387 = vmatpush1.bf16.msra.mxu0 0
    %388 = vmatprep.subr.bf16.mxu0 0
    %389 = vmatpush1.bf16.msra.mxu0 0
    %390 = vmatprep.subr.bf16.mxu0 0
    %391 = vmatpush1.bf16.msra.mxu0 0
    %392 = vmatprep.subr.bf16.mxu0 0
    %393 = vmatpush1.bf16.msra.mxu0 0
    %394 = vmatprep.subr.bf16.mxu0 0
    %395 = vmatpush1.bf16.msra.mxu0 0
    %396 = vmatprep.subr.bf16.mxu0 0
    %397 = vmatpush1.bf16.msra.mxu0 0
    %398 = vmatprep.subr.bf16.mxu0 0
    %399 = vmatpush1.bf16.msra.mxu0 0
    %400 = vmatprep.mubr.bf16.mxu0 0
    %401 = vmatmul.mubr.bf16.gmra.mrb[0].mxu0 %v200
    %v402 = vpop.f32.mrb[0].mxu0
    %v403 = vadd.f32 %v167, %v402
    %v404 = vpop.f32.mrb[0].mxu0
    %v405 = vadd.f32 %v171, %v404
    %v406 = vpop.f32.mrb[0].mxu0
    %v407 = vadd.f32 %v167, %v406
    %v408 = vpop.f32.mrb[0].mxu0
    %v409 = vadd.f32 %v171, %v408
    %410 = vmatprep.mubr.bf16.mxu0 0
    %411 = vmatmul.mubr.bf16.gmra.mrb[0].mxu0 %v201
    %v412 = vpop.f32.mrb[0].mxu0
    %v413 = vadd.f32 %v167, %v412
    %v414 = vpop.f32.mrb[0].mxu0
    %v415 = vadd.f32 %v171, %v414
    %v416 = vpop.f32.mrb[0].mxu0
    %v417 = vadd.f32 %v167, %v416
    %v418 = vpop.f32.mrb[0].mxu0
    %v419 = vadd.f32 %v171, %v418
    %420 = vmatprep.mubr.bf16.mxu0 0
    %421 = vmatmul.mubr.bf16.gmra.mrb[0].mxu0 %v202
    %v422 = vpop.f32.mrb[0].mxu0
    %v423 = vadd.f32 %v167, %v422
    %v424 = vpop.f32.mrb[0].mxu0
    %v425 = vadd.f32 %v171, %v424
    %v426 = vpop.f32.mrb[0].mxu0
    %v427 = vadd.f32 %v167, %v426
    %v428 = vpop.f32.mrb[0].mxu0
    %v429 = vadd.f32 %v171, %v428
    %430 = vmatprep.mubr.bf16.mxu0 0
    %431 = vmatmul.mubr.bf16.gmra.mrb[0].mxu0 %v203
    %v432 = vpop.f32.mrb[0].mxu0
    %v433 = vadd.f32 %v167, %v432
    %v434 = vpop.f32.mrb[0].mxu0
    %v435 = vadd.f32 %v171, %v434
    %v436 = vpop.f32.mrb[0].mxu0
    %v437 = vadd.f32 %v167, %v436
    %v438 = vpop.f32.mrb[0].mxu0
    %v439 = vadd.f32 %v171, %v438
    %440 = vdwg.mxu0
    %441 = vmatprep.subr.bf16.mxu0 %v307
    %442 = vmatpush1.bf16.msra.mxu0 %v306
    %443 = vmatprep.subr.bf16.mxu0 %v311
    %444 = vmatpush1.bf16.msra.mxu0 %v310
    %445 = vmatprep.subr.bf16.mxu0 %v315
    %446 = vmatpush1.bf16.msra.mxu0 %v314
    %447 = vmatprep.subr.bf16.mxu0 %v319
    %448 = vmatpush1.bf16.msra.mxu0 %v318
    %449 = vmatprep.subr.bf16.mxu0 %v323
    %450 = vmatpush1.bf16.msra.mxu0 %v322
    %451 = vmatprep.subr.bf16.mxu0 %v327
    %452 = vmatpush1.bf16.msra.mxu0 %v326
    %453 = vmatprep.subr.bf16.mxu0 %v331
    %454 = vmatpush1.bf16.msra.mxu0 %v330
    %455 = vmatprep.subr.bf16.mxu0 %v335
    %456 = vmatpush1.bf16.msra.mxu0 %v334
    %457 = vmatprep.subr.bf16.mxu0 0
    %458 = vmatpush1.bf16.msra.mxu0 0
    %459 = vmatprep.subr.bf16.mxu0 0
    %460 = vmatpush1.bf16.msra.mxu0 0
    %461 = vmatprep.subr.bf16.mxu0 0
    %462 = vmatpush1.bf16.msra.mxu0 0
    %463 = vmatprep.subr.bf16.mxu0 0
    %464 = vmatpush1.bf16.msra.mxu0 0
    %465 = vmatprep.subr.bf16.mxu0 0
    %466 = vmatpush1.bf16.msra.mxu0 0
    %467 = vmatprep.subr.bf16.mxu0 0
    %468 = vmatpush1.bf16.msra.mxu0 0
    %469 = vmatprep.subr.bf16.mxu0 0
    %470 = vmatpush1.bf16.msra.mxu0 0
    %471 = vmatprep.subr.bf16.mxu0 0
    %472 = vmatpush1.bf16.msra.mxu0 0
    %473 = vmatprep.mubr.bf16.mxu0 0
    %474 = vmatmul.mubr.bf16.gmra.mrb[0].mxu0 %v200
    %v475 = vpop.f32.mrb[0].mxu0
    %v476 = vadd.f32 %v175, %v475
    %v477 = vpop.f32.mrb[0].mxu0
    %v478 = vadd.f32 %v179, %v477
    %v479 = vpop.f32.mrb[0].mxu0
    %v480 = vadd.f32 %v175, %v479
    %v481 = vpop.f32.mrb[0].mxu0
    %v482 = vadd.f32 %v179, %v481
    %483 = vmatprep.mubr.bf16.mxu0 0
    %484 = vmatmul.mubr.bf16.gmra.mrb[0].mxu0 %v201
    %v485 = vpop.f32.mrb[0].mxu0
    %v486 = vadd.f32 %v175, %v485
    %v487 = vpop.f32.mrb[0].mxu0
    %v488 = vadd.f32 %v179, %v487
    %v489 = vpop.f32.mrb[0].mxu0
    %v490 = vadd.f32 %v175, %v489
    %v491 = vpop.f32.mrb[0].mxu0
    %v492 = vadd.f32 %v179, %v491
    %493 = vmatprep.mubr.bf16.mxu0 0
    %494 = vmatmul.mubr.bf16.gmra.mrb[0].mxu0 %v202
    %v495 = vpop.f32.mrb[0].mxu0
    %v496 = vadd.f32 %v175, %v495
    %v497 = vpop.f32.mrb[0].mxu0
    %v498 = vadd.f32 %v179, %v497
    %v499 = vpop.f32.mrb[0].mxu0
    %v500 = vadd.f32 %v175, %v499
    %v501 = vpop.f32.mrb[0].mxu0
    %v502 = vadd.f32 %v179, %v501
    %503 = vmatprep.mubr.bf16.mxu0 0
    %504 = vmatmul.mubr.bf16.gmra.mrb[0].mxu0 %v203
    %v505 = vpop.f32.mrb[0].mxu0
    %v506 = vadd.f32 %v175, %v505
    %v507 = vpop.f32.mrb[0].mxu0
    %v508 = vadd.f32 %v179, %v507
    %v509 = vpop.f32.mrb[0].mxu0
    %v510 = vadd.f32 %v175, %v509
    %v511 = vpop.f32.mrb[0].mxu0
    %v512 = vadd.f32 %v179, %v511
    %513 = vdwg.mxu0
    %514 = vst [vmem:[#allocation2] sm:$0xff] %v403
    %515 = vst [vmem:[#allocation2 + $0x8] sm:$0xff] %v405
    %516 = vst [vmem:[#allocation2 + $0x10] sm:$0xff] %v476
    %517 = vst [vmem:[#allocation2 + $0x18] sm:$0xff] %v478
    %518 = vst [vmem:[#allocation2 + $0x20] sm:$0xff] %v407
    %519 = vst [vmem:[#allocation2 + $0x28] sm:$0xff] %v409
    %520 = vst [vmem:[#allocation2 + $0x30] sm:$0xff] %v480
    %521 = vst [vmem:[#allocation2 + $0x38] sm:$0xff] %v482
    %522 = vst [vmem:[#allocation2 + $0x40] sm:$0xff] %v413
    %523 = vst [vmem:[#allocation2 + $0x48] sm:$0xff] %v415
    %524 = vst [vmem:[#allocation2 + $0x50] sm:$0xff] %v486
    %525 = vst [vmem:[#allocation2 + $0x58] sm:$0xff] %v488
    %526 = vst [vmem:[#allocation2 + $0x60] sm:$0xff] %v417
    %527 = vst [vmem:[#allocation2 + $0x68] sm:$0xff] %v419
    %528 = vst [vmem:[#allocation2 + $0x70] sm:$0xff] %v490
    %529 = vst [vmem:[#allocation2 + $0x78] sm:$0xff] %v492
    %530 = vst [vmem:[#allocation2 + $0x80] sm:$0xff] %v423
    %531 = vst [vmem:[#allocation2 + $0x88] sm:$0xff] %v425
    %532 = vst [vmem:[#allocation2 + $0x90] sm:$0xff] %v496
    %533 = vst [vmem:[#allocation2 + $0x98] sm:$0xff] %v498
    %534 = vst [vmem:[#allocation2 + $0xa0] sm:$0xff] %v427
    %535 = vst [vmem:[#allocation2 + $0xa8] sm:$0xff] %v429
    %536 = vst [vmem:[#allocation2 + $0xb0] sm:$0xff] %v500
    %537 = vst [vmem:[#allocation2 + $0xb8] sm:$0xff] %v502
    %538 = vst [vmem:[#allocation2 + $0xc0] sm:$0xff] %v433
    %539 = vst [vmem:[#allocation2 + $0xc8] sm:$0xff] %v435
    %540 = vst [vmem:[#allocation2 + $0xd0] sm:$0xff] %v506
    %541 = vst [vmem:[#allocation2 + $0xd8] sm:$0xff] %v508
    %542 = vst [vmem:[#allocation2 + $0xe0] sm:$0xff] %v437
    %543 = vst [vmem:[#allocation2 + $0xe8] sm:$0xff] %v439
    %544 = vst [vmem:[#allocation2 + $0xf0] sm:$0xff] %v510
    %545 = vst [vmem:[#allocation2 + $0xf8] sm:$0xff] %v512
    %v546 = vld [vmem:[%s5] sm:$0xf]
    %v548 = vlaneseq
    %v549 = vshrl.u32 %v548, 7
    %v550 = vsub.s32 0, %v549
    %v551 = vrot.slane %v546, %v550
    %v552 = vlaneseq
    %v553 = vshrl.u32 %v552, 7
    %v554 = vsub.s32 1, %v553
    %v555 = vrot.slane %v546, %v554
    %v556 = vlaneseq
    %v557 = vshrl.u32 %v556, 7
    %v558 = vsub.s32 2, %v557
    %v559 = vrot.slane %v546, %v558
    %v560 = vlaneseq
    %v561 = vshrl.u32 %v560, 7
    %v562 = vsub.s32 3, %v561
    %v563 = vrot.slane %v546, %v562
    %s568 = smul.u32 0, 4
    %s569 = smul.addr %s568, 8
    %s570 = scalar_lea.vmem [#allocation2], %s569
    %v571 = vld [vmem:[%s570] sm:$0xff]
    %v572 = vld [vmem:[%s570 + $0x8] sm:$0xff]
    %v573 = vld [vmem:[%s570 + $0x10] sm:$0xff]
    %v574 = vld [vmem:[%s570 + $0x18] sm:$0xff]
    %v575 = vld [vmem:[#allocation9] sm:$0xff]
    %v576 = vld [vmem:[#allocation9 + $0x8] sm:$0xff]
    %v577 = vld [vmem:[#allocation9 + $0x10] sm:$0xff]
    %v578 = vld [vmem:[#allocation9 + $0x18] sm:$0xff]
    %v579 = vld [vmem:[#allocation9 + $0x20] sm:$0xff]
    %v580 = vld [vmem:[#allocation9 + $0x28] sm:$0xff]
    %v581 = vld [vmem:[#allocation9 + $0x30] sm:$0xff]
    %v582 = vld [vmem:[#allocation9 + $0x38] sm:$0xff]
    %v583 = vld [vmem:[#allocation9 + $0x40] sm:$0xff]
    %v584 = vld [vmem:[#allocation9 + $0x48] sm:$0xff]
    %v585 = vld [vmem:[#allocation9 + $0x50] sm:$0xff]
    %v586 = vld [vmem:[#allocation9 + $0x58] sm:$0xff]
    %v587 = vld [vmem:[#allocation9 + $0x60] sm:$0xff]
    %v588 = vld [vmem:[#allocation9 + $0x68] sm:$0xff]
    %v589 = vld [vmem:[#allocation9 + $0x70] sm:$0xff]
    %v590 = vld [vmem:[#allocation9 + $0x78] sm:$0xff]
    %v591 = vld [vmem:[#allocation9 + $0x80] sm:$0xff]
    %v592 = vld [vmem:[#allocation9 + $0x88] sm:$0xff]
    %v593 = vld [vmem:[#allocation9 + $0x90] sm:$0xff]
    %v594 = vld [vmem:[#allocation9 + $0x98] sm:$0xff]
    %v595 = vld [vmem:[#allocation9 + $0xa0] sm:$0xff]
    %v596 = vld [vmem:[#allocation9 + $0xa8] sm:$0xff]
    %v597 = vld [vmem:[#allocation9 + $0xb0] sm:$0xff]
    %v598 = vld [vmem:[#allocation9 + $0xb8] sm:$0xff]
    %v599 = vld [vmem:[#allocation9 + $0xc0] sm:$0xff]
    %v600 = vld [vmem:[#allocation9 + $0xc8] sm:$0xff]
    %v601 = vld [vmem:[#allocation9 + $0xd0] sm:$0xff]
    %v602 = vld [vmem:[#allocation9 + $0xd8] sm:$0xff]
    %v603 = vld [vmem:[#allocation9 + $0xe0] sm:$0xff]
    %v604 = vld [vmem:[#allocation9 + $0xe8] sm:$0xff]
    %v605 = vld [vmem:[#allocation9 + $0xf0] sm:$0xff]
    %v606 = vld [vmem:[#allocation9 + $0xf8] sm:$0xff]
    %v639 = vunpack.c.l.b16 %v575
    %v640 = vunpack.c.h.b16 %v575
    %v641 = vunpack.c.l.b16 %v576
    %v642 = vunpack.c.h.b16 %v576
    %v643 = vunpack.c.l.b16 %v577
    %v644 = vunpack.c.h.b16 %v577
    %v645 = vunpack.c.l.b16 %v578
    %v646 = vunpack.c.h.b16 %v578
    %v647 = vunpack.c.l.b16 %v579
    %v648 = vunpack.c.h.b16 %v579
    %v649 = vunpack.c.l.b16 %v580
    %v650 = vunpack.c.h.b16 %v580
    %v651 = vunpack.c.l.b16 %v581
    %v652 = vunpack.c.h.b16 %v581
    %v653 = vunpack.c.l.b16 %v582
    %v654 = vunpack.c.h.b16 %v582
    %v655 = vunpack.c.l.b16 %v583
    %v656 = vunpack.c.h.b16 %v583
    %v657 = vunpack.c.l.b16 %v584
    %v658 = vunpack.c.h.b16 %v584
    %v659 = vunpack.c.l.b16 %v585
    %v660 = vunpack.c.h.b16 %v585
    %v661 = vunpack.c.l.b16 %v586
    %v662 = vunpack.c.h.b16 %v586
    %v663 = vunpack.c.l.b16 %v587
    %v664 = vunpack.c.h.b16 %v587
    %v665 = vunpack.c.l.b16 %v588
    %v666 = vunpack.c.h.b16 %v588
    %v667 = vunpack.c.l.b16 %v589
    %v668 = vunpack.c.h.b16 %v589
    %v669 = vunpack.c.l.b16 %v590
    %v670 = vunpack.c.h.b16 %v590
    %v671 = vunpack.c.l.b16 %v591
    %v672 = vunpack.c.h.b16 %v591
    %v673 = vunpack.c.l.b16 %v592
    %v674 = vunpack.c.h.b16 %v592
    %v675 = vunpack.c.l.b16 %v593
    %v676 = vunpack.c.h.b16 %v593
    %v677 = vunpack.c.l.b16 %v594
    %v678 = vunpack.c.h.b16 %v594
    %v679 = vunpack.c.l.b16 %v595
    %v680 = vunpack.c.h.b16 %v595
    %v681 = vunpack.c.l.b16 %v596
    %v682 = vunpack.c.h.b16 %v596
    %v683 = vunpack.c.l.b16 %v597
    %v684 = vunpack.c.h.b16 %v597
    %v685 = vunpack.c.l.b16 %v598
    %v686 = vunpack.c.h.b16 %v598
    %v687 = vunpack.c.l.b16 %v599
    %v688 = vunpack.c.h.b16 %v599
    %v689 = vunpack.c.l.b16 %v600
    %v690 = vunpack.c.h.b16 %v600
    %v691 = vunpack.c.l.b16 %v601
    %v692 = vunpack.c.h.b16 %v601
    %v693 = vunpack.c.l.b16 %v602
    %v694 = vunpack.c.h.b16 %v602
    %v695 = vunpack.c.l.b16 %v603
    %v696 = vunpack.c.h.b16 %v603
    %v697 = vunpack.c.l.b16 %v604
    %v698 = vunpack.c.h.b16 %v604
    %v699 = vunpack.c.l.b16 %v605
    %v700 = vunpack.c.h.b16 %v605
    %v701 = vunpack.c.l.b16 %v606
    %v702 = vunpack.c.h.b16 %v606
    %v703 = vpack.c.b16 %v643, %v639
    %v704 = vpack.c.b16 %v644, %v640
    %v705 = vpack.c.b16 %v645, %v641
    %v706 = vpack.c.b16 %v646, %v642
    %v707 = vpack.c.b16 %v651, %v647
    %v708 = vpack.c.b16 %v652, %v648
    %v709 = vpack.c.b16 %v653, %v649
    %v710 = vpack.c.b16 %v654, %v650
    %v711 = vpack.c.b16 %v659, %v655
    %v712 = vpack.c.b16 %v660, %v656
    %v713 = vpack.c.b16 %v661, %v657
    %v714 = vpack.c.b16 %v662, %v658
    %v715 = vpack.c.b16 %v667, %v663
    %v716 = vpack.c.b16 %v668, %v664
    %v717 = vpack.c.b16 %v669, %v665
    %v718 = vpack.c.b16 %v670, %v666
    %v719 = vpack.c.b16 %v675, %v671
    %v720 = vpack.c.b16 %v676, %v672
    %v721 = vpack.c.b16 %v677, %v673
    %v722 = vpack.c.b16 %v678, %v674
    %v723 = vpack.c.b16 %v683, %v679
    %v724 = vpack.c.b16 %v684, %v680
    %v725 = vpack.c.b16 %v685, %v681
    %v726 = vpack.c.b16 %v686, %v682
    %v727 = vpack.c.b16 %v691, %v687
    %v728 = vpack.c.b16 %v692, %v688
    %v729 = vpack.c.b16 %v693, %v689
    %v730 = vpack.c.b16 %v694, %v690
    %v731 = vpack.c.b16 %v699, %v695
    %v732 = vpack.c.b16 %v700, %v696
    %v733 = vpack.c.b16 %v701, %v697
    %v734 = vpack.c.b16 %v702, %v698
    %767 = vmatprep.subr.bf16.mxu0 %v704
    %768 = vmatpush1.bf16.msra.mxu0 %v703
    %769 = vmatprep.subr.bf16.mxu0 %v708
    %770 = vmatpush1.bf16.msra.mxu0 %v707
    %771 = vmatprep.subr.bf16.mxu0 %v712
    %772 = vmatpush1.bf16.msra.mxu0 %v711
    %773 = vmatprep.subr.bf16.mxu0 %v716
    %774 = vmatpush1.bf16.msra.mxu0 %v715
    %775 = vmatprep.subr.bf16.mxu0 %v720
    %776 = vmatpush1.bf16.msra.mxu0 %v719
    %777 = vmatprep.subr.bf16.mxu0 %v724
    %778 = vmatpush1.bf16.msra.mxu0 %v723
    %779 = vmatprep.subr.bf16.mxu0 %v728
    %780 = vmatpush1.bf16.msra.mxu0 %v727
    %781 = vmatprep.subr.bf16.mxu0 %v732
    %782 = vmatpush1.bf16.msra.mxu0 %v731
    %783 = vmatprep.subr.bf16.mxu0 0
    %784 = vmatpush1.bf16.msra.mxu0 0
    %785 = vmatprep.subr.bf16.mxu0 0
    %786 = vmatpush1.bf16.msra.mxu0 0
    %787 = vmatprep.subr.bf16.mxu0 0
    %788 = vmatpush1.bf16.msra.mxu0 0
    %789 = vmatprep.subr.bf16.mxu0 0
    %790 = vmatpush1.bf16.msra.mxu0 0
    %791 = vmatprep.subr.bf16.mxu0 0
    %792 = vmatpush1.bf16.msra.mxu0 0
    %793 = vmatprep.subr.bf16.mxu0 0
    %794 = vmatpush1.bf16.msra.mxu0 0
    %795 = vmatprep.subr.bf16.mxu0 0
    %796 = vmatpush1.bf16.msra.mxu0 0
    %797 = vmatprep.subr.bf16.mxu0 0
    %798 = vmatpush1.bf16.msra.mxu0 0
    %799 = vmatprep.mubr.bf16.mxu0 0
    %800 = vmatmul.mubr.bf16.gmra.mrb[0].mxu0 0
    %v801 = vpop.f32.mrb[0].mxu0
    %v802 = vadd.f32 0.0, %v801
    %v803 = vpop.f32.mrb[0].mxu0
    %v804 = vadd.f32 0.0, %v803
    %v805 = vpop.f32.mrb[0].mxu0
    %v806 = vpop.f32.mrb[0].mxu0
    %807 = vdwg.mxu0
    %808 = vmatprep.subr.bf16.mxu0 %v706
    %809 = vmatpush1.bf16.msra.mxu0 %v705
    %810 = vmatprep.subr.bf16.mxu0 %v710
    %811 = vmatpush1.bf16.msra.mxu0 %v709
    %812 = vmatprep.subr.bf16.mxu0 %v714
    %813 = vmatpush1.bf16.msra.mxu0 %v713
    %814 = vmatprep.subr.bf16.mxu0 %v718
    %815 = vmatpush1.bf16.msra.mxu0 %v717
    %816 = vmatprep.subr.bf16.mxu0 %v722
    %817 = vmatpush1.bf16.msra.mxu0 %v721
    %818 = vmatprep.subr.bf16.mxu0 %v726
    %819 = vmatpush1.bf16.msra.mxu0 %v725
    %820 = vmatprep.subr.bf16.mxu0 %v730
    %821 = vmatpush1.bf16.msra.mxu0 %v729
    %822 = vmatprep.subr.bf16.mxu0 %v734
    %823 = vmatpush1.bf16.msra.mxu0 %v733
    %824 = vmatprep.subr.bf16.mxu0 0
    %825 = vmatpush1.bf16.msra.mxu0 0
    %826 = vmatprep.subr.bf16.mxu0 0
    %827 = vmatpush1.bf16.msra.mxu0 0
    %828 = vmatprep.subr.bf16.mxu0 0
    %829 = vmatpush1.bf16.msra.mxu0 0
    %830 = vmatprep.subr.bf16.mxu0 0
    %831 = vmatpush1.bf16.msra.mxu0 0
    %832 = vmatprep.subr.bf16.mxu0 0
    %833 = vmatpush1.bf16.msra.mxu0 0
    %834 = vmatprep.subr.bf16.mxu0 0
    %835 = vmatpush1.bf16.msra.mxu0 0
    %836 = vmatprep.subr.bf16.mxu0 0
    %837 = vmatpush1.bf16.msra.mxu0 0
    %838 = vmatprep.subr.bf16.mxu0 0
    %839 = vmatpush1.bf16.msra.mxu0 0
    %840 = vmatprep.mubr.bf16.mxu0 0
    %841 = vmatmul.mubr.bf16.gmra.mrb[0].mxu0 0
    %v842 = vpop.f32.mrb[0].mxu0
    %v843 = vadd.f32 0.0, %v842
    %v844 = vpop.f32.mrb[0].mxu0
    %v845 = vadd.f32 0.0, %v844
    %v846 = vpop.f32.mrb[0].mxu0
    %v847 = vpop.f32.mrb[0].mxu0
    %848 = vdwg.mxu0
    %v849 = vadd.f32 %v571, %v802
    %v850 = vadd.f32 %v572, %v804
    %v851 = vadd.f32 %v573, %v843
    %v852 = vadd.f32 %v574, %v845
    %v853 = vxor.u32 %v849, 2147483648
    %v854 = vmul.f32 %v853, 1.442695
    %v855 = vpow.pop %v854
    %v856 = vadd.f32 %v855, 1.0
    %v857 = vrcp.pop %v856
    %v858 = vmul.f32 1.0, %v857
    %v859 = vxor.u32 %v850, 2147483648
    %v860 = vmul.f32 %v859, 1.442695
    %v861 = vpow.pop %v860
    %v862 = vadd.f32 %v861, 1.0
    %v863 = vrcp.pop %v862
    %v864 = vmul.f32 1.0, %v863
    %v865 = vtanh.pop %v851
    %v866 = vxor.u32 %v852, 2147483648
    %v867 = vmul.f32 %v866, 1.442695
    %v868 = vpow.pop %v867
    %v869 = vadd.f32 %v868, 1.0
    %v870 = vrcp.pop %v869
    %v871 = vmul.f32 1.0, %v870
    %v872 = vmul.f32 %v864, 0.0
    %v873 = vmul.f32 %v858, %v865
    %v874 = vadd.f32 %v872, %v873
    %v875 = vtanh.pop %v874
    %v876 = vmul.f32 %v871, %v875
    %v877 = vpack.c.bf16 %v876, %v876
    %v878 = vpack.c.bf16 0.0, 0.0
    %v879 = vld [vmem:[#allocation10] sm:$0xff]
    %v880 = vld [vmem:[#allocation10 + $0x8] sm:$0xff]
    %v881 = vld [vmem:[#allocation10 + $0x10] sm:$0xff]
    %v882 = vld [vmem:[#allocation10 + $0x18] sm:$0xff]
    %v883 = vld [vmem:[#allocation10 + $0x20] sm:$0xff]
    %v884 = vld [vmem:[#allocation10 + $0x28] sm:$0xff]
    %v885 = vld [vmem:[#allocation10 + $0x30] sm:$0xff]
    %v886 = vld [vmem:[#allocation10 + $0x38] sm:$0xff]
    %v887 = vld [vmem:[#allocation10 + $0x40] sm:$0xff]
    %v888 = vld [vmem:[#allocation10 + $0x48] sm:$0xff]
    %v889 = vld [vmem:[#allocation10 + $0x50] sm:$0xff]
    %v890 = vld [vmem:[#allocation10 + $0x58] sm:$0xff]
    %v891 = vld [vmem:[#allocation10 + $0x60] sm:$0xff]
    %v892 = vld [vmem:[#allocation10 + $0x68] sm:$0xff]
    %v893 = vld [vmem:[#allocation10 + $0x70] sm:$0xff]
    %v894 = vld [vmem:[#allocation10 + $0x78] sm:$0xff]
    %v895 = vld [vmem:[#allocation10 + $0x80] sm:$0xff]
    %v896 = vld [vmem:[#allocation10 + $0x88] sm:$0xff]
    %v897 = vld [vmem:[#allocation10 + $0x90] sm:$0xff]
    %v898 = vld [vmem:[#allocation10 + $0x98] sm:$0xff]
    %v899 = vld [vmem:[#allocation10 + $0xa0] sm:$0xff]
    %v900 = vld [vmem:[#allocation10 + $0xa8] sm:$0xff]
    %v901 = vld [vmem:[#allocation10 + $0xb0] sm:$0xff]
    %v902 = vld [vmem:[#allocation10 + $0xb8] sm:$0xff]
    %v903 = vld [vmem:[#allocation10 + $0xc0] sm:$0xff]
    %v904 = vld [vmem:[#allocation10 + $0xc8] sm:$0xff]
    %v905 = vld [vmem:[#allocation10 + $0xd0] sm:$0xff]
    %v906 = vld [vmem:[#allocation10 + $0xd8] sm:$0xff]
    %v907 = vld [vmem:[#allocation10 + $0xe0] sm:$0xff]
    %v908 = vld [vmem:[#allocation10 + $0xe8] sm:$0xff]
    %v909 = vld [vmem:[#allocation10 + $0xf0] sm:$0xff]
    %v910 = vld [vmem:[#allocation10 + $0xf8] sm:$0xff]
    %v911 = vld [vmem:[#allocation10 + $0x100] sm:$0xff]
    %v912 = vld [vmem:[#allocation10 + $0x108] sm:$0xff]
    %v913 = vld [vmem:[#allocation10 + $0x110] sm:$0xff]
    %v914 = vld [vmem:[#allocation10 + $0x118] sm:$0xff]
    %v915 = vld [vmem:[#allocation10 + $0x120] sm:$0xff]
    %v916 = vld [vmem:[#allocation10 + $0x128] sm:$0xff]
    %v917 = vld [vmem:[#allocation10 + $0x130] sm:$0xff]
    %v918 = vld [vmem:[#allocation10 + $0x138] sm:$0xff]
    %v919 = vld [vmem:[#allocation10 + $0x140] sm:$0xff]
    %v920 = vld [vmem:[#allocation10 + $0x148] sm:$0xff]
    %v921 = vld [vmem:[#allocation10 + $0x150] sm:$0xff]
    %v922 = vld [vmem:[#allocation10 + $0x158] sm:$0xff]
    %v923 = vld [vmem:[#allocation10 + $0x160] sm:$0xff]
    %v924 = vld [vmem:[#allocation10 + $0x168] sm:$0xff]
    %v925 = vld [vmem:[#allocation10 + $0x170] sm:$0xff]
    %v926 = vld [vmem:[#allocation10 + $0x178] sm:$0xff]
    %v927 = vld [vmem:[#allocation10 + $0x180] sm:$0xff]
    %v928 = vld [vmem:[#allocation10 + $0x188] sm:$0xff]
    %v929 = vld [vmem:[#allocation10 + $0x190] sm:$0xff]
    %v930 = vld [vmem:[#allocation10 + $0x198] sm:$0xff]
    %v931 = vld [vmem:[#allocation10 + $0x1a0] sm:$0xff]
    %v932 = vld [vmem:[#allocation10 + $0x1a8] sm:$0xff]
    %v933 = vld [vmem:[#allocation10 + $0x1b0] sm:$0xff]
    %v934 = vld [vmem:[#allocation10 + $0x1b8] sm:$0xff]
    %v935 = vld [vmem:[#allocation10 + $0x1c0] sm:$0xff]
    %v936 = vld [vmem:[#allocation10 + $0x1c8] sm:$0xff]
    %v937 = vld [vmem:[#allocation10 + $0x1d0] sm:$0xff]
    %v938 = vld [vmem:[#allocation10 + $0x1d8] sm:$0xff]
    %v939 = vld [vmem:[#allocation10 + $0x1e0] sm:$0xff]
    %v940 = vld [vmem:[#allocation10 + $0x1e8] sm:$0xff]
    %v941 = vld [vmem:[#allocation10 + $0x1f0] sm:$0xff]
    %v942 = vld [vmem:[#allocation10 + $0x1f8] sm:$0xff]
    %v1007 = vunpack.c.l.b16 %v879
    %v1008 = vunpack.c.h.b16 %v879
    %v1009 = vunpack.c.l.b16 %v880
    %v1010 = vunpack.c.h.b16 %v880
    %v1011 = vunpack.c.l.b16 %v881
    %v1012 = vunpack.c.h.b16 %v881
    %v1013 = vunpack.c.l.b16 %v882
    %v1014 = vunpack.c.h.b16 %v882
    %v1015 = vunpack.c.l.b16 %v883
    %v1016 = vunpack.c.h.b16 %v883
    %v1017 = vunpack.c.l.b16 %v884
    %v1018 = vunpack.c.h.b16 %v884
    %v1019 = vunpack.c.l.b16 %v885
    %v1020 = vunpack.c.h.b16 %v885
    %v1021 = vunpack.c.l.b16 %v886
    %v1022 = vunpack.c.h.b16 %v886
    %v1023 = vunpack.c.l.b16 %v887
    %v1024 = vunpack.c.h.b16 %v887
    %v1025 = vunpack.c.l.b16 %v888
    %v1026 = vunpack.c.h.b16 %v888
    %v1027 = vunpack.c.l.b16 %v889
    %v1028 = vunpack.c.h.b16 %v889
    %v1029 = vunpack.c.l.b16 %v890
    %v1030 = vunpack.c.h.b16 %v890
    %v1031 = vunpack.c.l.b16 %v891
    %v1032 = vunpack.c.h.b16 %v891
    %v1033 = vunpack.c.l.b16 %v892
    %v1034 = vunpack.c.h.b16 %v892
    %v1035 = vunpack.c.l.b16 %v893
    %v1036 = vunpack.c.h.b16 %v893
    %v1037 = vunpack.c.l.b16 %v894
    %v1038 = vunpack.c.h.b16 %v894
    %v1039 = vunpack.c.l.b16 %v895
    %v1040 = vunpack.c.h.b16 %v895
    %v1041 = vunpack.c.l.b16 %v896
    %v1042 = vunpack.c.h.b16 %v896
    %v1043 = vunpack.c.l.b16 %v897
    %v1044 = vunpack.c.h.b16 %v897
    %v1045 = vunpack.c.l.b16 %v898
    %v1046 = vunpack.c.h.b16 %v898
    %v1047 = vunpack.c.l.b16 %v899
    %v1048 = vunpack.c.h.b16 %v899
    %v1049 = vunpack.c.l.b16 %v900
    %v1050 = vunpack.c.h.b16 %v900
    %v1051 = vunpack.c.l.b16 %v901
    %v1052 = vunpack.c.h.b16 %v901
    %v1053 = vunpack.c.l.b16 %v902
    %v1054 = vunpack.c.h.b16 %v902
    %v1055 = vunpack.c.l.b16 %v903
    %v1056 = vunpack.c.h.b16 %v903
    %v1057 = vunpack.c.l.b16 %v904
    %v1058 = vunpack.c.h.b16 %v904
    %v1059 = vunpack.c.l.b16 %v905
    %v1060 = vunpack.c.h.b16 %v905
    %v1061 = vunpack.c.l.b16 %v906
    %v1062 = vunpack.c.h.b16 %v906
    %v1063 = vunpack.c.l.b16 %v907
    %v1064 = vunpack.c.h.b16 %v907
    %v1065 = vunpack.c.l.b16 %v908
    %v1066 = vunpack.c.h.b16 %v908
    %v1067 = vunpack.c.l.b16 %v909
    %v1068 = vunpack.c.h.b16 %v909
    %v1069 = vunpack.c.l.b16 %v910
    %v1070 = vunpack.c.h.b16 %v910
    %v1071 = vunpack.c.l.b16 %v911
    %v1072 = vunpack.c.h.b16 %v911
    %v1073 = vunpack.c.l.b16 %v912
    %v1074 = vunpack.c.h.b16 %v912
    %v1075 = vunpack.c.l.b16 %v913
    %v1076 = vunpack.c.h.b16 %v913
    %v1077 = vunpack.c.l.b16 %v914
    %v1078 = vunpack.c.h.b16 %v914
    %v1079 = vunpack.c.l.b16 %v915
    %v1080 = vunpack.c.h.b16 %v915
    %v1081 = vunpack.c.l.b16 %v916
    %v1082 = vunpack.c.h.b16 %v916
    %v1083 = vunpack.c.l.b16 %v917
    %v1084 = vunpack.c.h.b16 %v917
    %v1085 = vunpack.c.l.b16 %v918
    %v1086 = vunpack.c.h.b16 %v918
    %v1087 = vunpack.c.l.b16 %v919
    %v1088 = vunpack.c.h.b16 %v919
    %v1089 = vunpack.c.l.b16 %v920
    %v1090 = vunpack.c.h.b16 %v920
    %v1091 = vunpack.c.l.b16 %v921
    %v1092 = vunpack.c.h.b16 %v921
    %v1093 = vunpack.c.l.b16 %v922
    %v1094 = vunpack.c.h.b16 %v922
    %v1095 = vunpack.c.l.b16 %v923
    %v1096 = vunpack.c.h.b16 %v923
    %v1097 = vunpack.c.l.b16 %v924
    %v1098 = vunpack.c.h.b16 %v924
    %v1099 = vunpack.c.l.b16 %v925
    %v1100 = vunpack.c.h.b16 %v925
    %v1101 = vunpack.c.l.b16 %v926
    %v1102 = vunpack.c.h.b16 %v926
    %v1103 = vunpack.c.l.b16 %v927
    %v1104 = vunpack.c.h.b16 %v927
    %v1105 = vunpack.c.l.b16 %v928
    %v1106 = vunpack.c.h.b16 %v928
    %v1107 = vunpack.c.l.b16 %v929
    %v1108 = vunpack.c.h.b16 %v929
    %v1109 = vunpack.c.l.b16 %v930
    %v1110 = vunpack.c.h.b16 %v930
    %v1111 = vunpack.c.l.b16 %v931
    %v1112 = vunpack.c.h.b16 %v931
    %v1113 = vunpack.c.l.b16 %v932
    %v1114 = vunpack.c.h.b16 %v932
    %v1115 = vunpack.c.l.b16 %v933
    %v1116 = vunpack.c.h.b16 %v933
    %v1117 = vunpack.c.l.b16 %v934
    %v1118 = vunpack.c.h.b16 %v934
    %v1119 = vunpack.c.l.b16 %v935
    %v1120 = vunpack.c.h.b16 %v935
    %v1121 = vunpack.c.l.b16 %v936
    %v1122 = vunpack.c.h.b16 %v936
    %v1123 = vunpack.c.l.b16 %v937
    %v1124 = vunpack.c.h.b16 %v937
    %v1125 = vunpack.c.l.b16 %v938
    %v1126 = vunpack.c.h.b16 %v938
    %v1127 = vunpack.c.l.b16 %v939
    %v1128 = vunpack.c.h.b16 %v939
    %v1129 = vunpack.c.l.b16 %v940
    %v1130 = vunpack.c.h.b16 %v940
    %v1131 = vunpack.c.l.b16 %v941
    %v1132 = vunpack.c.h.b16 %v941
    %v1133 = vunpack.c.l.b16 %v942
    %v1134 = vunpack.c.h.b16 %v942
    %v1135 = vpack.c.b16 %v1011, %v1007
    %v1136 = vpack.c.b16 %v1012, %v1008
    %v1137 = vpack.c.b16 %v1013, %v1009
    %v1138 = vpack.c.b16 %v1014, %v1010
    %v1139 = vpack.c.b16 %v1019, %v1015
    %v1140 = vpack.c.b16 %v1020, %v1016
    %v1141 = vpack.c.b16 %v1021, %v1017
    %v1142 = vpack.c.b16 %v1022, %v1018
    %v1143 = vpack.c.b16 %v1027, %v1023
    %v1144 = vpack.c.b16 %v1028, %v1024
    %v1145 = vpack.c.b16 %v1029, %v1025
    %v1146 = vpack.c.b16 %v1030, %v1026
    %v1147 = vpack.c.b16 %v1035, %v1031
    %v1148 = vpack.c.b16 %v1036, %v1032
    %v1149 = vpack.c.b16 %v1037, %v1033
    %v1150 = vpack.c.b16 %v1038, %v1034
    %v1151 = vpack.c.b16 %v1043, %v1039
    %v1152 = vpack.c.b16 %v1044, %v1040
    %v1153 = vpack.c.b16 %v1045, %v1041
    %v1154 = vpack.c.b16 %v1046, %v1042
    %v1155 = vpack.c.b16 %v1051, %v1047
    %v1156 = vpack.c.b16 %v1052, %v1048
    %v1157 = vpack.c.b16 %v1053, %v1049
    %v1158 = vpack.c.b16 %v1054, %v1050
    %v1159 = vpack.c.b16 %v1059, %v1055
    %v1160 = vpack.c.b16 %v1060, %v1056
    %v1161 = vpack.c.b16 %v1061, %v1057
    %v1162 = vpack.c.b16 %v1062, %v1058
    %v1163 = vpack.c.b16 %v1067, %v1063
    %v1164 = vpack.c.b16 %v1068, %v1064
    %v1165 = vpack.c.b16 %v1069, %v1065
    %v1166 = vpack.c.b16 %v1070, %v1066
    %v1167 = vpack.c.b16 %v1075, %v1071
    %v1168 = vpack.c.b16 %v1076, %v1072
    %v1169 = vpack.c.b16 %v1077, %v1073
    %v1170 = vpack.c.b16 %v1078, %v1074
    %v1171 = vpack.c.b16 %v1083, %v1079
    %v1172 = vpack.c.b16 %v1084, %v1080
    %v1173 = vpack.c.b16 %v1085, %v1081
    %v1174 = vpack.c.b16 %v1086, %v1082
    %v1175 = vpack.c.b16 %v1091, %v1087
    %v1176 = vpack.c.b16 %v1092, %v1088
    %v1177 = vpack.c.b16 %v1093, %v1089
    %v1178 = vpack.c.b16 %v1094, %v1090
    %v1179 = vpack.c.b16 %v1099, %v1095
    %v1180 = vpack.c.b16 %v1100, %v1096
    %v1181 = vpack.c.b16 %v1101, %v1097
    %v1182 = vpack.c.b16 %v1102, %v1098
    %v1183 = vpack.c.b16 %v1107, %v1103
    %v1184 = vpack.c.b16 %v1108, %v1104
    %v1185 = vpack.c.b16 %v1109, %v1105
    %v1186 = vpack.c.b16 %v1110, %v1106
    %v1187 = vpack.c.b16 %v1115, %v1111
    %v1188 = vpack.c.b16 %v1116, %v1112
    %v1189 = vpack.c.b16 %v1117, %v1113
    %v1190 = vpack.c.b16 %v1118, %v1114
    %v1191 = vpack.c.b16 %v1123, %v1119
    %v1192 = vpack.c.b16 %v1124, %v1120
    %v1193 = vpack.c.b16 %v1125, %v1121
    %v1194 = vpack.c.b16 %v1126, %v1122
    %v1195 = vpack.c.b16 %v1131, %v1127
    %v1196 = vpack.c.b16 %v1132, %v1128
    %v1197 = vpack.c.b16 %v1133, %v1129
    %v1198 = vpack.c.b16 %v1134, %v1130
    %1263 = vmatprep.subr.bf16.mxu0 %v1136
    %1264 = vmatpush1.bf16.msra.mxu0 %v1135
    %1265 = vmatprep.subr.bf16.mxu0 %v1140
    %1266 = vmatpush1.bf16.msra.mxu0 %v1139
    %1267 = vmatprep.subr.bf16.mxu0 %v1144
    %1268 = vmatpush1.bf16.msra.mxu0 %v1143
    %1269 = vmatprep.subr.bf16.mxu0 %v1148
    %1270 = vmatpush1.bf16.msra.mxu0 %v1147
    %1271 = vmatprep.subr.bf16.mxu0 %v1152
    %1272 = vmatpush1.bf16.msra.mxu0 %v1151
    %1273 = vmatprep.subr.bf16.mxu0 %v1156
    %1274 = vmatpush1.bf16.msra.mxu0 %v1155
    %1275 = vmatprep.subr.bf16.mxu0 %v1160
    %1276 = vmatpush1.bf16.msra.mxu0 %v1159
    %1277 = vmatprep.subr.bf16.mxu0 %v1164
    %1278 = vmatpush1.bf16.msra.mxu0 %v1163
    %1279 = vmatprep.subr.bf16.mxu0 %v1168
    %1280 = vmatpush1.bf16.msra.mxu0 %v1167
    %1281 = vmatprep.subr.bf16.mxu0 %v1172
    %1282 = vmatpush1.bf16.msra.mxu0 %v1171
    %1283 = vmatprep.subr.bf16.mxu0 %v1176
    %1284 = vmatpush1.bf16.msra.mxu0 %v1175
    %1285 = vmatprep.subr.bf16.mxu0 %v1180
    %1286 = vmatpush1.bf16.msra.mxu0 %v1179
    %1287 = vmatprep.subr.bf16.mxu0 %v1184
    %1288 = vmatpush1.bf16.msra.mxu0 %v1183
    %1289 = vmatprep.subr.bf16.mxu0 %v1188
    %1290 = vmatpush1.bf16.msra.mxu0 %v1187
    %1291 = vmatprep.subr.bf16.mxu0 %v1192
    %1292 = vmatpush1.bf16.msra.mxu0 %v1191
    %1293 = vmatprep.subr.bf16.mxu0 %v1196
    %1294 = vmatpush1.bf16.msra.mxu0 %v1195
    %1295 = vmatprep.mubr.bf16.mxu0 %v878
    %1296 = vmatmul.mubr.bf16.gmra.mrb[0].mxu0 %v877
    %v1297 = vpop.f32.mrb[0].mxu0
    %v1298 = vadd.f32 %v551, %v1297
    %v1299 = vpop.f32.mrb[0].mxu0
    %v1300 = vadd.f32 %v555, %v1299
    %v1301 = vpop.f32.mrb[0].mxu0
    %v1302 = vpop.f32.mrb[0].mxu0
    %1303 = vdwg.mxu0
    %1304 = vmatprep.subr.bf16.mxu0 %v1138
    %1305 = vmatpush1.bf16.msra.mxu0 %v1137
    %1306 = vmatprep.subr.bf16.mxu0 %v1142
    %1307 = vmatpush1.bf16.msra.mxu0 %v1141
    %1308 = vmatprep.subr.bf16.mxu0 %v1146
    %1309 = vmatpush1.bf16.msra.mxu0 %v1145
    %1310 = vmatprep.subr.bf16.mxu0 %v1150
    %1311 = vmatpush1.bf16.msra.mxu0 %v1149
    %1312 = vmatprep.subr.bf16.mxu0 %v1154
    %1313 = vmatpush1.bf16.msra.mxu0 %v1153
    %1314 = vmatprep.subr.bf16.mxu0 %v1158
    %1315 = vmatpush1.bf16.msra.mxu0 %v1157
    %1316 = vmatprep.subr.bf16.mxu0 %v1162
    %1317 = vmatpush1.bf16.msra.mxu0 %v1161
    %1318 = vmatprep.subr.bf16.mxu0 %v1166
    %1319 = vmatpush1.bf16.msra.mxu0 %v1165
    %1320 = vmatprep.subr.bf16.mxu0 %v1170
    %1321 = vmatpush1.bf16.msra.mxu0 %v1169
    %1322 = vmatprep.subr.bf16.mxu0 %v1174
    %1323 = vmatpush1.bf16.msra.mxu0 %v1173
    %1324 = vmatprep.subr.bf16.mxu0 %v1178
    %1325 = vmatpush1.bf16.msra.mxu0 %v1177
    %1326 = vmatprep.subr.bf16.mxu0 %v1182
    %1327 = vmatpush1.bf16.msra.mxu0 %v1181
    %1328 = vmatprep.subr.bf16.mxu0 %v1186
    %1329 = vmatpush1.bf16.msra.mxu0 %v1185
    %1330 = vmatprep.subr.bf16.mxu0 %v1190
    %1331 = vmatpush1.bf16.msra.mxu0 %v1189
    %1332 = vmatprep.subr.bf16.mxu0 %v1194
    %1333 = vmatpush1.bf16.msra.mxu0 %v1193
    %1334 = vmatprep.subr.bf16.mxu0 %v1198
    %1335 = vmatpush1.bf16.msra.mxu0 %v1197
    %1336 = vmatprep.mubr.bf16.mxu0 %v878
    %1337 = vmatmul.mubr.bf16.gmra.mrb[0].mxu0 %v877
    %v1338 = vpop.f32.mrb[0].mxu0
    %v1339 = vadd.f32 %v559, %v1338
    %v1340 = vpop.f32.mrb[0].mxu0
    %v1341 = vadd.f32 %v563, %v1340
    %v1342 = vpop.f32.mrb[0].mxu0
    %v1343 = vpop.f32.mrb[0].mxu0
    %1344 = vdwg.mxu0
    %v1345 = vxor.u32 %v1298, 2147483648
    %v1346 = vmul.f32 %v1345, 1.442695
    %v1347 = vpow.pop %v1346
    %v1348 = vadd.f32 %v1347, 1.0
    %v1349 = vrcp.pop %v1348
    %v1350 = vmul.f32 1.0, %v1349
    %v1351 = vxor.u32 %v1300, 2147483648
    %v1352 = vmul.f32 %v1351, 1.442695
    %v1353 = vpow.pop %v1352
    %v1354 = vadd.f32 %v1353, 1.0
    %v1355 = vrcp.pop %v1354
    %v1356 = vmul.f32 1.0, %v1355
    %v1357 = vtanh.pop %v1339
    %v1358 = vxor.u32 %v1341, 2147483648
    %v1359 = vmul.f32 %v1358, 1.442695
    %v1360 = vpow.pop %v1359
    %v1361 = vadd.f32 %v1360, 1.0
    %v1362 = vrcp.pop %v1361
    %v1363 = vmul.f32 1.0, %v1362
    %v1364 = vmul.f32 %v1356, 0.0
    %v1365 = vmul.f32 %v1350, %v1357
    %v1366 = vadd.f32 %v1364, %v1365
    %v1367 = vtanh.pop %v1366
    %v1368 = vmul.f32 %v1363, %v1367
    %1369 = vst [vmem:[#allocation3] sm:$0xff] %v1368
    %s1370 = smul.u32 1, 4
    %s1371 = smul.addr %s1370, 8
    %s1372 = scalar_lea.vmem [#allocation2], %s1371
    %v1373 = vld [vmem:[%s1372] sm:$0xff]
    %v1374 = vld [vmem:[%s1372 + $0x8] sm:$0xff]
    %v1375 = vld [vmem:[%s1372 + $0x10] sm:$0xff]
    %v1376 = vld [vmem:[%s1372 + $0x18] sm:$0xff]
    %v1377 = vld [vmem:[#allocation9] sm:$0xff]
    %v1378 = vld [vmem:[#allocation9 + $0x8] sm:$0xff]
    %v1379 = vld [vmem:[#allocation9 + $0x10] sm:$0xff]
    %v1380 = vld [vmem:[#allocation9 + $0x18] sm:$0xff]
    %v1381 = vld [vmem:[#allocation9 + $0x20] sm:$0xff]
    %v1382 = vld [vmem:[#allocation9 + $0x28] sm:$0xff]
    %v1383 = vld [vmem:[#allocation9 + $0x30] sm:$0xff]
    %v1384 = vld [vmem:[#allocation9 + $0x38] sm:$0xff]
    %v1385 = vld [vmem:[#allocation9 + $0x40] sm:$0xff]
    %v1386 = vld [vmem:[#allocation9 + $0x48] sm:$0xff]
    %v1387 = vld [vmem:[#allocation9 + $0x50] sm:$0xff]
    %v1388 = vld [vmem:[#allocation9 + $0x58] sm:$0xff]
    %v1389 = vld [vmem:[#allocation9 + $0x60] sm:$0xff]
    %v1390 = vld [vmem:[#allocation9 + $0x68] sm:$0xff]
    %v1391 = vld [vmem:[#allocation9 + $0x70] sm:$0xff]
    %v1392 = vld [vmem:[#allocation9 + $0x78] sm:$0xff]
    %v1393 = vld [vmem:[#allocation9 + $0x80] sm:$0xff]
    %v1394 = vld [vmem:[#allocation9 + $0x88] sm:$0xff]
    %v1395 = vld [vmem:[#allocation9 + $0x90] sm:$0xff]
    %v1396 = vld [vmem:[#allocation9 + $0x98] sm:$0xff]
    %v1397 = vld [vmem:[#allocation9 + $0xa0] sm:$0xff]
    %v1398 = vld [vmem:[#allocation9 + $0xa8] sm:$0xff]
    %v1399 = vld [vmem:[#allocation9 + $0xb0] sm:$0xff]
    %v1400 = vld [vmem:[#allocation9 + $0xb8] sm:$0xff]
    %v1401 = vld [vmem:[#allocation9 + $0xc0] sm:$0xff]
    %v1402 = vld [vmem:[#allocation9 + $0xc8] sm:$0xff]
    %v1403 = vld [vmem:[#allocation9 + $0xd0] sm:$0xff]
    %v1404 = vld [vmem:[#allocation9 + $0xd8] sm:$0xff]
    %v1405 = vld [vmem:[#allocation9 + $0xe0] sm:$0xff]
    %v1406 = vld [vmem:[#allocation9 + $0xe8] sm:$0xff]
    %v1407 = vld [vmem:[#allocation9 + $0xf0] sm:$0xff]
    %v1408 = vld [vmem:[#allocation9 + $0xf8] sm:$0xff]
    %v1441 = vunpack.c.l.b16 %v1377
    %v1442 = vunpack.c.h.b16 %v1377
    %v1443 = vunpack.c.l.b16 %v1378
    %v1444 = vunpack.c.h.b16 %v1378
    %v1445 = vunpack.c.l.b16 %v1379
    %v1446 = vunpack.c.h.b16 %v1379
    %v1447 = vunpack.c.l.b16 %v1380
    %v1448 = vunpack.c.h.b16 %v1380
    %v1449 = vunpack.c.l.b16 %v1381
    %v1450 = vunpack.c.h.b16 %v1381
    %v1451 = vunpack.c.l.b16 %v1382
    %v1452 = vunpack.c.h.b16 %v1382
    %v1453 = vunpack.c.l.b16 %v1383
    %v1454 = vunpack.c.h.b16 %v1383
    %v1455 = vunpack.c.l.b16 %v1384
    %v1456 = vunpack.c.h.b16 %v1384
    %v1457 = vunpack.c.l.b16 %v1385
    %v1458 = vunpack.c.h.b16 %v1385
    %v1459 = vunpack.c.l.b16 %v1386
    %v1460 = vunpack.c.h.b16 %v1386
    %v1461 = vunpack.c.l.b16 %v1387
    %v1462 = vunpack.c.h.b16 %v1387
    %v1463 = vunpack.c.l.b16 %v1388
    %v1464 = vunpack.c.h.b16 %v1388
    %v1465 = vunpack.c.l.b16 %v1389
    %v1466 = vunpack.c.h.b16 %v1389
    %v1467 = vunpack.c.l.b16 %v1390
    %v1468 = vunpack.c.h.b16 %v1390
    %v1469 = vunpack.c.l.b16 %v1391
    %v1470 = vunpack.c.h.b16 %v1391
    %v1471 = vunpack.c.l.b16 %v1392
    %v1472 = vunpack.c.h.b16 %v1392
    %v1473 = vunpack.c.l.b16 %v1393
    %v1474 = vunpack.c.h.b16 %v1393
    %v1475 = vunpack.c.l.b16 %v1394
    %v1476 = vunpack.c.h.b16 %v1394
    %v1477 = vunpack.c.l.b16 %v1395
    %v1478 = vunpack.c.h.b16 %v1395
    %v1479 = vunpack.c.l.b16 %v1396
    %v1480 = vunpack.c.h.b16 %v1396
    %v1481 = vunpack.c.l.b16 %v1397
    %v1482 = vunpack.c.h.b16 %v1397
    %v1483 = vunpack.c.l.b16 %v1398
    %v1484 = vunpack.c.h.b16 %v1398
    %v1485 = vunpack.c.l.b16 %v1399
    %v1486 = vunpack.c.h.b16 %v1399
    %v1487 = vunpack.c.l.b16 %v1400
    %v1488 = vunpack.c.h.b16 %v1400
    %v1489 = vunpack.c.l.b16 %v1401
    %v1490 = vunpack.c.h.b16 %v1401
    %v1491 = vunpack.c.l.b16 %v1402
    %v1492 = vunpack.c.h.b16 %v1402
    %v1493 = vunpack.c.l.b16 %v1403
    %v1494 = vunpack.c.h.b16 %v1403
    %v1495 = vunpack.c.l.b16 %v1404
    %v1496 = vunpack.c.h.b16 %v1404
    %v1497 = vunpack.c.l.b16 %v1405
    %v1498 = vunpack.c.h.b16 %v1405
    %v1499 = vunpack.c.l.b16 %v1406
    %v1500 = vunpack.c.h.b16 %v1406
    %v1501 = vunpack.c.l.b16 %v1407
    %v1502 = vunpack.c.h.b16 %v1407
    %v1503 = vunpack.c.l.b16 %v1408
    %v1504 = vunpack.c.h.b16 %v1408
    %v1505 = vpack.c.b16 %v1445, %v1441
    %v1506 = vpack.c.b16 %v1446, %v1442
    %v1507 = vpack.c.b16 %v1447, %v1443
    %v1508 = vpack.c.b16 %v1448, %v1444
    %v1509 = vpack.c.b16 %v1453, %v1449
    %v1510 = vpack.c.b16 %v1454, %v1450
    %v1511 = vpack.c.b16 %v1455, %v1451
    %v1512 = vpack.c.b16 %v1456, %v1452
    %v1513 = vpack.c.b16 %v1461, %v1457
    %v1514 = vpack.c.b16 %v1462, %v1458
    %v1515 = vpack.c.b16 %v1463, %v1459
    %v1516 = vpack.c.b16 %v1464, %v1460
    %v1517 = vpack.c.b16 %v1469, %v1465
    %v1518 = vpack.c.b16 %v1470, %v1466
    %v1519 = vpack.c.b16 %v1471, %v1467
    %v1520 = vpack.c.b16 %v1472, %v1468
    %v1521 = vpack.c.b16 %v1477, %v1473
    %v1522 = vpack.c.b16 %v1478, %v1474
    %v1523 = vpack.c.b16 %v1479, %v1475
    %v1524 = vpack.c.b16 %v1480, %v1476
    %v1525 = vpack.c.b16 %v1485, %v1481
    %v1526 = vpack.c.b16 %v1486, %v1482
    %v1527 = vpack.c.b16 %v1487, %v1483
    %v1528 = vpack.c.b16 %v1488, %v1484
    %v1529 = vpack.c.b16 %v1493, %v1489
    %v1530 = vpack.c.b16 %v1494, %v1490
    %v1531 = vpack.c.b16 %v1495, %v1491
    %v1532 = vpack.c.b16 %v1496, %v1492
    %v1533 = vpack.c.b16 %v1501, %v1497
    %v1534 = vpack.c.b16 %v1502, %v1498
    %v1535 = vpack.c.b16 %v1503, %v1499
    %v1536 = vpack.c.b16 %v1504, %v1500
    %1569 = vmatprep.subr.bf16.mxu0 %v1506
    %1570 = vmatpush1.bf16.msra.mxu0 %v1505
    %1571 = vmatprep.subr.bf16.mxu0 %v1510
    %1572 = vmatpush1.bf16.msra.mxu0 %v1509
    %1573 = vmatprep.subr.bf16.mxu0 %v1514
    %1574 = vmatpush1.bf16.msra.mxu0 %v1513
    %1575 = vmatprep.subr.bf16.mxu0 %v1518
    %1576 = vmatpush1.bf16.msra.mxu0 %v1517
    %1577 = vmatprep.subr.bf16.mxu0 %v1522
    %1578 = vmatpush1.bf16.msra.mxu0 %v1521
    %1579 = vmatprep.subr.bf16.mxu0 %v1526
    %1580 = vmatpush1.bf16.msra.mxu0 %v1525
    %1581 = vmatprep.subr.bf16.mxu0 %v1530
    %1582 = vmatpush1.bf16.msra.mxu0 %v1529
    %1583 = vmatprep.subr.bf16.mxu0 %v1534
    %1584 = vmatpush1.bf16.msra.mxu0 %v1533
    %1585 = vmatprep.subr.bf16.mxu0 0
    %1586 = vmatpush1.bf16.msra.mxu0 0
    %1587 = vmatprep.subr.bf16.mxu0 0
    %1588 = vmatpush1.bf16.msra.mxu0 0
    %1589 = vmatprep.subr.bf16.mxu0 0
    %1590 = vmatpush1.bf16.msra.mxu0 0
    %1591 = vmatprep.subr.bf16.mxu0 0
    %1592 = vmatpush1.bf16.msra.mxu0 0
    %1593 = vmatprep.subr.bf16.mxu0 0
    %1594 = vmatpush1.bf16.msra.mxu0 0
    %1595 = vmatprep.subr.bf16.mxu0 0
    %1596 = vmatpush1.bf16.msra.mxu0 0
    %1597 = vmatprep.subr.bf16.mxu0 0
    %1598 = vmatpush1.bf16.msra.mxu0 0
    %1599 = vmatprep.subr.bf16.mxu0 0
    %1600 = vmatpush1.bf16.msra.mxu0 0
    %1601 = vmatprep.mubr.bf16.mxu0 0
    %1602 = vmatmul.mubr.bf16.gmra.mrb[0].mxu0 %v877
    %v1603 = vpop.f32.mrb[0].mxu0
    %v1604 = vadd.f32 0.0, %v1603
    %v1605 = vpop.f32.mrb[0].mxu0
    %v1606 = vadd.f32 0.0, %v1605
    %v1607 = vpop.f32.mrb[0].mxu0
    %v1608 = vpop.f32.mrb[0].mxu0
    %1609 = vdwg.mxu0
    %1610 = vmatprep.subr.bf16.mxu0 %v1508
    %1611 = vmatpush1.bf16.msra.mxu0 %v1507
    %1612 = vmatprep.subr.bf16.mxu0 %v1512
    %1613 = vmatpush1.bf16.msra.mxu0 %v1511
    %1614 = vmatprep.subr.bf16.mxu0 %v1516
    %1615 = vmatpush1.bf16.msra.mxu0 %v1515
    %1616 = vmatprep.subr.bf16.mxu0 %v1520
    %1617 = vmatpush1.bf16.msra.mxu0 %v1519
    %1618 = vmatprep.subr.bf16.mxu0 %v1524
    %1619 = vmatpush1.bf16.msra.mxu0 %v1523
    %1620 = vmatprep.subr.bf16.mxu0 %v1528
    %1621 = vmatpush1.bf16.msra.mxu0 %v1527
    %1622 = vmatprep.subr.bf16.mxu0 %v1532
    %1623 = vmatpush1.bf16.msra.mxu0 %v1531
    %1624 = vmatprep.subr.bf16.mxu0 %v1536
    %1625 = vmatpush1.bf16.msra.mxu0 %v1535
    %1626 = vmatprep.subr.bf16.mxu0 0
    %1627 = vmatpush1.bf16.msra.mxu0 0
    %1628 = vmatprep.subr.bf16.mxu0 0
    %1629 = vmatpush1.bf16.msra.mxu0 0
    %1630 = vmatprep.subr.bf16.mxu0 0
    %1631 = vmatpush1.bf16.msra.mxu0 0
    %1632 = vmatprep.subr.bf16.mxu0 0
    %1633 = vmatpush1.bf16.msra.mxu0 0
    %1634 = vmatprep.subr.bf16.mxu0 0
    %1635 = vmatpush1.bf16.msra.mxu0 0
    %1636 = vmatprep.subr.bf16.mxu0 0
    %1637 = vmatpush1.bf16.msra.mxu0 0
    %1638 = vmatprep.subr.bf16.mxu0 0
    %1639 = vmatpush1.bf16.msra.mxu0 0
    %1640 = vmatprep.subr.bf16.mxu0 0
    %1641 = vmatpush1.bf16.msra.mxu0 0
    %1642 = vmatprep.mubr.bf16.mxu0 0
    %1643 = vmatmul.mubr.bf16.gmra.mrb[0].mxu0 %v877
    %v1644 = vpop.f32.mrb[0].mxu0
    %v1645 = vadd.f32 0.0, %v1644
    %v1646 = vpop.f32.mrb[0].mxu0
    %v1647 = vadd.f32 0.0, %v1646
    %v1648 = vpop.f32.mrb[0].mxu0
    %v1649 = vpop.f32.mrb[0].mxu0
    %1650 = vdwg.mxu0
    %v1651 = vadd.f32 %v1373, %v1604
    %v1652 = vadd.f32 %v1374, %v1606
    %v1653 = vadd.f32 %v1375, %v1645
    %v1654 = vadd.f32 %v1376, %v1647
    %v1655 = vxor.u32 %v1651, 2147483648
    %v1656 = vmul.f32 %v1655, 1.442695
    %v1657 = vpow.pop %v1656
    %v1658 = vadd.f32 %v1657, 1.0
    %v1659 = vrcp.pop %v1658
    %v1660 = vmul.f32 1.0, %v1659
    %v1661 = vxor.u32 %v1652, 2147483648
    %v1662 = vmul.f32 %v1661, 1.442695
    %v1663 = vpow.pop %v1662
    %v1664 = vadd.f32 %v1663, 1.0
    %v1665 = vrcp.pop %v1664
    %v1666 = vmul.f32 1.0, %v1665
    %v1667 = vtanh.pop %v1653
    %v1668 = vxor.u32 %v1654, 2147483648
    %v1669 = vmul.f32 %v1668, 1.442695
    %v1670 = vpow.pop %v1669
    %v1671 = vadd.f32 %v1670, 1.0
    %v1672 = vrcp.pop %v1671
    %v1673 = vmul.f32 1.0, %v1672
    %v1674 = vmul.f32 %v1666, %v874
    %v1675 = vmul.f32 %v1660, %v1667
    %v1676 = vadd.f32 %v1674, %v1675
    %v1677 = vtanh.pop %v1676
    %v1678 = vmul.f32 %v1673, %v1677
    %v1679 = vpack.c.bf16 %v1678, %v1678
    %v1680 = vpack.c.bf16 %v1368, %v1368
    %v1681 = vld [vmem:[#allocation10] sm:$0xff]
    %v1682 = vld [vmem:[#allocation10 + $0x8] sm:$0xff]
    %v1683 = vld [vmem:[#allocation10 + $0x10] sm:$0xff]
    %v1684 = vld [vmem:[#allocation10 + $0x18] sm:$0xff]
    %v1685 = vld [vmem:[#allocation10 + $0x20] sm:$0xff]
    %v1686 = vld [vmem:[#allocation10 + $0x28] sm:$0xff]
    %v1687 = vld [vmem:[#allocation10 + $0x30] sm:$0xff]
    %v1688 = vld [vmem:[#allocation10 + $0x38] sm:$0xff]
    %v1689 = vld [vmem:[#allocation10 + $0x40] sm:$0xff]
    %v1690 = vld [vmem:[#allocation10 + $0x48] sm:$0xff]
    %v1691 = vld [vmem:[#allocation10 + $0x50] sm:$0xff]
    %v1692 = vld [vmem:[#allocation10 + $0x58] sm:$0xff]
    %v1693 = vld [vmem:[#allocation10 + $0x60] sm:$0xff]
    %v1694 = vld [vmem:[#allocation10 + $0x68] sm:$0xff]
    %v1695 = vld [vmem:[#allocation10 + $0x70] sm:$0xff]
    %v1696 = vld [vmem:[#allocation10 + $0x78] sm:$0xff]
    %v1697 = vld [vmem:[#allocation10 + $0x80] sm:$0xff]
    %v1698 = vld [vmem:[#allocation10 + $0x88] sm:$0xff]
    %v1699 = vld [vmem:[#allocation10 + $0x90] sm:$0xff]
    %v1700 = vld [vmem:[#allocation10 + $0x98] sm:$0xff]
    %v1701 = vld [vmem:[#allocation10 + $0xa0] sm:$0xff]
    %v1702 = vld [vmem:[#allocation10 + $0xa8] sm:$0xff]
    %v1703 = vld [vmem:[#allocation10 + $0xb0] sm:$0xff]
    %v1704 = vld [vmem:[#allocation10 + $0xb8] sm:$0xff]
    %v1705 = vld [vmem:[#allocation10 + $0xc0] sm:$0xff]
    %v1706 = vld [vmem:[#allocation10 + $0xc8] sm:$0xff]
    %v1707 = vld [vmem:[#allocation10 + $0xd0] sm:$0xff]
    %v1708 = vld [vmem:[#allocation10 + $0xd8] sm:$0xff]
    %v1709 = vld [vmem:[#allocation10 + $0xe0] sm:$0xff]
    %v1710 = vld [vmem:[#allocation10 + $0xe8] sm:$0xff]
    %v1711 = vld [vmem:[#allocation10 + $0xf0] sm:$0xff]
    %v1712 = vld [vmem:[#allocation10 + $0xf8] sm:$0xff]
    %v1713 = vld [vmem:[#allocation10 + $0x100] sm:$0xff]
    %v1714 = vld [vmem:[#allocation10 + $0x108] sm:$0xff]
    %v1715 = vld [vmem:[#allocation10 + $0x110] sm:$0xff]
    %v1716 = vld [vmem:[#allocation10 + $0x118] sm:$0xff]
    %v1717 = vld [vmem:[#allocation10 + $0x120] sm:$0xff]
    %v1718 = vld [vmem:[#allocation10 + $0x128] sm:$0xff]
    %v1719 = vld [vmem:[#allocation10 + $0x130] sm:$0xff]
    %v1720 = vld [vmem:[#allocation10 + $0x138] sm:$0xff]
    %v1721 = vld [vmem:[#allocation10 + $0x140] sm:$0xff]
    %v1722 = vld [vmem:[#allocation10 + $0x148] sm:$0xff]
    %v1723 = vld [vmem:[#allocation10 + $0x150] sm:$0xff]
    %v1724 = vld [vmem:[#allocation10 + $0x158] sm:$0xff]
    %v1725 = vld [vmem:[#allocation10 + $0x160] sm:$0xff]
    %v1726 = vld [vmem:[#allocation10 + $0x168] sm:$0xff]
    %v1727 = vld [vmem:[#allocation10 + $0x170] sm:$0xff]
    %v1728 = vld [vmem:[#allocation10 + $0x178] sm:$0xff]
    %v1729 = vld [vmem:[#allocation10 + $0x180] sm:$0xff]
    %v1730 = vld [vmem:[#allocation10 + $0x188] sm:$0xff]
    %v1731 = vld [vmem:[#allocation10 + $0x190] sm:$0xff]
    %v1732 = vld [vmem:[#allocation10 + $0x198] sm:$0xff]
    %v1733 = vld [vmem:[#allocation10 + $0x1a0] sm:$0xff]
    %v1734 = vld [vmem:[#allocation10 + $0x1a8] sm:$0xff]
    %v1735 = vld [vmem:[#allocation10 + $0x1b0] sm:$0xff]
    %v1736 = vld [vmem:[#allocation10 + $0x1b8] sm:$0xff]
    %v1737 = vld [vmem:[#allocation10 + $0x1c0] sm:$0xff]
    %v1738 = vld [vmem:[#allocation10 + $0x1c8] sm:$0xff]
    %v1739 = vld [vmem:[#allocation10 + $0x1d0] sm:$0xff]
    %v1740 = vld [vmem:[#allocation10 + $0x1d8] sm:$0xff]
    %v1741 = vld [vmem:[#allocation10 + $0x1e0] sm:$0xff]
    %v1742 = vld [vmem:[#allocation10 + $0x1e8] sm:$0xff]
    %v1743 = vld [vmem:[#allocation10 + $0x1f0] sm:$0xff]
    %v1744 = vld [vmem:[#allocation10 + $0x1f8] sm:$0xff]
    %v1809 = vunpack.c.l.b16 %v1681
    %v1810 = vunpack.c.h.b16 %v1681
    %v1811 = vunpack.c.l.b16 %v1682
    %v1812 = vunpack.c.h.b16 %v1682
    %v1813 = vunpack.c.l.b16 %v1683
    %v1814 = vunpack.c.h.b16 %v1683
    %v1815 = vunpack.c.l.b16 %v1684
    %v1816 = vunpack.c.h.b16 %v1684
    %v1817 = vunpack.c.l.b16 %v1685
    %v1818 = vunpack.c.h.b16 %v1685
    %v1819 = vunpack.c.l.b16 %v1686
    %v1820 = vunpack.c.h.b16 %v1686
    %v1821 = vunpack.c.l.b16 %v1687
    %v1822 = vunpack.c.h.b16 %v1687
    %v1823 = vunpack.c.l.b16 %v1688
    %v1824 = vunpack.c.h.b16 %v1688
    %v1825 = vunpack.c.l.b16 %v1689
    %v1826 = vunpack.c.h.b16 %v1689
    %v1827 = vunpack.c.l.b16 %v1690
    %v1828 = vunpack.c.h.b16 %v1690
    %v1829 = vunpack.c.l.b16 %v1691
    %v1830 = vunpack.c.h.b16 %v1691
    %v1831 = vunpack.c.l.b16 %v1692
    %v1832 = vunpack.c.h.b16 %v1692
    %v1833 = vunpack.c.l.b16 %v1693
    %v1834 = vunpack.c.h.b16 %v1693
    %v1835 = vunpack.c.l.b16 %v1694
    %v1836 = vunpack.c.h.b16 %v1694
    %v1837 = vunpack.c.l.b16 %v1695
    %v1838 = vunpack.c.h.b16 %v1695
    %v1839 = vunpack.c.l.b16 %v1696
    %v1840 = vunpack.c.h.b16 %v1696
    %v1841 = vunpack.c.l.b16 %v1697
    %v1842 = vunpack.c.h.b16 %v1697
    %v1843 = vunpack.c.l.b16 %v1698
    %v1844 = vunpack.c.h.b16 %v1698
    %v1845 = vunpack.c.l.b16 %v1699
    %v1846 = vunpack.c.h.b16 %v1699
    %v1847 = vunpack.c.l.b16 %v1700
    %v1848 = vunpack.c.h.b16 %v1700
    %v1849 = vunpack.c.l.b16 %v1701
    %v1850 = vunpack.c.h.b16 %v1701
    %v1851 = vunpack.c.l.b16 %v1702
    %v1852 = vunpack.c.h.b16 %v1702
    %v1853 = vunpack.c.l.b16 %v1703
    %v1854 = vunpack.c.h.b16 %v1703
    %v1855 = vunpack.c.l.b16 %v1704
    %v1856 = vunpack.c.h.b16 %v1704
    %v1857 = vunpack.c.l.b16 %v1705
    %v1858 = vunpack.c.h.b16 %v1705
    %v1859 = vunpack.c.l.b16 %v1706
    %v1860 = vunpack.c.h.b16 %v1706
    %v1861 = vunpack.c.l.b16 %v1707
    %v1862 = vunpack.c.h.b16 %v1707
    %v1863 = vunpack.c.l.b16 %v1708
    %v1864 = vunpack.c.h.b16 %v1708
    %v1865 = vunpack.c.l.b16 %v1709
    %v1866 = vunpack.c.h.b16 %v1709
    %v1867 = vunpack.c.l.b16 %v1710
    %v1868 = vunpack.c.h.b16 %v1710
    %v1869 = vunpack.c.l.b16 %v1711
    %v1870 = vunpack.c.h.b16 %v1711
    %v1871 = vunpack.c.l.b16 %v1712
    %v1872 = vunpack.c.h.b16 %v1712
    %v1873 = vunpack.c.l.b16 %v1713
    %v1874 = vunpack.c.h.b16 %v1713
    %v1875 = vunpack.c.l.b16 %v1714
    %v1876 = vunpack.c.h.b16 %v1714
    %v1877 = vunpack.c.l.b16 %v1715
    %v1878 = vunpack.c.h.b16 %v1715
    %v1879 = vunpack.c.l.b16 %v1716
    %v1880 = vunpack.c.h.b16 %v1716
    %v1881 = vunpack.c.l.b16 %v1717
    %v1882 = vunpack.c.h.b16 %v1717
    %v1883 = vunpack.c.l.b16 %v1718
    %v1884 = vunpack.c.h.b16 %v1718
    %v1885 = vunpack.c.l.b16 %v1719
    %v1886 = vunpack.c.h.b16 %v1719
    %v1887 = vunpack.c.l.b16 %v1720
    %v1888 = vunpack.c.h.b16 %v1720
    %v1889 = vunpack.c.l.b16 %v1721
    %v1890 = vunpack.c.h.b16 %v1721
    %v1891 = vunpack.c.l.b16 %v1722
    %v1892 = vunpack.c.h.b16 %v1722
    %v1893 = vunpack.c.l.b16 %v1723
    %v1894 = vunpack.c.h.b16 %v1723
    %v1895 = vunpack.c.l.b16 %v1724
    %v1896 = vunpack.c.h.b16 %v1724
    %v1897 = vunpack.c.l.b16 %v1725
    %v1898 = vunpack.c.h.b16 %v1725
    %v1899 = vunpack.c.l.b16 %v1726
    %v1900 = vunpack.c.h.b16 %v1726
    %v1901 = vunpack.c.l.b16 %v1727
    %v1902 = vunpack.c.h.b16 %v1727
    %v1903 = vunpack.c.l.b16 %v1728
    %v1904 = vunpack.c.h.b16 %v1728
    %v1905 = vunpack.c.l.b16 %v1729
    %v1906 = vunpack.c.h.b16 %v1729
    %v1907 = vunpack.c.l.b16 %v1730
    %v1908 = vunpack.c.h.b16 %v1730
    %v1909 = vunpack.c.l.b16 %v1731
    %v1910 = vunpack.c.h.b16 %v1731
    %v1911 = vunpack.c.l.b16 %v1732
    %v1912 = vunpack.c.h.b16 %v1732
    %v1913 = vunpack.c.l.b16 %v1733
    %v1914 = vunpack.c.h.b16 %v1733
    %v1915 = vunpack.c.l.b16 %v1734
    %v1916 = vunpack.c.h.b16 %v1734
    %v1917 = vunpack.c.l.b16 %v1735
    %v1918 = vunpack.c.h.b16 %v1735
    %v1919 = vunpack.c.l.b16 %v1736
    %v1920 = vunpack.c.h.b16 %v1736
    %v1921 = vunpack.c.l.b16 %v1737
    %v1922 = vunpack.c.h.b16 %v1737
    %v1923 = vunpack.c.l.b16 %v1738
    %v1924 = vunpack.c.h.b16 %v1738
    %v1925 = vunpack.c.l.b16 %v1739
    %v1926 = vunpack.c.h.b16 %v1739
    %v1927 = vunpack.c.l.b16 %v1740
    %v1928 = vunpack.c.h.b16 %v1740
    %v1929 = vunpack.c.l.b16 %v1741
    %v1930 = vunpack.c.h.b16 %v1741
    %v1931 = vunpack.c.l.b16 %v1742
    %v1932 = vunpack.c.h.b16 %v1742
    %v1933 = vunpack.c.l.b16 %v1743
    %v1934 = vunpack.c.h.b16 %v1743
    %v1935 = vunpack.c.l.b16 %v1744
    %v1936 = vunpack.c.h.b16 %v1744
    %v1937 = vpack.c.b16 %v1813, %v1809
    %v1938 = vpack.c.b16 %v1814, %v1810
    %v1939 = vpack.c.b16 %v1815, %v1811
    %v1940 = vpack.c.b16 %v1816, %v1812
    %v1941 = vpack.c.b16 %v1821, %v1817
    %v1942 = vpack.c.b16 %v1822, %v1818
    %v1943 = vpack.c.b16 %v1823, %v1819
    %v1944 = vpack.c.b16 %v1824, %v1820
    %v1945 = vpack.c.b16 %v1829, %v1825
    %v1946 = vpack.c.b16 %v1830, %v1826
    %v1947 = vpack.c.b16 %v1831, %v1827
    %v1948 = vpack.c.b16 %v1832, %v1828
    %v1949 = vpack.c.b16 %v1837, %v1833
    %v1950 = vpack.c.b16 %v1838, %v1834
    %v1951 = vpack.c.b16 %v1839, %v1835
    %v1952 = vpack.c.b16 %v1840, %v1836
    %v1953 = vpack.c.b16 %v1845, %v1841
    %v1954 = vpack.c.b16 %v1846, %v1842
    %v1955 = vpack.c.b16 %v1847, %v1843
    %v1956 = vpack.c.b16 %v1848, %v1844
    %v1957 = vpack.c.b16 %v1853, %v1849
    %v1958 = vpack.c.b16 %v1854, %v1850
    %v1959 = vpack.c.b16 %v1855, %v1851
    %v1960 = vpack.c.b16 %v1856, %v1852
    %v1961 = vpack.c.b16 %v1861, %v1857
    %v1962 = vpack.c.b16 %v1862, %v1858
    %v1963 = vpack.c.b16 %v1863, %v1859
    %v1964 = vpack.c.b16 %v1864, %v1860
    %v1965 = vpack.c.b16 %v1869, %v1865
    %v1966 = vpack.c.b16 %v1870, %v1866
    %v1967 = vpack.c.b16 %v1871, %v1867
    %v1968 = vpack.c.b16 %v1872, %v1868
    %v1969 = vpack.c.b16 %v1877, %v1873
    %v1970 = vpack.c.b16 %v1878, %v1874
    %v1971 = vpack.c.b16 %v1879, %v1875
    %v1972 = vpack.c.b16 %v1880, %v1876
    %v1973 = vpack.c.b16 %v1885, %v1881
    %v1974 = vpack.c.b16 %v1886, %v1882
    %v1975 = vpack.c.b16 %v1887, %v1883
    %v1976 = vpack.c.b16 %v1888, %v1884
    %v1977 = vpack.c.b16 %v1893, %v1889
    %v1978 = vpack.c.b16 %v1894, %v1890
    %v1979 = vpack.c.b16 %v1895, %v1891
    %v1980 = vpack.c.b16 %v1896, %v1892
    %v1981 = vpack.c.b16 %v1901, %v1897
    %v1982 = vpack.c.b16 %v1902, %v1898
    %v1983 = vpack.c.b16 %v1903, %v1899
    %v1984 = vpack.c.b16 %v1904, %v1900
    %v1985 = vpack.c.b16 %v1909, %v1905
    %v1986 = vpack.c.b16 %v1910, %v1906
    %v1987 = vpack.c.b16 %v1911, %v1907
    %v1988 = vpack.c.b16 %v1912, %v1908
    %v1989 = vpack.c.b16 %v1917, %v1913
    %v1990 = vpack.c.b16 %v1918, %v1914
    %v1991 = vpack.c.b16 %v1919, %v1915
    %v1992 = vpack.c.b16 %v1920, %v1916
    %v1993 = vpack.c.b16 %v1925, %v1921
    %v1994 = vpack.c.b16 %v1926, %v1922
    %v1995 = vpack.c.b16 %v1927, %v1923
    %v1996 = vpack.c.b16 %v1928, %v1924
    %v1997 = vpack.c.b16 %v1933, %v1929
    %v1998 = vpack.c.b16 %v1934, %v1930
    %v1999 = vpack.c.b16 %v1935, %v1931
    %v2000 = vpack.c.b16 %v1936, %v1932
    %2065 = vmatprep.subr.bf16.mxu0 %v1938
    %2066 = vmatpush1.bf16.msra.mxu0 %v1937
    %2067 = vmatprep.subr.bf16.mxu0 %v1942
    %2068 = vmatpush1.bf16.msra.mxu0 %v1941
    %2069 = vmatprep.subr.bf16.mxu0 %v1946
    %2070 = vmatpush1.bf16.msra.mxu0 %v1945
    %2071 = vmatprep.subr.bf16.mxu0 %v1950
    %2072 = vmatpush1.bf16.msra.mxu0 %v1949
    %2073 = vmatprep.subr.bf16.mxu0 %v1954
    %2074 = vmatpush1.bf16.msra.mxu0 %v1953
    %2075 = vmatprep.subr.bf16.mxu0 %v1958
    %2076 = vmatpush1.bf16.msra.mxu0 %v1957
    %2077 = vmatprep.subr.bf16.mxu0 %v1962
    %2078 = vmatpush1.bf16.msra.mxu0 %v1961
    %2079 = vmatprep.subr.bf16.mxu0 %v1966
    %2080 = vmatpush1.bf16.msra.mxu0 %v1965
    %2081 = vmatprep.subr.bf16.mxu0 %v1970
    %2082 = vmatpush1.bf16.msra.mxu0 %v1969
    %2083 = vmatprep.subr.bf16.mxu0 %v1974
    %2084 = vmatpush1.bf16.msra.mxu0 %v1973
    %2085 = vmatprep.subr.bf16.mxu0 %v1978
    %2086 = vmatpush1.bf16.msra.mxu0 %v1977
    %2087 = vmatprep.subr.bf16.mxu0 %v1982
    %2088 = vmatpush1.bf16.msra.mxu0 %v1981
    %2089 = vmatprep.subr.bf16.mxu0 %v1986
    %2090 = vmatpush1.bf16.msra.mxu0 %v1985
    %2091 = vmatprep.subr.bf16.mxu0 %v1990
    %2092 = vmatpush1.bf16.msra.mxu0 %v1989
    %2093 = vmatprep.subr.bf16.mxu0 %v1994
    %2094 = vmatpush1.bf16.msra.mxu0 %v1993
    %2095 = vmatprep.subr.bf16.mxu0 %v1998
    %2096 = vmatpush1.bf16.msra.mxu0 %v1997
    %2097 = vmatprep.mubr.bf16.mxu0 %v1680
    %2098 = vmatmul.mubr.bf16.gmra.mrb[0].mxu0 %v1679
    %v2099 = vpop.f32.mrb[0].mxu0
    %v2100 = vadd.f32 %v551, %v2099
    %v2101 = vpop.f32.mrb[0].mxu0
    %v2102 = vadd.f32 %v555, %v2101
    %v2103 = vpop.f32.mrb[0].mxu0
    %v2104 = vpop.f32.mrb[0].mxu0
    %2105 = vdwg.mxu0
    %2106 = vmatprep.subr.bf16.mxu0 %v1940
    %2107 = vmatpush1.bf16.msra.mxu0 %v1939
    %2108 = vmatprep.subr.bf16.mxu0 %v1944
    %2109 = vmatpush1.bf16.msra.mxu0 %v1943
    %2110 = vmatprep.subr.bf16.mxu0 %v1948
    %2111 = vmatpush1.bf16.msra.mxu0 %v1947
    %2112 = vmatprep.subr.bf16.mxu0 %v1952
    %2113 = vmatpush1.bf16.msra.mxu0 %v1951
    %2114 = vmatprep.subr.bf16.mxu0 %v1956
    %2115 = vmatpush1.bf16.msra.mxu0 %v1955
    %2116 = vmatprep.subr.bf16.mxu0 %v1960
    %2117 = vmatpush1.bf16.msra.mxu0 %v1959
    %2118 = vmatprep.subr.bf16.mxu0 %v1964
    %2119 = vmatpush1.bf16.msra.mxu0 %v1963
    %2120 = vmatprep.subr.bf16.mxu0 %v1968
    %2121 = vmatpush1.bf16.msra.mxu0 %v1967
    %2122 = vmatprep.subr.bf16.mxu0 %v1972
    %2123 = vmatpush1.bf16.msra.mxu0 %v1971
    %2124 = vmatprep.subr.bf16.mxu0 %v1976
    %2125 = vmatpush1.bf16.msra.mxu0 %v1975
    %2126 = vmatprep.subr.bf16.mxu0 %v1980
    %2127 = vmatpush1.bf16.msra.mxu0 %v1979
    %2128 = vmatprep.subr.bf16.mxu0 %v1984
    %2129 = vmatpush1.bf16.msra.mxu0 %v1983
    %2130 = vmatprep.subr.bf16.mxu0 %v1988
    %2131 = vmatpush1.bf16.msra.mxu0 %v1987
    %2132 = vmatprep.subr.bf16.mxu0 %v1992
    %2133 = vmatpush1.bf16.msra.mxu0 %v1991
    %2134 = vmatprep.subr.bf16.mxu0 %v1996
    %2135 = vmatpush1.bf16.msra.mxu0 %v1995
    %2136 = vmatprep.subr.bf16.mxu0 %v2000
    %2137 = vmatpush1.bf16.msra.mxu0 %v1999
    %2138 = vmatprep.mubr.bf16.mxu0 %v1680
    %2139 = vmatmul.mubr.bf16.gmra.mrb[0].mxu0 %v1679
    %v2140 = vpop.f32.mrb[0].mxu0
    %v2141 = vadd.f32 %v559, %v2140
    %v2142 = vpop.f32.mrb[0].mxu0
    %v2143 = vadd.f32 %v563, %v2142
    %v2144 = vpop.f32.mrb[0].mxu0
    %v2145 = vpop.f32.mrb[0].mxu0
    %2146 = vdwg.mxu0
    %v2147 = vxor.u32 %v2100, 2147483648
    %v2148 = vmul.f32 %v2147, 1.442695
    %v2149 = vpow.pop %v2148
    %v2150 = vadd.f32 %v2149, 1.0
    %v2151 = vrcp.pop %v2150
    %v2152 = vmul.f32 1.0, %v2151
    %v2153 = vxor.u32 %v2102, 2147483648
    %v2154 = vmul.f32 %v2153, 1.442695
    %v2155 = vpow.pop %v2154
    %v2156 = vadd.f32 %v2155, 1.0
    %v2157 = vrcp.pop %v2156
    %v2158 = vmul.f32 1.0, %v2157
    %v2159 = vtanh.pop %v2141
    %v2160 = vxor.u32 %v2143, 2147483648
    %v2161 = vmul.f32 %v2160, 1.442695
    %v2162 = vpow.pop %v2161
    %v2163 = vadd.f32 %v2162, 1.0
    %v2164 = vrcp.pop %v2163
    %v2165 = vmul.f32 1.0, %v2164
    %v2166 = vmul.f32 %v2158, %v1366
    %v2167 = vmul.f32 %v2152, %v2159
    %v2168 = vadd.f32 %v2166, %v2167
    %v2169 = vtanh.pop %v2168
    %v2170 = vmul.f32 %v2165, %v2169
    %s2171 = scalar_lea.vmem [#allocation3], 8
    %2172 = vst [vmem:[%s2171] sm:$0xff] %v2170
    %s2173 = smul.u32 2, 4
    %s2174 = smul.addr %s2173, 8
    %s2175 = scalar_lea.vmem [#allocation2], %s2174
    %v2176 = vld [vmem:[%s2175] sm:$0xff]
    %v2177 = vld [vmem:[%s2175 + $0x8] sm:$0xff]
    %v2178 = vld [vmem:[%s2175 + $0x10] sm:$0xff]
    %v2179 = vld [vmem:[%s2175 + $0x18] sm:$0xff]
    %v2180 = vld [vmem:[#allocation9] sm:$0xff]
    %v2181 = vld [vmem:[#allocation9 + $0x8] sm:$0xff]
    %v2182 = vld [vmem:[#allocation9 + $0x10] sm:$0xff]
    %v2183 = vld [vmem:[#allocation9 + $0x18] sm:$0xff]
    %v2184 = vld [vmem:[#allocation9 + $0x20] sm:$0xff]
    %v2185 = vld [vmem:[#allocation9 + $0x28] sm:$0xff]
    %v2186 = vld [vmem:[#allocation9 + $0x30] sm:$0xff]
    %v2187 = vld [vmem:[#allocation9 + $0x38] sm:$0xff]
    %v2188 = vld [vmem:[#allocation9 + $0x40] sm:$0xff]
    %v2189 = vld [vmem:[#allocation9 + $0x48] sm:$0xff]
    %v2190 = vld [vmem:[#allocation9 + $0x50] sm:$0xff]
    %v2191 = vld [vmem:[#allocation9 + $0x58] sm:$0xff]
    %v2192 = vld [vmem:[#allocation9 + $0x60] sm:$0xff]
    %v2193 = vld [vmem:[#allocation9 + $0x68] sm:$0xff]
    %v2194 = vld [vmem:[#allocation9 + $0x70] sm:$0xff]
    %v2195 = vld [vmem:[#allocation9 + $0x78] sm:$0xff]
    %v2196 = vld [vmem:[#allocation9 + $0x80] sm:$0xff]
    %v2197 = vld [vmem:[#allocation9 + $0x88] sm:$0xff]
    %v2198 = vld [vmem:[#allocation9 + $0x90] sm:$0xff]
    %v2199 = vld [vmem:[#allocation9 + $0x98] sm:$0xff]
    %v2200 = vld [vmem:[#allocation9 + $0xa0] sm:$0xff]
    %v2201 = vld [vmem:[#allocation9 + $0xa8] sm:$0xff]
    %v2202 = vld [vmem:[#allocation9 + $0xb0] sm:$0xff]
    %v2203 = vld [vmem:[#allocation9 + $0xb8] sm:$0xff]
    %v2204 = vld [vmem:[#allocation9 + $0xc0] sm:$0xff]
    %v2205 = vld [vmem:[#allocation9 + $0xc8] sm:$0xff]
    %v2206 = vld [vmem:[#allocation9 + $0xd0] sm:$0xff]
    %v2207 = vld [vmem:[#allocation9 + $0xd8] sm:$0xff]
    %v2208 = vld [vmem:[#allocation9 + $0xe0] sm:$0xff]
    %v2209 = vld [vmem:[#allocation9 + $0xe8] sm:$0xff]
    %v2210 = vld [vmem:[#allocation9 + $0xf0] sm:$0xff]
    %v2211 = vld [vmem:[#allocation9 + $0xf8] sm:$0xff]
    %v2244 = vunpack.c.l.b16 %v2180
    %v2245 = vunpack.c.h.b16 %v2180
    %v2246 = vunpack.c.l.b16 %v2181
    %v2247 = vunpack.c.h.b16 %v2181
    %v2248 = vunpack.c.l.b16 %v2182
    %v2249 = vunpack.c.h.b16 %v2182
    %v2250 = vunpack.c.l.b16 %v2183
    %v2251 = vunpack.c.h.b16 %v2183
    %v2252 = vunpack.c.l.b16 %v2184
    %v2253 = vunpack.c.h.b16 %v2184
    %v2254 = vunpack.c.l.b16 %v2185
    %v2255 = vunpack.c.h.b16 %v2185
    %v2256 = vunpack.c.l.b16 %v2186
    %v2257 = vunpack.c.h.b16 %v2186
    %v2258 = vunpack.c.l.b16 %v2187
    %v2259 = vunpack.c.h.b16 %v2187
    %v2260 = vunpack.c.l.b16 %v2188
    %v2261 = vunpack.c.h.b16 %v2188
    %v2262 = vunpack.c.l.b16 %v2189
    %v2263 = vunpack.c.h.b16 %v2189
    %v2264 = vunpack.c.l.b16 %v2190
    %v2265 = vunpack.c.h.b16 %v2190
    %v2266 = vunpack.c.l.b16 %v2191
    %v2267 = vunpack.c.h.b16 %v2191
    %v2268 = vunpack.c.l.b16 %v2192
    %v2269 = vunpack.c.h.b16 %v2192
    %v2270 = vunpack.c.l.b16 %v2193
    %v2271 = vunpack.c.h.b16 %v2193
    %v2272 = vunpack.c.l.b16 %v2194
    %v2273 = vunpack.c.h.b16 %v2194
    %v2274 = vunpack.c.l.b16 %v2195
    %v2275 = vunpack.c.h.b16 %v2195
    %v2276 = vunpack.c.l.b16 %v2196
    %v2277 = vunpack.c.h.b16 %v2196
    %v2278 = vunpack.c.l.b16 %v2197
    %v2279 = vunpack.c.h.b16 %v2197
    %v2280 = vunpack.c.l.b16 %v2198
    %v2281 = vunpack.c.h.b16 %v2198
    %v2282 = vunpack.c.l.b16 %v2199
    %v2283 = vunpack.c.h.b16 %v2199
    %v2284 = vunpack.c.l.b16 %v2200
    %v2285 = vunpack.c.h.b16 %v2200
    %v2286 = vunpack.c.l.b16 %v2201
    %v2287 = vunpack.c.h.b16 %v2201
    %v2288 = vunpack.c.l.b16 %v2202
    %v2289 = vunpack.c.h.b16 %v2202
    %v2290 = vunpack.c.l.b16 %v2203
    %v2291 = vunpack.c.h.b16 %v2203
    %v2292 = vunpack.c.l.b16 %v2204
    %v2293 = vunpack.c.h.b16 %v2204
    %v2294 = vunpack.c.l.b16 %v2205
    %v2295 = vunpack.c.h.b16 %v2205
    %v2296 = vunpack.c.l.b16 %v2206
    %v2297 = vunpack.c.h.b16 %v2206
    %v2298 = vunpack.c.l.b16 %v2207
    %v2299 = vunpack.c.h.b16 %v2207
    %v2300 = vunpack.c.l.b16 %v2208
    %v2301 = vunpack.c.h.b16 %v2208
    %v2302 = vunpack.c.l.b16 %v2209
    %v2303 = vunpack.c.h.b16 %v2209
    %v2304 = vunpack.c.l.b16 %v2210
    %v2305 = vunpack.c.h.b16 %v2210
    %v2306 = vunpack.c.l.b16 %v2211
    %v2307 = vunpack.c.h.b16 %v2211
    %v2308 = vpack.c.b16 %v2248, %v2244
    %v2309 = vpack.c.b16 %v2249, %v2245
    %v2310 = vpack.c.b16 %v2250, %v2246
    %v2311 = vpack.c.b16 %v2251, %v2247
    %v2312 = vpack.c.b16 %v2256, %v2252
    %v2313 = vpack.c.b16 %v2257, %v2253
    %v2314 = vpack.c.b16 %v2258, %v2254
    %v2315 = vpack.c.b16 %v2259, %v2255
    %v2316 = vpack.c.b16 %v2264, %v2260
    %v2317 = vpack.c.b16 %v2265, %v2261
    %v2318 = vpack.c.b16 %v2266, %v2262
    %v2319 = vpack.c.b16 %v2267, %v2263
    %v2320 = vpack.c.b16 %v2272, %v2268
    %v2321 = vpack.c.b16 %v2273, %v2269
    %v2322 = vpack.c.b16 %v2274, %v2270
    %v2323 = vpack.c.b16 %v2275, %v2271
    %v2324 = vpack.c.b16 %v2280, %v2276
    %v2325 = vpack.c.b16 %v2281, %v2277
    %v2326 = vpack.c.b16 %v2282, %v2278
    %v2327 = vpack.c.b16 %v2283, %v2279
    %v2328 = vpack.c.b16 %v2288, %v2284
    %v2329 = vpack.c.b16 %v2289, %v2285
    %v2330 = vpack.c.b16 %v2290, %v2286
    %v2331 = vpack.c.b16 %v2291, %v2287
    %v2332 = vpack.c.b16 %v2296, %v2292
    %v2333 = vpack.c.b16 %v2297, %v2293
    %v2334 = vpack.c.b16 %v2298, %v2294
    %v2335 = vpack.c.b16 %v2299, %v2295
    %v2336 = vpack.c.b16 %v2304, %v2300
    %v2337 = vpack.c.b16 %v2305, %v2301
    %v2338 = vpack.c.b16 %v2306, %v2302
    %v2339 = vpack.c.b16 %v2307, %v2303
    %2372 = vmatprep.subr.bf16.mxu0 %v2309
    %2373 = vmatpush1.bf16.msra.mxu0 %v2308
    %2374 = vmatprep.subr.bf16.mxu0 %v2313
    %2375 = vmatpush1.bf16.msra.mxu0 %v2312
    %2376 = vmatprep.subr.bf16.mxu0 %v2317
    %2377 = vmatpush1.bf16.msra.mxu0 %v2316
    %2378 = vmatprep.subr.bf16.mxu0 %v2321
    %2379 = vmatpush1.bf16.msra.mxu0 %v2320
    %2380 = vmatprep.subr.bf16.mxu0 %v2325
    %2381 = vmatpush1.bf16.msra.mxu0 %v2324
    %2382 = vmatprep.subr.bf16.mxu0 %v2329
    %2383 = vmatpush1.bf16.msra.mxu0 %v2328
    %2384 = vmatprep.subr.bf16.mxu0 %v2333
    %2385 = vmatpush1.bf16.msra.mxu0 %v2332
    %2386 = vmatprep.subr.bf16.mxu0 %v2337
    %2387 = vmatpush1.bf16.msra.mxu0 %v2336
    %2388 = vmatprep.subr.bf16.mxu0 0
    %2389 = vmatpush1.bf16.msra.mxu0 0
    %2390 = vmatprep.subr.bf16.mxu0 0
    %2391 = vmatpush1.bf16.msra.mxu0 0
    %2392 = vmatprep.subr.bf16.mxu0 0
    %2393 = vmatpush1.bf16.msra.mxu0 0
    %2394 = vmatprep.subr.bf16.mxu0 0
    %2395 = vmatpush1.bf16.msra.mxu0 0
    %2396 = vmatprep.subr.bf16.mxu0 0
    %2397 = vmatpush1.bf16.msra.mxu0 0
    %2398 = vmatprep.subr.bf16.mxu0 0
    %2399 = vmatpush1.bf16.msra.mxu0 0
    %2400 = vmatprep.subr.bf16.mxu0 0
    %2401 = vmatpush1.bf16.msra.mxu0 0
    %2402 = vmatprep.subr.bf16.mxu0 0
    %2403 = vmatpush1.bf16.msra.mxu0 0
    %2404 = vmatprep.mubr.bf16.mxu0 0
    %2405 = vmatmul.mubr.bf16.gmra.mrb[0].mxu0 %v1679
    %v2406 = vpop.f32.mrb[0].mxu0
    %v2407 = vadd.f32 0.0, %v2406
    %v2408 = vpop.f32.mrb[0].mxu0
    %v2409 = vadd.f32 0.0, %v2408
    %v2410 = vpop.f32.mrb[0].mxu0
    %v2411 = vpop.f32.mrb[0].mxu0
    %2412 = vdwg.mxu0
    %2413 = vmatprep.subr.bf16.mxu0 %v2311
    %2414 = vmatpush1.bf16.msra.mxu0 %v2310
    %2415 = vmatprep.subr.bf16.mxu0 %v2315
    %2416 = vmatpush1.bf16.msra.mxu0 %v2314
    %2417 = vmatprep.subr.bf16.mxu0 %v2319
    %2418 = vmatpush1.bf16.msra.mxu0 %v2318
    %2419 = vmatprep.subr.bf16.mxu0 %v2323
    %2420 = vmatpush1.bf16.msra.mxu0 %v2322
    %2421 = vmatprep.subr.bf16.mxu0 %v2327
    %2422 = vmatpush1.bf16.msra.mxu0 %v2326
    %2423 = vmatprep.subr.bf16.mxu0 %v2331
    %2424 = vmatpush1.bf16.msra.mxu0 %v2330
    %2425 = vmatprep.subr.bf16.mxu0 %v2335
    %2426 = vmatpush1.bf16.msra.mxu0 %v2334
    %2427 = vmatprep.subr.bf16.mxu0 %v2339
    %2428 = vmatpush1.bf16.msra.mxu0 %v2338
    %2429 = vmatprep.subr.bf16.mxu0 0
    %2430 = vmatpush1.bf16.msra.mxu0 0
    %2431 = vmatprep.subr.bf16.mxu0 0
    %2432 = vmatpush1.bf16.msra.mxu0 0
    %2433 = vmatprep.subr.bf16.mxu0 0
    %2434 = vmatpush1.bf16.msra.mxu0 0
    %2435 = vmatprep.subr.bf16.mxu0 0
    %2436 = vmatpush1.bf16.msra.mxu0 0
    %2437 = vmatprep.subr.bf16.mxu0 0
    %2438 = vmatpush1.bf16.msra.mxu0 0
    %2439 = vmatprep.subr.bf16.mxu0 0
    %2440 = vmatpush1.bf16.msra.mxu0 0
    %2441 = vmatprep.subr.bf16.mxu0 0
    %2442 = vmatpush1.bf16.msra.mxu0 0
    %2443 = vmatprep.subr.bf16.mxu0 0
    %2444 = vmatpush1.bf16.msra.mxu0 0
    %2445 = vmatprep.mubr.bf16.mxu0 0
    %2446 = vmatmul.mubr.bf16.gmra.mrb[0].mxu0 %v1679
    %v2447 = vpop.f32.mrb[0].mxu0
    %v2448 = vadd.f32 0.0, %v2447
    %v2449 = vpop.f32.mrb[0].mxu0
    %v2450 = vadd.f32 0.0, %v2449
    %v2451 = vpop.f32.mrb[0].mxu0
    %v2452 = vpop.f32.mrb[0].mxu0
    %2453 = vdwg.mxu0
    %v2454 = vadd.f32 %v2176, %v2407
    %v2455 = vadd.f32 %v2177, %v2409
    %v2456 = vadd.f32 %v2178, %v2448
    %v2457 = vadd.f32 %v2179, %v2450
    %v2458 = vxor.u32 %v2454, 2147483648
    %v2459 = vmul.f32 %v2458, 1.442695
    %v2460 = vpow.pop %v2459
    %v2461 = vadd.f32 %v2460, 1.0
    %v2462 = vrcp.pop %v2461
    %v2463 = vmul.f32 1.0, %v2462
    %v2464 = vxor.u32 %v2455, 2147483648
    %v2465 = vmul.f32 %v2464, 1.442695
    %v2466 = vpow.pop %v2465
    %v2467 = vadd.f32 %v2466, 1.0
    %v2468 = vrcp.pop %v2467
    %v2469 = vmul.f32 1.0, %v2468
    %v2470 = vtanh.pop %v2456
    %v2471 = vxor.u32 %v2457, 2147483648
    %v2472 = vmul.f32 %v2471, 1.442695
    %v2473 = vpow.pop %v2472
    %v2474 = vadd.f32 %v2473, 1.0
    %v2475 = vrcp.pop %v2474
    %v2476 = vmul.f32 1.0, %v2475
    %v2477 = vmul.f32 %v2469, %v1676
    %v2478 = vmul.f32 %v2463, %v2470
    %v2479 = vadd.f32 %v2477, %v2478
    %v2480 = vtanh.pop %v2479
    %v2481 = vmul.f32 %v2476, %v2480
    %v2482 = vpack.c.bf16 %v2481, %v2481
    %v2483 = vpack.c.bf16 %v2170, %v2170
    %v2484 = vld [vmem:[#allocation10] sm:$0xff]
    %v2485 = vld [vmem:[#allocation10 + $0x8] sm:$0xff]
    %v2486 = vld [vmem:[#allocation10 + $0x10] sm:$0xff]
    %v2487 = vld [vmem:[#allocation10 + $0x18] sm:$0xff]
    %v2488 = vld [vmem:[#allocation10 + $0x20] sm:$0xff]
    %v2489 = vld [vmem:[#allocation10 + $0x28] sm:$0xff]
    %v2490 = vld [vmem:[#allocation10 + $0x30] sm:$0xff]
    %v2491 = vld [vmem:[#allocation10 + $0x38] sm:$0xff]
    %v2492 = vld [vmem:[#allocation10 + $0x40] sm:$0xff]
    %v2493 = vld [vmem:[#allocation10 + $0x48] sm:$0xff]
    %v2494 = vld [vmem:[#allocation10 + $0x50] sm:$0xff]
    %v2495 = vld [vmem:[#allocation10 + $0x58] sm:$0xff]
    %v2496 = vld [vmem:[#allocation10 + $0x60] sm:$0xff]
    %v2497 = vld [vmem:[#allocation10 + $0x68] sm:$0xff]
    %v2498 = vld [vmem:[#allocation10 + $0x70] sm:$0xff]
    %v2499 = vld [vmem:[#allocation10 + $0x78] sm:$0xff]
    %v2500 = vld [vmem:[#allocation10 + $0x80] sm:$0xff]
    %v2501 = vld [vmem:[#allocation10 + $0x88] sm:$0xff]
    %v2502 = vld [vmem:[#allocation10 + $0x90] sm:$0xff]
    %v2503 = vld [vmem:[#allocation10 + $0x98] sm:$0xff]
    %v2504 = vld [vmem:[#allocation10 + $0xa0] sm:$0xff]
    %v2505 = vld [vmem:[#allocation10 + $0xa8] sm:$0xff]
    %v2506 = vld [vmem:[#allocation10 + $0xb0] sm:$0xff]
    %v2507 = vld [vmem:[#allocation10 + $0xb8] sm:$0xff]
    %v2508 = vld [vmem:[#allocation10 + $0xc0] sm:$0xff]
    %v2509 = vld [vmem:[#allocation10 + $0xc8] sm:$0xff]
    %v2510 = vld [vmem:[#allocation10 + $0xd0] sm:$0xff]
    %v2511 = vld [vmem:[#allocation10 + $0xd8] sm:$0xff]
    %v2512 = vld [vmem:[#allocation10 + $0xe0] sm:$0xff]
    %v2513 = vld [vmem:[#allocation10 + $0xe8] sm:$0xff]
    %v2514 = vld [vmem:[#allocation10 + $0xf0] sm:$0xff]
    %v2515 = vld [vmem:[#allocation10 + $0xf8] sm:$0xff]
    %v2516 = vld [vmem:[#allocation10 + $0x100] sm:$0xff]
    %v2517 = vld [vmem:[#allocation10 + $0x108] sm:$0xff]
    %v2518 = vld [vmem:[#allocation10 + $0x110] sm:$0xff]
    %v2519 = vld [vmem:[#allocation10 + $0x118] sm:$0xff]
    %v2520 = vld [vmem:[#allocation10 + $0x120] sm:$0xff]
    %v2521 = vld [vmem:[#allocation10 + $0x128] sm:$0xff]
    %v2522 = vld [vmem:[#allocation10 + $0x130] sm:$0xff]
    %v2523 = vld [vmem:[#allocation10 + $0x138] sm:$0xff]
    %v2524 = vld [vmem:[#allocation10 + $0x140] sm:$0xff]
    %v2525 = vld [vmem:[#allocation10 + $0x148] sm:$0xff]
    %v2526 = vld [vmem:[#allocation10 + $0x150] sm:$0xff]
    %v2527 = vld [vmem:[#allocation10 + $0x158] sm:$0xff]
    %v2528 = vld [vmem:[#allocation10 + $0x160] sm:$0xff]
    %v2529 = vld [vmem:[#allocation10 + $0x168] sm:$0xff]
    %v2530 = vld [vmem:[#allocation10 + $0x170] sm:$0xff]
    %v2531 = vld [vmem:[#allocation10 + $0x178] sm:$0xff]
    %v2532 = vld [vmem:[#allocation10 + $0x180] sm:$0xff]
    %v2533 = vld [vmem:[#allocation10 + $0x188] sm:$0xff]
    %v2534 = vld [vmem:[#allocation10 + $0x190] sm:$0xff]
    %v2535 = vld [vmem:[#allocation10 + $0x198] sm:$0xff]
    %v2536 = vld [vmem:[#allocation10 + $0x1a0] sm:$0xff]
    %v2537 = vld [vmem:[#allocation10 + $0x1a8] sm:$0xff]
    %v2538 = vld [vmem:[#allocation10 + $0x1b0] sm:$0xff]
    %v2539 = vld [vmem:[#allocation10 + $0x1b8] sm:$0xff]
    %v2540 = vld [vmem:[#allocation10 + $0x1c0] sm:$0xff]
    %v2541 = vld [vmem:[#allocation10 + $0x1c8] sm:$0xff]
    %v2542 = vld [vmem:[#allocation10 + $0x1d0] sm:$0xff]
    %v2543 = vld [vmem:[#allocation10 + $0x1d8] sm:$0xff]
    %v2544 = vld [vmem:[#allocation10 + $0x1e0] sm:$0xff]
    %v2545 = vld [vmem:[#allocation10 + $0x1e8] sm:$0xff]
    %v2546 = vld [vmem:[#allocation10 + $0x1f0] sm:$0xff]
    %v2547 = vld [vmem:[#allocation10 + $0x1f8] sm:$0xff]
    %v2612 = vunpack.c.l.b16 %v2484
    %v2613 = vunpack.c.h.b16 %v2484
    %v2614 = vunpack.c.l.b16 %v2485
    %v2615 = vunpack.c.h.b16 %v2485
    %v2616 = vunpack.c.l.b16 %v2486
    %v2617 = vunpack.c.h.b16 %v2486
    %v2618 = vunpack.c.l.b16 %v2487
    %v2619 = vunpack.c.h.b16 %v2487
    %v2620 = vunpack.c.l.b16 %v2488
    %v2621 = vunpack.c.h.b16 %v2488
    %v2622 = vunpack.c.l.b16 %v2489
    %v2623 = vunpack.c.h.b16 %v2489
    %v2624 = vunpack.c.l.b16 %v2490
    %v2625 = vunpack.c.h.b16 %v2490
    %v2626 = vunpack.c.l.b16 %v2491
    %v2627 = vunpack.c.h.b16 %v2491
    %v2628 = vunpack.c.l.b16 %v2492
    %v2629 = vunpack.c.h.b16 %v2492
    %v2630 = vunpack.c.l.b16 %v2493
    %v2631 = vunpack.c.h.b16 %v2493
    %v2632 = vunpack.c.l.b16 %v2494
    %v2633 = vunpack.c.h.b16 %v2494
    %v2634 = vunpack.c.l.b16 %v2495
    %v2635 = vunpack.c.h.b16 %v2495
    %v2636 = vunpack.c.l.b16 %v2496
    %v2637 = vunpack.c.h.b16 %v2496
    %v2638 = vunpack.c.l.b16 %v2497
    %v2639 = vunpack.c.h.b16 %v2497
    %v2640 = vunpack.c.l.b16 %v2498
    %v2641 = vunpack.c.h.b16 %v2498
    %v2642 = vunpack.c.l.b16 %v2499
    %v2643 = vunpack.c.h.b16 %v2499
    %v2644 = vunpack.c.l.b16 %v2500
    %v2645 = vunpack.c.h.b16 %v2500
    %v2646 = vunpack.c.l.b16 %v2501
    %v2647 = vunpack.c.h.b16 %v2501
    %v2648 = vunpack.c.l.b16 %v2502
    %v2649 = vunpack.c.h.b16 %v2502
    %v2650 = vunpack.c.l.b16 %v2503
    %v2651 = vunpack.c.h.b16 %v2503
    %v2652 = vunpack.c.l.b16 %v2504
    %v2653 = vunpack.c.h.b16 %v2504
    %v2654 = vunpack.c.l.b16 %v2505
    %v2655 = vunpack.c.h.b16 %v2505
    %v2656 = vunpack.c.l.b16 %v2506
    %v2657 = vunpack.c.h.b16 %v2506
    %v2658 = vunpack.c.l.b16 %v2507
    %v2659 = vunpack.c.h.b16 %v2507
    %v2660 = vunpack.c.l.b16 %v2508
    %v2661 = vunpack.c.h.b16 %v2508
    %v2662 = vunpack.c.l.b16 %v2509
    %v2663 = vunpack.c.h.b16 %v2509
    %v2664 = vunpack.c.l.b16 %v2510
    %v2665 = vunpack.c.h.b16 %v2510
    %v2666 = vunpack.c.l.b16 %v2511
    %v2667 = vunpack.c.h.b16 %v2511
    %v2668 = vunpack.c.l.b16 %v2512
    %v2669 = vunpack.c.h.b16 %v2512
    %v2670 = vunpack.c.l.b16 %v2513
    %v2671 = vunpack.c.h.b16 %v2513
    %v2672 = vunpack.c.l.b16 %v2514
    %v2673 = vunpack.c.h.b16 %v2514
    %v2674 = vunpack.c.l.b16 %v2515
    %v2675 = vunpack.c.h.b16 %v2515
    %v2676 = vunpack.c.l.b16 %v2516
    %v2677 = vunpack.c.h.b16 %v2516
    %v2678 = vunpack.c.l.b16 %v2517
    %v2679 = vunpack.c.h.b16 %v2517
    %v2680 = vunpack.c.l.b16 %v2518
    %v2681 = vunpack.c.h.b16 %v2518
    %v2682 = vunpack.c.l.b16 %v2519
    %v2683 = vunpack.c.h.b16 %v2519
    %v2684 = vunpack.c.l.b16 %v2520
    %v2685 = vunpack.c.h.b16 %v2520
    %v2686 = vunpack.c.l.b16 %v2521
    %v2687 = vunpack.c.h.b16 %v2521
    %v2688 = vunpack.c.l.b16 %v2522
    %v2689 = vunpack.c.h.b16 %v2522
    %v2690 = vunpack.c.l.b16 %v2523
    %v2691 = vunpack.c.h.b16 %v2523
    %v2692 = vunpack.c.l.b16 %v2524
    %v2693 = vunpack.c.h.b16 %v2524
    %v2694 = vunpack.c.l.b16 %v2525
    %v2695 = vunpack.c.h.b16 %v2525
    %v2696 = vunpack.c.l.b16 %v2526
    %v2697 = vunpack.c.h.b16 %v2526
    %v2698 = vunpack.c.l.b16 %v2527
    %v2699 = vunpack.c.h.b16 %v2527
    %v2700 = vunpack.c.l.b16 %v2528
    %v2701 = vunpack.c.h.b16 %v2528
    %v2702 = vunpack.c.l.b16 %v2529
    %v2703 = vunpack.c.h.b16 %v2529
    %v2704 = vunpack.c.l.b16 %v2530
    %v2705 = vunpack.c.h.b16 %v2530
    %v2706 = vunpack.c.l.b16 %v2531
    %v2707 = vunpack.c.h.b16 %v2531
    %v2708 = vunpack.c.l.b16 %v2532
    %v2709 = vunpack.c.h.b16 %v2532
    %v2710 = vunpack.c.l.b16 %v2533
    %v2711 = vunpack.c.h.b16 %v2533
    %v2712 = vunpack.c.l.b16 %v2534
    %v2713 = vunpack.c.h.b16 %v2534
    %v2714 = vunpack.c.l.b16 %v2535
    %v2715 = vunpack.c.h.b16 %v2535
    %v2716 = vunpack.c.l.b16 %v2536
    %v2717 = vunpack.c.h.b16 %v2536
    %v2718 = vunpack.c.l.b16 %v2537
    %v2719 = vunpack.c.h.b16 %v2537
    %v2720 = vunpack.c.l.b16 %v2538
    %v2721 = vunpack.c.h.b16 %v2538
    %v2722 = vunpack.c.l.b16 %v2539
    %v2723 = vunpack.c.h.b16 %v2539
    %v2724 = vunpack.c.l.b16 %v2540
    %v2725 = vunpack.c.h.b16 %v2540
    %v2726 = vunpack.c.l.b16 %v2541
    %v2727 = vunpack.c.h.b16 %v2541
    %v2728 = vunpack.c.l.b16 %v2542
    %v2729 = vunpack.c.h.b16 %v2542
    %v2730 = vunpack.c.l.b16 %v2543
    %v2731 = vunpack.c.h.b16 %v2543
    %v2732 = vunpack.c.l.b16 %v2544
    %v2733 = vunpack.c.h.b16 %v2544
    %v2734 = vunpack.c.l.b16 %v2545
    %v2735 = vunpack.c.h.b16 %v2545
    %v2736 = vunpack.c.l.b16 %v2546
    %v2737 = vunpack.c.h.b16 %v2546
    %v2738 = vunpack.c.l.b16 %v2547
    %v2739 = vunpack.c.h.b16 %v2547
    %v2740 = vpack.c.b16 %v2616, %v2612
    %v2741 = vpack.c.b16 %v2617, %v2613
    %v2742 = vpack.c.b16 %v2618, %v2614
    %v2743 = vpack.c.b16 %v2619, %v2615
    %v2744 = vpack.c.b16 %v2624, %v2620
    %v2745 = vpack.c.b16 %v2625, %v2621
    %v2746 = vpack.c.b16 %v2626, %v2622
    %v2747 = vpack.c.b16 %v2627, %v2623
    %v2748 = vpack.c.b16 %v2632, %v2628
    %v2749 = vpack.c.b16 %v2633, %v2629
    %v2750 = vpack.c.b16 %v2634, %v2630
    %v2751 = vpack.c.b16 %v2635, %v2631
    %v2752 = vpack.c.b16 %v2640, %v2636
    %v2753 = vpack.c.b16 %v2641, %v2637
    %v2754 = vpack.c.b16 %v2642, %v2638
    %v2755 = vpack.c.b16 %v2643, %v2639
    %v2756 = vpack.c.b16 %v2648, %v2644
    %v2757 = vpack.c.b16 %v2649, %v2645
    %v2758 = vpack.c.b16 %v2650, %v2646
    %v2759 = vpack.c.b16 %v2651, %v2647
    %v2760 = vpack.c.b16 %v2656, %v2652
    %v2761 = vpack.c.b16 %v2657, %v2653
    %v2762 = vpack.c.b16 %v2658, %v2654
    %v2763 = vpack.c.b16 %v2659, %v2655
    %v2764 = vpack.c.b16 %v2664, %v2660
    %v2765 = vpack.c.b16 %v2665, %v2661
    %v2766 = vpack.c.b16 %v2666, %v2662
    %v2767 = vpack.c.b16 %v2667, %v2663
    %v2768 = vpack.c.b16 %v2672, %v2668
    %v2769 = vpack.c.b16 %v2673, %v2669
    %v2770 = vpack.c.b16 %v2674, %v2670
    %v2771 = vpack.c.b16 %v2675, %v2671
    %v2772 = vpack.c.b16 %v2680, %v2676
    %v2773 = vpack.c.b16 %v2681, %v2677
    %v2774 = vpack.c.b16 %v2682, %v2678
    %v2775 = vpack.c.b16 %v2683, %v2679
    %v2776 = vpack.c.b16 %v2688, %v2684
    %v2777 = vpack.c.b16 %v2689, %v2685
    %v2778 = vpack.c.b16 %v2690, %v2686
    %v2779 = vpack.c.b16 %v2691, %v2687
    %v2780 = vpack.c.b16 %v2696, %v2692
    %v2781 = vpack.c.b16 %v2697, %v2693
    %v2782 = vpack.c.b16 %v2698, %v2694
    %v2783 = vpack.c.b16 %v2699, %v2695
    %v2784 = vpack.c.b16 %v2704, %v2700
    %v2785 = vpack.c.b16 %v2705, %v2701
    %v2786 = vpack.c.b16 %v2706, %v2702
    %v2787 = vpack.c.b16 %v2707, %v2703
    %v2788 = vpack.c.b16 %v2712, %v2708
    %v2789 = vpack.c.b16 %v2713, %v2709
    %v2790 = vpack.c.b16 %v2714, %v2710
    %v2791 = vpack.c.b16 %v2715, %v2711
    %v2792 = vpack.c.b16 %v2720, %v2716
    %v2793 = vpack.c.b16 %v2721, %v2717
    %v2794 = vpack.c.b16 %v2722, %v2718
    %v2795 = vpack.c.b16 %v2723, %v2719
    %v2796 = vpack.c.b16 %v2728, %v2724
    %v2797 = vpack.c.b16 %v2729, %v2725
    %v2798 = vpack.c.b16 %v2730, %v2726
    %v2799 = vpack.c.b16 %v2731, %v2727
    %v2800 = vpack.c.b16 %v2736, %v2732
    %v2801 = vpack.c.b16 %v2737, %v2733
    %v2802 = vpack.c.b16 %v2738, %v2734
    %v2803 = vpack.c.b16 %v2739, %v2735
    %2868 = vmatprep.subr.bf16.mxu0 %v2741
    %2869 = vmatpush1.bf16.msra.mxu0 %v2740
    %2870 = vmatprep.subr.bf16.mxu0 %v2745
    %2871 = vmatpush1.bf16.msra.mxu0 %v2744
    %2872 = vmatprep.subr.bf16.mxu0 %v2749
    %2873 = vmatpush1.bf16.msra.mxu0 %v2748
    %2874 = vmatprep.subr.bf16.mxu0 %v2753
    %2875 = vmatpush1.bf16.msra.mxu0 %v2752
    %2876 = vmatprep.subr.bf16.mxu0 %v2757
    %2877 = vmatpush1.bf16.msra.mxu0 %v2756
    %2878 = vmatprep.subr.bf16.mxu0 %v2761
    %2879 = vmatpush1.bf16.msra.mxu0 %v2760
    %2880 = vmatprep.subr.bf16.mxu0 %v2765
    %2881 = vmatpush1.bf16.msra.mxu0 %v2764
    %2882 = vmatprep.subr.bf16.mxu0 %v2769
    %2883 = vmatpush1.bf16.msra.mxu0 %v2768
    %2884 = vmatprep.subr.bf16.mxu0 %v2773
    %2885 = vmatpush1.bf16.msra.mxu0 %v2772
    %2886 = vmatprep.subr.bf16.mxu0 %v2777
    %2887 = vmatpush1.bf16.msra.mxu0 %v2776
    %2888 = vmatprep.subr.bf16.mxu0 %v2781
    %2889 = vmatpush1.bf16.msra.mxu0 %v2780
    %2890 = vmatprep.subr.bf16.mxu0 %v2785
    %2891 = vmatpush1.bf16.msra.mxu0 %v2784
    %2892 = vmatprep.subr.bf16.mxu0 %v2789
    %2893 = vmatpush1.bf16.msra.mxu0 %v2788
    %2894 = vmatprep.subr.bf16.mxu0 %v2793
    %2895 = vmatpush1.bf16.msra.mxu0 %v2792
    %2896 = vmatprep.subr.bf16.mxu0 %v2797
    %2897 = vmatpush1.bf16.msra.mxu0 %v2796
    %2898 = vmatprep.subr.bf16.mxu0 %v2801
    %2899 = vmatpush1.bf16.msra.mxu0 %v2800
    %2900 = vmatprep.mubr.bf16.mxu0 %v2483
    %2901 = vmatmul.mubr.bf16.gmra.mrb[0].mxu0 %v2482
    %v2902 = vpop.f32.mrb[0].mxu0
    %v2903 = vadd.f32 %v551, %v2902
    %v2904 = vpop.f32.mrb[0].mxu0
    %v2905 = vadd.f32 %v555, %v2904
    %v2906 = vpop.f32.mrb[0].mxu0
    %v2907 = vpop.f32.mrb[0].mxu0
    %2908 = vdwg.mxu0
    %2909 = vmatprep.subr.bf16.mxu0 %v2743
    %2910 = vmatpush1.bf16.msra.mxu0 %v2742
    %2911 = vmatprep.subr.bf16.mxu0 %v2747
    %2912 = vmatpush1.bf16.msra.mxu0 %v2746
    %2913 = vmatprep.subr.bf16.mxu0 %v2751
    %2914 = vmatpush1.bf16.msra.mxu0 %v2750
    %2915 = vmatprep.subr.bf16.mxu0 %v2755
    %2916 = vmatpush1.bf16.msra.mxu0 %v2754
    %2917 = vmatprep.subr.bf16.mxu0 %v2759
    %2918 = vmatpush1.bf16.msra.mxu0 %v2758
    %2919 = vmatprep.subr.bf16.mxu0 %v2763
    %2920 = vmatpush1.bf16.msra.mxu0 %v2762
    %2921 = vmatprep.subr.bf16.mxu0 %v2767
    %2922 = vmatpush1.bf16.msra.mxu0 %v2766
    %2923 = vmatprep.subr.bf16.mxu0 %v2771
    %2924 = vmatpush1.bf16.msra.mxu0 %v2770
    %2925 = vmatprep.subr.bf16.mxu0 %v2775
    %2926 = vmatpush1.bf16.msra.mxu0 %v2774
    %2927 = vmatprep.subr.bf16.mxu0 %v2779
    %2928 = vmatpush1.bf16.msra.mxu0 %v2778
    %2929 = vmatprep.subr.bf16.mxu0 %v2783
    %2930 = vmatpush1.bf16.msra.mxu0 %v2782
    %2931 = vmatprep.subr.bf16.mxu0 %v2787
    %2932 = vmatpush1.bf16.msra.mxu0 %v2786
    %2933 = vmatprep.subr.bf16.mxu0 %v2791
    %2934 = vmatpush1.bf16.msra.mxu0 %v2790
    %2935 = vmatprep.subr.bf16.mxu0 %v2795
    %2936 = vmatpush1.bf16.msra.mxu0 %v2794
    %2937 = vmatprep.subr.bf16.mxu0 %v2799
    %2938 = vmatpush1.bf16.msra.mxu0 %v2798
    %2939 = vmatprep.subr.bf16.mxu0 %v2803
    %2940 = vmatpush1.bf16.msra.mxu0 %v2802
    %2941 = vmatprep.mubr.bf16.mxu0 %v2483
    %2942 = vmatmul.mubr.bf16.gmra.mrb[0].mxu0 %v2482
    %v2943 = vpop.f32.mrb[0].mxu0
    %v2944 = vadd.f32 %v559, %v2943
    %v2945 = vpop.f32.mrb[0].mxu0
    %v2946 = vadd.f32 %v563, %v2945
    %v2947 = vpop.f32.mrb[0].mxu0
    %v2948 = vpop.f32.mrb[0].mxu0
    %2949 = vdwg.mxu0
    %v2950 = vxor.u32 %v2903, 2147483648
    %v2951 = vmul.f32 %v2950, 1.442695
    %v2952 = vpow.pop %v2951
    %v2953 = vadd.f32 %v2952, 1.0
    %v2954 = vrcp.pop %v2953
    %v2955 = vmul.f32 1.0, %v2954
    %v2956 = vxor.u32 %v2905, 2147483648
    %v2957 = vmul.f32 %v2956, 1.442695
    %v2958 = vpow.pop %v2957
    %v2959 = vadd.f32 %v2958, 1.0
    %v2960 = vrcp.pop %v2959
    %v2961 = vmul.f32 1.0, %v2960
    %v2962 = vtanh.pop %v2944
    %v2963 = vxor.u32 %v2946, 2147483648
    %v2964 = vmul.f32 %v2963, 1.442695
    %v2965 = vpow.pop %v2964
    %v2966 = vadd.f32 %v2965, 1.0
    %v2967 = vrcp.pop %v2966
    %v2968 = vmul.f32 1.0, %v2967
    %v2969 = vmul.f32 %v2961, %v2168
    %v2970 = vmul.f32 %v2955, %v2962
    %v2971 = vadd.f32 %v2969, %v2970
    %v2972 = vtanh.pop %v2971
    %v2973 = vmul.f32 %v2968, %v2972
    %s2974 = scalar_lea.vmem [#allocation3], 16
    %2975 = vst [vmem:[%s2974] sm:$0xff] %v2973
    %s2976 = smul.u32 3, 4
    %s2977 = smul.addr %s2976, 8
    %s2978 = scalar_lea.vmem [#allocation2], %s2977
    %v2979 = vld [vmem:[%s2978] sm:$0xff]
    %v2980 = vld [vmem:[%s2978 + $0x8] sm:$0xff]
    %v2981 = vld [vmem:[%s2978 + $0x10] sm:$0xff]
    %v2982 = vld [vmem:[%s2978 + $0x18] sm:$0xff]
    %v2983 = vld [vmem:[#allocation9] sm:$0xff]
    %v2984 = vld [vmem:[#allocation9 + $0x8] sm:$0xff]
    %v2985 = vld [vmem:[#allocation9 + $0x10] sm:$0xff]
    %v2986 = vld [vmem:[#allocation9 + $0x18] sm:$0xff]
    %v2987 = vld [vmem:[#allocation9 + $0x20] sm:$0xff]
    %v2988 = vld [vmem:[#allocation9 + $0x28] sm:$0xff]
    %v2989 = vld [vmem:[#allocation9 + $0x30] sm:$0xff]
    %v2990 = vld [vmem:[#allocation9 + $0x38] sm:$0xff]
    %v2991 = vld [vmem:[#allocation9 + $0x40] sm:$0xff]
    %v2992 = vld [vmem:[#allocation9 + $0x48] sm:$0xff]
    %v2993 = vld [vmem:[#allocation9 + $0x50] sm:$0xff]
    %v2994 = vld [vmem:[#allocation9 + $0x58] sm:$0xff]
    %v2995 = vld [vmem:[#allocation9 + $0x60] sm:$0xff]
    %v2996 = vld [vmem:[#allocation9 + $0x68] sm:$0xff]
    %v2997 = vld [vmem:[#allocation9 + $0x70] sm:$0xff]
    %v2998 = vld [vmem:[#allocation9 + $0x78] sm:$0xff]
    %v2999 = vld [vmem:[#allocation9 + $0x80] sm:$0xff]
    %v3000 = vld [vmem:[#allocation9 + $0x88] sm:$0xff]
    %v3001 = vld [vmem:[#allocation9 + $0x90] sm:$0xff]
    %v3002 = vld [vmem:[#allocation9 + $0x98] sm:$0xff]
    %v3003 = vld [vmem:[#allocation9 + $0xa0] sm:$0xff]
    %v3004 = vld [vmem:[#allocation9 + $0xa8] sm:$0xff]
    %v3005 = vld [vmem:[#allocation9 + $0xb0] sm:$0xff]
    %v3006 = vld [vmem:[#allocation9 + $0xb8] sm:$0xff]
    %v3007 = vld [vmem:[#allocation9 + $0xc0] sm:$0xff]
    %v3008 = vld [vmem:[#allocation9 + $0xc8] sm:$0xff]
    %v3009 = vld [vmem:[#allocation9 + $0xd0] sm:$0xff]
    %v3010 = vld [vmem:[#allocation9 + $0xd8] sm:$0xff]
    %v3011 = vld [vmem:[#allocation9 + $0xe0] sm:$0xff]
    %v3012 = vld [vmem:[#allocation9 + $0xe8] sm:$0xff]
    %v3013 = vld [vmem:[#allocation9 + $0xf0] sm:$0xff]
    %v3014 = vld [vmem:[#allocation9 + $0xf8] sm:$0xff]
    %v3047 = vunpack.c.l.b16 %v2983
    %v3048 = vunpack.c.h.b16 %v2983
    %v3049 = vunpack.c.l.b16 %v2984
    %v3050 = vunpack.c.h.b16 %v2984
    %v3051 = vunpack.c.l.b16 %v2985
    %v3052 = vunpack.c.h.b16 %v2985
    %v3053 = vunpack.c.l.b16 %v2986
    %v3054 = vunpack.c.h.b16 %v2986
    %v3055 = vunpack.c.l.b16 %v2987
    %v3056 = vunpack.c.h.b16 %v2987
    %v3057 = vunpack.c.l.b16 %v2988
    %v3058 = vunpack.c.h.b16 %v2988
    %v3059 = vunpack.c.l.b16 %v2989
    %v3060 = vunpack.c.h.b16 %v2989
    %v3061 = vunpack.c.l.b16 %v2990
    %v3062 = vunpack.c.h.b16 %v2990
    %v3063 = vunpack.c.l.b16 %v2991
    %v3064 = vunpack.c.h.b16 %v2991
    %v3065 = vunpack.c.l.b16 %v2992
    %v3066 = vunpack.c.h.b16 %v2992
    %v3067 = vunpack.c.l.b16 %v2993
    %v3068 = vunpack.c.h.b16 %v2993
    %v3069 = vunpack.c.l.b16 %v2994
    %v3070 = vunpack.c.h.b16 %v2994
    %v3071 = vunpack.c.l.b16 %v2995
    %v3072 = vunpack.c.h.b16 %v2995
    %v3073 = vunpack.c.l.b16 %v2996
    %v3074 = vunpack.c.h.b16 %v2996
    %v3075 = vunpack.c.l.b16 %v2997
    %v3076 = vunpack.c.h.b16 %v2997
    %v3077 = vunpack.c.l.b16 %v2998
    %v3078 = vunpack.c.h.b16 %v2998
    %v3079 = vunpack.c.l.b16 %v2999
    %v3080 = vunpack.c.h.b16 %v2999
    %v3081 = vunpack.c.l.b16 %v3000
    %v3082 = vunpack.c.h.b16 %v3000
    %v3083 = vunpack.c.l.b16 %v3001
    %v3084 = vunpack.c.h.b16 %v3001
    %v3085 = vunpack.c.l.b16 %v3002
    %v3086 = vunpack.c.h.b16 %v3002
    %v3087 = vunpack.c.l.b16 %v3003
    %v3088 = vunpack.c.h.b16 %v3003
    %v3089 = vunpack.c.l.b16 %v3004
    %v3090 = vunpack.c.h.b16 %v3004
    %v3091 = vunpack.c.l.b16 %v3005
    %v3092 = vunpack.c.h.b16 %v3005
    %v3093 = vunpack.c.l.b16 %v3006
    %v3094 = vunpack.c.h.b16 %v3006
    %v3095 = vunpack.c.l.b16 %v3007
    %v3096 = vunpack.c.h.b16 %v3007
    %v3097 = vunpack.c.l.b16 %v3008
    %v3098 = vunpack.c.h.b16 %v3008
    %v3099 = vunpack.c.l.b16 %v3009
    %v3100 = vunpack.c.h.b16 %v3009
    %v3101 = vunpack.c.l.b16 %v3010
    %v3102 = vunpack.c.h.b16 %v3010
    %v3103 = vunpack.c.l.b16 %v3011
    %v3104 = vunpack.c.h.b16 %v3011
    %v3105 = vunpack.c.l.b16 %v3012
    %v3106 = vunpack.c.h.b16 %v3012
    %v3107 = vunpack.c.l.b16 %v3013
    %v3108 = vunpack.c.h.b16 %v3013
    %v3109 = vunpack.c.l.b16 %v3014
    %v3110 = vunpack.c.h.b16 %v3014
    %v3111 = vpack.c.b16 %v3051, %v3047
    %v3112 = vpack.c.b16 %v3052, %v3048
    %v3113 = vpack.c.b16 %v3053, %v3049
    %v3114 = vpack.c.b16 %v3054, %v3050
    %v3115 = vpack.c.b16 %v3059, %v3055
    %v3116 = vpack.c.b16 %v3060, %v3056
    %v3117 = vpack.c.b16 %v3061, %v3057
    %v3118 = vpack.c.b16 %v3062, %v3058
    %v3119 = vpack.c.b16 %v3067, %v3063
    %v3120 = vpack.c.b16 %v3068, %v3064
    %v3121 = vpack.c.b16 %v3069, %v3065
    %v3122 = vpack.c.b16 %v3070, %v3066
    %v3123 = vpack.c.b16 %v3075, %v3071
    %v3124 = vpack.c.b16 %v3076, %v3072
    %v3125 = vpack.c.b16 %v3077, %v3073
    %v3126 = vpack.c.b16 %v3078, %v3074
    %v3127 = vpack.c.b16 %v3083, %v3079
    %v3128 = vpack.c.b16 %v3084, %v3080
    %v3129 = vpack.c.b16 %v3085, %v3081
    %v3130 = vpack.c.b16 %v3086, %v3082
    %v3131 = vpack.c.b16 %v3091, %v3087
    %v3132 = vpack.c.b16 %v3092, %v3088
    %v3133 = vpack.c.b16 %v3093, %v3089
    %v3134 = vpack.c.b16 %v3094, %v3090
    %v3135 = vpack.c.b16 %v3099, %v3095
    %v3136 = vpack.c.b16 %v3100, %v3096
    %v3137 = vpack.c.b16 %v3101, %v3097
    %v3138 = vpack.c.b16 %v3102, %v3098
    %v3139 = vpack.c.b16 %v3107, %v3103
    %v3140 = vpack.c.b16 %v3108, %v3104
    %v3141 = vpack.c.b16 %v3109, %v3105
    %v3142 = vpack.c.b16 %v3110, %v3106
    %3175 = vmatprep.subr.bf16.mxu0 %v3112
    %3176 = vmatpush1.bf16.msra.mxu0 %v3111
    %3177 = vmatprep.subr.bf16.mxu0 %v3116
    %3178 = vmatpush1.bf16.msra.mxu0 %v3115
    %3179 = vmatprep.subr.bf16.mxu0 %v3120
    %3180 = vmatpush1.bf16.msra.mxu0 %v3119
    %3181 = vmatprep.subr.bf16.mxu0 %v3124
    %3182 = vmatpush1.bf16.msra.mxu0 %v3123
    %3183 = vmatprep.subr.bf16.mxu0 %v3128
    %3184 = vmatpush1.bf16.msra.mxu0 %v3127
    %3185 = vmatprep.subr.bf16.mxu0 %v3132
    %3186 = vmatpush1.bf16.msra.mxu0 %v3131
    %3187 = vmatprep.subr.bf16.mxu0 %v3136
    %3188 = vmatpush1.bf16.msra.mxu0 %v3135
    %3189 = vmatprep.subr.bf16.mxu0 %v3140
    %3190 = vmatpush1.bf16.msra.mxu0 %v3139
    %3191 = vmatprep.subr.bf16.mxu0 0
    %3192 = vmatpush1.bf16.msra.mxu0 0
    %3193 = vmatprep.subr.bf16.mxu0 0
    %3194 = vmatpush1.bf16.msra.mxu0 0
    %3195 = vmatprep.subr.bf16.mxu0 0
    %3196 = vmatpush1.bf16.msra.mxu0 0
    %3197 = vmatprep.subr.bf16.mxu0 0
    %3198 = vmatpush1.bf16.msra.mxu0 0
    %3199 = vmatprep.subr.bf16.mxu0 0
    %3200 = vmatpush1.bf16.msra.mxu0 0
    %3201 = vmatprep.subr.bf16.mxu0 0
    %3202 = vmatpush1.bf16.msra.mxu0 0
    %3203 = vmatprep.subr.bf16.mxu0 0
    %3204 = vmatpush1.bf16.msra.mxu0 0
    %3205 = vmatprep.subr.bf16.mxu0 0
    %3206 = vmatpush1.bf16.msra.mxu0 0
    %3207 = vmatprep.mubr.bf16.mxu0 0
    %3208 = vmatmul.mubr.bf16.gmra.mrb[0].mxu0 %v2482
    %v3209 = vpop.f32.mrb[0].mxu0
    %v3210 = vadd.f32 0.0, %v3209
    %v3211 = vpop.f32.mrb[0].mxu0
    %v3212 = vadd.f32 0.0, %v3211
    %v3213 = vpop.f32.mrb[0].mxu0
    %v3214 = vpop.f32.mrb[0].mxu0
    %3215 = vdwg.mxu0
    %3216 = vmatprep.subr.bf16.mxu0 %v3114
    %3217 = vmatpush1.bf16.msra.mxu0 %v3113
    %3218 = vmatprep.subr.bf16.mxu0 %v3118
    %3219 = vmatpush1.bf16.msra.mxu0 %v3117
    %3220 = vmatprep.subr.bf16.mxu0 %v3122
    %3221 = vmatpush1.bf16.msra.mxu0 %v3121
    %3222 = vmatprep.subr.bf16.mxu0 %v3126
    %3223 = vmatpush1.bf16.msra.mxu0 %v3125
    %3224 = vmatprep.subr.bf16.mxu0 %v3130
    %3225 = vmatpush1.bf16.msra.mxu0 %v3129
    %3226 = vmatprep.subr.bf16.mxu0 %v3134
    %3227 = vmatpush1.bf16.msra.mxu0 %v3133
    %3228 = vmatprep.subr.bf16.mxu0 %v3138
    %3229 = vmatpush1.bf16.msra.mxu0 %v3137
    %3230 = vmatprep.subr.bf16.mxu0 %v3142
    %3231 = vmatpush1.bf16.msra.mxu0 %v3141
    %3232 = vmatprep.subr.bf16.mxu0 0
    %3233 = vmatpush1.bf16.msra.mxu0 0
    %3234 = vmatprep.subr.bf16.mxu0 0
    %3235 = vmatpush1.bf16.msra.mxu0 0
    %3236 = vmatprep.subr.bf16.mxu0 0
    %3237 = vmatpush1.bf16.msra.mxu0 0
    %3238 = vmatprep.subr.bf16.mxu0 0
    %3239 = vmatpush1.bf16.msra.mxu0 0
    %3240 = vmatprep.subr.bf16.mxu0 0
    %3241 = vmatpush1.bf16.msra.mxu0 0
    %3242 = vmatprep.subr.bf16.mxu0 0
    %3243 = vmatpush1.bf16.msra.mxu0 0
    %3244 = vmatprep.subr.bf16.mxu0 0
    %3245 = vmatpush1.bf16.msra.mxu0 0
    %3246 = vmatprep.subr.bf16.mxu0 0
    %3247 = vmatpush1.bf16.msra.mxu0 0
    %3248 = vmatprep.mubr.bf16.mxu0 0
    %3249 = vmatmul.mubr.bf16.gmra.mrb[0].mxu0 %v2482
    %v3250 = vpop.f32.mrb[0].mxu0
    %v3251 = vadd.f32 0.0, %v3250
    %v3252 = vpop.f32.mrb[0].mxu0
    %v3253 = vadd.f32 0.0, %v3252
    %v3254 = vpop.f32.mrb[0].mxu0
    %v3255 = vpop.f32.mrb[0].mxu0
    %3256 = vdwg.mxu0
    %v3257 = vadd.f32 %v2979, %v3210
    %v3258 = vadd.f32 %v2980, %v3212
    %v3259 = vadd.f32 %v2981, %v3251
    %v3260 = vadd.f32 %v2982, %v3253
    %v3261 = vxor.u32 %v3257, 2147483648
    %v3262 = vmul.f32 %v3261, 1.442695
    %v3263 = vpow.pop %v3262
    %v3264 = vadd.f32 %v3263, 1.0
    %v3265 = vrcp.pop %v3264
    %v3266 = vmul.f32 1.0, %v3265
    %v3267 = vxor.u32 %v3258, 2147483648
    %v3268 = vmul.f32 %v3267, 1.442695
    %v3269 = vpow.pop %v3268
    %v3270 = vadd.f32 %v3269, 1.0
    %v3271 = vrcp.pop %v3270
    %v3272 = vmul.f32 1.0, %v3271
    %v3273 = vtanh.pop %v3259
    %v3274 = vxor.u32 %v3260, 2147483648
    %v3275 = vmul.f32 %v3274, 1.442695
    %v3276 = vpow.pop %v3275
    %v3277 = vadd.f32 %v3276, 1.0
    %v3278 = vrcp.pop %v3277
    %v3279 = vmul.f32 1.0, %v3278
    %v3280 = vmul.f32 %v3272, %v2479
    %v3281 = vmul.f32 %v3266, %v3273
    %v3282 = vadd.f32 %v3280, %v3281
    %v3283 = vtanh.pop %v3282
    %v3284 = vmul.f32 %v3279, %v3283
    %v3285 = vpack.c.bf16 %v3284, %v3284
    %v3286 = vpack.c.bf16 %v2973, %v2973
    %v3287 = vld [vmem:[#allocation10] sm:$0xff]
    %v3288 = vld [vmem:[#allocation10 + $0x8] sm:$0xff]
    %v3289 = vld [vmem:[#allocation10 + $0x10] sm:$0xff]
    %v3290 = vld [vmem:[#allocation10 + $0x18] sm:$0xff]
    %v3291 = vld [vmem:[#allocation10 + $0x20] sm:$0xff]
    %v3292 = vld [vmem:[#allocation10 + $0x28] sm:$0xff]
    %v3293 = vld [vmem:[#allocation10 + $0x30] sm:$0xff]
    %v3294 = vld [vmem:[#allocation10 + $0x38] sm:$0xff]
    %v3295 = vld [vmem:[#allocation10 + $0x40] sm:$0xff]
    %v3296 = vld [vmem:[#allocation10 + $0x48] sm:$0xff]
    %v3297 = vld [vmem:[#allocation10 + $0x50] sm:$0xff]
    %v3298 = vld [vmem:[#allocation10 + $0x58] sm:$0xff]
    %v3299 = vld [vmem:[#allocation10 + $0x60] sm:$0xff]
    %v3300 = vld [vmem:[#allocation10 + $0x68] sm:$0xff]
    %v3301 = vld [vmem:[#allocation10 + $0x70] sm:$0xff]
    %v3302 = vld [vmem:[#allocation10 + $0x78] sm:$0xff]
    %v3303 = vld [vmem:[#allocation10 + $0x80] sm:$0xff]
    %v3304 = vld [vmem:[#allocation10 + $0x88] sm:$0xff]
    %v3305 = vld [vmem:[#allocation10 + $0x90] sm:$0xff]
    %v3306 = vld [vmem:[#allocation10 + $0x98] sm:$0xff]
    %v3307 = vld [vmem:[#allocation10 + $0xa0] sm:$0xff]
    %v3308 = vld [vmem:[#allocation10 + $0xa8] sm:$0xff]
    %v3309 = vld [vmem:[#allocation10 + $0xb0] sm:$0xff]
    %v3310 = vld [vmem:[#allocation10 + $0xb8] sm:$0xff]
    %v3311 = vld [vmem:[#allocation10 + $0xc0] sm:$0xff]
    %v3312 = vld [vmem:[#allocation10 + $0xc8] sm:$0xff]
    %v3313 = vld [vmem:[#allocation10 + $0xd0] sm:$0xff]
    %v3314 = vld [vmem:[#allocation10 + $0xd8] sm:$0xff]
    %v3315 = vld [vmem:[#allocation10 + $0xe0] sm:$0xff]
    %v3316 = vld [vmem:[#allocation10 + $0xe8] sm:$0xff]
    %v3317 = vld [vmem:[#allocation10 + $0xf0] sm:$0xff]
    %v3318 = vld [vmem:[#allocation10 + $0xf8] sm:$0xff]
    %v3319 = vld [vmem:[#allocation10 + $0x100] sm:$0xff]
    %v3320 = vld [vmem:[#allocation10 + $0x108] sm:$0xff]
    %v3321 = vld [vmem:[#allocation10 + $0x110] sm:$0xff]
    %v3322 = vld [vmem:[#allocation10 + $0x118] sm:$0xff]
    %v3323 = vld [vmem:[#allocation10 + $0x120] sm:$0xff]
    %v3324 = vld [vmem:[#allocation10 + $0x128] sm:$0xff]
    %v3325 = vld [vmem:[#allocation10 + $0x130] sm:$0xff]
    %v3326 = vld [vmem:[#allocation10 + $0x138] sm:$0xff]
    %v3327 = vld [vmem:[#allocation10 + $0x140] sm:$0xff]
    %v3328 = vld [vmem:[#allocation10 + $0x148] sm:$0xff]
    %v3329 = vld [vmem:[#allocation10 + $0x150] sm:$0xff]
    %v3330 = vld [vmem:[#allocation10 + $0x158] sm:$0xff]
    %v3331 = vld [vmem:[#allocation10 + $0x160] sm:$0xff]
    %v3332 = vld [vmem:[#allocation10 + $0x168] sm:$0xff]
    %v3333 = vld [vmem:[#allocation10 + $0x170] sm:$0xff]
    %v3334 = vld [vmem:[#allocation10 + $0x178] sm:$0xff]
    %v3335 = vld [vmem:[#allocation10 + $0x180] sm:$0xff]
    %v3336 = vld [vmem:[#allocation10 + $0x188] sm:$0xff]
    %v3337 = vld [vmem:[#allocation10 + $0x190] sm:$0xff]
    %v3338 = vld [vmem:[#allocation10 + $0x198] sm:$0xff]
    %v3339 = vld [vmem:[#allocation10 + $0x1a0] sm:$0xff]
    %v3340 = vld [vmem:[#allocation10 + $0x1a8] sm:$0xff]
    %v3341 = vld [vmem:[#allocation10 + $0x1b0] sm:$0xff]
    %v3342 = vld [vmem:[#allocation10 + $0x1b8] sm:$0xff]
    %v3343 = vld [vmem:[#allocation10 + $0x1c0] sm:$0xff]
    %v3344 = vld [vmem:[#allocation10 + $0x1c8] sm:$0xff]
    %v3345 = vld [vmem:[#allocation10 + $0x1d0] sm:$0xff]
    %v3346 = vld [vmem:[#allocation10 + $0x1d8] sm:$0xff]
    %v3347 = vld [vmem:[#allocation10 + $0x1e0] sm:$0xff]
    %v3348 = vld [vmem:[#allocation10 + $0x1e8] sm:$0xff]
    %v3349 = vld [vmem:[#allocation10 + $0x1f0] sm:$0xff]
    %v3350 = vld [vmem:[#allocation10 + $0x1f8] sm:$0xff]
    %v3415 = vunpack.c.l.b16 %v3287
    %v3416 = vunpack.c.h.b16 %v3287
    %v3417 = vunpack.c.l.b16 %v3288
    %v3418 = vunpack.c.h.b16 %v3288
    %v3419 = vunpack.c.l.b16 %v3289
    %v3420 = vunpack.c.h.b16 %v3289
    %v3421 = vunpack.c.l.b16 %v3290
    %v3422 = vunpack.c.h.b16 %v3290
    %v3423 = vunpack.c.l.b16 %v3291
    %v3424 = vunpack.c.h.b16 %v3291
    %v3425 = vunpack.c.l.b16 %v3292
    %v3426 = vunpack.c.h.b16 %v3292
    %v3427 = vunpack.c.l.b16 %v3293
    %v3428 = vunpack.c.h.b16 %v3293
    %v3429 = vunpack.c.l.b16 %v3294
    %v3430 = vunpack.c.h.b16 %v3294
    %v3431 = vunpack.c.l.b16 %v3295
    %v3432 = vunpack.c.h.b16 %v3295
    %v3433 = vunpack.c.l.b16 %v3296
    %v3434 = vunpack.c.h.b16 %v3296
    %v3435 = vunpack.c.l.b16 %v3297
    %v3436 = vunpack.c.h.b16 %v3297
    %v3437 = vunpack.c.l.b16 %v3298
    %v3438 = vunpack.c.h.b16 %v3298
    %v3439 = vunpack.c.l.b16 %v3299
    %v3440 = vunpack.c.h.b16 %v3299
    %v3441 = vunpack.c.l.b16 %v3300
    %v3442 = vunpack.c.h.b16 %v3300
    %v3443 = vunpack.c.l.b16 %v3301
    %v3444 = vunpack.c.h.b16 %v3301
    %v3445 = vunpack.c.l.b16 %v3302
    %v3446 = vunpack.c.h.b16 %v3302
    %v3447 = vunpack.c.l.b16 %v3303
    %v3448 = vunpack.c.h.b16 %v3303
    %v3449 = vunpack.c.l.b16 %v3304
    %v3450 = vunpack.c.h.b16 %v3304
    %v3451 = vunpack.c.l.b16 %v3305
    %v3452 = vunpack.c.h.b16 %v3305
    %v3453 = vunpack.c.l.b16 %v3306
    %v3454 = vunpack.c.h.b16 %v3306
    %v3455 = vunpack.c.l.b16 %v3307
    %v3456 = vunpack.c.h.b16 %v3307
    %v3457 = vunpack.c.l.b16 %v3308
    %v3458 = vunpack.c.h.b16 %v3308
    %v3459 = vunpack.c.l.b16 %v3309
    %v3460 = vunpack.c.h.b16 %v3309
    %v3461 = vunpack.c.l.b16 %v3310
    %v3462 = vunpack.c.h.b16 %v3310
    %v3463 = vunpack.c.l.b16 %v3311
    %v3464 = vunpack.c.h.b16 %v3311
    %v3465 = vunpack.c.l.b16 %v3312
    %v3466 = vunpack.c.h.b16 %v3312
    %v3467 = vunpack.c.l.b16 %v3313
    %v3468 = vunpack.c.h.b16 %v3313
    %v3469 = vunpack.c.l.b16 %v3314
    %v3470 = vunpack.c.h.b16 %v3314
    %v3471 = vunpack.c.l.b16 %v3315
    %v3472 = vunpack.c.h.b16 %v3315
    %v3473 = vunpack.c.l.b16 %v3316
    %v3474 = vunpack.c.h.b16 %v3316
    %v3475 = vunpack.c.l.b16 %v3317
    %v3476 = vunpack.c.h.b16 %v3317
    %v3477 = vunpack.c.l.b16 %v3318
    %v3478 = vunpack.c.h.b16 %v3318
    %v3479 = vunpack.c.l.b16 %v3319
    %v3480 = vunpack.c.h.b16 %v3319
    %v3481 = vunpack.c.l.b16 %v3320
    %v3482 = vunpack.c.h.b16 %v3320
    %v3483 = vunpack.c.l.b16 %v3321
    %v3484 = vunpack.c.h.b16 %v3321
    %v3485 = vunpack.c.l.b16 %v3322
    %v3486 = vunpack.c.h.b16 %v3322
    %v3487 = vunpack.c.l.b16 %v3323
    %v3488 = vunpack.c.h.b16 %v3323
    %v3489 = vunpack.c.l.b16 %v3324
    %v3490 = vunpack.c.h.b16 %v3324
    %v3491 = vunpack.c.l.b16 %v3325
    %v3492 = vunpack.c.h.b16 %v3325
    %v3493 = vunpack.c.l.b16 %v3326
    %v3494 = vunpack.c.h.b16 %v3326
    %v3495 = vunpack.c.l.b16 %v3327
    %v3496 = vunpack.c.h.b16 %v3327
    %v3497 = vunpack.c.l.b16 %v3328
    %v3498 = vunpack.c.h.b16 %v3328
    %v3499 = vunpack.c.l.b16 %v3329
    %v3500 = vunpack.c.h.b16 %v3329
    %v3501 = vunpack.c.l.b16 %v3330
    %v3502 = vunpack.c.h.b16 %v3330
    %v3503 = vunpack.c.l.b16 %v3331
    %v3504 = vunpack.c.h.b16 %v3331
    %v3505 = vunpack.c.l.b16 %v3332
    %v3506 = vunpack.c.h.b16 %v3332
    %v3507 = vunpack.c.l.b16 %v3333
    %v3508 = vunpack.c.h.b16 %v3333
    %v3509 = vunpack.c.l.b16 %v3334
    %v3510 = vunpack.c.h.b16 %v3334
    %v3511 = vunpack.c.l.b16 %v3335
    %v3512 = vunpack.c.h.b16 %v3335
    %v3513 = vunpack.c.l.b16 %v3336
    %v3514 = vunpack.c.h.b16 %v3336
    %v3515 = vunpack.c.l.b16 %v3337
    %v3516 = vunpack.c.h.b16 %v3337
    %v3517 = vunpack.c.l.b16 %v3338
    %v3518 = vunpack.c.h.b16 %v3338
    %v3519 = vunpack.c.l.b16 %v3339
    %v3520 = vunpack.c.h.b16 %v3339
    %v3521 = vunpack.c.l.b16 %v3340
    %v3522 = vunpack.c.h.b16 %v3340
    %v3523 = vunpack.c.l.b16 %v3341
    %v3524 = vunpack.c.h.b16 %v3341
    %v3525 = vunpack.c.l.b16 %v3342
    %v3526 = vunpack.c.h.b16 %v3342
    %v3527 = vunpack.c.l.b16 %v3343
    %v3528 = vunpack.c.h.b16 %v3343
    %v3529 = vunpack.c.l.b16 %v3344
    %v3530 = vunpack.c.h.b16 %v3344
    %v3531 = vunpack.c.l.b16 %v3345
    %v3532 = vunpack.c.h.b16 %v3345
    %v3533 = vunpack.c.l.b16 %v3346
    %v3534 = vunpack.c.h.b16 %v3346
    %v3535 = vunpack.c.l.b16 %v3347
    %v3536 = vunpack.c.h.b16 %v3347
    %v3537 = vunpack.c.l.b16 %v3348
    %v3538 = vunpack.c.h.b16 %v3348
    %v3539 = vunpack.c.l.b16 %v3349
    %v3540 = vunpack.c.h.b16 %v3349
    %v3541 = vunpack.c.l.b16 %v3350
    %v3542 = vunpack.c.h.b16 %v3350
    %v3543 = vpack.c.b16 %v3419, %v3415
    %v3544 = vpack.c.b16 %v3420, %v3416
    %v3545 = vpack.c.b16 %v3421, %v3417
    %v3546 = vpack.c.b16 %v3422, %v3418
    %v3547 = vpack.c.b16 %v3427, %v3423
    %v3548 = vpack.c.b16 %v3428, %v3424
    %v3549 = vpack.c.b16 %v3429, %v3425
    %v3550 = vpack.c.b16 %v3430, %v3426
    %v3551 = vpack.c.b16 %v3435, %v3431
    %v3552 = vpack.c.b16 %v3436, %v3432
    %v3553 = vpack.c.b16 %v3437, %v3433
    %v3554 = vpack.c.b16 %v3438, %v3434
    %v3555 = vpack.c.b16 %v3443, %v3439
    %v3556 = vpack.c.b16 %v3444, %v3440
    %v3557 = vpack.c.b16 %v3445, %v3441
    %v3558 = vpack.c.b16 %v3446, %v3442
    %v3559 = vpack.c.b16 %v3451, %v3447
    %v3560 = vpack.c.b16 %v3452, %v3448
    %v3561 = vpack.c.b16 %v3453, %v3449
    %v3562 = vpack.c.b16 %v3454, %v3450
    %v3563 = vpack.c.b16 %v3459, %v3455
    %v3564 = vpack.c.b16 %v3460, %v3456
    %v3565 = vpack.c.b16 %v3461, %v3457
    %v3566 = vpack.c.b16 %v3462, %v3458
    %v3567 = vpack.c.b16 %v3467, %v3463
    %v3568 = vpack.c.b16 %v3468, %v3464
    %v3569 = vpack.c.b16 %v3469, %v3465
    %v3570 = vpack.c.b16 %v3470, %v3466
    %v3571 = vpack.c.b16 %v3475, %v3471
    %v3572 = vpack.c.b16 %v3476, %v3472
    %v3573 = vpack.c.b16 %v3477, %v3473
    %v3574 = vpack.c.b16 %v3478, %v3474
    %v3575 = vpack.c.b16 %v3483, %v3479
    %v3576 = vpack.c.b16 %v3484, %v3480
    %v3577 = vpack.c.b16 %v3485, %v3481
    %v3578 = vpack.c.b16 %v3486, %v3482
    %v3579 = vpack.c.b16 %v3491, %v3487
    %v3580 = vpack.c.b16 %v3492, %v3488
    %v3581 = vpack.c.b16 %v3493, %v3489
    %v3582 = vpack.c.b16 %v3494, %v3490
    %v3583 = vpack.c.b16 %v3499, %v3495
    %v3584 = vpack.c.b16 %v3500, %v3496
    %v3585 = vpack.c.b16 %v3501, %v3497
    %v3586 = vpack.c.b16 %v3502, %v3498
    %v3587 = vpack.c.b16 %v3507, %v3503
    %v3588 = vpack.c.b16 %v3508, %v3504
    %v3589 = vpack.c.b16 %v3509, %v3505
    %v3590 = vpack.c.b16 %v3510, %v3506
    %v3591 = vpack.c.b16 %v3515, %v3511
    %v3592 = vpack.c.b16 %v3516, %v3512
    %v3593 = vpack.c.b16 %v3517, %v3513
    %v3594 = vpack.c.b16 %v3518, %v3514
    %v3595 = vpack.c.b16 %v3523, %v3519
    %v3596 = vpack.c.b16 %v3524, %v3520
    %v3597 = vpack.c.b16 %v3525, %v3521
    %v3598 = vpack.c.b16 %v3526, %v3522
    %v3599 = vpack.c.b16 %v3531, %v3527
    %v3600 = vpack.c.b16 %v3532, %v3528
    %v3601 = vpack.c.b16 %v3533, %v3529
    %v3602 = vpack.c.b16 %v3534, %v3530
    %v3603 = vpack.c.b16 %v3539, %v3535
    %v3604 = vpack.c.b16 %v3540, %v3536
    %v3605 = vpack.c.b16 %v3541, %v3537
    %v3606 = vpack.c.b16 %v3542, %v3538
    %3671 = vmatprep.subr.bf16.mxu0 %v3544
    %3672 = vmatpush1.bf16.msra.mxu0 %v3543
    %3673 = vmatprep.subr.bf16.mxu0 %v3548
    %3674 = vmatpush1.bf16.msra.mxu0 %v3547
    %3675 = vmatprep.subr.bf16.mxu0 %v3552
    %3676 = vmatpush1.bf16.msra.mxu0 %v3551
    %3677 = vmatprep.subr.bf16.mxu0 %v3556
    %3678 = vmatpush1.bf16.msra.mxu0 %v3555
    %3679 = vmatprep.subr.bf16.mxu0 %v3560
    %3680 = vmatpush1.bf16.msra.mxu0 %v3559
    %3681 = vmatprep.subr.bf16.mxu0 %v3564
    %3682 = vmatpush1.bf16.msra.mxu0 %v3563
    %3683 = vmatprep.subr.bf16.mxu0 %v3568
    %3684 = vmatpush1.bf16.msra.mxu0 %v3567
    %3685 = vmatprep.subr.bf16.mxu0 %v3572
    %3686 = vmatpush1.bf16.msra.mxu0 %v3571
    %3687 = vmatprep.subr.bf16.mxu0 %v3576
    %3688 = vmatpush1.bf16.msra.mxu0 %v3575
    %3689 = vmatprep.subr.bf16.mxu0 %v3580
    %3690 = vmatpush1.bf16.msra.mxu0 %v3579
    %3691 = vmatprep.subr.bf16.mxu0 %v3584
    %3692 = vmatpush1.bf16.msra.mxu0 %v3583
    %3693 = vmatprep.subr.bf16.mxu0 %v3588
    %3694 = vmatpush1.bf16.msra.mxu0 %v3587
    %3695 = vmatprep.subr.bf16.mxu0 %v3592
    %3696 = vmatpush1.bf16.msra.mxu0 %v3591
    %3697 = vmatprep.subr.bf16.mxu0 %v3596
    %3698 = vmatpush1.bf16.msra.mxu0 %v3595
    %3699 = vmatprep.subr.bf16.mxu0 %v3600
    %3700 = vmatpush1.bf16.msra.mxu0 %v3599
    %3701 = vmatprep.subr.bf16.mxu0 %v3604
    %3702 = vmatpush1.bf16.msra.mxu0 %v3603
    %3703 = vmatprep.mubr.bf16.mxu0 %v3286
    %3704 = vmatmul.mubr.bf16.gmra.mrb[0].mxu0 %v3285
    %v3705 = vpop.f32.mrb[0].mxu0
    %v3706 = vadd.f32 %v551, %v3705
    %v3707 = vpop.f32.mrb[0].mxu0
    %v3708 = vadd.f32 %v555, %v3707
    %v3709 = vpop.f32.mrb[0].mxu0
    %v3710 = vpop.f32.mrb[0].mxu0
    %3711 = vdwg.mxu0
    %3712 = vmatprep.subr.bf16.mxu0 %v3546
    %3713 = vmatpush1.bf16.msra.mxu0 %v3545
    %3714 = vmatprep.subr.bf16.mxu0 %v3550
    %3715 = vmatpush1.bf16.msra.mxu0 %v3549
    %3716 = vmatprep.subr.bf16.mxu0 %v3554
    %3717 = vmatpush1.bf16.msra.mxu0 %v3553
    %3718 = vmatprep.subr.bf16.mxu0 %v3558
    %3719 = vmatpush1.bf16.msra.mxu0 %v3557
    %3720 = vmatprep.subr.bf16.mxu0 %v3562
    %3721 = vmatpush1.bf16.msra.mxu0 %v3561
    %3722 = vmatprep.subr.bf16.mxu0 %v3566
    %3723 = vmatpush1.bf16.msra.mxu0 %v3565
    %3724 = vmatprep.subr.bf16.mxu0 %v3570
    %3725 = vmatpush1.bf16.msra.mxu0 %v3569
    %3726 = vmatprep.subr.bf16.mxu0 %v3574
    %3727 = vmatpush1.bf16.msra.mxu0 %v3573
    %3728 = vmatprep.subr.bf16.mxu0 %v3578
    %3729 = vmatpush1.bf16.msra.mxu0 %v3577
    %3730 = vmatprep.subr.bf16.mxu0 %v3582
    %3731 = vmatpush1.bf16.msra.mxu0 %v3581
    %3732 = vmatprep.subr.bf16.mxu0 %v3586
    %3733 = vmatpush1.bf16.msra.mxu0 %v3585
    %3734 = vmatprep.subr.bf16.mxu0 %v3590
    %3735 = vmatpush1.bf16.msra.mxu0 %v3589
    %3736 = vmatprep.subr.bf16.mxu0 %v3594
    %3737 = vmatpush1.bf16.msra.mxu0 %v3593
    %3738 = vmatprep.subr.bf16.mxu0 %v3598
    %3739 = vmatpush1.bf16.msra.mxu0 %v3597
    %3740 = vmatprep.subr.bf16.mxu0 %v3602
    %3741 = vmatpush1.bf16.msra.mxu0 %v3601
    %3742 = vmatprep.subr.bf16.mxu0 %v3606
    %3743 = vmatpush1.bf16.msra.mxu0 %v3605
    %3744 = vmatprep.mubr.bf16.mxu0 %v3286
    %3745 = vmatmul.mubr.bf16.gmra.mrb[0].mxu0 %v3285
    %v3746 = vpop.f32.mrb[0].mxu0
    %v3747 = vadd.f32 %v559, %v3746
    %v3748 = vpop.f32.mrb[0].mxu0
    %v3749 = vadd.f32 %v563, %v3748
    %v3750 = vpop.f32.mrb[0].mxu0
    %v3751 = vpop.f32.mrb[0].mxu0
    %3752 = vdwg.mxu0
    %v3753 = vxor.u32 %v3706, 2147483648
    %v3754 = vmul.f32 %v3753, 1.442695
    %v3755 = vpow.pop %v3754
    %v3756 = vadd.f32 %v3755, 1.0
    %v3757 = vrcp.pop %v3756
    %v3758 = vmul.f32 1.0, %v3757
    %v3759 = vxor.u32 %v3708, 2147483648
    %v3760 = vmul.f32 %v3759, 1.442695
    %v3761 = vpow.pop %v3760
    %v3762 = vadd.f32 %v3761, 1.0
    %v3763 = vrcp.pop %v3762
    %v3764 = vmul.f32 1.0, %v3763
    %v3765 = vtanh.pop %v3747
    %v3766 = vxor.u32 %v3749, 2147483648
    %v3767 = vmul.f32 %v3766, 1.442695
    %v3768 = vpow.pop %v3767
    %v3769 = vadd.f32 %v3768, 1.0
    %v3770 = vrcp.pop %v3769
    %v3771 = vmul.f32 1.0, %v3770
    %v3772 = vmul.f32 %v3764, %v2971
    %v3773 = vmul.f32 %v3758, %v3765
    %v3774 = vadd.f32 %v3772, %v3773
    %v3775 = vtanh.pop %v3774
    %v3776 = vmul.f32 %v3771, %v3775
    %s3777 = scalar_lea.vmem [#allocation3], 24
    %3778 = vst [vmem:[%s3777] sm:$0xff] %v3776
    %s3779 = smul.u32 4, 4
    %s3780 = smul.addr %s3779, 8
    %s3781 = scalar_lea.vmem [#allocation2], %s3780
    %v3782 = vld [vmem:[%s3781] sm:$0xff]
    %v3783 = vld [vmem:[%s3781 + $0x8] sm:$0xff]
    %v3784 = vld [vmem:[%s3781 + $0x10] sm:$0xff]
    %v3785 = vld [vmem:[%s3781 + $0x18] sm:$0xff]
    %v3786 = vld [vmem:[#allocation9] sm:$0xff]
    %v3787 = vld [vmem:[#allocation9 + $0x8] sm:$0xff]
    %v3788 = vld [vmem:[#allocation9 + $0x10] sm:$0xff]
    %v3789 = vld [vmem:[#allocation9 + $0x18] sm:$0xff]
    %v3790 = vld [vmem:[#allocation9 + $0x20] sm:$0xff]
    %v3791 = vld [vmem:[#allocation9 + $0x28] sm:$0xff]
    %v3792 = vld [vmem:[#allocation9 + $0x30] sm:$0xff]
    %v3793 = vld [vmem:[#allocation9 + $0x38] sm:$0xff]
    %v3794 = vld [vmem:[#allocation9 + $0x40] sm:$0xff]
    %v3795 = vld [vmem:[#allocation9 + $0x48] sm:$0xff]
    %v3796 = vld [vmem:[#allocation9 + $0x50] sm:$0xff]
    %v3797 = vld [vmem:[#allocation9 + $0x58] sm:$0xff]
    %v3798 = vld [vmem:[#allocation9 + $0x60] sm:$0xff]
    %v3799 = vld [vmem:[#allocation9 + $0x68] sm:$0xff]
    %v3800 = vld [vmem:[#allocation9 + $0x70] sm:$0xff]
    %v3801 = vld [vmem:[#allocation9 + $0x78] sm:$0xff]
    %v3802 = vld [vmem:[#allocation9 + $0x80] sm:$0xff]
    %v3803 = vld [vmem:[#allocation9 + $0x88] sm:$0xff]
    %v3804 = vld [vmem:[#allocation9 + $0x90] sm:$0xff]
    %v3805 = vld [vmem:[#allocation9 + $0x98] sm:$0xff]
    %v3806 = vld [vmem:[#allocation9 + $0xa0] sm:$0xff]
    %v3807 = vld [vmem:[#allocation9 + $0xa8] sm:$0xff]
    %v3808 = vld [vmem:[#allocation9 + $0xb0] sm:$0xff]
    %v3809 = vld [vmem:[#allocation9 + $0xb8] sm:$0xff]
    %v3810 = vld [vmem:[#allocation9 + $0xc0] sm:$0xff]
    %v3811 = vld [vmem:[#allocation9 + $0xc8] sm:$0xff]
    %v3812 = vld [vmem:[#allocation9 + $0xd0] sm:$0xff]
    %v3813 = vld [vmem:[#allocation9 + $0xd8] sm:$0xff]
    %v3814 = vld [vmem:[#allocation9 + $0xe0] sm:$0xff]
    %v3815 = vld [vmem:[#allocation9 + $0xe8] sm:$0xff]
    %v3816 = vld [vmem:[#allocation9 + $0xf0] sm:$0xff]
    %v3817 = vld [vmem:[#allocation9 + $0xf8] sm:$0xff]
    %v3850 = vunpack.c.l.b16 %v3786
    %v3851 = vunpack.c.h.b16 %v3786
    %v3852 = vunpack.c.l.b16 %v3787
    %v3853 = vunpack.c.h.b16 %v3787
    %v3854 = vunpack.c.l.b16 %v3788
    %v3855 = vunpack.c.h.b16 %v3788
    %v3856 = vunpack.c.l.b16 %v3789
    %v3857 = vunpack.c.h.b16 %v3789
    %v3858 = vunpack.c.l.b16 %v3790
    %v3859 = vunpack.c.h.b16 %v3790
    %v3860 = vunpack.c.l.b16 %v3791
    %v3861 = vunpack.c.h.b16 %v3791
    %v3862 = vunpack.c.l.b16 %v3792
    %v3863 = vunpack.c.h.b16 %v3792
    %v3864 = vunpack.c.l.b16 %v3793
    %v3865 = vunpack.c.h.b16 %v3793
    %v3866 = vunpack.c.l.b16 %v3794
    %v3867 = vunpack.c.h.b16 %v3794
    %v3868 = vunpack.c.l.b16 %v3795
    %v3869 = vunpack.c.h.b16 %v3795
    %v3870 = vunpack.c.l.b16 %v3796
    %v3871 = vunpack.c.h.b16 %v3796
    %v3872 = vunpack.c.l.b16 %v3797
    %v3873 = vunpack.c.h.b16 %v3797
    %v3874 = vunpack.c.l.b16 %v3798
    %v3875 = vunpack.c.h.b16 %v3798
    %v3876 = vunpack.c.l.b16 %v3799
    %v3877 = vunpack.c.h.b16 %v3799
    %v3878 = vunpack.c.l.b16 %v3800
    %v3879 = vunpack.c.h.b16 %v3800
    %v3880 = vunpack.c.l.b16 %v3801
    %v3881 = vunpack.c.h.b16 %v3801
    %v3882 = vunpack.c.l.b16 %v3802
    %v3883 = vunpack.c.h.b16 %v3802
    %v3884 = vunpack.c.l.b16 %v3803
    %v3885 = vunpack.c.h.b16 %v3803
    %v3886 = vunpack.c.l.b16 %v3804
    %v3887 = vunpack.c.h.b16 %v3804
    %v3888 = vunpack.c.l.b16 %v3805
    %v3889 = vunpack.c.h.b16 %v3805
    %v3890 = vunpack.c.l.b16 %v3806
    %v3891 = vunpack.c.h.b16 %v3806
    %v3892 = vunpack.c.l.b16 %v3807
    %v3893 = vunpack.c.h.b16 %v3807
    %v3894 = vunpack.c.l.b16 %v3808
    %v3895 = vunpack.c.h.b16 %v3808
    %v3896 = vunpack.c.l.b16 %v3809
    %v3897 = vunpack.c.h.b16 %v3809
    %v3898 = vunpack.c.l.b16 %v3810
    %v3899 = vunpack.c.h.b16 %v3810
    %v3900 = vunpack.c.l.b16 %v3811
    %v3901 = vunpack.c.h.b16 %v3811
    %v3902 = vunpack.c.l.b16 %v3812
    %v3903 = vunpack.c.h.b16 %v3812
    %v3904 = vunpack.c.l.b16 %v3813
    %v3905 = vunpack.c.h.b16 %v3813
    %v3906 = vunpack.c.l.b16 %v3814
    %v3907 = vunpack.c.h.b16 %v3814
    %v3908 = vunpack.c.l.b16 %v3815
    %v3909 = vunpack.c.h.b16 %v3815
    %v3910 = vunpack.c.l.b16 %v3816
    %v3911 = vunpack.c.h.b16 %v3816
    %v3912 = vunpack.c.l.b16 %v3817
    %v3913 = vunpack.c.h.b16 %v3817
    %v3914 = vpack.c.b16 %v3854, %v3850
    %v3915 = vpack.c.b16 %v3855, %v3851
    %v3916 = vpack.c.b16 %v3856, %v3852
    %v3917 = vpack.c.b16 %v3857, %v3853
    %v3918 = vpack.c.b16 %v3862, %v3858
    %v3919 = vpack.c.b16 %v3863, %v3859
    %v3920 = vpack.c.b16 %v3864, %v3860
    %v3921 = vpack.c.b16 %v3865, %v3861
    %v3922 = vpack.c.b16 %v3870, %v3866
    %v3923 = vpack.c.b16 %v3871, %v3867
    %v3924 = vpack.c.b16 %v3872, %v3868
    %v3925 = vpack.c.b16 %v3873, %v3869
    %v3926 = vpack.c.b16 %v3878, %v3874
    %v3927 = vpack.c.b16 %v3879, %v3875
    %v3928 = vpack.c.b16 %v3880, %v3876
    %v3929 = vpack.c.b16 %v3881, %v3877
    %v3930 = vpack.c.b16 %v3886, %v3882
    %v3931 = vpack.c.b16 %v3887, %v3883
    %v3932 = vpack.c.b16 %v3888, %v3884
    %v3933 = vpack.c.b16 %v3889, %v3885
    %v3934 = vpack.c.b16 %v3894, %v3890
    %v3935 = vpack.c.b16 %v3895, %v3891
    %v3936 = vpack.c.b16 %v3896, %v3892
    %v3937 = vpack.c.b16 %v3897, %v3893
    %v3938 = vpack.c.b16 %v3902, %v3898
    %v3939 = vpack.c.b16 %v3903, %v3899
    %v3940 = vpack.c.b16 %v3904, %v3900
    %v3941 = vpack.c.b16 %v3905, %v3901
    %v3942 = vpack.c.b16 %v3910, %v3906
    %v3943 = vpack.c.b16 %v3911, %v3907
    %v3944 = vpack.c.b16 %v3912, %v3908
    %v3945 = vpack.c.b16 %v3913, %v3909
    %3978 = vmatprep.subr.bf16.mxu0 %v3915
    %3979 = vmatpush1.bf16.msra.mxu0 %v3914
    %3980 = vmatprep.subr.bf16.mxu0 %v3919
    %3981 = vmatpush1.bf16.msra.mxu0 %v3918
    %3982 = vmatprep.subr.bf16.mxu0 %v3923
    %3983 = vmatpush1.bf16.msra.mxu0 %v3922
    %3984 = vmatprep.subr.bf16.mxu0 %v3927
    %3985 = vmatpush1.bf16.msra.mxu0 %v3926
    %3986 = vmatprep.subr.bf16.mxu0 %v3931
    %3987 = vmatpush1.bf16.msra.mxu0 %v3930
    %3988 = vmatprep.subr.bf16.mxu0 %v3935
    %3989 = vmatpush1.bf16.msra.mxu0 %v3934
    %3990 = vmatprep.subr.bf16.mxu0 %v3939
    %3991 = vmatpush1.bf16.msra.mxu0 %v3938
    %3992 = vmatprep.subr.bf16.mxu0 %v3943
    %3993 = vmatpush1.bf16.msra.mxu0 %v3942
    %3994 = vmatprep.subr.bf16.mxu0 0
    %3995 = vmatpush1.bf16.msra.mxu0 0
    %3996 = vmatprep.subr.bf16.mxu0 0
    %3997 = vmatpush1.bf16.msra.mxu0 0
    %3998 = vmatprep.subr.bf16.mxu0 0
    %3999 = vmatpush1.bf16.msra.mxu0 0
    %4000 = vmatprep.subr.bf16.mxu0 0
    %4001 = vmatpush1.bf16.msra.mxu0 0
    %4002 = vmatprep.subr.bf16.mxu0 0
    %4003 = vmatpush1.bf16.msra.mxu0 0
    %4004 = vmatprep.subr.bf16.mxu0 0
    %4005 = vmatpush1.bf16.msra.mxu0 0
    %4006 = vmatprep.subr.bf16.mxu0 0
    %4007 = vmatpush1.bf16.msra.mxu0 0
    %4008 = vmatprep.subr.bf16.mxu0 0
    %4009 = vmatpush1.bf16.msra.mxu0 0
    %4010 = vmatprep.mubr.bf16.mxu0 0
    %4011 = vmatmul.mubr.bf16.gmra.mrb[0].mxu0 %v3285
    %v4012 = vpop.f32.mrb[0].mxu0
    %v4013 = vadd.f32 0.0, %v4012
    %v4014 = vpop.f32.mrb[0].mxu0
    %v4015 = vadd.f32 0.0, %v4014
    %v4016 = vpop.f32.mrb[0].mxu0
    %v4017 = vpop.f32.mrb[0].mxu0
    %4018 = vdwg.mxu0
    %4019 = vmatprep.subr.bf16.mxu0 %v3917
    %4020 = vmatpush1.bf16.msra.mxu0 %v3916
    %4021 = vmatprep.subr.bf16.mxu0 %v3921
    %4022 = vmatpush1.bf16.msra.mxu0 %v3920
    %4023 = vmatprep.subr.bf16.mxu0 %v3925
    %4024 = vmatpush1.bf16.msra.mxu0 %v3924
    %4025 = vmatprep.subr.bf16.mxu0 %v3929
    %4026 = vmatpush1.bf16.msra.mxu0 %v3928
    %4027 = vmatprep.subr.bf16.mxu0 %v3933
    %4028 = vmatpush1.bf16.msra.mxu0 %v3932
    %4029 = vmatprep.subr.bf16.mxu0 %v3937
    %4030 = vmatpush1.bf16.msra.mxu0 %v3936
    %4031 = vmatprep.subr.bf16.mxu0 %v3941
    %4032 = vmatpush1.bf16.msra.mxu0 %v3940
    %4033 = vmatprep.subr.bf16.mxu0 %v3945
    %4034 = vmatpush1.bf16.msra.mxu0 %v3944
    %4035 = vmatprep.subr.bf16.mxu0 0
    %4036 = vmatpush1.bf16.msra.mxu0 0
    %4037 = vmatprep.subr.bf16.mxu0 0
    %4038 = vmatpush1.bf16.msra.mxu0 0
    %4039 = vmatprep.subr.bf16.mxu0 0
    %4040 = vmatpush1.bf16.msra.mxu0 0
    %4041 = vmatprep.subr.bf16.mxu0 0
    %4042 = vmatpush1.bf16.msra.mxu0 0
    %4043 = vmatprep.subr.bf16.mxu0 0
    %4044 = vmatpush1.bf16.msra.mxu0 0
    %4045 = vmatprep.subr.bf16.mxu0 0
    %4046 = vmatpush1.bf16.msra.mxu0 0
    %4047 = vmatprep.subr.bf16.mxu0 0
    %4048 = vmatpush1.bf16.msra.mxu0 0
    %4049 = vmatprep.subr.bf16.mxu0 0
    %4050 = vmatpush1.bf16.msra.mxu0 0
    %4051 = vmatprep.mubr.bf16.mxu0 0
    %4052 = vmatmul.mubr.bf16.gmra.mrb[0].mxu0 %v3285
    %v4053 = vpop.f32.mrb[0].mxu0
    %v4054 = vadd.f32 0.0, %v4053
    %v4055 = vpop.f32.mrb[0].mxu0
    %v4056 = vadd.f32 0.0, %v4055
    %v4057 = vpop.f32.mrb[0].mxu0
    %v4058 = vpop.f32.mrb[0].mxu0
    %4059 = vdwg.mxu0
    %v4060 = vadd.f32 %v3782, %v4013
    %v4061 = vadd.f32 %v3783, %v4015
    %v4062 = vadd.f32 %v3784, %v4054
    %v4063 = vadd.f32 %v3785, %v4056
    %v4064 = vxor.u32 %v4060, 2147483648
    %v4065 = vmul.f32 %v4064, 1.442695
    %v4066 = vpow.pop %v4065
    %v4067 = vadd.f32 %v4066, 1.0
    %v4068 = vrcp.pop %v4067
    %v4069 = vmul.f32 1.0, %v4068
    %v4070 = vxor.u32 %v4061, 2147483648
    %v4071 = vmul.f32 %v4070, 1.442695
    %v4072 = vpow.pop %v4071
    %v4073 = vadd.f32 %v4072, 1.0
    %v4074 = vrcp.pop %v4073
    %v4075 = vmul.f32 1.0, %v4074
    %v4076 = vtanh.pop %v4062
    %v4077 = vxor.u32 %v4063, 2147483648
    %v4078 = vmul.f32 %v4077, 1.442695
    %v4079 = vpow.pop %v4078
    %v4080 = vadd.f32 %v4079, 1.0
    %v4081 = vrcp.pop %v4080
    %v4082 = vmul.f32 1.0, %v4081
    %v4083 = vmul.f32 %v4075, %v3282
    %v4084 = vmul.f32 %v4069, %v4076
    %v4085 = vadd.f32 %v4083, %v4084
    %v4086 = vtanh.pop %v4085
    %v4087 = vmul.f32 %v4082, %v4086
    %v4088 = vpack.c.bf16 %v4087, %v4087
    %v4089 = vpack.c.bf16 %v3776, %v3776
    %v4090 = vld [vmem:[#allocation10] sm:$0xff]
    %v4091 = vld [vmem:[#allocation10 + $0x8] sm:$0xff]
    %v4092 = vld [vmem:[#allocation10 + $0x10] sm:$0xff]
    %v4093 = vld [vmem:[#allocation10 + $0x18] sm:$0xff]
    %v4094 = vld [vmem:[#allocation10 + $0x20] sm:$0xff]
    %v4095 = vld [vmem:[#allocation10 + $0x28] sm:$0xff]
    %v4096 = vld [vmem:[#allocation10 + $0x30] sm:$0xff]
    %v4097 = vld [vmem:[#allocation10 + $0x38] sm:$0xff]
    %v4098 = vld [vmem:[#allocation10 + $0x40] sm:$0xff]
    %v4099 = vld [vmem:[#allocation10 + $0x48] sm:$0xff]
    %v4100 = vld [vmem:[#allocation10 + $0x50] sm:$0xff]
    %v4101 = vld [vmem:[#allocation10 + $0x58] sm:$0xff]
    %v4102 = vld [vmem:[#allocation10 + $0x60] sm:$0xff]
    %v4103 = vld [vmem:[#allocation10 + $0x68] sm:$0xff]
    %v4104 = vld [vmem:[#allocation10 + $0x70] sm:$0xff]
    %v4105 = vld [vmem:[#allocation10 + $0x78] sm:$0xff]
    %v4106 = vld [vmem:[#allocation10 + $0x80] sm:$0xff]
    %v4107 = vld [vmem:[#allocation10 + $0x88] sm:$0xff]
    %v4108 = vld [vmem:[#allocation10 + $0x90] sm:$0xff]
    %v4109 = vld [vmem:[#allocation10 + $0x98] sm:$0xff]
    %v4110 = vld [vmem:[#allocation10 + $0xa0] sm:$0xff]
    %v4111 = vld [vmem:[#allocation10 + $0xa8] sm:$0xff]
    %v4112 = vld [vmem:[#allocation10 + $0xb0] sm:$0xff]
    %v4113 = vld [vmem:[#allocation10 + $0xb8] sm:$0xff]
    %v4114 = vld [vmem:[#allocation10 + $0xc0] sm:$0xff]
    %v4115 = vld [vmem:[#allocation10 + $0xc8] sm:$0xff]
    %v4116 = vld [vmem:[#allocation10 + $0xd0] sm:$0xff]
    %v4117 = vld [vmem:[#allocation10 + $0xd8] sm:$0xff]
    %v4118 = vld [vmem:[#allocation10 + $0xe0] sm:$0xff]
    %v4119 = vld [vmem:[#allocation10 + $0xe8] sm:$0xff]
    %v4120 = vld [vmem:[#allocation10 + $0xf0] sm:$0xff]
    %v4121 = vld [vmem:[#allocation10 + $0xf8] sm:$0xff]
    %v4122 = vld [vmem:[#allocation10 + $0x100] sm:$0xff]
    %v4123 = vld [vmem:[#allocation10 + $0x108] sm:$0xff]
    %v4124 = vld [vmem:[#allocation10 + $0x110] sm:$0xff]
    %v4125 = vld [vmem:[#allocation10 + $0x118] sm:$0xff]
    %v4126 = vld [vmem:[#allocation10 + $0x120] sm:$0xff]
    %v4127 = vld [vmem:[#allocation10 + $0x128] sm:$0xff]
    %v4128 = vld [vmem:[#allocation10 + $0x130] sm:$0xff]
    %v4129 = vld [vmem:[#allocation10 + $0x138] sm:$0xff]
    %v4130 = vld [vmem:[#allocation10 + $0x140] sm:$0xff]
    %v4131 = vld [vmem:[#allocation10 + $0x148] sm:$0xff]
    %v4132 = vld [vmem:[#allocation10 + $0x150] sm:$0xff]
    %v4133 = vld [vmem:[#allocation10 + $0x158] sm:$0xff]
    %v4134 = vld [vmem:[#allocation10 + $0x160] sm:$0xff]
    %v4135 = vld [vmem:[#allocation10 + $0x168] sm:$0xff]
    %v4136 = vld [vmem:[#allocation10 + $0x170] sm:$0xff]
    %v4137 = vld [vmem:[#allocation10 + $0x178] sm:$0xff]
    %v4138 = vld [vmem:[#allocation10 + $0x180] sm:$0xff]
    %v4139 = vld [vmem:[#allocation10 + $0x188] sm:$0xff]
    %v4140 = vld [vmem:[#allocation10 + $0x190] sm:$0xff]
    %v4141 = vld [vmem:[#allocation10 + $0x198] sm:$0xff]
    %v4142 = vld [vmem:[#allocation10 + $0x1a0] sm:$0xff]
    %v4143 = vld [vmem:[#allocation10 + $0x1a8] sm:$0xff]
    %v4144 = vld [vmem:[#allocation10 + $0x1b0] sm:$0xff]
    %v4145 = vld [vmem:[#allocation10 + $0x1b8] sm:$0xff]
    %v4146 = vld [vmem:[#allocation10 + $0x1c0] sm:$0xff]
    %v4147 = vld [vmem:[#allocation10 + $0x1c8] sm:$0xff]
    %v4148 = vld [vmem:[#allocation10 + $0x1d0] sm:$0xff]
    %v4149 = vld [vmem:[#allocation10 + $0x1d8] sm:$0xff]
    %v4150 = vld [vmem:[#allocation10 + $0x1e0] sm:$0xff]
    %v4151 = vld [vmem:[#allocation10 + $0x1e8] sm:$0xff]
    %v4152 = vld [vmem:[#allocation10 + $0x1f0] sm:$0xff]
    %v4153 = vld [vmem:[#allocation10 + $0x1f8] sm:$0xff]
    %v4218 = vunpack.c.l.b16 %v4090
    %v4219 = vunpack.c.h.b16 %v4090
    %v4220 = vunpack.c.l.b16 %v4091
    %v4221 = vunpack.c.h.b16 %v4091
    %v4222 = vunpack.c.l.b16 %v4092
    %v4223 = vunpack.c.h.b16 %v4092
    %v4224 = vunpack.c.l.b16 %v4093
    %v4225 = vunpack.c.h.b16 %v4093
    %v4226 = vunpack.c.l.b16 %v4094
    %v4227 = vunpack.c.h.b16 %v4094
    %v4228 = vunpack.c.l.b16 %v4095
    %v4229 = vunpack.c.h.b16 %v4095
    %v4230 = vunpack.c.l.b16 %v4096
    %v4231 = vunpack.c.h.b16 %v4096
    %v4232 = vunpack.c.l.b16 %v4097
    %v4233 = vunpack.c.h.b16 %v4097
    %v4234 = vunpack.c.l.b16 %v4098
    %v4235 = vunpack.c.h.b16 %v4098
    %v4236 = vunpack.c.l.b16 %v4099
    %v4237 = vunpack.c.h.b16 %v4099
    %v4238 = vunpack.c.l.b16 %v4100
    %v4239 = vunpack.c.h.b16 %v4100
    %v4240 = vunpack.c.l.b16 %v4101
    %v4241 = vunpack.c.h.b16 %v4101
    %v4242 = vunpack.c.l.b16 %v4102
    %v4243 = vunpack.c.h.b16 %v4102
    %v4244 = vunpack.c.l.b16 %v4103
    %v4245 = vunpack.c.h.b16 %v4103
    %v4246 = vunpack.c.l.b16 %v4104
    %v4247 = vunpack.c.h.b16 %v4104
    %v4248 = vunpack.c.l.b16 %v4105
    %v4249 = vunpack.c.h.b16 %v4105
    %v4250 = vunpack.c.l.b16 %v4106
    %v4251 = vunpack.c.h.b16 %v4106
    %v4252 = vunpack.c.l.b16 %v4107
    %v4253 = vunpack.c.h.b16 %v4107
    %v4254 = vunpack.c.l.b16 %v4108
    %v4255 = vunpack.c.h.b16 %v4108
    %v4256 = vunpack.c.l.b16 %v4109
    %v4257 = vunpack.c.h.b16 %v4109
    %v4258 = vunpack.c.l.b16 %v4110
    %v4259 = vunpack.c.h.b16 %v4110
    %v4260 = vunpack.c.l.b16 %v4111
    %v4261 = vunpack.c.h.b16 %v4111
    %v4262 = vunpack.c.l.b16 %v4112
    %v4263 = vunpack.c.h.b16 %v4112
    %v4264 = vunpack.c.l.b16 %v4113
    %v4265 = vunpack.c.h.b16 %v4113
    %v4266 = vunpack.c.l.b16 %v4114
    %v4267 = vunpack.c.h.b16 %v4114
    %v4268 = vunpack.c.l.b16 %v4115
    %v4269 = vunpack.c.h.b16 %v4115
    %v4270 = vunpack.c.l.b16 %v4116
    %v4271 = vunpack.c.h.b16 %v4116
    %v4272 = vunpack.c.l.b16 %v4117
    %v4273 = vunpack.c.h.b16 %v4117
    %v4274 = vunpack.c.l.b16 %v4118
    %v4275 = vunpack.c.h.b16 %v4118
    %v4276 = vunpack.c.l.b16 %v4119
    %v4277 = vunpack.c.h.b16 %v4119
    %v4278 = vunpack.c.l.b16 %v4120
    %v4279 = vunpack.c.h.b16 %v4120
    %v4280 = vunpack.c.l.b16 %v4121
    %v4281 = vunpack.c.h.b16 %v4121
    %v4282 = vunpack.c.l.b16 %v4122
    %v4283 = vunpack.c.h.b16 %v4122
    %v4284 = vunpack.c.l.b16 %v4123
    %v4285 = vunpack.c.h.b16 %v4123
    %v4286 = vunpack.c.l.b16 %v4124
    %v4287 = vunpack.c.h.b16 %v4124
    %v4288 = vunpack.c.l.b16 %v4125
    %v4289 = vunpack.c.h.b16 %v4125
    %v4290 = vunpack.c.l.b16 %v4126
    %v4291 = vunpack.c.h.b16 %v4126
    %v4292 = vunpack.c.l.b16 %v4127
    %v4293 = vunpack.c.h.b16 %v4127
    %v4294 = vunpack.c.l.b16 %v4128
    %v4295 = vunpack.c.h.b16 %v4128
    %v4296 = vunpack.c.l.b16 %v4129
    %v4297 = vunpack.c.h.b16 %v4129
    %v4298 = vunpack.c.l.b16 %v4130
    %v4299 = vunpack.c.h.b16 %v4130
    %v4300 = vunpack.c.l.b16 %v4131
    %v4301 = vunpack.c.h.b16 %v4131
    %v4302 = vunpack.c.l.b16 %v4132
    %v4303 = vunpack.c.h.b16 %v4132
    %v4304 = vunpack.c.l.b16 %v4133
    %v4305 = vunpack.c.h.b16 %v4133
    %v4306 = vunpack.c.l.b16 %v4134
    %v4307 = vunpack.c.h.b16 %v4134
    %v4308 = vunpack.c.l.b16 %v4135
    %v4309 = vunpack.c.h.b16 %v4135
    %v4310 = vunpack.c.l.b16 %v4136
    %v4311 = vunpack.c.h.b16 %v4136
    %v4312 = vunpack.c.l.b16 %v4137
    %v4313 = vunpack.c.h.b16 %v4137
    %v4314 = vunpack.c.l.b16 %v4138
    %v4315 = vunpack.c.h.b16 %v4138
    %v4316 = vunpack.c.l.b16 %v4139
    %v4317 = vunpack.c.h.b16 %v4139
    %v4318 = vunpack.c.l.b16 %v4140
    %v4319 = vunpack.c.h.b16 %v4140
    %v4320 = vunpack.c.l.b16 %v4141
    %v4321 = vunpack.c.h.b16 %v4141
    %v4322 = vunpack.c.l.b16 %v4142
    %v4323 = vunpack.c.h.b16 %v4142
    %v4324 = vunpack.c.l.b16 %v4143
    %v4325 = vunpack.c.h.b16 %v4143
    %v4326 = vunpack.c.l.b16 %v4144
    %v4327 = vunpack.c.h.b16 %v4144
    %v4328 = vunpack.c.l.b16 %v4145
    %v4329 = vunpack.c.h.b16 %v4145
    %v4330 = vunpack.c.l.b16 %v4146
    %v4331 = vunpack.c.h.b16 %v4146
    %v4332 = vunpack.c.l.b16 %v4147
    %v4333 = vunpack.c.h.b16 %v4147
    %v4334 = vunpack.c.l.b16 %v4148
    %v4335 = vunpack.c.h.b16 %v4148
    %v4336 = vunpack.c.l.b16 %v4149
    %v4337 = vunpack.c.h.b16 %v4149
    %v4338 = vunpack.c.l.b16 %v4150
    %v4339 = vunpack.c.h.b16 %v4150
    %v4340 = vunpack.c.l.b16 %v4151
    %v4341 = vunpack.c.h.b16 %v4151
    %v4342 = vunpack.c.l.b16 %v4152
    %v4343 = vunpack.c.h.b16 %v4152
    %v4344 = vunpack.c.l.b16 %v4153
    %v4345 = vunpack.c.h.b16 %v4153
    %v4346 = vpack.c.b16 %v4222, %v4218
    %v4347 = vpack.c.b16 %v4223, %v4219
    %v4348 = vpack.c.b16 %v4224, %v4220
    %v4349 = vpack.c.b16 %v4225, %v4221
    %v4350 = vpack.c.b16 %v4230, %v4226
    %v4351 = vpack.c.b16 %v4231, %v4227
    %v4352 = vpack.c.b16 %v4232, %v4228
    %v4353 = vpack.c.b16 %v4233, %v4229
    %v4354 = vpack.c.b16 %v4238, %v4234
    %v4355 = vpack.c.b16 %v4239, %v4235
    %v4356 = vpack.c.b16 %v4240, %v4236
    %v4357 = vpack.c.b16 %v4241, %v4237
    %v4358 = vpack.c.b16 %v4246, %v4242
    %v4359 = vpack.c.b16 %v4247, %v4243
    %v4360 = vpack.c.b16 %v4248, %v4244
    %v4361 = vpack.c.b16 %v4249, %v4245
    %v4362 = vpack.c.b16 %v4254, %v4250
    %v4363 = vpack.c.b16 %v4255, %v4251
    %v4364 = vpack.c.b16 %v4256, %v4252
    %v4365 = vpack.c.b16 %v4257, %v4253
    %v4366 = vpack.c.b16 %v4262, %v4258
    %v4367 = vpack.c.b16 %v4263, %v4259
    %v4368 = vpack.c.b16 %v4264, %v4260
    %v4369 = vpack.c.b16 %v4265, %v4261
    %v4370 = vpack.c.b16 %v4270, %v4266
    %v4371 = vpack.c.b16 %v4271, %v4267
    %v4372 = vpack.c.b16 %v4272, %v4268
    %v4373 = vpack.c.b16 %v4273, %v4269
    %v4374 = vpack.c.b16 %v4278, %v4274
    %v4375 = vpack.c.b16 %v4279, %v4275
    %v4376 = vpack.c.b16 %v4280, %v4276
    %v4377 = vpack.c.b16 %v4281, %v4277
    %v4378 = vpack.c.b16 %v4286, %v4282
    %v4379 = vpack.c.b16 %v4287, %v4283
    %v4380 = vpack.c.b16 %v4288, %v4284
    %v4381 = vpack.c.b16 %v4289, %v4285
    %v4382 = vpack.c.b16 %v4294, %v4290
    %v4383 = vpack.c.b16 %v4295, %v4291
    %v4384 = vpack.c.b16 %v4296, %v4292
    %v4385 = vpack.c.b16 %v4297, %v4293
    %v4386 = vpack.c.b16 %v4302, %v4298
    %v4387 = vpack.c.b16 %v4303, %v4299
    %v4388 = vpack.c.b16 %v4304, %v4300
    %v4389 = vpack.c.b16 %v4305, %v4301
    %v4390 = vpack.c.b16 %v4310, %v4306
    %v4391 = vpack.c.b16 %v4311, %v4307
    %v4392 = vpack.c.b16 %v4312, %v4308
    %v4393 = vpack.c.b16 %v4313, %v4309
    %v4394 = vpack.c.b16 %v4318, %v4314
    %v4395 = vpack.c.b16 %v4319, %v4315
    %v4396 = vpack.c.b16 %v4320, %v4316
    %v4397 = vpack.c.b16 %v4321, %v4317
    %v4398 = vpack.c.b16 %v4326, %v4322
    %v4399 = vpack.c.b16 %v4327, %v4323
    %v4400 = vpack.c.b16 %v4328, %v4324
    %v4401 = vpack.c.b16 %v4329, %v4325
    %v4402 = vpack.c.b16 %v4334, %v4330
    %v4403 = vpack.c.b16 %v4335, %v4331
    %v4404 = vpack.c.b16 %v4336, %v4332
    %v4405 = vpack.c.b16 %v4337, %v4333
    %v4406 = vpack.c.b16 %v4342, %v4338
    %v4407 = vpack.c.b16 %v4343, %v4339
    %v4408 = vpack.c.b16 %v4344, %v4340
    %v4409 = vpack.c.b16 %v4345, %v4341
    %4474 = vmatprep.subr.bf16.mxu0 %v4347
    %4475 = vmatpush1.bf16.msra.mxu0 %v4346
    %4476 = vmatprep.subr.bf16.mxu0 %v4351
    %4477 = vmatpush1.bf16.msra.mxu0 %v4350
    %4478 = vmatprep.subr.bf16.mxu0 %v4355
    %4479 = vmatpush1.bf16.msra.mxu0 %v4354
    %4480 = vmatprep.subr.bf16.mxu0 %v4359
    %4481 = vmatpush1.bf16.msra.mxu0 %v4358
    %4482 = vmatprep.subr.bf16.mxu0 %v4363
    %4483 = vmatpush1.bf16.msra.mxu0 %v4362
    %4484 = vmatprep.subr.bf16.mxu0 %v4367
    %4485 = vmatpush1.bf16.msra.mxu0 %v4366
    %4486 = vmatprep.subr.bf16.mxu0 %v4371
    %4487 = vmatpush1.bf16.msra.mxu0 %v4370
    %4488 = vmatprep.subr.bf16.mxu0 %v4375
    %4489 = vmatpush1.bf16.msra.mxu0 %v4374
    %4490 = vmatprep.subr.bf16.mxu0 %v4379
    %4491 = vmatpush1.bf16.msra.mxu0 %v4378
    %4492 = vmatprep.subr.bf16.mxu0 %v4383
    %4493 = vmatpush1.bf16.msra.mxu0 %v4382
    %4494 = vmatprep.subr.bf16.mxu0 %v4387
    %4495 = vmatpush1.bf16.msra.mxu0 %v4386
    %4496 = vmatprep.subr.bf16.mxu0 %v4391
    %4497 = vmatpush1.bf16.msra.mxu0 %v4390
    %4498 = vmatprep.subr.bf16.mxu0 %v4395
    %4499 = vmatpush1.bf16.msra.mxu0 %v4394
    %4500 = vmatprep.subr.bf16.mxu0 %v4399
    %4501 = vmatpush1.bf16.msra.mxu0 %v4398
    %4502 = vmatprep.subr.bf16.mxu0 %v4403
    %4503 = vmatpush1.bf16.msra.mxu0 %v4402
    %4504 = vmatprep.subr.bf16.mxu0 %v4407
    %4505 = vmatpush1.bf16.msra.mxu0 %v4406
    %4506 = vmatprep.mubr.bf16.mxu0 %v4089
    %4507 = vmatmul.mubr.bf16.gmra.mrb[0].mxu0 %v4088
    %v4508 = vpop.f32.mrb[0].mxu0
    %v4509 = vadd.f32 %v551, %v4508
    %v4510 = vpop.f32.mrb[0].mxu0
    %v4511 = vadd.f32 %v555, %v4510
    %v4512 = vpop.f32.mrb[0].mxu0
    %v4513 = vpop.f32.mrb[0].mxu0
    %4514 = vdwg.mxu0
    %4515 = vmatprep.subr.bf16.mxu0 %v4349
    %4516 = vmatpush1.bf16.msra.mxu0 %v4348
    %4517 = vmatprep.subr.bf16.mxu0 %v4353
    %4518 = vmatpush1.bf16.msra.mxu0 %v4352
    %4519 = vmatprep.subr.bf16.mxu0 %v4357
    %4520 = vmatpush1.bf16.msra.mxu0 %v4356
    %4521 = vmatprep.subr.bf16.mxu0 %v4361
    %4522 = vmatpush1.bf16.msra.mxu0 %v4360
    %4523 = vmatprep.subr.bf16.mxu0 %v4365
    %4524 = vmatpush1.bf16.msra.mxu0 %v4364
    %4525 = vmatprep.subr.bf16.mxu0 %v4369
    %4526 = vmatpush1.bf16.msra.mxu0 %v4368
    %4527 = vmatprep.subr.bf16.mxu0 %v4373
    %4528 = vmatpush1.bf16.msra.mxu0 %v4372
    %4529 = vmatprep.subr.bf16.mxu0 %v4377
    %4530 = vmatpush1.bf16.msra.mxu0 %v4376
    %4531 = vmatprep.subr.bf16.mxu0 %v4381
    %4532 = vmatpush1.bf16.msra.mxu0 %v4380
    %4533 = vmatprep.subr.bf16.mxu0 %v4385
    %4534 = vmatpush1.bf16.msra.mxu0 %v4384
    %4535 = vmatprep.subr.bf16.mxu0 %v4389
    %4536 = vmatpush1.bf16.msra.mxu0 %v4388
    %4537 = vmatprep.subr.bf16.mxu0 %v4393
    %4538 = vmatpush1.bf16.msra.mxu0 %v4392
    %4539 = vmatprep.subr.bf16.mxu0 %v4397
    %4540 = vmatpush1.bf16.msra.mxu0 %v4396
    %4541 = vmatprep.subr.bf16.mxu0 %v4401
    %4542 = vmatpush1.bf16.msra.mxu0 %v4400
    %4543 = vmatprep.subr.bf16.mxu0 %v4405
    %4544 = vmatpush1.bf16.msra.mxu0 %v4404
    %4545 = vmatprep.subr.bf16.mxu0 %v4409
    %4546 = vmatpush1.bf16.msra.mxu0 %v4408
    %4547 = vmatprep.mubr.bf16.mxu0 %v4089
    %4548 = vmatmul.mubr.bf16.gmra.mrb[0].mxu0 %v4088
    %v4549 = vpop.f32.mrb[0].mxu0
    %v4550 = vadd.f32 %v559, %v4549
    %v4551 = vpop.f32.mrb[0].mxu0
    %v4552 = vadd.f32 %v563, %v4551
    %v4553 = vpop.f32.mrb[0].mxu0
    %v4554 = vpop.f32.mrb[0].mxu0
    %4555 = vdwg.mxu0
    %v4556 = vxor.u32 %v4509, 2147483648
    %v4557 = vmul.f32 %v4556, 1.442695
    %v4558 = vpow.pop %v4557
    %v4559 = vadd.f32 %v4558, 1.0
    %v4560 = vrcp.pop %v4559
    %v4561 = vmul.f32 1.0, %v4560
    %v4562 = vxor.u32 %v4511, 2147483648
    %v4563 = vmul.f32 %v4562, 1.442695
    %v4564 = vpow.pop %v4563
    %v4565 = vadd.f32 %v4564, 1.0
    %v4566 = vrcp.pop %v4565
    %v4567 = vmul.f32 1.0, %v4566
    %v4568 = vtanh.pop %v4550
    %v4569 = vxor.u32 %v4552, 2147483648
    %v4570 = vmul.f32 %v4569, 1.442695
    %v4571 = vpow.pop %v4570
    %v4572 = vadd.f32 %v4571, 1.0
    %v4573 = vrcp.pop %v4572
    %v4574 = vmul.f32 1.0, %v4573
    %v4575 = vmul.f32 %v4567, %v3774
    %v4576 = vmul.f32 %v4561, %v4568
    %v4577 = vadd.f32 %v4575, %v4576
    %v4578 = vtanh.pop %v4577
    %v4579 = vmul.f32 %v4574, %v4578
    %s4580 = scalar_lea.vmem [#allocation3], 32
    %4581 = vst [vmem:[%s4580] sm:$0xff] %v4579
    %s4582 = smul.u32 5, 4
    %s4583 = smul.addr %s4582, 8
    %s4584 = scalar_lea.vmem [#allocation2], %s4583
    %v4585 = vld [vmem:[%s4584] sm:$0xff]
    %v4586 = vld [vmem:[%s4584 + $0x8] sm:$0xff]
    %v4587 = vld [vmem:[%s4584 + $0x10] sm:$0xff]
    %v4588 = vld [vmem:[%s4584 + $0x18] sm:$0xff]
    %v4589 = vld [vmem:[#allocation9] sm:$0xff]
    %v4590 = vld [vmem:[#allocation9 + $0x8] sm:$0xff]
    %v4591 = vld [vmem:[#allocation9 + $0x10] sm:$0xff]
    %v4592 = vld [vmem:[#allocation9 + $0x18] sm:$0xff]
    %v4593 = vld [vmem:[#allocation9 + $0x20] sm:$0xff]
    %v4594 = vld [vmem:[#allocation9 + $0x28] sm:$0xff]
    %v4595 = vld [vmem:[#allocation9 + $0x30] sm:$0xff]
    %v4596 = vld [vmem:[#allocation9 + $0x38] sm:$0xff]
    %v4597 = vld [vmem:[#allocation9 + $0x40] sm:$0xff]
    %v4598 = vld [vmem:[#allocation9 + $0x48] sm:$0xff]
    %v4599 = vld [vmem:[#allocation9 + $0x50] sm:$0xff]
    %v4600 = vld [vmem:[#allocation9 + $0x58] sm:$0xff]
    %v4601 = vld [vmem:[#allocation9 + $0x60] sm:$0xff]
    %v4602 = vld [vmem:[#allocation9 + $0x68] sm:$0xff]
    %v4603 = vld [vmem:[#allocation9 + $0x70] sm:$0xff]
    %v4604 = vld [vmem:[#allocation9 + $0x78] sm:$0xff]
    %v4605 = vld [vmem:[#allocation9 + $0x80] sm:$0xff]
    %v4606 = vld [vmem:[#allocation9 + $0x88] sm:$0xff]
    %v4607 = vld [vmem:[#allocation9 + $0x90] sm:$0xff]
    %v4608 = vld [vmem:[#allocation9 + $0x98] sm:$0xff]
    %v4609 = vld [vmem:[#allocation9 + $0xa0] sm:$0xff]
    %v4610 = vld [vmem:[#allocation9 + $0xa8] sm:$0xff]
    %v4611 = vld [vmem:[#allocation9 + $0xb0] sm:$0xff]
    %v4612 = vld [vmem:[#allocation9 + $0xb8] sm:$0xff]
    %v4613 = vld [vmem:[#allocation9 + $0xc0] sm:$0xff]
    %v4614 = vld [vmem:[#allocation9 + $0xc8] sm:$0xff]
    %v4615 = vld [vmem:[#allocation9 + $0xd0] sm:$0xff]
    %v4616 = vld [vmem:[#allocation9 + $0xd8] sm:$0xff]
    %v4617 = vld [vmem:[#allocation9 + $0xe0] sm:$0xff]
    %v4618 = vld [vmem:[#allocation9 + $0xe8] sm:$0xff]
    %v4619 = vld [vmem:[#allocation9 + $0xf0] sm:$0xff]
    %v4620 = vld [vmem:[#allocation9 + $0xf8] sm:$0xff]
    %v4653 = vunpack.c.l.b16 %v4589
    %v4654 = vunpack.c.h.b16 %v4589
    %v4655 = vunpack.c.l.b16 %v4590
    %v4656 = vunpack.c.h.b16 %v4590
    %v4657 = vunpack.c.l.b16 %v4591
    %v4658 = vunpack.c.h.b16 %v4591
    %v4659 = vunpack.c.l.b16 %v4592
    %v4660 = vunpack.c.h.b16 %v4592
    %v4661 = vunpack.c.l.b16 %v4593
    %v4662 = vunpack.c.h.b16 %v4593
    %v4663 = vunpack.c.l.b16 %v4594
    %v4664 = vunpack.c.h.b16 %v4594
    %v4665 = vunpack.c.l.b16 %v4595
    %v4666 = vunpack.c.h.b16 %v4595
    %v4667 = vunpack.c.l.b16 %v4596
    %v4668 = vunpack.c.h.b16 %v4596
    %v4669 = vunpack.c.l.b16 %v4597
    %v4670 = vunpack.c.h.b16 %v4597
    %v4671 = vunpack.c.l.b16 %v4598
    %v4672 = vunpack.c.h.b16 %v4598
    %v4673 = vunpack.c.l.b16 %v4599
    %v4674 = vunpack.c.h.b16 %v4599
    %v4675 = vunpack.c.l.b16 %v4600
    %v4676 = vunpack.c.h.b16 %v4600
    %v4677 = vunpack.c.l.b16 %v4601
    %v4678 = vunpack.c.h.b16 %v4601
    %v4679 = vunpack.c.l.b16 %v4602
    %v4680 = vunpack.c.h.b16 %v4602
    %v4681 = vunpack.c.l.b16 %v4603
    %v4682 = vunpack.c.h.b16 %v4603
    %v4683 = vunpack.c.l.b16 %v4604
    %v4684 = vunpack.c.h.b16 %v4604
    %v4685 = vunpack.c.l.b16 %v4605
    %v4686 = vunpack.c.h.b16 %v4605
    %v4687 = vunpack.c.l.b16 %v4606
    %v4688 = vunpack.c.h.b16 %v4606
    %v4689 = vunpack.c.l.b16 %v4607
    %v4690 = vunpack.c.h.b16 %v4607
    %v4691 = vunpack.c.l.b16 %v4608
    %v4692 = vunpack.c.h.b16 %v4608
    %v4693 = vunpack.c.l.b16 %v4609
    %v4694 = vunpack.c.h.b16 %v4609
    %v4695 = vunpack.c.l.b16 %v4610
    %v4696 = vunpack.c.h.b16 %v4610
    %v4697 = vunpack.c.l.b16 %v4611
    %v4698 = vunpack.c.h.b16 %v4611
    %v4699 = vunpack.c.l.b16 %v4612
    %v4700 = vunpack.c.h.b16 %v4612
    %v4701 = vunpack.c.l.b16 %v4613
    %v4702 = vunpack.c.h.b16 %v4613
    %v4703 = vunpack.c.l.b16 %v4614
    %v4704 = vunpack.c.h.b16 %v4614
    %v4705 = vunpack.c.l.b16 %v4615
    %v4706 = vunpack.c.h.b16 %v4615
    %v4707 = vunpack.c.l.b16 %v4616
    %v4708 = vunpack.c.h.b16 %v4616
    %v4709 = vunpack.c.l.b16 %v4617
    %v4710 = vunpack.c.h.b16 %v4617
    %v4711 = vunpack.c.l.b16 %v4618
    %v4712 = vunpack.c.h.b16 %v4618
    %v4713 = vunpack.c.l.b16 %v4619
    %v4714 = vunpack.c.h.b16 %v4619
    %v4715 = vunpack.c.l.b16 %v4620
    %v4716 = vunpack.c.h.b16 %v4620
    %v4717 = vpack.c.b16 %v4657, %v4653
    %v4718 = vpack.c.b16 %v4658, %v4654
    %v4719 = vpack.c.b16 %v4659, %v4655
    %v4720 = vpack.c.b16 %v4660, %v4656
    %v4721 = vpack.c.b16 %v4665, %v4661
    %v4722 = vpack.c.b16 %v4666, %v4662
    %v4723 = vpack.c.b16 %v4667, %v4663
    %v4724 = vpack.c.b16 %v4668, %v4664
    %v4725 = vpack.c.b16 %v4673, %v4669
    %v4726 = vpack.c.b16 %v4674, %v4670
    %v4727 = vpack.c.b16 %v4675, %v4671
    %v4728 = vpack.c.b16 %v4676, %v4672
    %v4729 = vpack.c.b16 %v4681, %v4677
    %v4730 = vpack.c.b16 %v4682, %v4678
    %v4731 = vpack.c.b16 %v4683, %v4679
    %v4732 = vpack.c.b16 %v4684, %v4680
    %v4733 = vpack.c.b16 %v4689, %v4685
    %v4734 = vpack.c.b16 %v4690, %v4686
    %v4735 = vpack.c.b16 %v4691, %v4687
    %v4736 = vpack.c.b16 %v4692, %v4688
    %v4737 = vpack.c.b16 %v4697, %v4693
    %v4738 = vpack.c.b16 %v4698, %v4694
    %v4739 = vpack.c.b16 %v4699, %v4695
    %v4740 = vpack.c.b16 %v4700, %v4696
    %v4741 = vpack.c.b16 %v4705, %v4701
    %v4742 = vpack.c.b16 %v4706, %v4702
    %v4743 = vpack.c.b16 %v4707, %v4703
    %v4744 = vpack.c.b16 %v4708, %v4704
    %v4745 = vpack.c.b16 %v4713, %v4709
    %v4746 = vpack.c.b16 %v4714, %v4710
    %v4747 = vpack.c.b16 %v4715, %v4711
    %v4748 = vpack.c.b16 %v4716, %v4712
    %4781 = vmatprep.subr.bf16.mxu0 %v4718
    %4782 = vmatpush1.bf16.msra.mxu0 %v4717
    %4783 = vmatprep.subr.bf16.mxu0 %v4722
    %4784 = vmatpush1.bf16.msra.mxu0 %v4721
    %4785 = vmatprep.subr.bf16.mxu0 %v4726
    %4786 = vmatpush1.bf16.msra.mxu0 %v4725
    %4787 = vmatprep.subr.bf16.mxu0 %v4730
    %4788 = vmatpush1.bf16.msra.mxu0 %v4729
    %4789 = vmatprep.subr.bf16.mxu0 %v4734
    %4790 = vmatpush1.bf16.msra.mxu0 %v4733
    %4791 = vmatprep.subr.bf16.mxu0 %v4738
    %4792 = vmatpush1.bf16.msra.mxu0 %v4737
    %4793 = vmatprep.subr.bf16.mxu0 %v4742
    %4794 = vmatpush1.bf16.msra.mxu0 %v4741
    %4795 = vmatprep.subr.bf16.mxu0 %v4746
    %4796 = vmatpush1.bf16.msra.mxu0 %v4745
    %4797 = vmatprep.subr.bf16.mxu0 0
    %4798 = vmatpush1.bf16.msra.mxu0 0
    %4799 = vmatprep.subr.bf16.mxu0 0
    %4800 = vmatpush1.bf16.msra.mxu0 0
    %4801 = vmatprep.subr.bf16.mxu0 0
    %4802 = vmatpush1.bf16.msra.mxu0 0
    %4803 = vmatprep.subr.bf16.mxu0 0
    %4804 = vmatpush1.bf16.msra.mxu0 0
    %4805 = vmatprep.subr.bf16.mxu0 0
    %4806 = vmatpush1.bf16.msra.mxu0 0
    %4807 = vmatprep.subr.bf16.mxu0 0
    %4808 = vmatpush1.bf16.msra.mxu0 0
    %4809 = vmatprep.subr.bf16.mxu0 0
    %4810 = vmatpush1.bf16.msra.mxu0 0
    %4811 = vmatprep.subr.bf16.mxu0 0
    %4812 = vmatpush1.bf16.msra.mxu0 0
    %4813 = vmatprep.mubr.bf16.mxu0 0
    %4814 = vmatmul.mubr.bf16.gmra.mrb[0].mxu0 %v4088
    %v4815 = vpop.f32.mrb[0].mxu0
    %v4816 = vadd.f32 0.0, %v4815
    %v4817 = vpop.f32.mrb[0].mxu0
    %v4818 = vadd.f32 0.0, %v4817
    %v4819 = vpop.f32.mrb[0].mxu0
    %v4820 = vpop.f32.mrb[0].mxu0
    %4821 = vdwg.mxu0
    %4822 = vmatprep.subr.bf16.mxu0 %v4720
    %4823 = vmatpush1.bf16.msra.mxu0 %v4719
    %4824 = vmatprep.subr.bf16.mxu0 %v4724
    %4825 = vmatpush1.bf16.msra.mxu0 %v4723
    %4826 = vmatprep.subr.bf16.mxu0 %v4728
    %4827 = vmatpush1.bf16.msra.mxu0 %v4727
    %4828 = vmatprep.subr.bf16.mxu0 %v4732
    %4829 = vmatpush1.bf16.msra.mxu0 %v4731
    %4830 = vmatprep.subr.bf16.mxu0 %v4736
    %4831 = vmatpush1.bf16.msra.mxu0 %v4735
    %4832 = vmatprep.subr.bf16.mxu0 %v4740
    %4833 = vmatpush1.bf16.msra.mxu0 %v4739
    %4834 = vmatprep.subr.bf16.mxu0 %v4744
    %4835 = vmatpush1.bf16.msra.mxu0 %v4743
    %4836 = vmatprep.subr.bf16.mxu0 %v4748
    %4837 = vmatpush1.bf16.msra.mxu0 %v4747
    %4838 = vmatprep.subr.bf16.mxu0 0
    %4839 = vmatpush1.bf16.msra.mxu0 0
    %4840 = vmatprep.subr.bf16.mxu0 0
    %4841 = vmatpush1.bf16.msra.mxu0 0
    %4842 = vmatprep.subr.bf16.mxu0 0
    %4843 = vmatpush1.bf16.msra.mxu0 0
    %4844 = vmatprep.subr.bf16.mxu0 0
    %4845 = vmatpush1.bf16.msra.mxu0 0
    %4846 = vmatprep.subr.bf16.mxu0 0
    %4847 = vmatpush1.bf16.msra.mxu0 0
    %4848 = vmatprep.subr.bf16.mxu0 0
    %4849 = vmatpush1.bf16.msra.mxu0 0
    %4850 = vmatprep.subr.bf16.mxu0 0
    %4851 = vmatpush1.bf16.msra.mxu0 0
    %4852 = vmatprep.subr.bf16.mxu0 0
    %4853 = vmatpush1.bf16.msra.mxu0 0
    %4854 = vmatprep.mubr.bf16.mxu0 0
    %4855 = vmatmul.mubr.bf16.gmra.mrb[0].mxu0 %v4088
    %v4856 = vpop.f32.mrb[0].mxu0
    %v4857 = vadd.f32 0.0, %v4856
    %v4858 = vpop.f32.mrb[0].mxu0
    %v4859 = vadd.f32 0.0, %v4858
    %v4860 = vpop.f32.mrb[0].mxu0
    %v4861 = vpop.f32.mrb[0].mxu0
    %4862 = vdwg.mxu0
    %v4863 = vadd.f32 %v4585, %v4816
    %v4864 = vadd.f32 %v4586, %v4818
    %v4865 = vadd.f32 %v4587, %v4857
    %v4866 = vadd.f32 %v4588, %v4859
    %v4867 = vxor.u32 %v4863, 2147483648
    %v4868 = vmul.f32 %v4867, 1.442695
    %v4869 = vpow.pop %v4868
    %v4870 = vadd.f32 %v4869, 1.0
    %v4871 = vrcp.pop %v4870
    %v4872 = vmul.f32 1.0, %v4871
    %v4873 = vxor.u32 %v4864, 2147483648
    %v4874 = vmul.f32 %v4873, 1.442695
    %v4875 = vpow.pop %v4874
    %v4876 = vadd.f32 %v4875, 1.0
    %v4877 = vrcp.pop %v4876
    %v4878 = vmul.f32 1.0, %v4877
    %v4879 = vtanh.pop %v4865
    %v4880 = vxor.u32 %v4866, 2147483648
    %v4881 = vmul.f32 %v4880, 1.442695
    %v4882 = vpow.pop %v4881
    %v4883 = vadd.f32 %v4882, 1.0
    %v4884 = vrcp.pop %v4883
    %v4885 = vmul.f32 1.0, %v4884
    %v4886 = vmul.f32 %v4878, %v4085
    %v4887 = vmul.f32 %v4872, %v4879
    %v4888 = vadd.f32 %v4886, %v4887
    %v4889 = vtanh.pop %v4888
    %v4890 = vmul.f32 %v4885, %v4889
    %v4891 = vpack.c.bf16 %v4890, %v4890
    %v4892 = vpack.c.bf16 %v4579, %v4579
    %v4893 = vld [vmem:[#allocation10] sm:$0xff]
    %v4894 = vld [vmem:[#allocation10 + $0x8] sm:$0xff]
    %v4895 = vld [vmem:[#allocation10 + $0x10] sm:$0xff]
    %v4896 = vld [vmem:[#allocation10 + $0x18] sm:$0xff]
    %v4897 = vld [vmem:[#allocation10 + $0x20] sm:$0xff]
    %v4898 = vld [vmem:[#allocation10 + $0x28] sm:$0xff]
    %v4899 = vld [vmem:[#allocation10 + $0x30] sm:$0xff]
    %v4900 = vld [vmem:[#allocation10 + $0x38] sm:$0xff]
    %v4901 = vld [vmem:[#allocation10 + $0x40] sm:$0xff]
    %v4902 = vld [vmem:[#allocation10 + $0x48] sm:$0xff]
    %v4903 = vld [vmem:[#allocation10 + $0x50] sm:$0xff]
    %v4904 = vld [vmem:[#allocation10 + $0x58] sm:$0xff]
    %v4905 = vld [vmem:[#allocation10 + $0x60] sm:$0xff]
    %v4906 = vld [vmem:[#allocation10 + $0x68] sm:$0xff]
    %v4907 = vld [vmem:[#allocation10 + $0x70] sm:$0xff]
    %v4908 = vld [vmem:[#allocation10 + $0x78] sm:$0xff]
    %v4909 = vld [vmem:[#allocation10 + $0x80] sm:$0xff]
    %v4910 = vld [vmem:[#allocation10 + $0x88] sm:$0xff]
    %v4911 = vld [vmem:[#allocation10 + $0x90] sm:$0xff]
    %v4912 = vld [vmem:[#allocation10 + $0x98] sm:$0xff]
    %v4913 = vld [vmem:[#allocation10 + $0xa0] sm:$0xff]
    %v4914 = vld [vmem:[#allocation10 + $0xa8] sm:$0xff]
    %v4915 = vld [vmem:[#allocation10 + $0xb0] sm:$0xff]
    %v4916 = vld [vmem:[#allocation10 + $0xb8] sm:$0xff]
    %v4917 = vld [vmem:[#allocation10 + $0xc0] sm:$0xff]
    %v4918 = vld [vmem:[#allocation10 + $0xc8] sm:$0xff]
    %v4919 = vld [vmem:[#allocation10 + $0xd0] sm:$0xff]
    %v4920 = vld [vmem:[#allocation10 + $0xd8] sm:$0xff]
    %v4921 = vld [vmem:[#allocation10 + $0xe0] sm:$0xff]
    %v4922 = vld [vmem:[#allocation10 + $0xe8] sm:$0xff]
    %v4923 = vld [vmem:[#allocation10 + $0xf0] sm:$0xff]
    %v4924 = vld [vmem:[#allocation10 + $0xf8] sm:$0xff]
    %v4925 = vld [vmem:[#allocation10 + $0x100] sm:$0xff]
    %v4926 = vld [vmem:[#allocation10 + $0x108] sm:$0xff]
    %v4927 = vld [vmem:[#allocation10 + $0x110] sm:$0xff]
    %v4928 = vld [vmem:[#allocation10 + $0x118] sm:$0xff]
    %v4929 = vld [vmem:[#allocation10 + $0x120] sm:$0xff]
    %v4930 = vld [vmem:[#allocation10 + $0x128] sm:$0xff]
    %v4931 = vld [vmem:[#allocation10 + $0x130] sm:$0xff]
    %v4932 = vld [vmem:[#allocation10 + $0x138] sm:$0xff]
    %v4933 = vld [vmem:[#allocation10 + $0x140] sm:$0xff]
    %v4934 = vld [vmem:[#allocation10 + $0x148] sm:$0xff]
    %v4935 = vld [vmem:[#allocation10 + $0x150] sm:$0xff]
    %v4936 = vld [vmem:[#allocation10 + $0x158] sm:$0xff]
    %v4937 = vld [vmem:[#allocation10 + $0x160] sm:$0xff]
    %v4938 = vld [vmem:[#allocation10 + $0x168] sm:$0xff]
    %v4939 = vld [vmem:[#allocation10 + $0x170] sm:$0xff]
    %v4940 = vld [vmem:[#allocation10 + $0x178] sm:$0xff]
    %v4941 = vld [vmem:[#allocation10 + $0x180] sm:$0xff]
    %v4942 = vld [vmem:[#allocation10 + $0x188] sm:$0xff]
    %v4943 = vld [vmem:[#allocation10 + $0x190] sm:$0xff]
    %v4944 = vld [vmem:[#allocation10 + $0x198] sm:$0xff]
    %v4945 = vld [vmem:[#allocation10 + $0x1a0] sm:$0xff]
    %v4946 = vld [vmem:[#allocation10 + $0x1a8] sm:$0xff]
    %v4947 = vld [vmem:[#allocation10 + $0x1b0] sm:$0xff]
    %v4948 = vld [vmem:[#allocation10 + $0x1b8] sm:$0xff]
    %v4949 = vld [vmem:[#allocation10 + $0x1c0] sm:$0xff]
    %v4950 = vld [vmem:[#allocation10 + $0x1c8] sm:$0xff]
    %v4951 = vld [vmem:[#allocation10 + $0x1d0] sm:$0xff]
    %v4952 = vld [vmem:[#allocation10 + $0x1d8] sm:$0xff]
    %v4953 = vld [vmem:[#allocation10 + $0x1e0] sm:$0xff]
    %v4954 = vld [vmem:[#allocation10 + $0x1e8] sm:$0xff]
    %v4955 = vld [vmem:[#allocation10 + $0x1f0] sm:$0xff]
    %v4956 = vld [vmem:[#allocation10 + $0x1f8] sm:$0xff]
    %v5021 = vunpack.c.l.b16 %v4893
    %v5022 = vunpack.c.h.b16 %v4893
    %v5023 = vunpack.c.l.b16 %v4894
    %v5024 = vunpack.c.h.b16 %v4894
    %v5025 = vunpack.c.l.b16 %v4895
    %v5026 = vunpack.c.h.b16 %v4895
    %v5027 = vunpack.c.l.b16 %v4896
    %v5028 = vunpack.c.h.b16 %v4896
    %v5029 = vunpack.c.l.b16 %v4897
    %v5030 = vunpack.c.h.b16 %v4897
    %v5031 = vunpack.c.l.b16 %v4898
    %v5032 = vunpack.c.h.b16 %v4898
    %v5033 = vunpack.c.l.b16 %v4899
    %v5034 = vunpack.c.h.b16 %v4899
    %v5035 = vunpack.c.l.b16 %v4900
    %v5036 = vunpack.c.h.b16 %v4900
    %v5037 = vunpack.c.l.b16 %v4901
    %v5038 = vunpack.c.h.b16 %v4901
    %v5039 = vunpack.c.l.b16 %v4902
    %v5040 = vunpack.c.h.b16 %v4902
    %v5041 = vunpack.c.l.b16 %v4903
    %v5042 = vunpack.c.h.b16 %v4903
    %v5043 = vunpack.c.l.b16 %v4904
    %v5044 = vunpack.c.h.b16 %v4904
    %v5045 = vunpack.c.l.b16 %v4905
    %v5046 = vunpack.c.h.b16 %v4905
    %v5047 = vunpack.c.l.b16 %v4906
    %v5048 = vunpack.c.h.b16 %v4906
    %v5049 = vunpack.c.l.b16 %v4907
    %v5050 = vunpack.c.h.b16 %v4907
    %v5051 = vunpack.c.l.b16 %v4908
    %v5052 = vunpack.c.h.b16 %v4908
    %v5053 = vunpack.c.l.b16 %v4909
    %v5054 = vunpack.c.h.b16 %v4909
    %v5055 = vunpack.c.l.b16 %v4910
    %v5056 = vunpack.c.h.b16 %v4910
    %v5057 = vunpack.c.l.b16 %v4911
    %v5058 = vunpack.c.h.b16 %v4911
    %v5059 = vunpack.c.l.b16 %v4912
    %v5060 = vunpack.c.h.b16 %v4912
    %v5061 = vunpack.c.l.b16 %v4913
    %v5062 = vunpack.c.h.b16 %v4913
    %v5063 = vunpack.c.l.b16 %v4914
    %v5064 = vunpack.c.h.b16 %v4914
    %v5065 = vunpack.c.l.b16 %v4915
    %v5066 = vunpack.c.h.b16 %v4915
    %v5067 = vunpack.c.l.b16 %v4916
    %v5068 = vunpack.c.h.b16 %v4916
    %v5069 = vunpack.c.l.b16 %v4917
    %v5070 = vunpack.c.h.b16 %v4917
    %v5071 = vunpack.c.l.b16 %v4918
    %v5072 = vunpack.c.h.b16 %v4918
    %v5073 = vunpack.c.l.b16 %v4919
    %v5074 = vunpack.c.h.b16 %v4919
    %v5075 = vunpack.c.l.b16 %v4920
    %v5076 = vunpack.c.h.b16 %v4920
    %v5077 = vunpack.c.l.b16 %v4921
    %v5078 = vunpack.c.h.b16 %v4921
    %v5079 = vunpack.c.l.b16 %v4922
    %v5080 = vunpack.c.h.b16 %v4922
    %v5081 = vunpack.c.l.b16 %v4923
    %v5082 = vunpack.c.h.b16 %v4923
    %v5083 = vunpack.c.l.b16 %v4924
    %v5084 = vunpack.c.h.b16 %v4924
    %v5085 = vunpack.c.l.b16 %v4925
    %v5086 = vunpack.c.h.b16 %v4925
    %v5087 = vunpack.c.l.b16 %v4926
    %v5088 = vunpack.c.h.b16 %v4926
    %v5089 = vunpack.c.l.b16 %v4927
    %v5090 = vunpack.c.h.b16 %v4927
    %v5091 = vunpack.c.l.b16 %v4928
    %v5092 = vunpack.c.h.b16 %v4928
    %v5093 = vunpack.c.l.b16 %v4929
    %v5094 = vunpack.c.h.b16 %v4929
    %v5095 = vunpack.c.l.b16 %v4930
    %v5096 = vunpack.c.h.b16 %v4930
    %v5097 = vunpack.c.l.b16 %v4931
    %v5098 = vunpack.c.h.b16 %v4931
    %v5099 = vunpack.c.l.b16 %v4932
    %v5100 = vunpack.c.h.b16 %v4932
    %v5101 = vunpack.c.l.b16 %v4933
    %v5102 = vunpack.c.h.b16 %v4933
    %v5103 = vunpack.c.l.b16 %v4934
    %v5104 = vunpack.c.h.b16 %v4934
    %v5105 = vunpack.c.l.b16 %v4935
    %v5106 = vunpack.c.h.b16 %v4935
    %v5107 = vunpack.c.l.b16 %v4936
    %v5108 = vunpack.c.h.b16 %v4936
    %v5109 = vunpack.c.l.b16 %v4937
    %v5110 = vunpack.c.h.b16 %v4937
    %v5111 = vunpack.c.l.b16 %v4938
    %v5112 = vunpack.c.h.b16 %v4938
    %v5113 = vunpack.c.l.b16 %v4939
    %v5114 = vunpack.c.h.b16 %v4939
    %v5115 = vunpack.c.l.b16 %v4940
    %v5116 = vunpack.c.h.b16 %v4940
    %v5117 = vunpack.c.l.b16 %v4941
    %v5118 = vunpack.c.h.b16 %v4941
    %v5119 = vunpack.c.l.b16 %v4942
    %v5120 = vunpack.c.h.b16 %v4942
    %v5121 = vunpack.c.l.b16 %v4943
    %v5122 = vunpack.c.h.b16 %v4943
    %v5123 = vunpack.c.l.b16 %v4944
    %v5124 = vunpack.c.h.b16 %v4944
    %v5125 = vunpack.c.l.b16 %v4945
    %v5126 = vunpack.c.h.b16 %v4945
    %v5127 = vunpack.c.l.b16 %v4946
    %v5128 = vunpack.c.h.b16 %v4946
    %v5129 = vunpack.c.l.b16 %v4947
    %v5130 = vunpack.c.h.b16 %v4947
    %v5131 = vunpack.c.l.b16 %v4948
    %v5132 = vunpack.c.h.b16 %v4948
    %v5133 = vunpack.c.l.b16 %v4949
    %v5134 = vunpack.c.h.b16 %v4949
    %v5135 = vunpack.c.l.b16 %v4950
    %v5136 = vunpack.c.h.b16 %v4950
    %v5137 = vunpack.c.l.b16 %v4951
    %v5138 = vunpack.c.h.b16 %v4951
    %v5139 = vunpack.c.l.b16 %v4952
    %v5140 = vunpack.c.h.b16 %v4952
    %v5141 = vunpack.c.l.b16 %v4953
    %v5142 = vunpack.c.h.b16 %v4953
    %v5143 = vunpack.c.l.b16 %v4954
    %v5144 = vunpack.c.h.b16 %v4954
    %v5145 = vunpack.c.l.b16 %v4955
    %v5146 = vunpack.c.h.b16 %v4955
    %v5147 = vunpack.c.l.b16 %v4956
    %v5148 = vunpack.c.h.b16 %v4956
    %v5149 = vpack.c.b16 %v5025, %v5021
    %v5150 = vpack.c.b16 %v5026, %v5022
    %v5151 = vpack.c.b16 %v5027, %v5023
    %v5152 = vpack.c.b16 %v5028, %v5024
    %v5153 = vpack.c.b16 %v5033, %v5029
    %v5154 = vpack.c.b16 %v5034, %v5030
    %v5155 = vpack.c.b16 %v5035, %v5031
    %v5156 = vpack.c.b16 %v5036, %v5032
    %v5157 = vpack.c.b16 %v5041, %v5037
    %v5158 = vpack.c.b16 %v5042, %v5038
    %v5159 = vpack.c.b16 %v5043, %v5039
    %v5160 = vpack.c.b16 %v5044, %v5040
    %v5161 = vpack.c.b16 %v5049, %v5045
    %v5162 = vpack.c.b16 %v5050, %v5046
    %v5163 = vpack.c.b16 %v5051, %v5047
    %v5164 = vpack.c.b16 %v5052, %v5048
    %v5165 = vpack.c.b16 %v5057, %v5053
    %v5166 = vpack.c.b16 %v5058, %v5054
    %v5167 = vpack.c.b16 %v5059, %v5055
    %v5168 = vpack.c.b16 %v5060, %v5056
    %v5169 = vpack.c.b16 %v5065, %v5061
    %v5170 = vpack.c.b16 %v5066, %v5062
    %v5171 = vpack.c.b16 %v5067, %v5063
    %v5172 = vpack.c.b16 %v5068, %v5064
    %v5173 = vpack.c.b16 %v5073, %v5069
    %v5174 = vpack.c.b16 %v5074, %v5070
    %v5175 = vpack.c.b16 %v5075, %v5071
    %v5176 = vpack.c.b16 %v5076, %v5072
    %v5177 = vpack.c.b16 %v5081, %v5077
    %v5178 = vpack.c.b16 %v5082, %v5078
    %v5179 = vpack.c.b16 %v5083, %v5079
    %v5180 = vpack.c.b16 %v5084, %v5080
    %v5181 = vpack.c.b16 %v5089, %v5085
    %v5182 = vpack.c.b16 %v5090, %v5086
    %v5183 = vpack.c.b16 %v5091, %v5087
    %v5184 = vpack.c.b16 %v5092, %v5088
    %v5185 = vpack.c.b16 %v5097, %v5093
    %v5186 = vpack.c.b16 %v5098, %v5094
    %v5187 = vpack.c.b16 %v5099, %v5095
    %v5188 = vpack.c.b16 %v5100, %v5096
    %v5189 = vpack.c.b16 %v5105, %v5101
    %v5190 = vpack.c.b16 %v5106, %v5102
    %v5191 = vpack.c.b16 %v5107, %v5103
    %v5192 = vpack.c.b16 %v5108, %v5104
    %v5193 = vpack.c.b16 %v5113, %v5109
    %v5194 = vpack.c.b16 %v5114, %v5110
    %v5195 = vpack.c.b16 %v5115, %v5111
    %v5196 = vpack.c.b16 %v5116, %v5112
    %v5197 = vpack.c.b16 %v5121, %v5117
    %v5198 = vpack.c.b16 %v5122, %v5118
    %v5199 = vpack.c.b16 %v5123, %v5119
    %v5200 = vpack.c.b16 %v5124, %v5120
    %v5201 = vpack.c.b16 %v5129, %v5125
    %v5202 = vpack.c.b16 %v5130, %v5126
    %v5203 = vpack.c.b16 %v5131, %v5127
    %v5204 = vpack.c.b16 %v5132, %v5128
    %v5205 = vpack.c.b16 %v5137, %v5133
    %v5206 = vpack.c.b16 %v5138, %v5134
    %v5207 = vpack.c.b16 %v5139, %v5135
    %v5208 = vpack.c.b16 %v5140, %v5136
    %v5209 = vpack.c.b16 %v5145, %v5141
    %v5210 = vpack.c.b16 %v5146, %v5142
    %v5211 = vpack.c.b16 %v5147, %v5143
    %v5212 = vpack.c.b16 %v5148, %v5144
    %5277 = vmatprep.subr.bf16.mxu0 %v5150
    %5278 = vmatpush1.bf16.msra.mxu0 %v5149
    %5279 = vmatprep.subr.bf16.mxu0 %v5154
    %5280 = vmatpush1.bf16.msra.mxu0 %v5153
    %5281 = vmatprep.subr.bf16.mxu0 %v5158
    %5282 = vmatpush1.bf16.msra.mxu0 %v5157
    %5283 = vmatprep.subr.bf16.mxu0 %v5162
    %5284 = vmatpush1.bf16.msra.mxu0 %v5161
    %5285 = vmatprep.subr.bf16.mxu0 %v5166
    %5286 = vmatpush1.bf16.msra.mxu0 %v5165
    %5287 = vmatprep.subr.bf16.mxu0 %v5170
    %5288 = vmatpush1.bf16.msra.mxu0 %v5169
    %5289 = vmatprep.subr.bf16.mxu0 %v5174
    %5290 = vmatpush1.bf16.msra.mxu0 %v5173
    %5291 = vmatprep.subr.bf16.mxu0 %v5178
    %5292 = vmatpush1.bf16.msra.mxu0 %v5177
    %5293 = vmatprep.subr.bf16.mxu0 %v5182
    %5294 = vmatpush1.bf16.msra.mxu0 %v5181
    %5295 = vmatprep.subr.bf16.mxu0 %v5186
    %5296 = vmatpush1.bf16.msra.mxu0 %v5185
    %5297 = vmatprep.subr.bf16.mxu0 %v5190
    %5298 = vmatpush1.bf16.msra.mxu0 %v5189
    %5299 = vmatprep.subr.bf16.mxu0 %v5194
    %5300 = vmatpush1.bf16.msra.mxu0 %v5193
    %5301 = vmatprep.subr.bf16.mxu0 %v5198
    %5302 = vmatpush1.bf16.msra.mxu0 %v5197
    %5303 = vmatprep.subr.bf16.mxu0 %v5202
    %5304 = vmatpush1.bf16.msra.mxu0 %v5201
    %5305 = vmatprep.subr.bf16.mxu0 %v5206
    %5306 = vmatpush1.bf16.msra.mxu0 %v5205
    %5307 = vmatprep.subr.bf16.mxu0 %v5210
    %5308 = vmatpush1.bf16.msra.mxu0 %v5209
    %5309 = vmatprep.mubr.bf16.mxu0 %v4892
    %5310 = vmatmul.mubr.bf16.gmra.mrb[0].mxu0 %v4891
    %v5311 = vpop.f32.mrb[0].mxu0
    %v5312 = vadd.f32 %v551, %v5311
    %v5313 = vpop.f32.mrb[0].mxu0
    %v5314 = vadd.f32 %v555, %v5313
    %v5315 = vpop.f32.mrb[0].mxu0
    %v5316 = vpop.f32.mrb[0].mxu0
    %5317 = vdwg.mxu0
    %5318 = vmatprep.subr.bf16.mxu0 %v5152
    %5319 = vmatpush1.bf16.msra.mxu0 %v5151
    %5320 = vmatprep.subr.bf16.mxu0 %v5156
    %5321 = vmatpush1.bf16.msra.mxu0 %v5155
    %5322 = vmatprep.subr.bf16.mxu0 %v5160
    %5323 = vmatpush1.bf16.msra.mxu0 %v5159
    %5324 = vmatprep.subr.bf16.mxu0 %v5164
    %5325 = vmatpush1.bf16.msra.mxu0 %v5163
    %5326 = vmatprep.subr.bf16.mxu0 %v5168
    %5327 = vmatpush1.bf16.msra.mxu0 %v5167
    %5328 = vmatprep.subr.bf16.mxu0 %v5172
    %5329 = vmatpush1.bf16.msra.mxu0 %v5171
    %5330 = vmatprep.subr.bf16.mxu0 %v5176
    %5331 = vmatpush1.bf16.msra.mxu0 %v5175
    %5332 = vmatprep.subr.bf16.mxu0 %v5180
    %5333 = vmatpush1.bf16.msra.mxu0 %v5179
    %5334 = vmatprep.subr.bf16.mxu0 %v5184
    %5335 = vmatpush1.bf16.msra.mxu0 %v5183
    %5336 = vmatprep.subr.bf16.mxu0 %v5188
    %5337 = vmatpush1.bf16.msra.mxu0 %v5187
    %5338 = vmatprep.subr.bf16.mxu0 %v5192
    %5339 = vmatpush1.bf16.msra.mxu0 %v5191
    %5340 = vmatprep.subr.bf16.mxu0 %v5196
    %5341 = vmatpush1.bf16.msra.mxu0 %v5195
    %5342 = vmatprep.subr.bf16.mxu0 %v5200
    %5343 = vmatpush1.bf16.msra.mxu0 %v5199
    %5344 = vmatprep.subr.bf16.mxu0 %v5204
    %5345 = vmatpush1.bf16.msra.mxu0 %v5203
    %5346 = vmatprep.subr.bf16.mxu0 %v5208
    %5347 = vmatpush1.bf16.msra.mxu0 %v5207
    %5348 = vmatprep.subr.bf16.mxu0 %v5212
    %5349 = vmatpush1.bf16.msra.mxu0 %v5211
    %5350 = vmatprep.mubr.bf16.mxu0 %v4892
    %5351 = vmatmul.mubr.bf16.gmra.mrb[0].mxu0 %v4891
    %v5352 = vpop.f32.mrb[0].mxu0
    %v5353 = vadd.f32 %v559, %v5352
    %v5354 = vpop.f32.mrb[0].mxu0
    %v5355 = vadd.f32 %v563, %v5354
    %v5356 = vpop.f32.mrb[0].mxu0
    %v5357 = vpop.f32.mrb[0].mxu0
    %5358 = vdwg.mxu0
    %v5359 = vxor.u32 %v5312, 2147483648
    %v5360 = vmul.f32 %v5359, 1.442695
    %v5361 = vpow.pop %v5360
    %v5362 = vadd.f32 %v5361, 1.0
    %v5363 = vrcp.pop %v5362
    %v5364 = vmul.f32 1.0, %v5363
    %v5365 = vxor.u32 %v5314, 2147483648
    %v5366 = vmul.f32 %v5365, 1.442695
    %v5367 = vpow.pop %v5366
    %v5368 = vadd.f32 %v5367, 1.0
    %v5369 = vrcp.pop %v5368
    %v5370 = vmul.f32 1.0, %v5369
    %v5371 = vtanh.pop %v5353
    %v5372 = vxor.u32 %v5355, 2147483648
    %v5373 = vmul.f32 %v5372, 1.442695
    %v5374 = vpow.pop %v5373
    %v5375 = vadd.f32 %v5374, 1.0
    %v5376 = vrcp.pop %v5375
    %v5377 = vmul.f32 1.0, %v5376
    %v5378 = vmul.f32 %v5370, %v4577
    %v5379 = vmul.f32 %v5364, %v5371
    %v5380 = vadd.f32 %v5378, %v5379
    %v5381 = vtanh.pop %v5380
    %v5382 = vmul.f32 %v5377, %v5381
    %s5383 = scalar_lea.vmem [#allocation3], 40
    %5384 = vst [vmem:[%s5383] sm:$0xff] %v5382
    %s5385 = smul.u32 6, 4
    %s5386 = smul.addr %s5385, 8
    %s5387 = scalar_lea.vmem [#allocation2], %s5386
    %v5388 = vld [vmem:[%s5387] sm:$0xff]
    %v5389 = vld [vmem:[%s5387 + $0x8] sm:$0xff]
    %v5390 = vld [vmem:[%s5387 + $0x10] sm:$0xff]
    %v5391 = vld [vmem:[%s5387 + $0x18] sm:$0xff]
    %v5392 = vld [vmem:[#allocation9] sm:$0xff]
    %v5393 = vld [vmem:[#allocation9 + $0x8] sm:$0xff]
    %v5394 = vld [vmem:[#allocation9 + $0x10] sm:$0xff]
    %v5395 = vld [vmem:[#allocation9 + $0x18] sm:$0xff]
    %v5396 = vld [vmem:[#allocation9 + $0x20] sm:$0xff]
    %v5397 = vld [vmem:[#allocation9 + $0x28] sm:$0xff]
    %v5398 = vld [vmem:[#allocation9 + $0x30] sm:$0xff]
    %v5399 = vld [vmem:[#allocation9 + $0x38] sm:$0xff]
    %v5400 = vld [vmem:[#allocation9 + $0x40] sm:$0xff]
    %v5401 = vld [vmem:[#allocation9 + $0x48] sm:$0xff]
    %v5402 = vld [vmem:[#allocation9 + $0x50] sm:$0xff]
    %v5403 = vld [vmem:[#allocation9 + $0x58] sm:$0xff]
    %v5404 = vld [vmem:[#allocation9 + $0x60] sm:$0xff]
    %v5405 = vld [vmem:[#allocation9 + $0x68] sm:$0xff]
    %v5406 = vld [vmem:[#allocation9 + $0x70] sm:$0xff]
    %v5407 = vld [vmem:[#allocation9 + $0x78] sm:$0xff]
    %v5408 = vld [vmem:[#allocation9 + $0x80] sm:$0xff]
    %v5409 = vld [vmem:[#allocation9 + $0x88] sm:$0xff]
    %v5410 = vld [vmem:[#allocation9 + $0x90] sm:$0xff]
    %v5411 = vld [vmem:[#allocation9 + $0x98] sm:$0xff]
    %v5412 = vld [vmem:[#allocation9 + $0xa0] sm:$0xff]
    %v5413 = vld [vmem:[#allocation9 + $0xa8] sm:$0xff]
    %v5414 = vld [vmem:[#allocation9 + $0xb0] sm:$0xff]
    %v5415 = vld [vmem:[#allocation9 + $0xb8] sm:$0xff]
    %v5416 = vld [vmem:[#allocation9 + $0xc0] sm:$0xff]
    %v5417 = vld [vmem:[#allocation9 + $0xc8] sm:$0xff]
    %v5418 = vld [vmem:[#allocation9 + $0xd0] sm:$0xff]
    %v5419 = vld [vmem:[#allocation9 + $0xd8] sm:$0xff]
    %v5420 = vld [vmem:[#allocation9 + $0xe0] sm:$0xff]
    %v5421 = vld [vmem:[#allocation9 + $0xe8] sm:$0xff]
    %v5422 = vld [vmem:[#allocation9 + $0xf0] sm:$0xff]
    %v5423 = vld [vmem:[#allocation9 + $0xf8] sm:$0xff]
    %v5456 = vunpack.c.l.b16 %v5392
    %v5457 = vunpack.c.h.b16 %v5392
    %v5458 = vunpack.c.l.b16 %v5393
    %v5459 = vunpack.c.h.b16 %v5393
    %v5460 = vunpack.c.l.b16 %v5394
    %v5461 = vunpack.c.h.b16 %v5394
    %v5462 = vunpack.c.l.b16 %v5395
    %v5463 = vunpack.c.h.b16 %v5395
    %v5464 = vunpack.c.l.b16 %v5396
    %v5465 = vunpack.c.h.b16 %v5396
    %v5466 = vunpack.c.l.b16 %v5397
    %v5467 = vunpack.c.h.b16 %v5397
    %v5468 = vunpack.c.l.b16 %v5398
    %v5469 = vunpack.c.h.b16 %v5398
    %v5470 = vunpack.c.l.b16 %v5399
    %v5471 = vunpack.c.h.b16 %v5399
    %v5472 = vunpack.c.l.b16 %v5400
    %v5473 = vunpack.c.h.b16 %v5400
    %v5474 = vunpack.c.l.b16 %v5401
    %v5475 = vunpack.c.h.b16 %v5401
    %v5476 = vunpack.c.l.b16 %v5402
    %v5477 = vunpack.c.h.b16 %v5402
    %v5478 = vunpack.c.l.b16 %v5403
    %v5479 = vunpack.c.h.b16 %v5403
    %v5480 = vunpack.c.l.b16 %v5404
    %v5481 = vunpack.c.h.b16 %v5404
    %v5482 = vunpack.c.l.b16 %v5405
    %v5483 = vunpack.c.h.b16 %v5405
    %v5484 = vunpack.c.l.b16 %v5406
    %v5485 = vunpack.c.h.b16 %v5406
    %v5486 = vunpack.c.l.b16 %v5407
    %v5487 = vunpack.c.h.b16 %v5407
    %v5488 = vunpack.c.l.b16 %v5408
    %v5489 = vunpack.c.h.b16 %v5408
    %v5490 = vunpack.c.l.b16 %v5409
    %v5491 = vunpack.c.h.b16 %v5409
    %v5492 = vunpack.c.l.b16 %v5410
    %v5493 = vunpack.c.h.b16 %v5410
    %v5494 = vunpack.c.l.b16 %v5411
    %v5495 = vunpack.c.h.b16 %v5411
    %v5496 = vunpack.c.l.b16 %v5412
    %v5497 = vunpack.c.h.b16 %v5412
    %v5498 = vunpack.c.l.b16 %v5413
    %v5499 = vunpack.c.h.b16 %v5413
    %v5500 = vunpack.c.l.b16 %v5414
    %v5501 = vunpack.c.h.b16 %v5414
    %v5502 = vunpack.c.l.b16 %v5415
    %v5503 = vunpack.c.h.b16 %v5415
    %v5504 = vunpack.c.l.b16 %v5416
    %v5505 = vunpack.c.h.b16 %v5416
    %v5506 = vunpack.c.l.b16 %v5417
    %v5507 = vunpack.c.h.b16 %v5417
    %v5508 = vunpack.c.l.b16 %v5418
    %v5509 = vunpack.c.h.b16 %v5418
    %v5510 = vunpack.c.l.b16 %v5419
    %v5511 = vunpack.c.h.b16 %v5419
    %v5512 = vunpack.c.l.b16 %v5420
    %v5513 = vunpack.c.h.b16 %v5420
    %v5514 = vunpack.c.l.b16 %v5421
    %v5515 = vunpack.c.h.b16 %v5421
    %v5516 = vunpack.c.l.b16 %v5422
    %v5517 = vunpack.c.h.b16 %v5422
    %v5518 = vunpack.c.l.b16 %v5423
    %v5519 = vunpack.c.h.b16 %v5423
    %v5520 = vpack.c.b16 %v5460, %v5456
    %v5521 = vpack.c.b16 %v5461, %v5457
    %v5522 = vpack.c.b16 %v5462, %v5458
    %v5523 = vpack.c.b16 %v5463, %v5459
    %v5524 = vpack.c.b16 %v5468, %v5464
    %v5525 = vpack.c.b16 %v5469, %v5465
    %v5526 = vpack.c.b16 %v5470, %v5466
    %v5527 = vpack.c.b16 %v5471, %v5467
    %v5528 = vpack.c.b16 %v5476, %v5472
    %v5529 = vpack.c.b16 %v5477, %v5473
    %v5530 = vpack.c.b16 %v5478, %v5474
    %v5531 = vpack.c.b16 %v5479, %v5475
    %v5532 = vpack.c.b16 %v5484, %v5480
    %v5533 = vpack.c.b16 %v5485, %v5481
    %v5534 = vpack.c.b16 %v5486, %v5482
    %v5535 = vpack.c.b16 %v5487, %v5483
    %v5536 = vpack.c.b16 %v5492, %v5488
    %v5537 = vpack.c.b16 %v5493, %v5489
    %v5538 = vpack.c.b16 %v5494, %v5490
    %v5539 = vpack.c.b16 %v5495, %v5491
    %v5540 = vpack.c.b16 %v5500, %v5496
    %v5541 = vpack.c.b16 %v5501, %v5497
    %v5542 = vpack.c.b16 %v5502, %v5498
    %v5543 = vpack.c.b16 %v5503, %v5499
    %v5544 = vpack.c.b16 %v5508, %v5504
    %v5545 = vpack.c.b16 %v5509, %v5505
    %v5546 = vpack.c.b16 %v5510, %v5506
    %v5547 = vpack.c.b16 %v5511, %v5507
    %v5548 = vpack.c.b16 %v5516, %v5512
    %v5549 = vpack.c.b16 %v5517, %v5513
    %v5550 = vpack.c.b16 %v5518, %v5514
    %v5551 = vpack.c.b16 %v5519, %v5515
    %5584 = vmatprep.subr.bf16.mxu0 %v5521
    %5585 = vmatpush1.bf16.msra.mxu0 %v5520
    %5586 = vmatprep.subr.bf16.mxu0 %v5525
    %5587 = vmatpush1.bf16.msra.mxu0 %v5524
    %5588 = vmatprep.subr.bf16.mxu0 %v5529
    %5589 = vmatpush1.bf16.msra.mxu0 %v5528
    %5590 = vmatprep.subr.bf16.mxu0 %v5533
    %5591 = vmatpush1.bf16.msra.mxu0 %v5532
    %5592 = vmatprep.subr.bf16.mxu0 %v5537
    %5593 = vmatpush1.bf16.msra.mxu0 %v5536
    %5594 = vmatprep.subr.bf16.mxu0 %v5541
    %5595 = vmatpush1.bf16.msra.mxu0 %v5540
    %5596 = vmatprep.subr.bf16.mxu0 %v5545
    %5597 = vmatpush1.bf16.msra.mxu0 %v5544
    %5598 = vmatprep.subr.bf16.mxu0 %v5549
    %5599 = vmatpush1.bf16.msra.mxu0 %v5548
    %5600 = vmatprep.subr.bf16.mxu0 0
    %5601 = vmatpush1.bf16.msra.mxu0 0
    %5602 = vmatprep.subr.bf16.mxu0 0
    %5603 = vmatpush1.bf16.msra.mxu0 0
    %5604 = vmatprep.subr.bf16.mxu0 0
    %5605 = vmatpush1.bf16.msra.mxu0 0
    %5606 = vmatprep.subr.bf16.mxu0 0
    %5607 = vmatpush1.bf16.msra.mxu0 0
    %5608 = vmatprep.subr.bf16.mxu0 0
    %5609 = vmatpush1.bf16.msra.mxu0 0
    %5610 = vmatprep.subr.bf16.mxu0 0
    %5611 = vmatpush1.bf16.msra.mxu0 0
    %5612 = vmatprep.subr.bf16.mxu0 0
    %5613 = vmatpush1.bf16.msra.mxu0 0
    %5614 = vmatprep.subr.bf16.mxu0 0
    %5615 = vmatpush1.bf16.msra.mxu0 0
    %5616 = vmatprep.mubr.bf16.mxu0 0
    %5617 = vmatmul.mubr.bf16.gmra.mrb[0].mxu0 %v4891
    %v5618 = vpop.f32.mrb[0].mxu0
    %v5619 = vadd.f32 0.0, %v5618
    %v5620 = vpop.f32.mrb[0].mxu0
    %v5621 = vadd.f32 0.0, %v5620
    %v5622 = vpop.f32.mrb[0].mxu0
    %v5623 = vpop.f32.mrb[0].mxu0
    %5624 = vdwg.mxu0
    %5625 = vmatprep.subr.bf16.mxu0 %v5523
    %5626 = vmatpush1.bf16.msra.mxu0 %v5522
    %5627 = vmatprep.subr.bf16.mxu0 %v5527
    %5628 = vmatpush1.bf16.msra.mxu0 %v5526
    %5629 = vmatprep.subr.bf16.mxu0 %v5531
    %5630 = vmatpush1.bf16.msra.mxu0 %v5530
    %5631 = vmatprep.subr.bf16.mxu0 %v5535
    %5632 = vmatpush1.bf16.msra.mxu0 %v5534
    %5633 = vmatprep.subr.bf16.mxu0 %v5539
    %5634 = vmatpush1.bf16.msra.mxu0 %v5538
    %5635 = vmatprep.subr.bf16.mxu0 %v5543
    %5636 = vmatpush1.bf16.msra.mxu0 %v5542
    %5637 = vmatprep.subr.bf16.mxu0 %v5547
    %5638 = vmatpush1.bf16.msra.mxu0 %v5546
    %5639 = vmatprep.subr.bf16.mxu0 %v5551
    %5640 = vmatpush1.bf16.msra.mxu0 %v5550
    %5641 = vmatprep.subr.bf16.mxu0 0
    %5642 = vmatpush1.bf16.msra.mxu0 0
    %5643 = vmatprep.subr.bf16.mxu0 0
    %5644 = vmatpush1.bf16.msra.mxu0 0
    %5645 = vmatprep.subr.bf16.mxu0 0
    %5646 = vmatpush1.bf16.msra.mxu0 0
    %5647 = vmatprep.subr.bf16.mxu0 0
    %5648 = vmatpush1.bf16.msra.mxu0 0
    %5649 = vmatprep.subr.bf16.mxu0 0
    %5650 = vmatpush1.bf16.msra.mxu0 0
    %5651 = vmatprep.subr.bf16.mxu0 0
    %5652 = vmatpush1.bf16.msra.mxu0 0
    %5653 = vmatprep.subr.bf16.mxu0 0
    %5654 = vmatpush1.bf16.msra.mxu0 0
    %5655 = vmatprep.subr.bf16.mxu0 0
    %5656 = vmatpush1.bf16.msra.mxu0 0
    %5657 = vmatprep.mubr.bf16.mxu0 0
    %5658 = vmatmul.mubr.bf16.gmra.mrb[0].mxu0 %v4891
    %v5659 = vpop.f32.mrb[0].mxu0
    %v5660 = vadd.f32 0.0, %v5659
    %v5661 = vpop.f32.mrb[0].mxu0
    %v5662 = vadd.f32 0.0, %v5661
    %v5663 = vpop.f32.mrb[0].mxu0
    %v5664 = vpop.f32.mrb[0].mxu0
    %5665 = vdwg.mxu0
    %v5666 = vadd.f32 %v5388, %v5619
    %v5667 = vadd.f32 %v5389, %v5621
    %v5668 = vadd.f32 %v5390, %v5660
    %v5669 = vadd.f32 %v5391, %v5662
    %v5670 = vxor.u32 %v5666, 2147483648
    %v5671 = vmul.f32 %v5670, 1.442695
    %v5672 = vpow.pop %v5671
    %v5673 = vadd.f32 %v5672, 1.0
    %v5674 = vrcp.pop %v5673
    %v5675 = vmul.f32 1.0, %v5674
    %v5676 = vxor.u32 %v5667, 2147483648
    %v5677 = vmul.f32 %v5676, 1.442695
    %v5678 = vpow.pop %v5677
    %v5679 = vadd.f32 %v5678, 1.0
    %v5680 = vrcp.pop %v5679
    %v5681 = vmul.f32 1.0, %v5680
    %v5682 = vtanh.pop %v5668
    %v5683 = vxor.u32 %v5669, 2147483648
    %v5684 = vmul.f32 %v5683, 1.442695
    %v5685 = vpow.pop %v5684
    %v5686 = vadd.f32 %v5685, 1.0
    %v5687 = vrcp.pop %v5686
    %v5688 = vmul.f32 1.0, %v5687
    %v5689 = vmul.f32 %v5681, %v4888
    %v5690 = vmul.f32 %v5675, %v5682
    %v5691 = vadd.f32 %v5689, %v5690
    %v5692 = vtanh.pop %v5691
    %v5693 = vmul.f32 %v5688, %v5692
    %v5694 = vpack.c.bf16 %v5693, %v5693
    %v5695 = vpack.c.bf16 %v5382, %v5382
    %v5696 = vld [vmem:[#allocation10] sm:$0xff]
    %v5697 = vld [vmem:[#allocation10 + $0x8] sm:$0xff]
    %v5698 = vld [vmem:[#allocation10 + $0x10] sm:$0xff]
    %v5699 = vld [vmem:[#allocation10 + $0x18] sm:$0xff]
    %v5700 = vld [vmem:[#allocation10 + $0x20] sm:$0xff]
    %v5701 = vld [vmem:[#allocation10 + $0x28] sm:$0xff]
    %v5702 = vld [vmem:[#allocation10 + $0x30] sm:$0xff]
    %v5703 = vld [vmem:[#allocation10 + $0x38] sm:$0xff]
    %v5704 = vld [vmem:[#allocation10 + $0x40] sm:$0xff]
    %v5705 = vld [vmem:[#allocation10 + $0x48] sm:$0xff]
    %v5706 = vld [vmem:[#allocation10 + $0x50] sm:$0xff]
    %v5707 = vld [vmem:[#allocation10 + $0x58] sm:$0xff]
    %v5708 = vld [vmem:[#allocation10 + $0x60] sm:$0xff]
    %v5709 = vld [vmem:[#allocation10 + $0x68] sm:$0xff]
    %v5710 = vld [vmem:[#allocation10 + $0x70] sm:$0xff]
    %v5711 = vld [vmem:[#allocation10 + $0x78] sm:$0xff]
    %v5712 = vld [vmem:[#allocation10 + $0x80] sm:$0xff]
    %v5713 = vld [vmem:[#allocation10 + $0x88] sm:$0xff]
    %v5714 = vld [vmem:[#allocation10 + $0x90] sm:$0xff]
    %v5715 = vld [vmem:[#allocation10 + $0x98] sm:$0xff]
    %v5716 = vld [vmem:[#allocation10 + $0xa0] sm:$0xff]
    %v5717 = vld [vmem:[#allocation10 + $0xa8] sm:$0xff]
    %v5718 = vld [vmem:[#allocation10 + $0xb0] sm:$0xff]
    %v5719 = vld [vmem:[#allocation10 + $0xb8] sm:$0xff]
    %v5720 = vld [vmem:[#allocation10 + $0xc0] sm:$0xff]
    %v5721 = vld [vmem:[#allocation10 + $0xc8] sm:$0xff]
    %v5722 = vld [vmem:[#allocation10 + $0xd0] sm:$0xff]
    %v5723 = vld [vmem:[#allocation10 + $0xd8] sm:$0xff]
    %v5724 = vld [vmem:[#allocation10 + $0xe0] sm:$0xff]
    %v5725 = vld [vmem:[#allocation10 + $0xe8] sm:$0xff]
    %v5726 = vld [vmem:[#allocation10 + $0xf0] sm:$0xff]
    %v5727 = vld [vmem:[#allocation10 + $0xf8] sm:$0xff]
    %v5728 = vld [vmem:[#allocation10 + $0x100] sm:$0xff]
    %v5729 = vld [vmem:[#allocation10 + $0x108] sm:$0xff]
    %v5730 = vld [vmem:[#allocation10 + $0x110] sm:$0xff]
    %v5731 = vld [vmem:[#allocation10 + $0x118] sm:$0xff]
    %v5732 = vld [vmem:[#allocation10 + $0x120] sm:$0xff]
    %v5733 = vld [vmem:[#allocation10 + $0x128] sm:$0xff]
    %v5734 = vld [vmem:[#allocation10 + $0x130] sm:$0xff]
    %v5735 = vld [vmem:[#allocation10 + $0x138] sm:$0xff]
    %v5736 = vld [vmem:[#allocation10 + $0x140] sm:$0xff]
    %v5737 = vld [vmem:[#allocation10 + $0x148] sm:$0xff]
    %v5738 = vld [vmem:[#allocation10 + $0x150] sm:$0xff]
    %v5739 = vld [vmem:[#allocation10 + $0x158] sm:$0xff]
    %v5740 = vld [vmem:[#allocation10 + $0x160] sm:$0xff]
    %v5741 = vld [vmem:[#allocation10 + $0x168] sm:$0xff]
    %v5742 = vld [vmem:[#allocation10 + $0x170] sm:$0xff]
    %v5743 = vld [vmem:[#allocation10 + $0x178] sm:$0xff]
    %v5744 = vld [vmem:[#allocation10 + $0x180] sm:$0xff]
    %v5745 = vld [vmem:[#allocation10 + $0x188] sm:$0xff]
    %v5746 = vld [vmem:[#allocation10 + $0x190] sm:$0xff]
    %v5747 = vld [vmem:[#allocation10 + $0x198] sm:$0xff]
    %v5748 = vld [vmem:[#allocation10 + $0x1a0] sm:$0xff]
    %v5749 = vld [vmem:[#allocation10 + $0x1a8] sm:$0xff]
    %v5750 = vld [vmem:[#allocation10 + $0x1b0] sm:$0xff]
    %v5751 = vld [vmem:[#allocation10 + $0x1b8] sm:$0xff]
    %v5752 = vld [vmem:[#allocation10 + $0x1c0] sm:$0xff]
    %v5753 = vld [vmem:[#allocation10 + $0x1c8] sm:$0xff]
    %v5754 = vld [vmem:[#allocation10 + $0x1d0] sm:$0xff]
    %v5755 = vld [vmem:[#allocation10 + $0x1d8] sm:$0xff]
    %v5756 = vld [vmem:[#allocation10 + $0x1e0] sm:$0xff]
    %v5757 = vld [vmem:[#allocation10 + $0x1e8] sm:$0xff]
    %v5758 = vld [vmem:[#allocation10 + $0x1f0] sm:$0xff]
    %v5759 = vld [vmem:[#allocation10 + $0x1f8] sm:$0xff]
    %v5824 = vunpack.c.l.b16 %v5696
    %v5825 = vunpack.c.h.b16 %v5696
    %v5826 = vunpack.c.l.b16 %v5697
    %v5827 = vunpack.c.h.b16 %v5697
    %v5828 = vunpack.c.l.b16 %v5698
    %v5829 = vunpack.c.h.b16 %v5698
    %v5830 = vunpack.c.l.b16 %v5699
    %v5831 = vunpack.c.h.b16 %v5699
    %v5832 = vunpack.c.l.b16 %v5700
    %v5833 = vunpack.c.h.b16 %v5700
    %v5834 = vunpack.c.l.b16 %v5701
    %v5835 = vunpack.c.h.b16 %v5701
    %v5836 = vunpack.c.l.b16 %v5702
    %v5837 = vunpack.c.h.b16 %v5702
    %v5838 = vunpack.c.l.b16 %v5703
    %v5839 = vunpack.c.h.b16 %v5703
    %v5840 = vunpack.c.l.b16 %v5704
    %v5841 = vunpack.c.h.b16 %v5704
    %v5842 = vunpack.c.l.b16 %v5705
    %v5843 = vunpack.c.h.b16 %v5705
    %v5844 = vunpack.c.l.b16 %v5706
    %v5845 = vunpack.c.h.b16 %v5706
    %v5846 = vunpack.c.l.b16 %v5707
    %v5847 = vunpack.c.h.b16 %v5707
    %v5848 = vunpack.c.l.b16 %v5708
    %v5849 = vunpack.c.h.b16 %v5708
    %v5850 = vunpack.c.l.b16 %v5709
    %v5851 = vunpack.c.h.b16 %v5709
    %v5852 = vunpack.c.l.b16 %v5710
    %v5853 = vunpack.c.h.b16 %v5710
    %v5854 = vunpack.c.l.b16 %v5711
    %v5855 = vunpack.c.h.b16 %v5711
    %v5856 = vunpack.c.l.b16 %v5712
    %v5857 = vunpack.c.h.b16 %v5712
    %v5858 = vunpack.c.l.b16 %v5713
    %v5859 = vunpack.c.h.b16 %v5713
    %v5860 = vunpack.c.l.b16 %v5714
    %v5861 = vunpack.c.h.b16 %v5714
    %v5862 = vunpack.c.l.b16 %v5715
    %v5863 = vunpack.c.h.b16 %v5715
    %v5864 = vunpack.c.l.b16 %v5716
    %v5865 = vunpack.c.h.b16 %v5716
    %v5866 = vunpack.c.l.b16 %v5717
    %v5867 = vunpack.c.h.b16 %v5717
    %v5868 = vunpack.c.l.b16 %v5718
    %v5869 = vunpack.c.h.b16 %v5718
    %v5870 = vunpack.c.l.b16 %v5719
    %v5871 = vunpack.c.h.b16 %v5719
    %v5872 = vunpack.c.l.b16 %v5720
    %v5873 = vunpack.c.h.b16 %v5720
    %v5874 = vunpack.c.l.b16 %v5721
    %v5875 = vunpack.c.h.b16 %v5721
    %v5876 = vunpack.c.l.b16 %v5722
    %v5877 = vunpack.c.h.b16 %v5722
    %v5878 = vunpack.c.l.b16 %v5723
    %v5879 = vunpack.c.h.b16 %v5723
    %v5880 = vunpack.c.l.b16 %v5724
    %v5881 = vunpack.c.h.b16 %v5724
    %v5882 = vunpack.c.l.b16 %v5725
    %v5883 = vunpack.c.h.b16 %v5725
    %v5884 = vunpack.c.l.b16 %v5726
    %v5885 = vunpack.c.h.b16 %v5726
    %v5886 = vunpack.c.l.b16 %v5727
    %v5887 = vunpack.c.h.b16 %v5727
    %v5888 = vunpack.c.l.b16 %v5728
    %v5889 = vunpack.c.h.b16 %v5728
    %v5890 = vunpack.c.l.b16 %v5729
    %v5891 = vunpack.c.h.b16 %v5729
    %v5892 = vunpack.c.l.b16 %v5730
    %v5893 = vunpack.c.h.b16 %v5730
    %v5894 = vunpack.c.l.b16 %v5731
    %v5895 = vunpack.c.h.b16 %v5731
    %v5896 = vunpack.c.l.b16 %v5732
    %v5897 = vunpack.c.h.b16 %v5732
    %v5898 = vunpack.c.l.b16 %v5733
    %v5899 = vunpack.c.h.b16 %v5733
    %v5900 = vunpack.c.l.b16 %v5734
    %v5901 = vunpack.c.h.b16 %v5734
    %v5902 = vunpack.c.l.b16 %v5735
    %v5903 = vunpack.c.h.b16 %v5735
    %v5904 = vunpack.c.l.b16 %v5736
    %v5905 = vunpack.c.h.b16 %v5736
    %v5906 = vunpack.c.l.b16 %v5737
    %v5907 = vunpack.c.h.b16 %v5737
    %v5908 = vunpack.c.l.b16 %v5738
    %v5909 = vunpack.c.h.b16 %v5738
    %v5910 = vunpack.c.l.b16 %v5739
    %v5911 = vunpack.c.h.b16 %v5739
    %v5912 = vunpack.c.l.b16 %v5740
    %v5913 = vunpack.c.h.b16 %v5740
    %v5914 = vunpack.c.l.b16 %v5741
    %v5915 = vunpack.c.h.b16 %v5741
    %v5916 = vunpack.c.l.b16 %v5742
    %v5917 = vunpack.c.h.b16 %v5742
    %v5918 = vunpack.c.l.b16 %v5743
    %v5919 = vunpack.c.h.b16 %v5743
    %v5920 = vunpack.c.l.b16 %v5744
    %v5921 = vunpack.c.h.b16 %v5744
    %v5922 = vunpack.c.l.b16 %v5745
    %v5923 = vunpack.c.h.b16 %v5745
    %v5924 = vunpack.c.l.b16 %v5746
    %v5925 = vunpack.c.h.b16 %v5746
    %v5926 = vunpack.c.l.b16 %v5747
    %v5927 = vunpack.c.h.b16 %v5747
    %v5928 = vunpack.c.l.b16 %v5748
    %v5929 = vunpack.c.h.b16 %v5748
    %v5930 = vunpack.c.l.b16 %v5749
    %v5931 = vunpack.c.h.b16 %v5749
    %v5932 = vunpack.c.l.b16 %v5750
    %v5933 = vunpack.c.h.b16 %v5750
    %v5934 = vunpack.c.l.b16 %v5751
    %v5935 = vunpack.c.h.b16 %v5751
    %v5936 = vunpack.c.l.b16 %v5752
    %v5937 = vunpack.c.h.b16 %v5752
    %v5938 = vunpack.c.l.b16 %v5753
    %v5939 = vunpack.c.h.b16 %v5753
    %v5940 = vunpack.c.l.b16 %v5754
    %v5941 = vunpack.c.h.b16 %v5754
    %v5942 = vunpack.c.l.b16 %v5755
    %v5943 = vunpack.c.h.b16 %v5755
    %v5944 = vunpack.c.l.b16 %v5756
    %v5945 = vunpack.c.h.b16 %v5756
    %v5946 = vunpack.c.l.b16 %v5757
    %v5947 = vunpack.c.h.b16 %v5757
    %v5948 = vunpack.c.l.b16 %v5758
    %v5949 = vunpack.c.h.b16 %v5758
    %v5950 = vunpack.c.l.b16 %v5759
    %v5951 = vunpack.c.h.b16 %v5759
    %v5952 = vpack.c.b16 %v5828, %v5824
    %v5953 = vpack.c.b16 %v5829, %v5825
    %v5954 = vpack.c.b16 %v5830, %v5826
    %v5955 = vpack.c.b16 %v5831, %v5827
    %v5956 = vpack.c.b16 %v5836, %v5832
    %v5957 = vpack.c.b16 %v5837, %v5833
    %v5958 = vpack.c.b16 %v5838, %v5834
    %v5959 = vpack.c.b16 %v5839, %v5835
    %v5960 = vpack.c.b16 %v5844, %v5840
    %v5961 = vpack.c.b16 %v5845, %v5841
    %v5962 = vpack.c.b16 %v5846, %v5842
    %v5963 = vpack.c.b16 %v5847, %v5843
    %v5964 = vpack.c.b16 %v5852, %v5848
    %v5965 = vpack.c.b16 %v5853, %v5849
    %v5966 = vpack.c.b16 %v5854, %v5850
    %v5967 = vpack.c.b16 %v5855, %v5851
    %v5968 = vpack.c.b16 %v5860, %v5856
    %v5969 = vpack.c.b16 %v5861, %v5857
    %v5970 = vpack.c.b16 %v5862, %v5858
    %v5971 = vpack.c.b16 %v5863, %v5859
    %v5972 = vpack.c.b16 %v5868, %v5864
    %v5973 = vpack.c.b16 %v5869, %v5865
    %v5974 = vpack.c.b16 %v5870, %v5866
    %v5975 = vpack.c.b16 %v5871, %v5867
    %v5976 = vpack.c.b16 %v5876, %v5872
    %v5977 = vpack.c.b16 %v5877, %v5873
    %v5978 = vpack.c.b16 %v5878, %v5874
    %v5979 = vpack.c.b16 %v5879, %v5875
    %v5980 = vpack.c.b16 %v5884, %v5880
    %v5981 = vpack.c.b16 %v5885, %v5881
    %v5982 = vpack.c.b16 %v5886, %v5882
    %v5983 = vpack.c.b16 %v5887, %v5883
    %v5984 = vpack.c.b16 %v5892, %v5888
    %v5985 = vpack.c.b16 %v5893, %v5889
    %v5986 = vpack.c.b16 %v5894, %v5890
    %v5987 = vpack.c.b16 %v5895, %v5891
    %v5988 = vpack.c.b16 %v5900, %v5896
    %v5989 = vpack.c.b16 %v5901, %v5897
    %v5990 = vpack.c.b16 %v5902, %v5898
    %v5991 = vpack.c.b16 %v5903, %v5899
    %v5992 = vpack.c.b16 %v5908, %v5904
    %v5993 = vpack.c.b16 %v5909, %v5905
    %v5994 = vpack.c.b16 %v5910, %v5906
    %v5995 = vpack.c.b16 %v5911, %v5907
    %v5996 = vpack.c.b16 %v5916, %v5912
    %v5997 = vpack.c.b16 %v5917, %v5913
    %v5998 = vpack.c.b16 %v5918, %v5914
    %v5999 = vpack.c.b16 %v5919, %v5915
    %v6000 = vpack.c.b16 %v5924, %v5920
    %v6001 = vpack.c.b16 %v5925, %v5921
    %v6002 = vpack.c.b16 %v5926, %v5922
    %v6003 = vpack.c.b16 %v5927, %v5923
    %v6004 = vpack.c.b16 %v5932, %v5928
    %v6005 = vpack.c.b16 %v5933, %v5929
    %v6006 = vpack.c.b16 %v5934, %v5930
    %v6007 = vpack.c.b16 %v5935, %v5931
    %v6008 = vpack.c.b16 %v5940, %v5936
    %v6009 = vpack.c.b16 %v5941, %v5937
    %v6010 = vpack.c.b16 %v5942, %v5938
    %v6011 = vpack.c.b16 %v5943, %v5939
    %v6012 = vpack.c.b16 %v5948, %v5944
    %v6013 = vpack.c.b16 %v5949, %v5945
    %v6014 = vpack.c.b16 %v5950, %v5946
    %v6015 = vpack.c.b16 %v5951, %v5947
    %6080 = vmatprep.subr.bf16.mxu0 %v5953
    %6081 = vmatpush1.bf16.msra.mxu0 %v5952
    %6082 = vmatprep.subr.bf16.mxu0 %v5957
    %6083 = vmatpush1.bf16.msra.mxu0 %v5956
    %6084 = vmatprep.subr.bf16.mxu0 %v5961
    %6085 = vmatpush1.bf16.msra.mxu0 %v5960
    %6086 = vmatprep.subr.bf16.mxu0 %v5965
    %6087 = vmatpush1.bf16.msra.mxu0 %v5964
    %6088 = vmatprep.subr.bf16.mxu0 %v5969
    %6089 = vmatpush1.bf16.msra.mxu0 %v5968
    %6090 = vmatprep.subr.bf16.mxu0 %v5973
    %6091 = vmatpush1.bf16.msra.mxu0 %v5972
    %6092 = vmatprep.subr.bf16.mxu0 %v5977
    %6093 = vmatpush1.bf16.msra.mxu0 %v5976
    %6094 = vmatprep.subr.bf16.mxu0 %v5981
    %6095 = vmatpush1.bf16.msra.mxu0 %v5980
    %6096 = vmatprep.subr.bf16.mxu0 %v5985
    %6097 = vmatpush1.bf16.msra.mxu0 %v5984
    %6098 = vmatprep.subr.bf16.mxu0 %v5989
    %6099 = vmatpush1.bf16.msra.mxu0 %v5988
    %6100 = vmatprep.subr.bf16.mxu0 %v5993
    %6101 = vmatpush1.bf16.msra.mxu0 %v5992
    %6102 = vmatprep.subr.bf16.mxu0 %v5997
    %6103 = vmatpush1.bf16.msra.mxu0 %v5996
    %6104 = vmatprep.subr.bf16.mxu0 %v6001
    %6105 = vmatpush1.bf16.msra.mxu0 %v6000
    %6106 = vmatprep.subr.bf16.mxu0 %v6005
    %6107 = vmatpush1.bf16.msra.mxu0 %v6004
    %6108 = vmatprep.subr.bf16.mxu0 %v6009
    %6109 = vmatpush1.bf16.msra.mxu0 %v6008
    %6110 = vmatprep.subr.bf16.mxu0 %v6013
    %6111 = vmatpush1.bf16.msra.mxu0 %v6012
    %6112 = vmatprep.mubr.bf16.mxu0 %v5695
    %6113 = vmatmul.mubr.bf16.gmra.mrb[0].mxu0 %v5694
    %v6114 = vpop.f32.mrb[0].mxu0
    %v6115 = vadd.f32 %v551, %v6114
    %v6116 = vpop.f32.mrb[0].mxu0
    %v6117 = vadd.f32 %v555, %v6116
    %v6118 = vpop.f32.mrb[0].mxu0
    %v6119 = vpop.f32.mrb[0].mxu0
    %6120 = vdwg.mxu0
    %6121 = vmatprep.subr.bf16.mxu0 %v5955
    %6122 = vmatpush1.bf16.msra.mxu0 %v5954
    %6123 = vmatprep.subr.bf16.mxu0 %v5959
    %6124 = vmatpush1.bf16.msra.mxu0 %v5958
    %6125 = vmatprep.subr.bf16.mxu0 %v5963
    %6126 = vmatpush1.bf16.msra.mxu0 %v5962
    %6127 = vmatprep.subr.bf16.mxu0 %v5967
    %6128 = vmatpush1.bf16.msra.mxu0 %v5966
    %6129 = vmatprep.subr.bf16.mxu0 %v5971
    %6130 = vmatpush1.bf16.msra.mxu0 %v5970
    %6131 = vmatprep.subr.bf16.mxu0 %v5975
    %6132 = vmatpush1.bf16.msra.mxu0 %v5974
    %6133 = vmatprep.subr.bf16.mxu0 %v5979
    %6134 = vmatpush1.bf16.msra.mxu0 %v5978
    %6135 = vmatprep.subr.bf16.mxu0 %v5983
    %6136 = vmatpush1.bf16.msra.mxu0 %v5982
    %6137 = vmatprep.subr.bf16.mxu0 %v5987
    %6138 = vmatpush1.bf16.msra.mxu0 %v5986
    %6139 = vmatprep.subr.bf16.mxu0 %v5991
    %6140 = vmatpush1.bf16.msra.mxu0 %v5990
    %6141 = vmatprep.subr.bf16.mxu0 %v5995
    %6142 = vmatpush1.bf16.msra.mxu0 %v5994
    %6143 = vmatprep.subr.bf16.mxu0 %v5999
    %6144 = vmatpush1.bf16.msra.mxu0 %v5998
    %6145 = vmatprep.subr.bf16.mxu0 %v6003
    %6146 = vmatpush1.bf16.msra.mxu0 %v6002
    %6147 = vmatprep.subr.bf16.mxu0 %v6007
    %6148 = vmatpush1.bf16.msra.mxu0 %v6006
    %6149 = vmatprep.subr.bf16.mxu0 %v6011
    %6150 = vmatpush1.bf16.msra.mxu0 %v6010
    %6151 = vmatprep.subr.bf16.mxu0 %v6015
    %6152 = vmatpush1.bf16.msra.mxu0 %v6014
    %6153 = vmatprep.mubr.bf16.mxu0 %v5695
    %6154 = vmatmul.mubr.bf16.gmra.mrb[0].mxu0 %v5694
    %v6155 = vpop.f32.mrb[0].mxu0
    %v6156 = vadd.f32 %v559, %v6155
    %v6157 = vpop.f32.mrb[0].mxu0
    %v6158 = vadd.f32 %v563, %v6157
    %v6159 = vpop.f32.mrb[0].mxu0
    %v6160 = vpop.f32.mrb[0].mxu0
    %6161 = vdwg.mxu0
    %v6162 = vxor.u32 %v6115, 2147483648
    %v6163 = vmul.f32 %v6162, 1.442695
    %v6164 = vpow.pop %v6163
    %v6165 = vadd.f32 %v6164, 1.0
    %v6166 = vrcp.pop %v6165
    %v6167 = vmul.f32 1.0, %v6166
    %v6168 = vxor.u32 %v6117, 2147483648
    %v6169 = vmul.f32 %v6168, 1.442695
    %v6170 = vpow.pop %v6169
    %v6171 = vadd.f32 %v6170, 1.0
    %v6172 = vrcp.pop %v6171
    %v6173 = vmul.f32 1.0, %v6172
    %v6174 = vtanh.pop %v6156
    %v6175 = vxor.u32 %v6158, 2147483648
    %v6176 = vmul.f32 %v6175, 1.442695
    %v6177 = vpow.pop %v6176
    %v6178 = vadd.f32 %v6177, 1.0
    %v6179 = vrcp.pop %v6178
    %v6180 = vmul.f32 1.0, %v6179
    %v6181 = vmul.f32 %v6173, %v5380
    %v6182 = vmul.f32 %v6167, %v6174
    %v6183 = vadd.f32 %v6181, %v6182
    %v6184 = vtanh.pop %v6183
    %v6185 = vmul.f32 %v6180, %v6184
    %s6186 = scalar_lea.vmem [#allocation3], 48
    %6187 = vst [vmem:[%s6186] sm:$0xff] %v6185
    %s6188 = smul.u32 7, 4
    %s6189 = smul.addr %s6188, 8
    %s6190 = scalar_lea.vmem [#allocation2], %s6189
    %v6191 = vld [vmem:[%s6190] sm:$0xff]
    %v6192 = vld [vmem:[%s6190 + $0x8] sm:$0xff]
    %v6193 = vld [vmem:[%s6190 + $0x10] sm:$0xff]
    %v6194 = vld [vmem:[%s6190 + $0x18] sm:$0xff]
    %v6195 = vld [vmem:[#allocation9] sm:$0xff]
    %v6196 = vld [vmem:[#allocation9 + $0x8] sm:$0xff]
    %v6197 = vld [vmem:[#allocation9 + $0x10] sm:$0xff]
    %v6198 = vld [vmem:[#allocation9 + $0x18] sm:$0xff]
    %v6199 = vld [vmem:[#allocation9 + $0x20] sm:$0xff]
    %v6200 = vld [vmem:[#allocation9 + $0x28] sm:$0xff]
    %v6201 = vld [vmem:[#allocation9 + $0x30] sm:$0xff]
    %v6202 = vld [vmem:[#allocation9 + $0x38] sm:$0xff]
    %v6203 = vld [vmem:[#allocation9 + $0x40] sm:$0xff]
    %v6204 = vld [vmem:[#allocation9 + $0x48] sm:$0xff]
    %v6205 = vld [vmem:[#allocation9 + $0x50] sm:$0xff]
    %v6206 = vld [vmem:[#allocation9 + $0x58] sm:$0xff]
    %v6207 = vld [vmem:[#allocation9 + $0x60] sm:$0xff]
    %v6208 = vld [vmem:[#allocation9 + $0x68] sm:$0xff]
    %v6209 = vld [vmem:[#allocation9 + $0x70] sm:$0xff]
    %v6210 = vld [vmem:[#allocation9 + $0x78] sm:$0xff]
    %v6211 = vld [vmem:[#allocation9 + $0x80] sm:$0xff]
    %v6212 = vld [vmem:[#allocation9 + $0x88] sm:$0xff]
    %v6213 = vld [vmem:[#allocation9 + $0x90] sm:$0xff]
    %v6214 = vld [vmem:[#allocation9 + $0x98] sm:$0xff]
    %v6215 = vld [vmem:[#allocation9 + $0xa0] sm:$0xff]
    %v6216 = vld [vmem:[#allocation9 + $0xa8] sm:$0xff]
    %v6217 = vld [vmem:[#allocation9 + $0xb0] sm:$0xff]
    %v6218 = vld [vmem:[#allocation9 + $0xb8] sm:$0xff]
    %v6219 = vld [vmem:[#allocation9 + $0xc0] sm:$0xff]
    %v6220 = vld [vmem:[#allocation9 + $0xc8] sm:$0xff]
    %v6221 = vld [vmem:[#allocation9 + $0xd0] sm:$0xff]
    %v6222 = vld [vmem:[#allocation9 + $0xd8] sm:$0xff]
    %v6223 = vld [vmem:[#allocation9 + $0xe0] sm:$0xff]
    %v6224 = vld [vmem:[#allocation9 + $0xe8] sm:$0xff]
    %v6225 = vld [vmem:[#allocation9 + $0xf0] sm:$0xff]
    %v6226 = vld [vmem:[#allocation9 + $0xf8] sm:$0xff]
    %v6259 = vunpack.c.l.b16 %v6195
    %v6260 = vunpack.c.h.b16 %v6195
    %v6261 = vunpack.c.l.b16 %v6196
    %v6262 = vunpack.c.h.b16 %v6196
    %v6263 = vunpack.c.l.b16 %v6197
    %v6264 = vunpack.c.h.b16 %v6197
    %v6265 = vunpack.c.l.b16 %v6198
    %v6266 = vunpack.c.h.b16 %v6198
    %v6267 = vunpack.c.l.b16 %v6199
    %v6268 = vunpack.c.h.b16 %v6199
    %v6269 = vunpack.c.l.b16 %v6200
    %v6270 = vunpack.c.h.b16 %v6200
    %v6271 = vunpack.c.l.b16 %v6201
    %v6272 = vunpack.c.h.b16 %v6201
    %v6273 = vunpack.c.l.b16 %v6202
    %v6274 = vunpack.c.h.b16 %v6202
    %v6275 = vunpack.c.l.b16 %v6203
    %v6276 = vunpack.c.h.b16 %v6203
    %v6277 = vunpack.c.l.b16 %v6204
    %v6278 = vunpack.c.h.b16 %v6204
    %v6279 = vunpack.c.l.b16 %v6205
    %v6280 = vunpack.c.h.b16 %v6205
    %v6281 = vunpack.c.l.b16 %v6206
    %v6282 = vunpack.c.h.b16 %v6206
    %v6283 = vunpack.c.l.b16 %v6207
    %v6284 = vunpack.c.h.b16 %v6207
    %v6285 = vunpack.c.l.b16 %v6208
    %v6286 = vunpack.c.h.b16 %v6208
    %v6287 = vunpack.c.l.b16 %v6209
    %v6288 = vunpack.c.h.b16 %v6209
    %v6289 = vunpack.c.l.b16 %v6210
    %v6290 = vunpack.c.h.b16 %v6210
    %v6291 = vunpack.c.l.b16 %v6211
    %v6292 = vunpack.c.h.b16 %v6211
    %v6293 = vunpack.c.l.b16 %v6212
    %v6294 = vunpack.c.h.b16 %v6212
    %v6295 = vunpack.c.l.b16 %v6213
    %v6296 = vunpack.c.h.b16 %v6213
    %v6297 = vunpack.c.l.b16 %v6214
    %v6298 = vunpack.c.h.b16 %v6214
    %v6299 = vunpack.c.l.b16 %v6215
    %v6300 = vunpack.c.h.b16 %v6215
    %v6301 = vunpack.c.l.b16 %v6216
    %v6302 = vunpack.c.h.b16 %v6216
    %v6303 = vunpack.c.l.b16 %v6217
    %v6304 = vunpack.c.h.b16 %v6217
    %v6305 = vunpack.c.l.b16 %v6218
    %v6306 = vunpack.c.h.b16 %v6218
    %v6307 = vunpack.c.l.b16 %v6219
    %v6308 = vunpack.c.h.b16 %v6219
    %v6309 = vunpack.c.l.b16 %v6220
    %v6310 = vunpack.c.h.b16 %v6220
    %v6311 = vunpack.c.l.b16 %v6221
    %v6312 = vunpack.c.h.b16 %v6221
    %v6313 = vunpack.c.l.b16 %v6222
    %v6314 = vunpack.c.h.b16 %v6222
    %v6315 = vunpack.c.l.b16 %v6223
    %v6316 = vunpack.c.h.b16 %v6223
    %v6317 = vunpack.c.l.b16 %v6224
    %v6318 = vunpack.c.h.b16 %v6224
    %v6319 = vunpack.c.l.b16 %v6225
    %v6320 = vunpack.c.h.b16 %v6225
    %v6321 = vunpack.c.l.b16 %v6226
    %v6322 = vunpack.c.h.b16 %v6226
    %v6323 = vpack.c.b16 %v6263, %v6259
    %v6324 = vpack.c.b16 %v6264, %v6260
    %v6325 = vpack.c.b16 %v6265, %v6261
    %v6326 = vpack.c.b16 %v6266, %v6262
    %v6327 = vpack.c.b16 %v6271, %v6267
    %v6328 = vpack.c.b16 %v6272, %v6268
    %v6329 = vpack.c.b16 %v6273, %v6269
    %v6330 = vpack.c.b16 %v6274, %v6270
    %v6331 = vpack.c.b16 %v6279, %v6275
    %v6332 = vpack.c.b16 %v6280, %v6276
    %v6333 = vpack.c.b16 %v6281, %v6277
    %v6334 = vpack.c.b16 %v6282, %v6278
    %v6335 = vpack.c.b16 %v6287, %v6283
    %v6336 = vpack.c.b16 %v6288, %v6284
    %v6337 = vpack.c.b16 %v6289, %v6285
    %v6338 = vpack.c.b16 %v6290, %v6286
    %v6339 = vpack.c.b16 %v6295, %v6291
    %v6340 = vpack.c.b16 %v6296, %v6292
    %v6341 = vpack.c.b16 %v6297, %v6293
    %v6342 = vpack.c.b16 %v6298, %v6294
    %v6343 = vpack.c.b16 %v6303, %v6299
    %v6344 = vpack.c.b16 %v6304, %v6300
    %v6345 = vpack.c.b16 %v6305, %v6301
    %v6346 = vpack.c.b16 %v6306, %v6302
    %v6347 = vpack.c.b16 %v6311, %v6307
    %v6348 = vpack.c.b16 %v6312, %v6308
    %v6349 = vpack.c.b16 %v6313, %v6309
    %v6350 = vpack.c.b16 %v6314, %v6310
    %v6351 = vpack.c.b16 %v6319, %v6315
    %v6352 = vpack.c.b16 %v6320, %v6316
    %v6353 = vpack.c.b16 %v6321, %v6317
    %v6354 = vpack.c.b16 %v6322, %v6318
    %6387 = vmatprep.subr.bf16.mxu0 %v6324
    %6388 = vmatpush1.bf16.msra.mxu0 %v6323
    %6389 = vmatprep.subr.bf16.mxu0 %v6328
    %6390 = vmatpush1.bf16.msra.mxu0 %v6327
    %6391 = vmatprep.subr.bf16.mxu0 %v6332
    %6392 = vmatpush1.bf16.msra.mxu0 %v6331
    %6393 = vmatprep.subr.bf16.mxu0 %v6336
    %6394 = vmatpush1.bf16.msra.mxu0 %v6335
    %6395 = vmatprep.subr.bf16.mxu0 %v6340
    %6396 = vmatpush1.bf16.msra.mxu0 %v6339
    %6397 = vmatprep.subr.bf16.mxu0 %v6344
    %6398 = vmatpush1.bf16.msra.mxu0 %v6343
    %6399 = vmatprep.subr.bf16.mxu0 %v6348
    %6400 = vmatpush1.bf16.msra.mxu0 %v6347
    %6401 = vmatprep.subr.bf16.mxu0 %v6352
    %6402 = vmatpush1.bf16.msra.mxu0 %v6351
    %6403 = vmatprep.subr.bf16.mxu0 0
    %6404 = vmatpush1.bf16.msra.mxu0 0
    %6405 = vmatprep.subr.bf16.mxu0 0
    %6406 = vmatpush1.bf16.msra.mxu0 0
    %6407 = vmatprep.subr.bf16.mxu0 0
    %6408 = vmatpush1.bf16.msra.mxu0 0
    %6409 = vmatprep.subr.bf16.mxu0 0
    %6410 = vmatpush1.bf16.msra.mxu0 0
    %6411 = vmatprep.subr.bf16.mxu0 0
    %6412 = vmatpush1.bf16.msra.mxu0 0
    %6413 = vmatprep.subr.bf16.mxu0 0
    %6414 = vmatpush1.bf16.msra.mxu0 0
    %6415 = vmatprep.subr.bf16.mxu0 0
    %6416 = vmatpush1.bf16.msra.mxu0 0
    %6417 = vmatprep.subr.bf16.mxu0 0
    %6418 = vmatpush1.bf16.msra.mxu0 0
    %6419 = vmatprep.mubr.bf16.mxu0 0
    %6420 = vmatmul.mubr.bf16.gmra.mrb[0].mxu0 %v5694
    %v6421 = vpop.f32.mrb[0].mxu0
    %v6422 = vadd.f32 0.0, %v6421
    %v6423 = vpop.f32.mrb[0].mxu0
    %v6424 = vadd.f32 0.0, %v6423
    %v6425 = vpop.f32.mrb[0].mxu0
    %v6426 = vpop.f32.mrb[0].mxu0
    %6427 = vdwg.mxu0
    %6428 = vmatprep.subr.bf16.mxu0 %v6326
    %6429 = vmatpush1.bf16.msra.mxu0 %v6325
    %6430 = vmatprep.subr.bf16.mxu0 %v6330
    %6431 = vmatpush1.bf16.msra.mxu0 %v6329
    %6432 = vmatprep.subr.bf16.mxu0 %v6334
    %6433 = vmatpush1.bf16.msra.mxu0 %v6333
    %6434 = vmatprep.subr.bf16.mxu0 %v6338
    %6435 = vmatpush1.bf16.msra.mxu0 %v6337
    %6436 = vmatprep.subr.bf16.mxu0 %v6342
    %6437 = vmatpush1.bf16.msra.mxu0 %v6341
    %6438 = vmatprep.subr.bf16.mxu0 %v6346
    %6439 = vmatpush1.bf16.msra.mxu0 %v6345
    %6440 = vmatprep.subr.bf16.mxu0 %v6350
    %6441 = vmatpush1.bf16.msra.mxu0 %v6349
    %6442 = vmatprep.subr.bf16.mxu0 %v6354
    %6443 = vmatpush1.bf16.msra.mxu0 %v6353
    %6444 = vmatprep.subr.bf16.mxu0 0
    %6445 = vmatpush1.bf16.msra.mxu0 0
    %6446 = vmatprep.subr.bf16.mxu0 0
    %6447 = vmatpush1.bf16.msra.mxu0 0
    %6448 = vmatprep.subr.bf16.mxu0 0
    %6449 = vmatpush1.bf16.msra.mxu0 0
    %6450 = vmatprep.subr.bf16.mxu0 0
    %6451 = vmatpush1.bf16.msra.mxu0 0
    %6452 = vmatprep.subr.bf16.mxu0 0
    %6453 = vmatpush1.bf16.msra.mxu0 0
    %6454 = vmatprep.subr.bf16.mxu0 0
    %6455 = vmatpush1.bf16.msra.mxu0 0
    %6456 = vmatprep.subr.bf16.mxu0 0
    %6457 = vmatpush1.bf16.msra.mxu0 0
    %6458 = vmatprep.subr.bf16.mxu0 0
    %6459 = vmatpush1.bf16.msra.mxu0 0
    %6460 = vmatprep.mubr.bf16.mxu0 0
    %6461 = vmatmul.mubr.bf16.gmra.mrb[0].mxu0 %v5694
    %v6462 = vpop.f32.mrb[0].mxu0
    %v6463 = vadd.f32 0.0, %v6462
    %v6464 = vpop.f32.mrb[0].mxu0
    %v6465 = vadd.f32 0.0, %v6464
    %v6466 = vpop.f32.mrb[0].mxu0
    %v6467 = vpop.f32.mrb[0].mxu0
    %6468 = vdwg.mxu0
    %v6469 = vadd.f32 %v6191, %v6422
    %v6470 = vadd.f32 %v6192, %v6424
    %v6471 = vadd.f32 %v6193, %v6463
    %v6472 = vadd.f32 %v6194, %v6465
    %v6473 = vxor.u32 %v6469, 2147483648
    %v6474 = vmul.f32 %v6473, 1.442695
    %v6475 = vpow.pop %v6474
    %v6476 = vadd.f32 %v6475, 1.0
    %v6477 = vrcp.pop %v6476
    %v6478 = vmul.f32 1.0, %v6477
    %v6479 = vxor.u32 %v6470, 2147483648
    %v6480 = vmul.f32 %v6479, 1.442695
    %v6481 = vpow.pop %v6480
    %v6482 = vadd.f32 %v6481, 1.0
    %v6483 = vrcp.pop %v6482
    %v6484 = vmul.f32 1.0, %v6483
    %v6485 = vtanh.pop %v6471
    %v6486 = vxor.u32 %v6472, 2147483648
    %v6487 = vmul.f32 %v6486, 1.442695
    %v6488 = vpow.pop %v6487
    %v6489 = vadd.f32 %v6488, 1.0
    %v6490 = vrcp.pop %v6489
    %v6491 = vmul.f32 1.0, %v6490
    %v6492 = vmul.f32 %v6484, %v5691
    %v6493 = vmul.f32 %v6478, %v6485
    %v6494 = vadd.f32 %v6492, %v6493
    %v6495 = vtanh.pop %v6494
    %v6496 = vmul.f32 %v6491, %v6495
    %v6497 = vpack.c.bf16 %v6496, %v6496
    %v6498 = vpack.c.bf16 %v6185, %v6185
    %v6499 = vld [vmem:[#allocation10] sm:$0xff]
    %v6500 = vld [vmem:[#allocation10 + $0x8] sm:$0xff]
    %v6501 = vld [vmem:[#allocation10 + $0x10] sm:$0xff]
    %v6502 = vld [vmem:[#allocation10 + $0x18] sm:$0xff]
    %v6503 = vld [vmem:[#allocation10 + $0x20] sm:$0xff]
    %v6504 = vld [vmem:[#allocation10 + $0x28] sm:$0xff]
    %v6505 = vld [vmem:[#allocation10 + $0x30] sm:$0xff]
    %v6506 = vld [vmem:[#allocation10 + $0x38] sm:$0xff]
    %v6507 = vld [vmem:[#allocation10 + $0x40] sm:$0xff]
    %v6508 = vld [vmem:[#allocation10 + $0x48] sm:$0xff]
    %v6509 = vld [vmem:[#allocation10 + $0x50] sm:$0xff]
    %v6510 = vld [vmem:[#allocation10 + $0x58] sm:$0xff]
    %v6511 = vld [vmem:[#allocation10 + $0x60] sm:$0xff]
    %v6512 = vld [vmem:[#allocation10 + $0x68] sm:$0xff]
    %v6513 = vld [vmem:[#allocation10 + $0x70] sm:$0xff]
    %v6514 = vld [vmem:[#allocation10 + $0x78] sm:$0xff]
    %v6515 = vld [vmem:[#allocation10 + $0x80] sm:$0xff]
    %v6516 = vld [vmem:[#allocation10 + $0x88] sm:$0xff]
    %v6517 = vld [vmem:[#allocation10 + $0x90] sm:$0xff]
    %v6518 = vld [vmem:[#allocation10 + $0x98] sm:$0xff]
    %v6519 = vld [vmem:[#allocation10 + $0xa0] sm:$0xff]
    %v6520 = vld [vmem:[#allocation10 + $0xa8] sm:$0xff]
    %v6521 = vld [vmem:[#allocation10 + $0xb0] sm:$0xff]
    %v6522 = vld [vmem:[#allocation10 + $0xb8] sm:$0xff]
    %v6523 = vld [vmem:[#allocation10 + $0xc0] sm:$0xff]
    %v6524 = vld [vmem:[#allocation10 + $0xc8] sm:$0xff]
    %v6525 = vld [vmem:[#allocation10 + $0xd0] sm:$0xff]
    %v6526 = vld [vmem:[#allocation10 + $0xd8] sm:$0xff]
    %v6527 = vld [vmem:[#allocation10 + $0xe0] sm:$0xff]
    %v6528 = vld [vmem:[#allocation10 + $0xe8] sm:$0xff]
    %v6529 = vld [vmem:[#allocation10 + $0xf0] sm:$0xff]
    %v6530 = vld [vmem:[#allocation10 + $0xf8] sm:$0xff]
    %v6531 = vld [vmem:[#allocation10 + $0x100] sm:$0xff]
    %v6532 = vld [vmem:[#allocation10 + $0x108] sm:$0xff]
    %v6533 = vld [vmem:[#allocation10 + $0x110] sm:$0xff]
    %v6534 = vld [vmem:[#allocation10 + $0x118] sm:$0xff]
    %v6535 = vld [vmem:[#allocation10 + $0x120] sm:$0xff]
    %v6536 = vld [vmem:[#allocation10 + $0x128] sm:$0xff]
    %v6537 = vld [vmem:[#allocation10 + $0x130] sm:$0xff]
    %v6538 = vld [vmem:[#allocation10 + $0x138] sm:$0xff]
    %v6539 = vld [vmem:[#allocation10 + $0x140] sm:$0xff]
    %v6540 = vld [vmem:[#allocation10 + $0x148] sm:$0xff]
    %v6541 = vld [vmem:[#allocation10 + $0x150] sm:$0xff]
    %v6542 = vld [vmem:[#allocation10 + $0x158] sm:$0xff]
    %v6543 = vld [vmem:[#allocation10 + $0x160] sm:$0xff]
    %v6544 = vld [vmem:[#allocation10 + $0x168] sm:$0xff]
    %v6545 = vld [vmem:[#allocation10 + $0x170] sm:$0xff]
    %v6546 = vld [vmem:[#allocation10 + $0x178] sm:$0xff]
    %v6547 = vld [vmem:[#allocation10 + $0x180] sm:$0xff]
    %v6548 = vld [vmem:[#allocation10 + $0x188] sm:$0xff]
    %v6549 = vld [vmem:[#allocation10 + $0x190] sm:$0xff]
    %v6550 = vld [vmem:[#allocation10 + $0x198] sm:$0xff]
    %v6551 = vld [vmem:[#allocation10 + $0x1a0] sm:$0xff]
    %v6552 = vld [vmem:[#allocation10 + $0x1a8] sm:$0xff]
    %v6553 = vld [vmem:[#allocation10 + $0x1b0] sm:$0xff]
    %v6554 = vld [vmem:[#allocation10 + $0x1b8] sm:$0xff]
    %v6555 = vld [vmem:[#allocation10 + $0x1c0] sm:$0xff]
    %v6556 = vld [vmem:[#allocation10 + $0x1c8] sm:$0xff]
    %v6557 = vld [vmem:[#allocation10 + $0x1d0] sm:$0xff]
    %v6558 = vld [vmem:[#allocation10 + $0x1d8] sm:$0xff]
    %v6559 = vld [vmem:[#allocation10 + $0x1e0] sm:$0xff]
    %v6560 = vld [vmem:[#allocation10 + $0x1e8] sm:$0xff]
    %v6561 = vld [vmem:[#allocation10 + $0x1f0] sm:$0xff]
    %v6562 = vld [vmem:[#allocation10 + $0x1f8] sm:$0xff]
    %v6627 = vunpack.c.l.b16 %v6499
    %v6628 = vunpack.c.h.b16 %v6499
    %v6629 = vunpack.c.l.b16 %v6500
    %v6630 = vunpack.c.h.b16 %v6500
    %v6631 = vunpack.c.l.b16 %v6501
    %v6632 = vunpack.c.h.b16 %v6501
    %v6633 = vunpack.c.l.b16 %v6502
    %v6634 = vunpack.c.h.b16 %v6502
    %v6635 = vunpack.c.l.b16 %v6503
    %v6636 = vunpack.c.h.b16 %v6503
    %v6637 = vunpack.c.l.b16 %v6504
    %v6638 = vunpack.c.h.b16 %v6504
    %v6639 = vunpack.c.l.b16 %v6505
    %v6640 = vunpack.c.h.b16 %v6505
    %v6641 = vunpack.c.l.b16 %v6506
    %v6642 = vunpack.c.h.b16 %v6506
    %v6643 = vunpack.c.l.b16 %v6507
    %v6644 = vunpack.c.h.b16 %v6507
    %v6645 = vunpack.c.l.b16 %v6508
    %v6646 = vunpack.c.h.b16 %v6508
    %v6647 = vunpack.c.l.b16 %v6509
    %v6648 = vunpack.c.h.b16 %v6509
    %v6649 = vunpack.c.l.b16 %v6510
    %v6650 = vunpack.c.h.b16 %v6510
    %v6651 = vunpack.c.l.b16 %v6511
    %v6652 = vunpack.c.h.b16 %v6511
    %v6653 = vunpack.c.l.b16 %v6512
    %v6654 = vunpack.c.h.b16 %v6512
    %v6655 = vunpack.c.l.b16 %v6513
    %v6656 = vunpack.c.h.b16 %v6513
    %v6657 = vunpack.c.l.b16 %v6514
    %v6658 = vunpack.c.h.b16 %v6514
    %v6659 = vunpack.c.l.b16 %v6515
    %v6660 = vunpack.c.h.b16 %v6515
    %v6661 = vunpack.c.l.b16 %v6516
    %v6662 = vunpack.c.h.b16 %v6516
    %v6663 = vunpack.c.l.b16 %v6517
    %v6664 = vunpack.c.h.b16 %v6517
    %v6665 = vunpack.c.l.b16 %v6518
    %v6666 = vunpack.c.h.b16 %v6518
    %v6667 = vunpack.c.l.b16 %v6519
    %v6668 = vunpack.c.h.b16 %v6519
    %v6669 = vunpack.c.l.b16 %v6520
    %v6670 = vunpack.c.h.b16 %v6520
    %v6671 = vunpack.c.l.b16 %v6521
    %v6672 = vunpack.c.h.b16 %v6521
    %v6673 = vunpack.c.l.b16 %v6522
    %v6674 = vunpack.c.h.b16 %v6522
    %v6675 = vunpack.c.l.b16 %v6523
    %v6676 = vunpack.c.h.b16 %v6523
    %v6677 = vunpack.c.l.b16 %v6524
    %v6678 = vunpack.c.h.b16 %v6524
    %v6679 = vunpack.c.l.b16 %v6525
    %v6680 = vunpack.c.h.b16 %v6525
    %v6681 = vunpack.c.l.b16 %v6526
    %v6682 = vunpack.c.h.b16 %v6526
    %v6683 = vunpack.c.l.b16 %v6527
    %v6684 = vunpack.c.h.b16 %v6527
    %v6685 = vunpack.c.l.b16 %v6528
    %v6686 = vunpack.c.h.b16 %v6528
    %v6687 = vunpack.c.l.b16 %v6529
    %v6688 = vunpack.c.h.b16 %v6529
    %v6689 = vunpack.c.l.b16 %v6530
    %v6690 = vunpack.c.h.b16 %v6530
    %v6691 = vunpack.c.l.b16 %v6531
    %v6692 = vunpack.c.h.b16 %v6531
    %v6693 = vunpack.c.l.b16 %v6532
    %v6694 = vunpack.c.h.b16 %v6532
    %v6695 = vunpack.c.l.b16 %v6533
    %v6696 = vunpack.c.h.b16 %v6533
    %v6697 = vunpack.c.l.b16 %v6534
    %v6698 = vunpack.c.h.b16 %v6534
    %v6699 = vunpack.c.l.b16 %v6535
    %v6700 = vunpack.c.h.b16 %v6535
    %v6701 = vunpack.c.l.b16 %v6536
    %v6702 = vunpack.c.h.b16 %v6536
    %v6703 = vunpack.c.l.b16 %v6537
    %v6704 = vunpack.c.h.b16 %v6537
    %v6705 = vunpack.c.l.b16 %v6538
    %v6706 = vunpack.c.h.b16 %v6538
    %v6707 = vunpack.c.l.b16 %v6539
    %v6708 = vunpack.c.h.b16 %v6539
    %v6709 = vunpack.c.l.b16 %v6540
    %v6710 = vunpack.c.h.b16 %v6540
    %v6711 = vunpack.c.l.b16 %v6541
    %v6712 = vunpack.c.h.b16 %v6541
    %v6713 = vunpack.c.l.b16 %v6542
    %v6714 = vunpack.c.h.b16 %v6542
    %v6715 = vunpack.c.l.b16 %v6543
    %v6716 = vunpack.c.h.b16 %v6543
    %v6717 = vunpack.c.l.b16 %v6544
    %v6718 = vunpack.c.h.b16 %v6544
    %v6719 = vunpack.c.l.b16 %v6545
    %v6720 = vunpack.c.h.b16 %v6545
    %v6721 = vunpack.c.l.b16 %v6546
    %v6722 = vunpack.c.h.b16 %v6546
    %v6723 = vunpack.c.l.b16 %v6547
    %v6724 = vunpack.c.h.b16 %v6547
    %v6725 = vunpack.c.l.b16 %v6548
    %v6726 = vunpack.c.h.b16 %v6548
    %v6727 = vunpack.c.l.b16 %v6549
    %v6728 = vunpack.c.h.b16 %v6549
    %v6729 = vunpack.c.l.b16 %v6550
    %v6730 = vunpack.c.h.b16 %v6550
    %v6731 = vunpack.c.l.b16 %v6551
    %v6732 = vunpack.c.h.b16 %v6551
    %v6733 = vunpack.c.l.b16 %v6552
    %v6734 = vunpack.c.h.b16 %v6552
    %v6735 = vunpack.c.l.b16 %v6553
    %v6736 = vunpack.c.h.b16 %v6553
    %v6737 = vunpack.c.l.b16 %v6554
    %v6738 = vunpack.c.h.b16 %v6554
    %v6739 = vunpack.c.l.b16 %v6555
    %v6740 = vunpack.c.h.b16 %v6555
    %v6741 = vunpack.c.l.b16 %v6556
    %v6742 = vunpack.c.h.b16 %v6556
    %v6743 = vunpack.c.l.b16 %v6557
    %v6744 = vunpack.c.h.b16 %v6557
    %v6745 = vunpack.c.l.b16 %v6558
    %v6746 = vunpack.c.h.b16 %v6558
    %v6747 = vunpack.c.l.b16 %v6559
    %v6748 = vunpack.c.h.b16 %v6559
    %v6749 = vunpack.c.l.b16 %v6560
    %v6750 = vunpack.c.h.b16 %v6560
    %v6751 = vunpack.c.l.b16 %v6561
    %v6752 = vunpack.c.h.b16 %v6561
    %v6753 = vunpack.c.l.b16 %v6562
    %v6754 = vunpack.c.h.b16 %v6562
    %v6755 = vpack.c.b16 %v6631, %v6627
    %v6756 = vpack.c.b16 %v6632, %v6628
    %v6757 = vpack.c.b16 %v6633, %v6629
    %v6758 = vpack.c.b16 %v6634, %v6630
    %v6759 = vpack.c.b16 %v6639, %v6635
    %v6760 = vpack.c.b16 %v6640, %v6636
    %v6761 = vpack.c.b16 %v6641, %v6637
    %v6762 = vpack.c.b16 %v6642, %v6638
    %v6763 = vpack.c.b16 %v6647, %v6643
    %v6764 = vpack.c.b16 %v6648, %v6644
    %v6765 = vpack.c.b16 %v6649, %v6645
    %v6766 = vpack.c.b16 %v6650, %v6646
    %v6767 = vpack.c.b16 %v6655, %v6651
    %v6768 = vpack.c.b16 %v6656, %v6652
    %v6769 = vpack.c.b16 %v6657, %v6653
    %v6770 = vpack.c.b16 %v6658, %v6654
    %v6771 = vpack.c.b16 %v6663, %v6659
    %v6772 = vpack.c.b16 %v6664, %v6660
    %v6773 = vpack.c.b16 %v6665, %v6661
    %v6774 = vpack.c.b16 %v6666, %v6662
    %v6775 = vpack.c.b16 %v6671, %v6667
    %v6776 = vpack.c.b16 %v6672, %v6668
    %v6777 = vpack.c.b16 %v6673, %v6669
    %v6778 = vpack.c.b16 %v6674, %v6670
    %v6779 = vpack.c.b16 %v6679, %v6675
    %v6780 = vpack.c.b16 %v6680, %v6676
    %v6781 = vpack.c.b16 %v6681, %v6677
    %v6782 = vpack.c.b16 %v6682, %v6678
    %v6783 = vpack.c.b16 %v6687, %v6683
    %v6784 = vpack.c.b16 %v6688, %v6684
    %v6785 = vpack.c.b16 %v6689, %v6685
    %v6786 = vpack.c.b16 %v6690, %v6686
    %v6787 = vpack.c.b16 %v6695, %v6691
    %v6788 = vpack.c.b16 %v6696, %v6692
    %v6789 = vpack.c.b16 %v6697, %v6693
    %v6790 = vpack.c.b16 %v6698, %v6694
    %v6791 = vpack.c.b16 %v6703, %v6699
    %v6792 = vpack.c.b16 %v6704, %v6700
    %v6793 = vpack.c.b16 %v6705, %v6701
    %v6794 = vpack.c.b16 %v6706, %v6702
    %v6795 = vpack.c.b16 %v6711, %v6707
    %v6796 = vpack.c.b16 %v6712, %v6708
    %v6797 = vpack.c.b16 %v6713, %v6709
    %v6798 = vpack.c.b16 %v6714, %v6710
    %v6799 = vpack.c.b16 %v6719, %v6715
    %v6800 = vpack.c.b16 %v6720, %v6716
    %v6801 = vpack.c.b16 %v6721, %v6717
    %v6802 = vpack.c.b16 %v6722, %v6718
    %v6803 = vpack.c.b16 %v6727, %v6723
    %v6804 = vpack.c.b16 %v6728, %v6724
    %v6805 = vpack.c.b16 %v6729, %v6725
    %v6806 = vpack.c.b16 %v6730, %v6726
    %v6807 = vpack.c.b16 %v6735, %v6731
    %v6808 = vpack.c.b16 %v6736, %v6732
    %v6809 = vpack.c.b16 %v6737, %v6733
    %v6810 = vpack.c.b16 %v6738, %v6734
    %v6811 = vpack.c.b16 %v6743, %v6739
    %v6812 = vpack.c.b16 %v6744, %v6740
    %v6813 = vpack.c.b16 %v6745, %v6741
    %v6814 = vpack.c.b16 %v6746, %v6742
    %v6815 = vpack.c.b16 %v6751, %v6747
    %v6816 = vpack.c.b16 %v6752, %v6748
    %v6817 = vpack.c.b16 %v6753, %v6749
    %v6818 = vpack.c.b16 %v6754, %v6750
    %6883 = vmatprep.subr.bf16.mxu0 %v6756
    %6884 = vmatpush1.bf16.msra.mxu0 %v6755
    %6885 = vmatprep.subr.bf16.mxu0 %v6760
    %6886 = vmatpush1.bf16.msra.mxu0 %v6759
    %6887 = vmatprep.subr.bf16.mxu0 %v6764
    %6888 = vmatpush1.bf16.msra.mxu0 %v6763
    %6889 = vmatprep.subr.bf16.mxu0 %v6768
    %6890 = vmatpush1.bf16.msra.mxu0 %v6767
    %6891 = vmatprep.subr.bf16.mxu0 %v6772
    %6892 = vmatpush1.bf16.msra.mxu0 %v6771
    %6893 = vmatprep.subr.bf16.mxu0 %v6776
    %6894 = vmatpush1.bf16.msra.mxu0 %v6775
    %6895 = vmatprep.subr.bf16.mxu0 %v6780
    %6896 = vmatpush1.bf16.msra.mxu0 %v6779
    %6897 = vmatprep.subr.bf16.mxu0 %v6784
    %6898 = vmatpush1.bf16.msra.mxu0 %v6783
    %6899 = vmatprep.subr.bf16.mxu0 %v6788
    %6900 = vmatpush1.bf16.msra.mxu0 %v6787
    %6901 = vmatprep.subr.bf16.mxu0 %v6792
    %6902 = vmatpush1.bf16.msra.mxu0 %v6791
    %6903 = vmatprep.subr.bf16.mxu0 %v6796
    %6904 = vmatpush1.bf16.msra.mxu0 %v6795
    %6905 = vmatprep.subr.bf16.mxu0 %v6800
    %6906 = vmatpush1.bf16.msra.mxu0 %v6799
    %6907 = vmatprep.subr.bf16.mxu0 %v6804
    %6908 = vmatpush1.bf16.msra.mxu0 %v6803
    %6909 = vmatprep.subr.bf16.mxu0 %v6808
    %6910 = vmatpush1.bf16.msra.mxu0 %v6807
    %6911 = vmatprep.subr.bf16.mxu0 %v6812
    %6912 = vmatpush1.bf16.msra.mxu0 %v6811
    %6913 = vmatprep.subr.bf16.mxu0 %v6816
    %6914 = vmatpush1.bf16.msra.mxu0 %v6815
    %6915 = vmatprep.mubr.bf16.mxu0 %v6498
    %6916 = vmatmul.mubr.bf16.gmra.mrb[0].mxu0 %v6497
    %v6917 = vpop.f32.mrb[0].mxu0
    %v6918 = vadd.f32 %v551, %v6917
    %v6919 = vpop.f32.mrb[0].mxu0
    %v6920 = vadd.f32 %v555, %v6919
    %v6921 = vpop.f32.mrb[0].mxu0
    %v6922 = vpop.f32.mrb[0].mxu0
    %6923 = vdwg.mxu0
    %6924 = vmatprep.subr.bf16.mxu0 %v6758
    %6925 = vmatpush1.bf16.msra.mxu0 %v6757
    %6926 = vmatprep.subr.bf16.mxu0 %v6762
    %6927 = vmatpush1.bf16.msra.mxu0 %v6761
    %6928 = vmatprep.subr.bf16.mxu0 %v6766
    %6929 = vmatpush1.bf16.msra.mxu0 %v6765
    %6930 = vmatprep.subr.bf16.mxu0 %v6770
    %6931 = vmatpush1.bf16.msra.mxu0 %v6769
    %6932 = vmatprep.subr.bf16.mxu0 %v6774
    %6933 = vmatpush1.bf16.msra.mxu0 %v6773
    %6934 = vmatprep.subr.bf16.mxu0 %v6778
    %6935 = vmatpush1.bf16.msra.mxu0 %v6777
    %6936 = vmatprep.subr.bf16.mxu0 %v6782
    %6937 = vmatpush1.bf16.msra.mxu0 %v6781
    %6938 = vmatprep.subr.bf16.mxu0 %v6786
    %6939 = vmatpush1.bf16.msra.mxu0 %v6785
    %6940 = vmatprep.subr.bf16.mxu0 %v6790
    %6941 = vmatpush1.bf16.msra.mxu0 %v6789
    %6942 = vmatprep.subr.bf16.mxu0 %v6794
    %6943 = vmatpush1.bf16.msra.mxu0 %v6793
    %6944 = vmatprep.subr.bf16.mxu0 %v6798
    %6945 = vmatpush1.bf16.msra.mxu0 %v6797
    %6946 = vmatprep.subr.bf16.mxu0 %v6802
    %6947 = vmatpush1.bf16.msra.mxu0 %v6801
    %6948 = vmatprep.subr.bf16.mxu0 %v6806
    %6949 = vmatpush1.bf16.msra.mxu0 %v6805
    %6950 = vmatprep.subr.bf16.mxu0 %v6810
    %6951 = vmatpush1.bf16.msra.mxu0 %v6809
    %6952 = vmatprep.subr.bf16.mxu0 %v6814
    %6953 = vmatpush1.bf16.msra.mxu0 %v6813
    %6954 = vmatprep.subr.bf16.mxu0 %v6818
    %6955 = vmatpush1.bf16.msra.mxu0 %v6817
    %6956 = vmatprep.mubr.bf16.mxu0 %v6498
    %6957 = vmatmul.mubr.bf16.gmra.mrb[0].mxu0 %v6497
    %v6958 = vpop.f32.mrb[0].mxu0
    %v6959 = vadd.f32 %v559, %v6958
    %v6960 = vpop.f32.mrb[0].mxu0
    %v6961 = vadd.f32 %v563, %v6960
    %v6962 = vpop.f32.mrb[0].mxu0
    %v6963 = vpop.f32.mrb[0].mxu0
    %6964 = vdwg.mxu0
    %v6965 = vxor.u32 %v6918, 2147483648
    %v6966 = vmul.f32 %v6965, 1.442695
    %v6967 = vpow.pop %v6966
    %v6968 = vadd.f32 %v6967, 1.0
    %v6969 = vrcp.pop %v6968
    %v6970 = vmul.f32 1.0, %v6969
    %v6971 = vxor.u32 %v6920, 2147483648
    %v6972 = vmul.f32 %v6971, 1.442695
    %v6973 = vpow.pop %v6972
    %v6974 = vadd.f32 %v6973, 1.0
    %v6975 = vrcp.pop %v6974
    %v6976 = vmul.f32 1.0, %v6975
    %v6977 = vtanh.pop %v6959
    %v6978 = vxor.u32 %v6961, 2147483648
    %v6979 = vmul.f32 %v6978, 1.442695
    %v6980 = vpow.pop %v6979
    %v6981 = vadd.f32 %v6980, 1.0
    %v6982 = vrcp.pop %v6981
    %v6983 = vmul.f32 1.0, %v6982
    %v6984 = vmul.f32 %v6976, %v6183
    %v6985 = vmul.f32 %v6970, %v6977
    %v6986 = vadd.f32 %v6984, %v6985
    %v6987 = vtanh.pop %v6986
    %v6988 = vmul.f32 %v6983, %v6987
    %s6989 = scalar_lea.vmem [#allocation3], 56
    %6990 = vst [vmem:[%s6989] sm:$0xff] %v6988
    %v6991 = vld [vmem:[#allocation3] sm:$0xff]
    %v6992 = vld [vmem:[#allocation3 + $0x8] sm:$0xff]
    %v6993 = vld [vmem:[#allocation3 + $0x10] sm:$0xff]
    %v6994 = vld [vmem:[#allocation3 + $0x18] sm:$0xff]
    %v6995 = vld [vmem:[#allocation3 + $0x20] sm:$0xff]
    %v6996 = vld [vmem:[#allocation3 + $0x28] sm:$0xff]
    %v6997 = vld [vmem:[#allocation3 + $0x30] sm:$0xff]
    %v6998 = vld [vmem:[#allocation3 + $0x38] sm:$0xff]
    %v6999 = vpack.c.bf16 %v6992, %v6991
    %v7000 = vpack.c.bf16 %v6994, %v6993
    %v7001 = vpack.c.bf16 %v6996, %v6995
    %v7002 = vpack.c.bf16 %v6998, %v6997
    %v7003 = vld [vmem:[#allocation12] sm:$0xf]
    %v7004 = vld [vmem:[#allocation12 + $0x4] sm:$0xf]
    %v7005 = vld [vmem:[#allocation12 + $0x8] sm:$0xf]
    %v7006 = vld [vmem:[#allocation12 + $0xc] sm:$0xf]
    %v7007 = vld [vmem:[#allocation12 + $0x10] sm:$0xf]
    %v7008 = vld [vmem:[#allocation12 + $0x14] sm:$0xf]
    %v7009 = vld [vmem:[#allocation12 + $0x18] sm:$0xf]
    %v7010 = vld [vmem:[#allocation12 + $0x1c] sm:$0xf]
    %v7011 = vld [vmem:[#allocation12 + $0x20] sm:$0xf]
    %v7012 = vld [vmem:[#allocation12 + $0x24] sm:$0xf]
    %v7013 = vld [vmem:[#allocation12 + $0x28] sm:$0xf]
    %v7014 = vld [vmem:[#allocation12 + $0x2c] sm:$0xf]
    %v7015 = vld [vmem:[#allocation12 + $0x30] sm:$0xf]
    %v7016 = vld [vmem:[#allocation12 + $0x34] sm:$0xf]
    %v7017 = vld [vmem:[#allocation12 + $0x38] sm:$0xf]
    %v7018 = vld [vmem:[#allocation12 + $0x3c] sm:$0xf]
    %v7019 = vld [vmem:[%s7] sm:$0x1]
    %v7021 = vlaneseq
    %v7022 = vshrl.u32 %v7021, 7
    %v7023 = vsub.s32 0, %v7022
    %v7024 = vrot.slane %v7019, %v7023
    %v7042 = vunpack.c.l.b16 %v7003
    %v7043 = vunpack.c.l.b16 %v7004
    %v7044 = vunpack.c.l.b16 %v7005
    %v7045 = vunpack.c.l.b16 %v7006
    %v7046 = vunpack.c.l.b16 %v7007
    %v7047 = vunpack.c.l.b16 %v7008
    %v7048 = vunpack.c.l.b16 %v7009
    %v7049 = vunpack.c.l.b16 %v7010
    %v7050 = vunpack.c.l.b16 %v7011
    %v7051 = vunpack.c.l.b16 %v7012
    %v7052 = vunpack.c.l.b16 %v7013
    %v7053 = vunpack.c.l.b16 %v7014
    %v7054 = vunpack.c.l.b16 %v7015
    %v7055 = vunpack.c.l.b16 %v7016
    %v7056 = vunpack.c.l.b16 %v7017
    %v7057 = vunpack.c.l.b16 %v7018
    %v7058 = vpack.c.b16 %v7043, %v7042
    %v7059 = vpack.c.b16 %v7045, %v7044
    %v7060 = vpack.c.b16 %v7047, %v7046
    %v7061 = vpack.c.b16 %v7049, %v7048
    %v7062 = vpack.c.b16 %v7051, %v7050
    %v7063 = vpack.c.b16 %v7053, %v7052
    %v7064 = vpack.c.b16 %v7055, %v7054
    %v7065 = vpack.c.b16 %v7057, %v7056
    %7074 = vmatprep.subr.bf16.mxu0 0
    %7075 = vmatpush1.bf16.msra.mxu0 %v7058
    %7076 = vmatprep.subr.bf16.mxu0 0
    %7077 = vmatpush1.bf16.msra.mxu0 %v7059
    %7078 = vmatprep.subr.bf16.mxu0 0
    %7079 = vmatpush1.bf16.msra.mxu0 %v7060
    %7080 = vmatprep.subr.bf16.mxu0 0
    %7081 = vmatpush1.bf16.msra.mxu0 %v7061
    %7082 = vmatprep.subr.bf16.mxu0 0
    %7083 = vmatpush1.bf16.msra.mxu0 %v7062
    %7084 = vmatprep.subr.bf16.mxu0 0
    %7085 = vmatpush1.bf16.msra.mxu0 %v7063
    %7086 = vmatprep.subr.bf16.mxu0 0
    %7087 = vmatpush1.bf16.msra.mxu0 %v7064
    %7088 = vmatprep.subr.bf16.mxu0 0
    %7089 = vmatpush1.bf16.msra.mxu0 %v7065
    %7090 = vmatprep.subr.bf16.mxu0 0
    %7091 = vmatpush1.bf16.msra.mxu0 0
    %7092 = vmatprep.subr.bf16.mxu0 0
    %7093 = vmatpush1.bf16.msra.mxu0 0
    %7094 = vmatprep.subr.bf16.mxu0 0
    %7095 = vmatpush1.bf16.msra.mxu0 0
    %7096 = vmatprep.subr.bf16.mxu0 0
    %7097 = vmatpush1.bf16.msra.mxu0 0
    %7098 = vmatprep.subr.bf16.mxu0 0
    %7099 = vmatpush1.bf16.msra.mxu0 0
    %7100 = vmatprep.subr.bf16.mxu0 0
    %7101 = vmatpush1.bf16.msra.mxu0 0
    %7102 = vmatprep.subr.bf16.mxu0 0
    %7103 = vmatpush1.bf16.msra.mxu0 0
    %7104 = vmatprep.subr.bf16.mxu0 0
    %7105 = vmatpush1.bf16.msra.mxu0 0
    %7106 = vmatprep.mubr.bf16.mxu0 0
    %7107 = vmatmul.mubr.bf16.gmra.mrb[0].mxu0 %v6999
    %v7108 = vpop.f32.mrb[0].mxu0
    %v7109 = vadd.f32 %v7024, %v7108
    %v7110 = vpop.f32.mrb[0].mxu0
    %v7111 = vpop.f32.mrb[0].mxu0
    %v7112 = vadd.f32 %v7024, %v7111
    %v7113 = vpop.f32.mrb[0].mxu0
    %7114 = vmatprep.mubr.bf16.mxu0 0
    %7115 = vmatmul.mubr.bf16.gmra.mrb[0].mxu0 %v7000
    %v7116 = vpop.f32.mrb[0].mxu0
    %v7117 = vadd.f32 %v7024, %v7116
    %v7118 = vpop.f32.mrb[0].mxu0
    %v7119 = vpop.f32.mrb[0].mxu0
    %v7120 = vadd.f32 %v7024, %v7119
    %v7121 = vpop.f32.mrb[0].mxu0
    %7122 = vmatprep.mubr.bf16.mxu0 0
    %7123 = vmatmul.mubr.bf16.gmra.mrb[0].mxu0 %v7001
    %v7124 = vpop.f32.mrb[0].mxu0
    %v7125 = vadd.f32 %v7024, %v7124
    %v7126 = vpop.f32.mrb[0].mxu0
    %v7127 = vpop.f32.mrb[0].mxu0
    %v7128 = vadd.f32 %v7024, %v7127
    %v7129 = vpop.f32.mrb[0].mxu0
    %7130 = vmatprep.mubr.bf16.mxu0 0
    %7131 = vmatmul.mubr.bf16.gmra.mrb[0].mxu0 %v7002
    %v7132 = vpop.f32.mrb[0].mxu0
    %v7133 = vadd.f32 %v7024, %v7132
    %v7134 = vpop.f32.mrb[0].mxu0
    %v7135 = vpop.f32.mrb[0].mxu0
    %v7136 = vadd.f32 %v7024, %v7135
    %v7137 = vpop.f32.mrb[0].mxu0
    %7138 = vdwg.mxu0
    %v7139 = vadd.f32 %v7109, %v6988
    %v7140 = vadd.f32 %v7112, %v6988
    %v7141 = vadd.f32 %v7117, %v6988
    %v7142 = vadd.f32 %v7120, %v6988
    %v7143 = vadd.f32 %v7125, %v6988
    %v7144 = vadd.f32 %v7128, %v6988
    %v7145 = vadd.f32 %v7133, %v6988
    %v7146 = vadd.f32 %v7136, %v6988
    %v7147 = vtanh.pop %v7139
    %v7148 = vtanh.pop %v7140
    %v7149 = vtanh.pop %v7141
    %v7150 = vtanh.pop %v7142
    %v7151 = vtanh.pop %v7143
    %v7152 = vtanh.pop %v7144
    %v7153 = vtanh.pop %v7145
    %v7154 = vtanh.pop %v7146
    %v7155 = vld [vmem:[%s8] sm:$0x1]
    %v7157 = vlaneseq
    %v7158 = vshrl.u32 %v7157, 7
    %v7159 = vsub.s32 0, %v7158
    %v7160 = vrot.slane %v7155, %v7159
    %v7162 = vmul.f32 %v7147, %v7160
    %v7163 = vmul.f32 %v7148, %v7160
    %v7164 = vmul.f32 %v7149, %v7160
    %v7165 = vmul.f32 %v7150, %v7160
    %v7166 = vmul.f32 %v7151, %v7160
    %v7167 = vmul.f32 %v7152, %v7160
    %v7168 = vmul.f32 %v7153, %v7160
    %v7169 = vmul.f32 %v7154, %v7160
    %7170 = vadd.xlane.f32.xlu0 %v7162
    %v7171 = vpop.xlane.xlu0 %7170
    %7172 = vadd.xlane.f32.xlu0 %v7163
    %v7173 = vpop.xlane.xlu0 %7172
    %7174 = vadd.xlane.f32.xlu0 %v7164
    %v7175 = vpop.xlane.xlu0 %7174
    %7176 = vadd.xlane.f32.xlu0 %v7165
    %v7177 = vpop.xlane.xlu0 %7176
    %7178 = vadd.xlane.f32.xlu0 %v7166
    %v7179 = vpop.xlane.xlu0 %7178
    %7180 = vadd.xlane.f32.xlu0 %v7167
    %v7181 = vpop.xlane.xlu0 %7180
    %7182 = vadd.xlane.f32.xlu0 %v7168
    %v7183 = vpop.xlane.xlu0 %7182
    %7184 = vadd.xlane.f32.xlu0 %v7169
    %v7185 = vpop.xlane.xlu0 %7184
    %v7186 = vmax.f32 %v7171, %v7179
    %v7187 = vmax.f32 %v7173, %v7181
    %v7188 = vmax.f32 %v7175, %v7183
    %v7189 = vmax.f32 %v7177, %v7185
    %v7190 = vmax.f32 %v7186, %v7187
    %v7191 = vmax.f32 %v7188, %v7189
    %v7192 = vmax.f32 %v7190, %v7191
    %v7193 = vsub.f32 %v7171, %v7192
    %v7194 = vsub.f32 %v7173, %v7192
    %v7195 = vsub.f32 %v7175, %v7192
    %v7196 = vsub.f32 %v7177, %v7192
    %v7197 = vsub.f32 %v7179, %v7192
    %v7198 = vsub.f32 %v7181, %v7192
    %v7199 = vsub.f32 %v7183, %v7192
    %v7200 = vsub.f32 %v7185, %v7192
    %v7201 = vmul.f32 %v7193, 1.442695
    %v7202 = vpow.pop %v7201
    %v7203 = vmul.f32 %v7194, 1.442695
    %v7204 = vpow.pop %v7203
    %v7205 = vmul.f32 %v7195, 1.442695
    %v7206 = vpow.pop %v7205
    %v7207 = vmul.f32 %v7196, 1.442695
    %v7208 = vpow.pop %v7207
    %v7209 = vmul.f32 %v7197, 1.442695
    %v7210 = vpow.pop %v7209
    %v7211 = vmul.f32 %v7198, 1.442695
    %v7212 = vpow.pop %v7211
    %v7213 = vmul.f32 %v7199, 1.442695
    %v7214 = vpow.pop %v7213
    %v7215 = vmul.f32 %v7200, 1.442695
    %v7216 = vpow.pop %v7215
    %v7217 = vadd.f32 %v7202, %v7204
    %v7218 = vadd.f32 %v7217, %v7206
    %v7219 = vadd.f32 %v7218, %v7208
    %v7220 = vadd.f32 %v7219, %v7210
    %v7221 = vadd.f32 %v7220, %v7212
    %v7222 = vadd.f32 %v7221, %v7214
    %v7223 = vadd.f32 %v7222, %v7216
    %v7224 = vrcp.pop %v7223
    %v7225 = vmul.f32 %v7202, %v7224
    %v7226 = vmul.f32 %v7204, %v7224
    %v7227 = vmul.f32 %v7206, %v7224
    %v7228 = vmul.f32 %v7208, %v7224
    %v7229 = vmul.f32 %v7210, %v7224
    %v7230 = vmul.f32 %v7212, %v7224
    %v7231 = vmul.f32 %v7214, %v7224
    %v7232 = vmul.f32 %v7216, %v7224
    %v7233 = vmul.f32 %v7225, %v6991
    %v7234 = vmul.f32 %v7226, %v6992
    %v7235 = vmul.f32 %v7227, %v6993
    %v7236 = vmul.f32 %v7228, %v6994
    %v7237 = vmul.f32 %v7229, %v6995
    %v7238 = vmul.f32 %v7230, %v6996
    %v7239 = vmul.f32 %v7231, %v6997
    %v7240 = vmul.f32 %v7232, %v6998
    %v7241 = vadd.f32 %v7233, %v7234
    %v7242 = vadd.f32 %v7241, %v7235
    %v7243 = vadd.f32 %v7242, %v7236
    %v7244 = vadd.f32 %v7243, %v7237
    %v7245 = vadd.f32 %v7244, %v7238
    %v7246 = vadd.f32 %v7245, %v7239
    %v7247 = vadd.f32 %v7246, %v7240
    %v7248 = vpack.c.bf16 %v7247, %v7247
    %v7249 = vld [vmem:[#allocation13] sm:$0xf]
    %v7250 = vld [vmem:[#allocation13 + $0x4] sm:$0xf]
    %v7251 = vld [vmem:[#allocation13 + $0x8] sm:$0xf]
    %v7252 = vld [vmem:[#allocation13 + $0xc] sm:$0xf]
    %v7253 = vld [vmem:[#allocation13 + $0x10] sm:$0xf]
    %v7254 = vld [vmem:[#allocation13 + $0x14] sm:$0xf]
    %v7255 = vld [vmem:[#allocation13 + $0x18] sm:$0xf]
    %v7256 = vld [vmem:[#allocation13 + $0x1c] sm:$0xf]
    %v7257 = vld [vmem:[#allocation13 + $0x20] sm:$0xf]
    %v7258 = vld [vmem:[#allocation13 + $0x24] sm:$0xf]
    %v7259 = vld [vmem:[#allocation13 + $0x28] sm:$0xf]
    %v7260 = vld [vmem:[#allocation13 + $0x2c] sm:$0xf]
    %v7261 = vld [vmem:[#allocation13 + $0x30] sm:$0xf]
    %v7262 = vld [vmem:[#allocation13 + $0x34] sm:$0xf]
    %v7263 = vld [vmem:[#allocation13 + $0x38] sm:$0xf]
    %v7264 = vld [vmem:[#allocation13 + $0x3c] sm:$0xf]
    %v7265 = vld [vmem:[%s10] sm:$0x1]
    %v7267 = vlaneseq
    %v7268 = vshrl.u32 %v7267, 7
    %v7269 = vsub.s32 0, %v7268
    %v7270 = vrot.slane %v7265, %v7269
    %v7288 = vunpack.c.l.b16 %v7249
    %v7289 = vunpack.c.l.b16 %v7250
    %v7290 = vunpack.c.l.b16 %v7251
    %v7291 = vunpack.c.l.b16 %v7252
    %v7292 = vunpack.c.l.b16 %v7253
    %v7293 = vunpack.c.l.b16 %v7254
    %v7294 = vunpack.c.l.b16 %v7255
    %v7295 = vunpack.c.l.b16 %v7256
    %v7296 = vunpack.c.l.b16 %v7257
    %v7297 = vunpack.c.l.b16 %v7258
    %v7298 = vunpack.c.l.b16 %v7259
    %v7299 = vunpack.c.l.b16 %v7260
    %v7300 = vunpack.c.l.b16 %v7261
    %v7301 = vunpack.c.l.b16 %v7262
    %v7302 = vunpack.c.l.b16 %v7263
    %v7303 = vunpack.c.l.b16 %v7264
    %v7304 = vpack.c.b16 %v7289, %v7288
    %v7305 = vpack.c.b16 %v7291, %v7290
    %v7306 = vpack.c.b16 %v7293, %v7292
    %v7307 = vpack.c.b16 %v7295, %v7294
    %v7308 = vpack.c.b16 %v7297, %v7296
    %v7309 = vpack.c.b16 %v7299, %v7298
    %v7310 = vpack.c.b16 %v7301, %v7300
    %v7311 = vpack.c.b16 %v7303, %v7302
    %7320 = vmatprep.subr.bf16.mxu0 0
    %7321 = vmatpush1.bf16.msra.mxu0 %v7304
    %7322 = vmatprep.subr.bf16.mxu0 0
    %7323 = vmatpush1.bf16.msra.mxu0 %v7305
    %7324 = vmatprep.subr.bf16.mxu0 0
    %7325 = vmatpush1.bf16.msra.mxu0 %v7306
    %7326 = vmatprep.subr.bf16.mxu0 0
    %7327 = vmatpush1.bf16.msra.mxu0 %v7307
    %7328 = vmatprep.subr.bf16.mxu0 0
    %7329 = vmatpush1.bf16.msra.mxu0 %v7308
    %7330 = vmatprep.subr.bf16.mxu0 0
    %7331 = vmatpush1.bf16.msra.mxu0 %v7309
    %7332 = vmatprep.subr.bf16.mxu0 0
    %7333 = vmatpush1.bf16.msra.mxu0 %v7310
    %7334 = vmatprep.subr.bf16.mxu0 0
    %7335 = vmatpush1.bf16.msra.mxu0 %v7311
    %7336 = vmatprep.subr.bf16.mxu0 0
    %7337 = vmatpush1.bf16.msra.mxu0 0
    %7338 = vmatprep.subr.bf16.mxu0 0
    %7339 = vmatpush1.bf16.msra.mxu0 0
    %7340 = vmatprep.subr.bf16.mxu0 0
    %7341 = vmatpush1.bf16.msra.mxu0 0
    %7342 = vmatprep.subr.bf16.mxu0 0
    %7343 = vmatpush1.bf16.msra.mxu0 0
    %7344 = vmatprep.subr.bf16.mxu0 0
    %7345 = vmatpush1.bf16.msra.mxu0 0
    %7346 = vmatprep.subr.bf16.mxu0 0
    %7347 = vmatpush1.bf16.msra.mxu0 0
    %7348 = vmatprep.subr.bf16.mxu0 0
    %7349 = vmatpush1.bf16.msra.mxu0 0
    %7350 = vmatprep.subr.bf16.mxu0 0
    %7351 = vmatpush1.bf16.msra.mxu0 0
    %7352 = vmatprep.mubr.bf16.mxu0 0
    %7353 = vmatmul.mubr.bf16.gmra.mrb[0].mxu0 %v7248
    %v7354 = vpop.f32.mrb[0].mxu0
    %v7355 = vadd.f32 %v7270, %v7354
    %v7356 = vpop.f32.mrb[0].mxu0
    %v7357 = vpop.f32.mrb[0].mxu0
    %v7358 = vpop.f32.mrb[0].mxu0
    %7359 = vdwg.mxu0
    %7360 = vst [vmem:[#allocation15] sm:$0xff] %v7355
    // Predicated region
    $region70: #{tpu_custom_call.1} parent=1 // pred_check
      _
    $region71: #{tpu_custom_call.1} parent=1 // pred_check_branch
      %7362 = sbr.rel (0) target = $region73
    $region72: #{tpu_custom_call.1} parent=1 // pred_region
      %s7364 = ssub.s32 128, 128
      %7365 = vsyncadd [#allocation6], %s7364
      %s7367 = sshll.u32 [#allocation15], 4
      %s7368 = int_to_ptr.vmem [resolvable:$true] %s7367
      %7370 = dma.vmem_to_hbm [thread:$0]  %s7368, 128, %s11, [#allocation6]
    $region73: #{tpu_custom_call.1} parent=1 // pred_fallthru
      _
    // Predicated region
    $region74: #{tpu_custom_call.1} parent=1 // pred_check
      _
    $region75: #{tpu_custom_call.1} parent=1 // pred_check_branch
      %7372 = sbr.rel (0) target = $region77
    $region76: #{tpu_custom_call.1} parent=1 // pred_region
      %7373 = dma.done [#allocation6], 128
    $region77: #{tpu_custom_call.1} parent=1 // pred_fallthru
      _
    %7374 = vsyncpa [#allocation5], 1
    %7375 = vsyncpa [#allocation8], 1
    %7376 = vsyncpa [#allocation11], 1
    %7377 = vsyncpa [#allocation14], 1
    %7378 = vsyncpa [#allocation6], 1

</llo_original>
